<compile_context>
chip_gen: v5e
topology: v5e:2x2
jax: 0.10.0
libtpu: 0.0.40
codegen_flags: <defaults>
</compile_context>

<pallas_src>
import math
import functools

import jax
import jax.numpy as jnp
from jax.experimental import pallas as pl
from jax.experimental.pallas import tpu as pltpu


_TM = 1024                       # in-kernel lane-chunk per f32 accumulator
_VMEM_CAP = 48 * 1024 * 1024     # stay under v7x's 64 MiB physical VMEM


# ---------------------------------------------------------------------------
# Pallas kernel: tap-sum packed-complex GEMM for one image.
#   out(R, mcols) = sum_t  W[t] (R, Ck) @ x[phase_t, :, off_t : off_t+mcols]
#                 + bias(R, 1)   [+ ReLU]      stored as bf16
# All tap offsets are static Python ints, so every slice is a static window.
# ---------------------------------------------------------------------------
def _tap_gemm_kernel(w_ref, b_ref, x_ref, o_ref, *, taps, mcols, tm, relu):
    for m0 in range(0, mcols, tm):
        mc = min(tm, mcols - m0)
        acc = None
        for t, (p, off) in enumerate(taps):
            rhs = x_ref[p, :, m0 + off:m0 + off + mc]          # (Ck, mc) bf16
            d = jnp.dot(w_ref[t], rhs, preferred_element_type=jnp.float32)
            acc = d if acc is None else acc + d
        out = acc + b_ref[...]                                  # (R, mc) f32
        if relu:                                                # complex ReLU
            out = jnp.maximum(out, 0.0)
        o_ref[:, m0:m0 + mc] = out.astype(o_ref.dtype)          # bf16 store


def tap_conv_gemm(x_flat, w_taps, bias, taps, mcols, relu):
    """x_flat (N, P, Ck, L) bf16, w_taps (T, R, Ck) bf16, bias (R, 1) f32
    -> (N, R, mcols) bf16.  Grid over the batch; weights stay resident."""
    N, P, Ck, L = x_flat.shape
    T, R, Ck2 = w_taps.shape
    assert Ck == Ck2 and T == len(taps)
    assert max(off for _, off in taps) + mcols <= L

    tm = min(_TM, mcols)
    kernel = functools.partial(_tap_gemm_kernel, taps=taps, mcols=mcols,
                               tm=tm, relu=relu)

    # Double-buffered per-image blocks + resident weights/bias (+ headroom).
    need = (w_taps.size * 2 + bias.size * 4
            + 2 * P * Ck * L * 2 + 2 * R * mcols * 2)
    vmem_limit = int(min(_VMEM_CAP, max(16 * 1024 * 1024, 2 * need)))

    out = pl.pallas_call(
        kernel,
        out_shape=jax.ShapeDtypeStruct((N, R, mcols), jnp.bfloat16),
        grid=(N,),
        in_specs=[
            pl.BlockSpec((T, R, Ck), lambda n: (0, 0, 0)),       # weights
            pl.BlockSpec((R, 1), lambda n: (0, 0)),              # bias
            pl.BlockSpec((None, P, Ck, L), lambda n: (n, 0, 0, 0)),  # image
        ],
        out_specs=pl.BlockSpec((None, R, mcols), lambda n: (n, 0, 0)),
        compiler_params=pltpu.CompilerParams(
            dimension_semantics=("parallel",),   # v7x: one image per TC
            vmem_limit_bytes=vmem_limit,
        ),
    )(w_taps, bias, x_flat)
    return out


# ---------------------------------------------------------------------------
# Weight / bias packing (one-time, outside the forward hot path)
# ---------------------------------------------------------------------------
def _pack_tap_weights(wr, wi):
    """wr/wi (R, Cin, kh, kw) -> per-tap packed complex weights
    (kh*kw, 2R, 2Cin) bf16 with tap t = i*kw + j holding
    [[Wr[:,:,i,j], -Wi[:,:,i,j]], [Wi[:,:,i,j], Wr[:,:,i,j]]]."""
    R, Cin, kh, kw = wr.shape
    wr_t = wr.transpose(2, 3, 0, 1).reshape(kh * kw, R, Cin)
    wi_t = wi.transpose(2, 3, 0, 1).reshape(kh * kw, R, Cin)
    top = jnp.concatenate([wr_t, -wi_t], axis=2)
    bot = jnp.concatenate([wi_t, wr_t], axis=2)
    return jnp.concatenate([top, bot], axis=1).astype(jnp.bfloat16)


def _pack_complex_bias(br, bi, reps):
    # apply_complex bias fold: real gets (br - bi), imag gets (br + bi).
    b_real = jnp.tile(br - bi, reps)
    b_imag = jnp.tile(br + bi, reps)
    return jnp.concatenate([b_real, b_imag]).astype(jnp.float32)[:, None]


def _phase_weights(w):
    """ConvTranspose2d weight (Cin, Cout, 4, 4), stride 2, pad 1 -> sub-pixel
    phase kernels (4*Cout, Cin, 3, 3) for a stride-1 conv over a 3x3/pad-1
    window of the UNDILATED input.  Row order: (py, px, cout).

    y[:, 2*qy+py, 2*qx+px] = sum_{ty,tx} w_flip[:, :, py+2ty, px+2tx]
                                         * x_pad[:, qy+py+ty, qx+px+tx]
    """
    Cin, Cout, k, _ = w.shape
    assert k == 4
    w_flip = jnp.flip(w, axis=(2, 3)).transpose(1, 0, 2, 3)   # (Cout,Cin,4,4)
    phases = jnp.zeros((2, 2, Cout, Cin, 3, 3), w.dtype)
    for py in range(2):
        for px in range(2):
            for ty in range(2):
                for tx in range(2):
                    phases = phases.at[py, px, :, :, py + ty, px + tx].set(
                        w_flip[:, :, py + 2 * ty, px + 2 * tx])
    return phases.reshape(4 * Cout, Cin, 3, 3)


# ---------------------------------------------------------------------------
# Layers.  Activations in NCHW with 2*C channels: [real C | imag C], bf16.
# ---------------------------------------------------------------------------
def complex_conv2d_down(x, layer):
    """ComplexConv2d(3x3, stride 2, pad 1) + complex ReLU (fused in kernel)."""
    w_taps, b = layer                            # (9, 2Cout, 2Cin), (2Cout, 1)
    N, C2, H, W = x.shape
    assert H % 2 == 0 and W % 2 == 0
    OH, OW = H // 2, W // 2
    OHp, OWp = OH + 1, OW + 1

    # pad + 2x2 sub-pixel phase split of the input: (N, 4, 2Cin, OHp*OWp)
    xp = jnp.pad(x, ((0, 0), (0, 0), (1, 1), (1, 1)))
    xp = xp.reshape(N, C2, OHp, 2, OWp, 2).transpose(0, 3, 5, 1, 2, 4)
    xp = xp.reshape(N, 4, C2, OHp * OWp)

    mcols = OH * OWp - 1                         # all valid cols (+1 junk/row)
    taps = tuple(((i % 2) * 2 + (j % 2), (i // 2) * OWp + (j // 2))
                 for i in range(3) for j in range(3))
    out = tap_conv_gemm(xp, w_taps, b, taps, mcols, relu=True)

    R = w_taps.shape[1]
    out = jnp.pad(out, ((0, 0), (0, 0), (0, OH * OWp - mcols)))
    out = out.reshape(N, R, OH, OWp)[:, :, :, :OW]
    return out                                    # (N, 2Cout, OH, OW) bf16


def complex_conv_transpose2d_up(x, layer, relu):
    """ComplexConvTranspose2d(4x4, stride 2, pad 1) via sub-pixel phases."""
    w_taps, b = layer                            # (9, 8Cout, 2Cin), (8Cout, 1)
    N, C2, H, W = x.shape
    Hp, Wp = H + 2, W + 2
    cout = w_taps.shape[1] // 8

    xp = jnp.pad(x, ((0, 0), (0, 0), (1, 1), (1, 1))).reshape(N, 1, C2, Hp * Wp)

    mcols = H * Wp - 2
    taps = tuple((0, a * Wp + bb) for a in range(3) for bb in range(3))
    out = tap_conv_gemm(xp, w_taps, b, taps, mcols, relu=relu)

    # rows: (ri, py, px, cout); cols: flat (y, x) over the padded grid.
    out = jnp.pad(out, ((0, 0), (0, 0), (0, H * Wp - mcols)))
    out = out.reshape(N, 2, 2, 2, cout, H, Wp)[..., :W]
    out = out.transpose(0, 1, 4, 5, 2, 6, 3).reshape(N, 2 * cout, 2 * H, 2 * W)
    return out                                    # (N, 2Cout, 2H, 2W) bf16


# ---------------------------------------------------------------------------
# Parameter init (PyTorch-shaped) + one-time packing into tap-GEMM form
# ---------------------------------------------------------------------------
def _init_conv(key, cin, cout, k, transpose=False):
    kwr, kwi, kbr, kbi = jax.random.split(key, 4)
    bound = 1.0 / math.sqrt(cin * k * k)
    wshape = (cin, cout, k, k) if transpose else (cout, cin, k, k)
    wr = jax.random.uniform(kwr, wshape, jnp.float32, -bound, bound)
    wi = jax.random.uniform(kwi, wshape, jnp.float32, -bound, bound)
    br = jax.random.uniform(kbr, (cout,), jnp.float32, -bound, bound)
    bi = jax.random.uniform(kbi, (cout,), jnp.float32, -bound, bound)
    return (wr, wi, br, bi)


def init_ccnn1(key):
    keys = jax.random.split(key, 8)
    return {
        'down1': _init_conv(keys[0], 1, 4, 3),
        'down2': _init_conv(keys[1], 4, 8, 3),
        'down3': _init_conv(keys[2], 8, 16, 3),
        'down4': _init_conv(keys[3], 16, 32, 3),
        'up4': _init_conv(keys[4], 32, 16, 4, transpose=True),
        'up3': _init_conv(keys[5], 16, 8, 4, transpose=True),
        'up2': _init_conv(keys[6], 8, 4, 4, transpose=True),
        'up1': _init_conv(keys[7], 4, 1, 4, transpose=True),
    }


def pack_ccnn1_params(params):
    packed = {}
    for name in ('down1', 'down2', 'down3', 'down4'):
        wr, wi, br, bi = params[name]
        packed[name] = (_pack_tap_weights(wr, wi),
                        _pack_complex_bias(br, bi, 1))
    for name in ('up4', 'up3', 'up2', 'up1'):
        wr, wi, br, bi = params[name]
        packed[name] = (_pack_tap_weights(_phase_weights(wr),
                                          _phase_weights(wi)),
                        _pack_complex_bias(br, bi, 4))
    return packed


# ---------------------------------------------------------------------------
# CCNN1 forward
# ---------------------------------------------------------------------------
def ccnn1_forward(packed, xr, xi):
    N, C, H, W = xr.shape
    assert C == 1 and xi.shape == xr.shape
    assert H % 16 == 0 and W % 16 == 0, "H, W must be divisible by 16"

    # (N, 2, H, W) bf16: channel 0 = real, 1 = imag.
    x = jnp.concatenate([xr, xi], axis=1).astype(jnp.bfloat16)

    d1 = complex_conv2d_down(x, packed['down1'])
    d2 = complex_conv2d_down(d1, packed['down2'])
    d3 = complex_conv2d_down(d2, packed['down3'])
    d4 = complex_conv2d_down(d3, packed['down4'])
    u4 = complex_conv_transpose2d_up(d4, packed['up4'], relu=True)
    u3 = complex_conv_transpose2d_up(u4 + d3, packed['up3'], relu=True)
    u2 = complex_conv_transpose2d_up(u3 + d2, packed['up2'], relu=True)
    u1 = complex_conv_transpose2d_up(u2 + d1, packed['up1'], relu=False)

    # TODO(synk): arctan2 could be folded into the up1 kernel epilogue (EUP
    # slot is idle), kept as a tiny XLA elementwise op for guaranteed lowering.
    phase = jnp.arctan2(u1[:, 1].astype(jnp.float32),
                        u1[:, 0].astype(jnp.float32))
    return phase[:, None, :, :]                 # NCHW (N, 1, H, W) f32


if __name__ == "__main__":
    key = jax.random.PRNGKey(0)
    pkey, kr, ki = jax.random.split(key, 3)
    params = init_ccnn1(pkey)
    packed = pack_ccnn1_params(params)

    N, C, H, W = 2, 1, 16, 16   # H, W divisible by 16 (4 stride-2 downsamples)
    xr = jax.random.normal(kr, (N, C, H, W), jnp.float32)
    xi = jax.random.normal(ki, (N, C, H, W), jnp.float32)

    fwd = jax.jit(ccnn1_forward)
    out = fwd(packed, xr, xi)
    out = jax.block_until_ready(out)
    assert out.shape == (N, 1, H, W), out.shape
    assert out.dtype == jnp.float32
    assert bool(jnp.all(jnp.isfinite(out)))
    print("KERNEL_OK")
</pallas_src>

<mosaic_0001>
module attributes {stable_mosaic.version = 11 : i64} {
  func.func @_tap_gemm_kernel(%arg0: i32, %arg1: memref<9x8x2xbf16, #tpu.memory_space<vmem>>, %arg2: memref<8x1xf32, #tpu.memory_space<vmem>>, %arg3: memref<1x4x2x81xbf16, #tpu.memory_space<vmem>>, %arg4: memref<1x8x71xbf16, #tpu.memory_space<vmem>>) attributes {dimension_semantics = [#tpu.dimension_semantics<parallel>], iteration_bounds = array<i64: 2>, scalar_prefetch = 0 : i64, scratch_operands = 0 : i64, tpu.core_type = #tpu.core_type<tc>, window_params = [{pipeline_mode = #tpu.pipeline_mode<synchronous>, transform_indices = @transform_0, window_bounds = array<i64: 9, 8, 2>}, {pipeline_mode = #tpu.pipeline_mode<synchronous>, transform_indices = @transform_1, window_bounds = array<i64: 8, 1>}, {transform_indices = @transform_2, window_bounds = array<i64: 1, 4, 2, 81>}, {transform_indices = @transform_3, window_bounds = array<i64: 1, 8, 71>}]} {
    %c0 = arith.constant 0 : index
    %c0_0 = arith.constant 0 : index
    %c0_1 = arith.constant 0 : index
    %c0_2 = arith.constant 0 : index
    %0 = vector.load %arg3[%c0, %c0_0, %c0_1, %c0_2] : memref<1x4x2x81xbf16, #tpu.memory_space<vmem>>, vector<1x1x2x71xbf16>
    %1 = vector.shape_cast %0 : vector<1x1x2x71xbf16> to vector<2x71xbf16>
    %c0_3 = arith.constant 0 : index
    %c0_4 = arith.constant 0 : index
    %c0_5 = arith.constant 0 : index
    %2 = vector.load %arg1[%c0_3, %c0_4, %c0_5] : memref<9x8x2xbf16, #tpu.memory_space<vmem>>, vector<1x8x2xbf16>
    %3 = vector.shape_cast %2 : vector<1x8x2xbf16> to vector<8x2xbf16>
    %cst = arith.constant dense<0.000000e+00> : vector<8x71xf32>
    %4 = tpu.matmul %3, %1, %cst {dimension_numbers = #tpu.dot_dimension_numbers<[1], [0], [0], [1], [0, 0, 1, 1], [], []>} : vector<8x2xbf16>, vector<2x71xbf16>, vector<8x71xf32> -> vector<8x71xf32>
    %c0_6 = arith.constant 0 : index
    %c1 = arith.constant 1 : index
    %c0_7 = arith.constant 0 : index
    %c0_8 = arith.constant 0 : index
    %5 = vector.load %arg3[%c0_6, %c1, %c0_7, %c0_8] : memref<1x4x2x81xbf16, #tpu.memory_space<vmem>>, vector<1x1x2x71xbf16>
    %6 = vector.shape_cast %5 : vector<1x1x2x71xbf16> to vector<2x71xbf16>
    %c1_9 = arith.constant 1 : index
    %c0_10 = arith.constant 0 : index
    %c0_11 = arith.constant 0 : index
    %7 = vector.load %arg1[%c1_9, %c0_10, %c0_11] : memref<9x8x2xbf16, #tpu.memory_space<vmem>>, vector<1x8x2xbf16>
    %8 = vector.shape_cast %7 : vector<1x8x2xbf16> to vector<8x2xbf16>
    %cst_12 = arith.constant dense<0.000000e+00> : vector<8x71xf32>
    %9 = tpu.matmul %8, %6, %cst_12 {dimension_numbers = #tpu.dot_dimension_numbers<[1], [0], [0], [1], [0, 0, 1, 1], [], []>} : vector<8x2xbf16>, vector<2x71xbf16>, vector<8x71xf32> -> vector<8x71xf32>
    %10 = arith.addf %4, %9 : vector<8x71xf32>
    %c0_13 = arith.constant 0 : index
    %c0_14 = arith.constant 0 : index
    %c0_15 = arith.constant 0 : index
    %c1_16 = arith.constant 1 : index
    %11 = vector.load %arg3[%c0_13, %c0_14, %c0_15, %c1_16] : memref<1x4x2x81xbf16, #tpu.memory_space<vmem>>, vector<1x1x2x71xbf16>
    %12 = vector.shape_cast %11 : vector<1x1x2x71xbf16> to vector<2x71xbf16>
    %c2 = arith.constant 2 : index
    %c0_17 = arith.constant 0 : index
    %c0_18 = arith.constant 0 : index
    %13 = vector.load %arg1[%c2, %c0_17, %c0_18] : memref<9x8x2xbf16, #tpu.memory_space<vmem>>, vector<1x8x2xbf16>
    %14 = vector.shape_cast %13 : vector<1x8x2xbf16> to vector<8x2xbf16>
    %cst_19 = arith.constant dense<0.000000e+00> : vector<8x71xf32>
    %15 = tpu.matmul %14, %12, %cst_19 {dimension_numbers = #tpu.dot_dimension_numbers<[1], [0], [0], [1], [0, 0, 1, 1], [], []>} : vector<8x2xbf16>, vector<2x71xbf16>, vector<8x71xf32> -> vector<8x71xf32>
    %16 = arith.addf %10, %15 : vector<8x71xf32>
    %c0_20 = arith.constant 0 : index
    %c2_21 = arith.constant 2 : index
    %c0_22 = arith.constant 0 : index
    %c0_23 = arith.constant 0 : index
    %17 = vector.load %arg3[%c0_20, %c2_21, %c0_22, %c0_23] : memref<1x4x2x81xbf16, #tpu.memory_space<vmem>>, vector<1x1x2x71xbf16>
    %18 = vector.shape_cast %17 : vector<1x1x2x71xbf16> to vector<2x71xbf16>
    %c3 = arith.constant 3 : index
    %c0_24 = arith.constant 0 : index
    %c0_25 = arith.constant 0 : index
    %19 = vector.load %arg1[%c3, %c0_24, %c0_25] : memref<9x8x2xbf16, #tpu.memory_space<vmem>>, vector<1x8x2xbf16>
    %20 = vector.shape_cast %19 : vector<1x8x2xbf16> to vector<8x2xbf16>
    %cst_26 = arith.constant dense<0.000000e+00> : vector<8x71xf32>
    %21 = tpu.matmul %20, %18, %cst_26 {dimension_numbers = #tpu.dot_dimension_numbers<[1], [0], [0], [1], [0, 0, 1, 1], [], []>} : vector<8x2xbf16>, vector<2x71xbf16>, vector<8x71xf32> -> vector<8x71xf32>
    %22 = arith.addf %16, %21 : vector<8x71xf32>
    %c0_27 = arith.constant 0 : index
    %c3_28 = arith.constant 3 : index
    %c0_29 = arith.constant 0 : index
    %c0_30 = arith.constant 0 : index
    %23 = vector.load %arg3[%c0_27, %c3_28, %c0_29, %c0_30] : memref<1x4x2x81xbf16, #tpu.memory_space<vmem>>, vector<1x1x2x71xbf16>
    %24 = vector.shape_cast %23 : vector<1x1x2x71xbf16> to vector<2x71xbf16>
    %c4 = arith.constant 4 : index
    %c0_31 = arith.constant 0 : index
    %c0_32 = arith.constant 0 : index
    %25 = vector.load %arg1[%c4, %c0_31, %c0_32] : memref<9x8x2xbf16, #tpu.memory_space<vmem>>, vector<1x8x2xbf16>
    %26 = vector.shape_cast %25 : vector<1x8x2xbf16> to vector<8x2xbf16>
    %cst_33 = arith.constant dense<0.000000e+00> : vector<8x71xf32>
    %27 = tpu.matmul %26, %24, %cst_33 {dimension_numbers = #tpu.dot_dimension_numbers<[1], [0], [0], [1], [0, 0, 1, 1], [], []>} : vector<8x2xbf16>, vector<2x71xbf16>, vector<8x71xf32> -> vector<8x71xf32>
    %28 = arith.addf %22, %27 : vector<8x71xf32>
    %c0_34 = arith.constant 0 : index
    %c2_35 = arith.constant 2 : index
    %c0_36 = arith.constant 0 : index
    %c1_37 = arith.constant 1 : index
    %29 = vector.load %arg3[%c0_34, %c2_35, %c0_36, %c1_37] : memref<1x4x2x81xbf16, #tpu.memory_space<vmem>>, vector<1x1x2x71xbf16>
    %30 = vector.shape_cast %29 : vector<1x1x2x71xbf16> to vector<2x71xbf16>
    %c5 = arith.constant 5 : index
    %c0_38 = arith.constant 0 : index
    %c0_39 = arith.constant 0 : index
    %31 = vector.load %arg1[%c5, %c0_38, %c0_39] : memref<9x8x2xbf16, #tpu.memory_space<vmem>>, vector<1x8x2xbf16>
    %32 = vector.shape_cast %31 : vector<1x8x2xbf16> to vector<8x2xbf16>
    %cst_40 = arith.constant dense<0.000000e+00> : vector<8x71xf32>
    %33 = tpu.matmul %32, %30, %cst_40 {dimension_numbers = #tpu.dot_dimension_numbers<[1], [0], [0], [1], [0, 0, 1, 1], [], []>} : vector<8x2xbf16>, vector<2x71xbf16>, vector<8x71xf32> -> vector<8x71xf32>
    %34 = arith.addf %28, %33 : vector<8x71xf32>
    %c0_41 = arith.constant 0 : index
    %c0_42 = arith.constant 0 : index
    %c0_43 = arith.constant 0 : index
    %c9 = arith.constant 9 : index
    %35 = vector.load %arg3[%c0_41, %c0_42, %c0_43, %c9] : memref<1x4x2x81xbf16, #tpu.memory_space<vmem>>, vector<1x1x2x71xbf16>
    %36 = vector.shape_cast %35 : vector<1x1x2x71xbf16> to vector<2x71xbf16>
    %c6 = arith.constant 6 : index
    %c0_44 = arith.constant 0 : index
    %c0_45 = arith.constant 0 : index
    %37 = vector.load %arg1[%c6, %c0_44, %c0_45] : memref<9x8x2xbf16, #tpu.memory_space<vmem>>, vector<1x8x2xbf16>
    %38 = vector.shape_cast %37 : vector<1x8x2xbf16> to vector<8x2xbf16>
    %cst_46 = arith.constant dense<0.000000e+00> : vector<8x71xf32>
    %39 = tpu.matmul %38, %36, %cst_46 {dimension_numbers = #tpu.dot_dimension_numbers<[1], [0], [0], [1], [0, 0, 1, 1], [], []>} : vector<8x2xbf16>, vector<2x71xbf16>, vector<8x71xf32> -> vector<8x71xf32>
    %40 = arith.addf %34, %39 : vector<8x71xf32>
    %c0_47 = arith.constant 0 : index
    %c1_48 = arith.constant 1 : index
    %c0_49 = arith.constant 0 : index
    %c9_50 = arith.constant 9 : index
    %41 = vector.load %arg3[%c0_47, %c1_48, %c0_49, %c9_50] : memref<1x4x2x81xbf16, #tpu.memory_space<vmem>>, vector<1x1x2x71xbf16>
    %42 = vector.shape_cast %41 : vector<1x1x2x71xbf16> to vector<2x71xbf16>
    %c7 = arith.constant 7 : index
    %c0_51 = arith.constant 0 : index
    %c0_52 = arith.constant 0 : index
    %43 = vector.load %arg1[%c7, %c0_51, %c0_52] : memref<9x8x2xbf16, #tpu.memory_space<vmem>>, vector<1x8x2xbf16>
    %44 = vector.shape_cast %43 : vector<1x8x2xbf16> to vector<8x2xbf16>
    %cst_53 = arith.constant dense<0.000000e+00> : vector<8x71xf32>
    %45 = tpu.matmul %44, %42, %cst_53 {dimension_numbers = #tpu.dot_dimension_numbers<[1], [0], [0], [1], [0, 0, 1, 1], [], []>} : vector<8x2xbf16>, vector<2x71xbf16>, vector<8x71xf32> -> vector<8x71xf32>
    %46 = arith.addf %40, %45 : vector<8x71xf32>
    %c0_54 = arith.constant 0 : index
    %c0_55 = arith.constant 0 : index
    %c0_56 = arith.constant 0 : index
    %c10 = arith.constant 10 : index
    %47 = vector.load %arg3[%c0_54, %c0_55, %c0_56, %c10] : memref<1x4x2x81xbf16, #tpu.memory_space<vmem>>, vector<1x1x2x71xbf16>
    %48 = vector.shape_cast %47 : vector<1x1x2x71xbf16> to vector<2x71xbf16>
    %c8 = arith.constant 8 : index
    %c0_57 = arith.constant 0 : index
    %c0_58 = arith.constant 0 : index
    %49 = vector.load %arg1[%c8, %c0_57, %c0_58] : memref<9x8x2xbf16, #tpu.memory_space<vmem>>, vector<1x8x2xbf16>
    %50 = vector.shape_cast %49 : vector<1x8x2xbf16> to vector<8x2xbf16>
    %cst_59 = arith.constant dense<0.000000e+00> : vector<8x71xf32>
    %51 = tpu.matmul %50, %48, %cst_59 {dimension_numbers = #tpu.dot_dimension_numbers<[1], [0], [0], [1], [0, 0, 1, 1], [], []>} : vector<8x2xbf16>, vector<2x71xbf16>, vector<8x71xf32> -> vector<8x71xf32>
    %52 = arith.addf %46, %51 : vector<8x71xf32>
    %c0_60 = arith.constant 0 : index
    %c0_61 = arith.constant 0 : index
    %53 = vector.load %arg2[%c0_60, %c0_61] : memref<8x1xf32, #tpu.memory_space<vmem>>, vector<8x1xf32>
    %54 = vector.broadcast %53 : vector<8x1xf32> to vector<8x71xf32>
    %55 = arith.addf %52, %54 : vector<8x71xf32>
    %cst_62 = arith.constant 0.000000e+00 : f32
    %56 = vector.broadcast %cst_62 : f32 to vector<8x71xf32>
    %57 = arith.maximumf %55, %56 : vector<8x71xf32>
    %58 = arith.truncf %57 : vector<8x71xf32> to vector<8x71xbf16>
    %c0_63 = arith.constant 0 : index
    %c0_64 = arith.constant 0 : index
    %c0_65 = arith.constant 0 : index
    %59 = vector.load %arg4[%c0_63, %c0_64, %c0_65] : memref<1x8x71xbf16, #tpu.memory_space<vmem>>, vector<1x8x71xbf16>
    %60 = vector.shape_cast %59 : vector<1x8x71xbf16> to vector<8x71xbf16>
    %61 = vector.shape_cast %58 : vector<8x71xbf16> to vector<1x8x71xbf16>
    tpu.vector_store %arg4[%c0_63, %c0_64, %c0_65], %61 {strides = array<i32>} : memref<1x8x71xbf16, #tpu.memory_space<vmem>>, vector<1x8x71xbf16>,
    return
  }
  func.func @transform_0(%arg0: i32) -> (i32, i32, i32) {
    %c0_i32 = arith.constant 0 : i32
    %c0_i32_0 = arith.constant 0 : i32
    %c0_i32_1 = arith.constant 0 : i32
    %c0_i32_2 = arith.constant 0 : i32
    return %c0_i32, %c0_i32_0, %c0_i32_1 : i32, i32, i32
  }
  func.func @transform_1(%arg0: i32) -> (i32, i32) {
    %c0_i32 = arith.constant 0 : i32
    %c0_i32_0 = arith.constant 0 : i32
    %c0_i32_1 = arith.constant 0 : i32
    return %c0_i32, %c0_i32_0 : i32, i32
  }
  func.func @transform_2(%arg0: i32) -> (i32, i32, i32, i32) {
    %c0_i32 = arith.constant 0 : i32
    %c0_i32_0 = arith.constant 0 : i32
    %c0_i32_1 = arith.constant 0 : i32
    %c0_i32_2 = arith.constant 0 : i32
    return %arg0, %c0_i32, %c0_i32_0, %c0_i32_1 : i32, i32, i32, i32
  }
  func.func @transform_3(%arg0: i32) -> (i32, i32, i32) {
    %c0_i32 = arith.constant 0 : i32
    %c0_i32_0 = arith.constant 0 : i32
    %c0_i32_1 = arith.constant 0 : i32
    return %arg0, %c0_i32, %c0_i32_0 : i32, i32, i32
  }
}

module attributes {stable_mosaic.version = 11 : i64} {
  func.func @_tap_gemm_kernel(%arg0: i32, %arg1: memref<9x16x8xbf16, #tpu.memory_space<vmem>>, %arg2: memref<16x1xf32, #tpu.memory_space<vmem>>, %arg3: memref<1x4x8x25xbf16, #tpu.memory_space<vmem>>, %arg4: memref<1x16x19xbf16, #tpu.memory_space<vmem>>) attributes {dimension_semantics = [#tpu.dimension_semantics<parallel>], iteration_bounds = array<i64: 2>, scalar_prefetch = 0 : i64, scratch_operands = 0 : i64, tpu.core_type = #tpu.core_type<tc>, window_params = [{pipeline_mode = #tpu.pipeline_mode<synchronous>, transform_indices = @transform_0, window_bounds = array<i64: 9, 16, 8>}, {pipeline_mode = #tpu.pipeline_mode<synchronous>, transform_indices = @transform_1, window_bounds = array<i64: 16, 1>}, {transform_indices = @transform_2, window_bounds = array<i64: 1, 4, 8, 25>}, {transform_indices = @transform_3, window_bounds = array<i64: 1, 16, 19>}]} {
    %c0 = arith.constant 0 : index
    %c0_0 = arith.constant 0 : index
    %c0_1 = arith.constant 0 : index
    %c0_2 = arith.constant 0 : index
    %0 = vector.load %arg3[%c0, %c0_0, %c0_1, %c0_2] : memref<1x4x8x25xbf16, #tpu.memory_space<vmem>>, vector<1x1x8x19xbf16>
    %1 = vector.shape_cast %0 : vector<1x1x8x19xbf16> to vector<8x19xbf16>
    %c0_3 = arith.constant 0 : index
    %c0_4 = arith.constant 0 : index
    %c0_5 = arith.constant 0 : index
    %2 = vector.load %arg1[%c0_3, %c0_4, %c0_5] : memref<9x16x8xbf16, #tpu.memory_space<vmem>>, vector<1x16x8xbf16>
    %3 = vector.shape_cast %2 : vector<1x16x8xbf16> to vector<16x8xbf16>
    %cst = arith.constant dense<0.000000e+00> : vector<16x19xf32>
    %4 = tpu.matmul %3, %1, %cst {dimension_numbers = #tpu.dot_dimension_numbers<[1], [0], [0], [1], [0, 0, 1, 1], [], []>} : vector<16x8xbf16>, vector<8x19xbf16>, vector<16x19xf32> -> vector<16x19xf32>
    %c0_6 = arith.constant 0 : index
    %c1 = arith.constant 1 : index
    %c0_7 = arith.constant 0 : index
    %c0_8 = arith.constant 0 : index
    %5 = vector.load %arg3[%c0_6, %c1, %c0_7, %c0_8] : memref<1x4x8x25xbf16, #tpu.memory_space<vmem>>, vector<1x1x8x19xbf16>
    %6 = vector.shape_cast %5 : vector<1x1x8x19xbf16> to vector<8x19xbf16>
    %c1_9 = arith.constant 1 : index
    %c0_10 = arith.constant 0 : index
    %c0_11 = arith.constant 0 : index
    %7 = vector.load %arg1[%c1_9, %c0_10, %c0_11] : memref<9x16x8xbf16, #tpu.memory_space<vmem>>, vector<1x16x8xbf16>
    %8 = vector.shape_cast %7 : vector<1x16x8xbf16> to vector<16x8xbf16>
    %cst_12 = arith.constant dense<0.000000e+00> : vector<16x19xf32>
    %9 = tpu.matmul %8, %6, %cst_12 {dimension_numbers = #tpu.dot_dimension_numbers<[1], [0], [0], [1], [0, 0, 1, 1], [], []>} : vector<16x8xbf16>, vector<8x19xbf16>, vector<16x19xf32> -> vector<16x19xf32>
    %10 = arith.addf %4, %9 : vector<16x19xf32>
    %c0_13 = arith.constant 0 : index
    %c0_14 = arith.constant 0 : index
    %c0_15 = arith.constant 0 : index
    %c1_16 = arith.constant 1 : index
    %11 = vector.load %arg3[%c0_13, %c0_14, %c0_15, %c1_16] : memref<1x4x8x25xbf16, #tpu.memory_space<vmem>>, vector<1x1x8x19xbf16>
    %12 = vector.shape_cast %11 : vector<1x1x8x19xbf16> to vector<8x19xbf16>
    %c2 = arith.constant 2 : index
    %c0_17 = arith.constant 0 : index
    %c0_18 = arith.constant 0 : index
    %13 = vector.load %arg1[%c2, %c0_17, %c0_18] : memref<9x16x8xbf16, #tpu.memory_space<vmem>>, vector<1x16x8xbf16>
    %14 = vector.shape_cast %13 : vector<1x16x8xbf16> to vector<16x8xbf16>
    %cst_19 = arith.constant dense<0.000000e+00> : vector<16x19xf32>
    %15 = tpu.matmul %14, %12, %cst_19 {dimension_numbers = #tpu.dot_dimension_numbers<[1], [0], [0], [1], [0, 0, 1, 1], [], []>} : vector<16x8xbf16>, vector<8x19xbf16>, vector<16x19xf32> -> vector<16x19xf32>
    %16 = arith.addf %10, %15 : vector<16x19xf32>
    %c0_20 = arith.constant 0 : index
    %c2_21 = arith.constant 2 : index
    %c0_22 = arith.constant 0 : index
    %c0_23 = arith.constant 0 : index
    %17 = vector.load %arg3[%c0_20, %c2_21, %c0_22, %c0_23] : memref<1x4x8x25xbf16, #tpu.memory_space<vmem>>, vector<1x1x8x19xbf16>
    %18 = vector.shape_cast %17 : vector<1x1x8x19xbf16> to vector<8x19xbf16>
    %c3 = arith.constant 3 : index
    %c0_24 = arith.constant 0 : index
    %c0_25 = arith.constant 0 : index
    %19 = vector.load %arg1[%c3, %c0_24, %c0_25] : memref<9x16x8xbf16, #tpu.memory_space<vmem>>, vector<1x16x8xbf16>
    %20 = vector.shape_cast %19 : vector<1x16x8xbf16> to vector<16x8xbf16>
    %cst_26 = arith.constant dense<0.000000e+00> : vector<16x19xf32>
    %21 = tpu.matmul %20, %18, %cst_26 {dimension_numbers = #tpu.dot_dimension_numbers<[1], [0], [0], [1], [0, 0, 1, 1], [], []>} : vector<16x8xbf16>, vector<8x19xbf16>, vector<16x19xf32> -> vector<16x19xf32>
    %22 = arith.addf %16, %21 : vector<16x19xf32>
    %c0_27 = arith.constant 0 : index
    %c3_28 = arith.constant 3 : index
    %c0_29 = arith.constant 0 : index
    %c0_30 = arith.constant 0 : index
    %23 = vector.load %arg3[%c0_27, %c3_28, %c0_29, %c0_30] : memref<1x4x8x25xbf16, #tpu.memory_space<vmem>>, vector<1x1x8x19xbf16>
    %24 = vector.shape_cast %23 : vector<1x1x8x19xbf16> to vector<8x19xbf16>
    %c4 = arith.constant 4 : index
    %c0_31 = arith.constant 0 : index
    %c0_32 = arith.constant 0 : index
    %25 = vector.load %arg1[%c4, %c0_31, %c0_32] : memref<9x16x8xbf16, #tpu.memory_space<vmem>>, vector<1x16x8xbf16>
    %26 = vector.shape_cast %25 : vector<1x16x8xbf16> to vector<16x8xbf16>
    %cst_33 = arith.constant dense<0.000000e+00> : vector<16x19xf32>
    %27 = tpu.matmul %26, %24, %cst_33 {dimension_numbers = #tpu.dot_dimension_numbers<[1], [0], [0], [1], [0, 0, 1, 1], [], []>} : vector<16x8xbf16>, vector<8x19xbf16>, vector<16x19xf32> -> vector<16x19xf32>
    %28 = arith.addf %22, %27 : vector<16x19xf32>
    %c0_34 = arith.constant 0 : index
    %c2_35 = arith.constant 2 : index
    %c0_36 = arith.constant 0 : index
    %c1_37 = arith.constant 1 : index
    %29 = vector.load %arg3[%c0_34, %c2_35, %c0_36, %c1_37] : memref<1x4x8x25xbf16, #tpu.memory_space<vmem>>, vector<1x1x8x19xbf16>
    %30 = vector.shape_cast %29 : vector<1x1x8x19xbf16> to vector<8x19xbf16>
    %c5 = arith.constant 5 : index
    %c0_38 = arith.constant 0 : index
    %c0_39 = arith.constant 0 : index
    %31 = vector.load %arg1[%c5, %c0_38, %c0_39] : memref<9x16x8xbf16, #tpu.memory_space<vmem>>, vector<1x16x8xbf16>
    %32 = vector.shape_cast %31 : vector<1x16x8xbf16> to vector<16x8xbf16>
    %cst_40 = arith.constant dense<0.000000e+00> : vector<16x19xf32>
    %33 = tpu.matmul %32, %30, %cst_40 {dimension_numbers = #tpu.dot_dimension_numbers<[1], [0], [0], [1], [0, 0, 1, 1], [], []>} : vector<16x8xbf16>, vector<8x19xbf16>, vector<16x19xf32> -> vector<16x19xf32>
    %34 = arith.addf %28, %33 : vector<16x19xf32>
    %c0_41 = arith.constant 0 : index
    %c0_42 = arith.constant 0 : index
    %c0_43 = arith.constant 0 : index
    %c5_44 = arith.constant 5 : index
    %35 = vector.load %arg3[%c0_41, %c0_42, %c0_43, %c5_44] : memref<1x4x8x25xbf16, #tpu.memory_space<vmem>>, vector<1x1x8x19xbf16>
    %36 = vector.shape_cast %35 : vector<1x1x8x19xbf16> to vector<8x19xbf16>
    %c6 = arith.constant 6 : index
    %c0_45 = arith.constant 0 : index
    %c0_46 = arith.constant 0 : index
    %37 = vector.load %arg1[%c6, %c0_45, %c0_46] : memref<9x16x8xbf16, #tpu.memory_space<vmem>>, vector<1x16x8xbf16>
    %38 = vector.shape_cast %37 : vector<1x16x8xbf16> to vector<16x8xbf16>
    %cst_47 = arith.constant dense<0.000000e+00> : vector<16x19xf32>
    %39 = tpu.matmul %38, %36, %cst_47 {dimension_numbers = #tpu.dot_dimension_numbers<[1], [0], [0], [1], [0, 0, 1, 1], [], []>} : vector<16x8xbf16>, vector<8x19xbf16>, vector<16x19xf32> -> vector<16x19xf32>
    %40 = arith.addf %34, %39 : vector<16x19xf32>
    %c0_48 = arith.constant 0 : index
    %c1_49 = arith.constant 1 : index
    %c0_50 = arith.constant 0 : index
    %c5_51 = arith.constant 5 : index
    %41 = vector.load %arg3[%c0_48, %c1_49, %c0_50, %c5_51] : memref<1x4x8x25xbf16, #tpu.memory_space<vmem>>, vector<1x1x8x19xbf16>
    %42 = vector.shape_cast %41 : vector<1x1x8x19xbf16> to vector<8x19xbf16>
    %c7 = arith.constant 7 : index
    %c0_52 = arith.constant 0 : index
    %c0_53 = arith.constant 0 : index
    %43 = vector.load %arg1[%c7, %c0_52, %c0_53] : memref<9x16x8xbf16, #tpu.memory_space<vmem>>, vector<1x16x8xbf16>
    %44 = vector.shape_cast %43 : vector<1x16x8xbf16> to vector<16x8xbf16>
    %cst_54 = arith.constant dense<0.000000e+00> : vector<16x19xf32>
    %45 = tpu.matmul %44, %42, %cst_54 {dimension_numbers = #tpu.dot_dimension_numbers<[1], [0], [0], [1], [0, 0, 1, 1], [], []>} : vector<16x8xbf16>, vector<8x19xbf16>, vector<16x19xf32> -> vector<16x19xf32>
    %46 = arith.addf %40, %45 : vector<16x19xf32>
    %c0_55 = arith.constant 0 : index
    %c0_56 = arith.constant 0 : index
    %c0_57 = arith.constant 0 : index
    %c6_58 = arith.constant 6 : index
    %47 = vector.load %arg3[%c0_55, %c0_56, %c0_57, %c6_58] : memref<1x4x8x25xbf16, #tpu.memory_space<vmem>>, vector<1x1x8x19xbf16>
    %48 = vector.shape_cast %47 : vector<1x1x8x19xbf16> to vector<8x19xbf16>
    %c8 = arith.constant 8 : index
    %c0_59 = arith.constant 0 : index
    %c0_60 = arith.constant 0 : index
    %49 = vector.load %arg1[%c8, %c0_59, %c0_60] : memref<9x16x8xbf16, #tpu.memory_space<vmem>>, vector<1x16x8xbf16>
    %50 = vector.shape_cast %49 : vector<1x16x8xbf16> to vector<16x8xbf16>
    %cst_61 = arith.constant dense<0.000000e+00> : vector<16x19xf32>
    %51 = tpu.matmul %50, %48, %cst_61 {dimension_numbers = #tpu.dot_dimension_numbers<[1], [0], [0], [1], [0, 0, 1, 1], [], []>} : vector<16x8xbf16>, vector<8x19xbf16>, vector<16x19xf32> -> vector<16x19xf32>
    %52 = arith.addf %46, %51 : vector<16x19xf32>
    %c0_62 = arith.constant 0 : index
    %c0_63 = arith.constant 0 : index
    %53 = vector.load %arg2[%c0_62, %c0_63] : memref<16x1xf32, #tpu.memory_space<vmem>>, vector<16x1xf32>
    %54 = vector.broadcast %53 : vector<16x1xf32> to vector<16x19xf32>
    %55 = arith.addf %52, %54 : vector<16x19xf32>
    %cst_64 = arith.constant 0.000000e+00 : f32
    %56 = vector.broadcast %cst_64 : f32 to vector<16x19xf32>
    %57 = arith.maximumf %55, %56 : vector<16x19xf32>
    %58 = arith.truncf %57 : vector<16x19xf32> to vector<16x19xbf16>
    %c0_65 = arith.constant 0 : index
    %c0_66 = arith.constant 0 : index
    %c0_67 = arith.constant 0 : index
    %59 = vector.load %arg4[%c0_65, %c0_66, %c0_67] : memref<1x16x19xbf16, #tpu.memory_space<vmem>>, vector<1x16x19xbf16>
    %60 = vector.shape_cast %59 : vector<1x16x19xbf16> to vector<16x19xbf16>
    %61 = vector.shape_cast %58 : vector<16x19xbf16> to vector<1x16x19xbf16>
    tpu.vector_store %arg4[%c0_65, %c0_66, %c0_67], %61 {strides = array<i32>} : memref<1x16x19xbf16, #tpu.memory_space<vmem>>, vector<1x16x19xbf16>,
    return
  }
  func.func @transform_0(%arg0: i32) -> (i32, i32, i32) {
    %c0_i32 = arith.constant 0 : i32
    %c0_i32_0 = arith.constant 0 : i32
    %c0_i32_1 = arith.constant 0 : i32
    %c0_i32_2 = arith.constant 0 : i32
    return %c0_i32, %c0_i32_0, %c0_i32_1 : i32, i32, i32
  }
  func.func @transform_1(%arg0: i32) -> (i32, i32) {
    %c0_i32 = arith.constant 0 : i32
    %c0_i32_0 = arith.constant 0 : i32
    %c0_i32_1 = arith.constant 0 : i32
    return %c0_i32, %c0_i32_0 : i32, i32
  }
  func.func @transform_2(%arg0: i32) -> (i32, i32, i32, i32) {
    %c0_i32 = arith.constant 0 : i32
    %c0_i32_0 = arith.constant 0 : i32
    %c0_i32_1 = arith.constant 0 : i32
    %c0_i32_2 = arith.constant 0 : i32
    return %arg0, %c0_i32, %c0_i32_0, %c0_i32_1 : i32, i32, i32, i32
  }
  func.func @transform_3(%arg0: i32) -> (i32, i32, i32) {
    %c0_i32 = arith.constant 0 : i32
    %c0_i32_0 = arith.constant 0 : i32
    %c0_i32_1 = arith.constant 0 : i32
    return %arg0, %c0_i32, %c0_i32_0 : i32, i32, i32
  }
}

module attributes {stable_mosaic.version = 11 : i64} {
  func.func @_tap_gemm_kernel(%arg0: i32, %arg1: memref<9x32x16xbf16, #tpu.memory_space<vmem>>, %arg2: memref<32x1xf32, #tpu.memory_space<vmem>>, %arg3: memref<1x4x16x9xbf16, #tpu.memory_space<vmem>>, %arg4: memref<1x32x5xbf16, #tpu.memory_space<vmem>>) attributes {dimension_semantics = [#tpu.dimension_semantics<parallel>], iteration_bounds = array<i64: 2>, scalar_prefetch = 0 : i64, scratch_operands = 0 : i64, tpu.core_type = #tpu.core_type<tc>, window_params = [{pipeline_mode = #tpu.pipeline_mode<synchronous>, transform_indices = @transform_0, window_bounds = array<i64: 9, 32, 16>}, {pipeline_mode = #tpu.pipeline_mode<synchronous>, transform_indices = @transform_1, window_bounds = array<i64: 32, 1>}, {transform_indices = @transform_2, window_bounds = array<i64: 1, 4, 16, 9>}, {transform_indices = @transform_3, window_bounds = array<i64: 1, 32, 5>}]} {
    %c0 = arith.constant 0 : index
    %c0_0 = arith.constant 0 : index
    %c0_1 = arith.constant 0 : index
    %c0_2 = arith.constant 0 : index
    %0 = vector.load %arg3[%c0, %c0_0, %c0_1, %c0_2] : memref<1x4x16x9xbf16, #tpu.memory_space<vmem>>, vector<1x1x16x5xbf16>
    %1 = vector.shape_cast %0 : vector<1x1x16x5xbf16> to vector<16x5xbf16>
    %c0_3 = arith.constant 0 : index
    %c0_4 = arith.constant 0 : index
    %c0_5 = arith.constant 0 : index
    %2 = vector.load %arg1[%c0_3, %c0_4, %c0_5] : memref<9x32x16xbf16, #tpu.memory_space<vmem>>, vector<1x32x16xbf16>
    %3 = vector.shape_cast %2 : vector<1x32x16xbf16> to vector<32x16xbf16>
    %cst = arith.constant dense<0.000000e+00> : vector<32x5xf32>
    %4 = tpu.matmul %3, %1, %cst {dimension_numbers = #tpu.dot_dimension_numbers<[1], [0], [0], [1], [0, 0, 1, 1], [], []>} : vector<32x16xbf16>, vector<16x5xbf16>, vector<32x5xf32> -> vector<32x5xf32>
    %c0_6 = arith.constant 0 : index
    %c1 = arith.constant 1 : index
    %c0_7 = arith.constant 0 : index
    %c0_8 = arith.constant 0 : index
    %5 = vector.load %arg3[%c0_6, %c1, %c0_7, %c0_8] : memref<1x4x16x9xbf16, #tpu.memory_space<vmem>>, vector<1x1x16x5xbf16>
    %6 = vector.shape_cast %5 : vector<1x1x16x5xbf16> to vector<16x5xbf16>
    %c1_9 = arith.constant 1 : index
    %c0_10 = arith.constant 0 : index
    %c0_11 = arith.constant 0 : index
    %7 = vector.load %arg1[%c1_9, %c0_10, %c0_11] : memref<9x32x16xbf16, #tpu.memory_space<vmem>>, vector<1x32x16xbf16>
    %8 = vector.shape_cast %7 : vector<1x32x16xbf16> to vector<32x16xbf16>
    %cst_12 = arith.constant dense<0.000000e+00> : vector<32x5xf32>
    %9 = tpu.matmul %8, %6, %cst_12 {dimension_numbers = #tpu.dot_dimension_numbers<[1], [0], [0], [1], [0, 0, 1, 1], [], []>} : vector<32x16xbf16>, vector<16x5xbf16>, vector<32x5xf32> -> vector<32x5xf32>
    %10 = arith.addf %4, %9 : vector<32x5xf32>
    %c0_13 = arith.constant 0 : index
    %c0_14 = arith.constant 0 : index
    %c0_15 = arith.constant 0 : index
    %c1_16 = arith.constant 1 : index
    %11 = vector.load %arg3[%c0_13, %c0_14, %c0_15, %c1_16] : memref<1x4x16x9xbf16, #tpu.memory_space<vmem>>, vector<1x1x16x5xbf16>
    %12 = vector.shape_cast %11 : vector<1x1x16x5xbf16> to vector<16x5xbf16>
    %c2 = arith.constant 2 : index
    %c0_17 = arith.constant 0 : index
    %c0_18 = arith.constant 0 : index
    %13 = vector.load %arg1[%c2, %c0_17, %c0_18] : memref<9x32x16xbf16, #tpu.memory_space<vmem>>, vector<1x32x16xbf16>
    %14 = vector.shape_cast %13 : vector<1x32x16xbf16> to vector<32x16xbf16>
    %cst_19 = arith.constant dense<0.000000e+00> : vector<32x5xf32>
    %15 = tpu.matmul %14, %12, %cst_19 {dimension_numbers = #tpu.dot_dimension_numbers<[1], [0], [0], [1], [0, 0, 1, 1], [], []>} : vector<32x16xbf16>, vector<16x5xbf16>, vector<32x5xf32> -> vector<32x5xf32>
    %16 = arith.addf %10, %15 : vector<32x5xf32>
    %c0_20 = arith.constant 0 : index
    %c2_21 = arith.constant 2 : index
    %c0_22 = arith.constant 0 : index
    %c0_23 = arith.constant 0 : index
    %17 = vector.load %arg3[%c0_20, %c2_21, %c0_22, %c0_23] : memref<1x4x16x9xbf16, #tpu.memory_space<vmem>>, vector<1x1x16x5xbf16>
    %18 = vector.shape_cast %17 : vector<1x1x16x5xbf16> to vector<16x5xbf16>
    %c3 = arith.constant 3 : index
    %c0_24 = arith.constant 0 : index
    %c0_25 = arith.constant 0 : index
    %19 = vector.load %arg1[%c3, %c0_24, %c0_25] : memref<9x32x16xbf16, #tpu.memory_space<vmem>>, vector<1x32x16xbf16>
    %20 = vector.shape_cast %19 : vector<1x32x16xbf16> to vector<32x16xbf16>
    %cst_26 = arith.constant dense<0.000000e+00> : vector<32x5xf32>
    %21 = tpu.matmul %20, %18, %cst_26 {dimension_numbers = #tpu.dot_dimension_numbers<[1], [0], [0], [1], [0, 0, 1, 1], [], []>} : vector<32x16xbf16>, vector<16x5xbf16>, vector<32x5xf32> -> vector<32x5xf32>
    %22 = arith.addf %16, %21 : vector<32x5xf32>
    %c0_27 = arith.constant 0 : index
    %c3_28 = arith.constant 3 : index
    %c0_29 = arith.constant 0 : index
    %c0_30 = arith.constant 0 : index
    %23 = vector.load %arg3[%c0_27, %c3_28, %c0_29, %c0_30] : memref<1x4x16x9xbf16, #tpu.memory_space<vmem>>, vector<1x1x16x5xbf16>
    %24 = vector.shape_cast %23 : vector<1x1x16x5xbf16> to vector<16x5xbf16>
    %c4 = arith.constant 4 : index
    %c0_31 = arith.constant 0 : index
    %c0_32 = arith.constant 0 : index
    %25 = vector.load %arg1[%c4, %c0_31, %c0_32] : memref<9x32x16xbf16, #tpu.memory_space<vmem>>, vector<1x32x16xbf16>
    %26 = vector.shape_cast %25 : vector<1x32x16xbf16> to vector<32x16xbf16>
    %cst_33 = arith.constant dense<0.000000e+00> : vector<32x5xf32>
    %27 = tpu.matmul %26, %24, %cst_33 {dimension_numbers = #tpu.dot_dimension_numbers<[1], [0], [0], [1], [0, 0, 1, 1], [], []>} : vector<32x16xbf16>, vector<16x5xbf16>, vector<32x5xf32> -> vector<32x5xf32>
    %28 = arith.addf %22, %27 : vector<32x5xf32>
    %c0_34 = arith.constant 0 : index
    %c2_35 = arith.constant 2 : index
    %c0_36 = arith.constant 0 : index
    %c1_37 = arith.constant 1 : index
    %29 = vector.load %arg3[%c0_34, %c2_35, %c0_36, %c1_37] : memref<1x4x16x9xbf16, #tpu.memory_space<vmem>>, vector<1x1x16x5xbf16>
    %30 = vector.shape_cast %29 : vector<1x1x16x5xbf16> to vector<16x5xbf16>
    %c5 = arith.constant 5 : index
    %c0_38 = arith.constant 0 : index
    %c0_39 = arith.constant 0 : index
    %31 = vector.load %arg1[%c5, %c0_38, %c0_39] : memref<9x32x16xbf16, #tpu.memory_space<vmem>>, vector<1x32x16xbf16>
    %32 = vector.shape_cast %31 : vector<1x32x16xbf16> to vector<32x16xbf16>
    %cst_40 = arith.constant dense<0.000000e+00> : vector<32x5xf32>
    %33 = tpu.matmul %32, %30, %cst_40 {dimension_numbers = #tpu.dot_dimension_numbers<[1], [0], [0], [1], [0, 0, 1, 1], [], []>} : vector<32x16xbf16>, vector<16x5xbf16>, vector<32x5xf32> -> vector<32x5xf32>
    %34 = arith.addf %28, %33 : vector<32x5xf32>
    %c0_41 = arith.constant 0 : index
    %c0_42 = arith.constant 0 : index
    %c0_43 = arith.constant 0 : index
    %c3_44 = arith.constant 3 : index
    %35 = vector.load %arg3[%c0_41, %c0_42, %c0_43, %c3_44] : memref<1x4x16x9xbf16, #tpu.memory_space<vmem>>, vector<1x1x16x5xbf16>
    %36 = vector.shape_cast %35 : vector<1x1x16x5xbf16> to vector<16x5xbf16>
    %c6 = arith.constant 6 : index
    %c0_45 = arith.constant 0 : index
    %c0_46 = arith.constant 0 : index
    %37 = vector.load %arg1[%c6, %c0_45, %c0_46] : memref<9x32x16xbf16, #tpu.memory_space<vmem>>, vector<1x32x16xbf16>
    %38 = vector.shape_cast %37 : vector<1x32x16xbf16> to vector<32x16xbf16>
    %cst_47 = arith.constant dense<0.000000e+00> : vector<32x5xf32>
    %39 = tpu.matmul %38, %36, %cst_47 {dimension_numbers = #tpu.dot_dimension_numbers<[1], [0], [0], [1], [0, 0, 1, 1], [], []>} : vector<32x16xbf16>, vector<16x5xbf16>, vector<32x5xf32> -> vector<32x5xf32>
    %40 = arith.addf %34, %39 : vector<32x5xf32>
    %c0_48 = arith.constant 0 : index
    %c1_49 = arith.constant 1 : index
    %c0_50 = arith.constant 0 : index
    %c3_51 = arith.constant 3 : index
    %41 = vector.load %arg3[%c0_48, %c1_49, %c0_50, %c3_51] : memref<1x4x16x9xbf16, #tpu.memory_space<vmem>>, vector<1x1x16x5xbf16>
    %42 = vector.shape_cast %41 : vector<1x1x16x5xbf16> to vector<16x5xbf16>
    %c7 = arith.constant 7 : index
    %c0_52 = arith.constant 0 : index
    %c0_53 = arith.constant 0 : index
    %43 = vector.load %arg1[%c7, %c0_52, %c0_53] : memref<9x32x16xbf16, #tpu.memory_space<vmem>>, vector<1x32x16xbf16>
    %44 = vector.shape_cast %43 : vector<1x32x16xbf16> to vector<32x16xbf16>
    %cst_54 = arith.constant dense<0.000000e+00> : vector<32x5xf32>
    %45 = tpu.matmul %44, %42, %cst_54 {dimension_numbers = #tpu.dot_dimension_numbers<[1], [0], [0], [1], [0, 0, 1, 1], [], []>} : vector<32x16xbf16>, vector<16x5xbf16>, vector<32x5xf32> -> vector<32x5xf32>
    %46 = arith.addf %40, %45 : vector<32x5xf32>
    %c0_55 = arith.constant 0 : index
    %c0_56 = arith.constant 0 : index
    %c0_57 = arith.constant 0 : index
    %c4_58 = arith.constant 4 : index
    %47 = vector.load %arg3[%c0_55, %c0_56, %c0_57, %c4_58] : memref<1x4x16x9xbf16, #tpu.memory_space<vmem>>, vector<1x1x16x5xbf16>
    %48 = vector.shape_cast %47 : vector<1x1x16x5xbf16> to vector<16x5xbf16>
    %c8 = arith.constant 8 : index
    %c0_59 = arith.constant 0 : index
    %c0_60 = arith.constant 0 : index
    %49 = vector.load %arg1[%c8, %c0_59, %c0_60] : memref<9x32x16xbf16, #tpu.memory_space<vmem>>, vector<1x32x16xbf16>
    %50 = vector.shape_cast %49 : vector<1x32x16xbf16> to vector<32x16xbf16>
    %cst_61 = arith.constant dense<0.000000e+00> : vector<32x5xf32>
    %51 = tpu.matmul %50, %48, %cst_61 {dimension_numbers = #tpu.dot_dimension_numbers<[1], [0], [0], [1], [0, 0, 1, 1], [], []>} : vector<32x16xbf16>, vector<16x5xbf16>, vector<32x5xf32> -> vector<32x5xf32>
    %52 = arith.addf %46, %51 : vector<32x5xf32>
    %c0_62 = arith.constant 0 : index
    %c0_63 = arith.constant 0 : index
    %53 = vector.load %arg2[%c0_62, %c0_63] : memref<32x1xf32, #tpu.memory_space<vmem>>, vector<32x1xf32>
    %54 = vector.broadcast %53 : vector<32x1xf32> to vector<32x5xf32>
    %55 = arith.addf %52, %54 : vector<32x5xf32>
    %cst_64 = arith.constant 0.000000e+00 : f32
    %56 = vector.broadcast %cst_64 : f32 to vector<32x5xf32>
    %57 = arith.maximumf %55, %56 : vector<32x5xf32>
    %58 = arith.truncf %57 : vector<32x5xf32> to vector<32x5xbf16>
    %c0_65 = arith.constant 0 : index
    %c0_66 = arith.constant 0 : index
    %c0_67 = arith.constant 0 : index
    %59 = vector.load %arg4[%c0_65, %c0_66, %c0_67] : memref<1x32x5xbf16, #tpu.memory_space<vmem>>, vector<1x32x5xbf16>
    %60 = vector.shape_cast %59 : vector<1x32x5xbf16> to vector<32x5xbf16>
    %61 = vector.shape_cast %58 : vector<32x5xbf16> to vector<1x32x5xbf16>
    tpu.vector_store %arg4[%c0_65, %c0_66, %c0_67], %61 {strides = array<i32>} : memref<1x32x5xbf16, #tpu.memory_space<vmem>>, vector<1x32x5xbf16>,
    return
  }
  func.func @transform_0(%arg0: i32) -> (i32, i32, i32) {
    %c0_i32 = arith.constant 0 : i32
    %c0_i32_0 = arith.constant 0 : i32
    %c0_i32_1 = arith.constant 0 : i32
    %c0_i32_2 = arith.constant 0 : i32
    return %c0_i32, %c0_i32_0, %c0_i32_1 : i32, i32, i32
  }
  func.func @transform_1(%arg0: i32) -> (i32, i32) {
    %c0_i32 = arith.constant 0 : i32
    %c0_i32_0 = arith.constant 0 : i32
    %c0_i32_1 = arith.constant 0 : i32
    return %c0_i32, %c0_i32_0 : i32, i32
  }
  func.func @transform_2(%arg0: i32) -> (i32, i32, i32, i32) {
    %c0_i32 = arith.constant 0 : i32
    %c0_i32_0 = arith.constant 0 : i32
    %c0_i32_1 = arith.constant 0 : i32
    %c0_i32_2 = arith.constant 0 : i32
    return %arg0, %c0_i32, %c0_i32_0, %c0_i32_1 : i32, i32, i32, i32
  }
  func.func @transform_3(%arg0: i32) -> (i32, i32, i32) {
    %c0_i32 = arith.constant 0 : i32
    %c0_i32_0 = arith.constant 0 : i32
    %c0_i32_1 = arith.constant 0 : i32
    return %arg0, %c0_i32, %c0_i32_0 : i32, i32, i32
  }
}

module attributes {stable_mosaic.version = 11 : i64} {
  func.func @_tap_gemm_kernel(%arg0: i32, %arg1: memref<9x64x32xbf16, #tpu.memory_space<vmem>>, %arg2: memref<64x1xf32, #tpu.memory_space<vmem>>, %arg3: memref<1x4x32x4xbf16, #tpu.memory_space<vmem>>, %arg4: memref<1x64x1xbf16, #tpu.memory_space<vmem>>) attributes {dimension_semantics = [#tpu.dimension_semantics<parallel>], iteration_bounds = array<i64: 2>, scalar_prefetch = 0 : i64, scratch_operands = 0 : i64, tpu.core_type = #tpu.core_type<tc>, window_params = [{pipeline_mode = #tpu.pipeline_mode<synchronous>, transform_indices = @transform_0, window_bounds = array<i64: 9, 64, 32>}, {pipeline_mode = #tpu.pipeline_mode<synchronous>, transform_indices = @transform_1, window_bounds = array<i64: 64, 1>}, {transform_indices = @transform_2, window_bounds = array<i64: 1, 4, 32, 4>}, {transform_indices = @transform_3, window_bounds = array<i64: 1, 64, 1>}]} {
    %c0 = arith.constant 0 : index
    %c0_0 = arith.constant 0 : index
    %c0_1 = arith.constant 0 : index
    %c0_2 = arith.constant 0 : index
    %0 = vector.load %arg3[%c0, %c0_0, %c0_1, %c0_2] : memref<1x4x32x4xbf16, #tpu.memory_space<vmem>>, vector<1x1x32x1xbf16>
    %1 = vector.shape_cast %0 : vector<1x1x32x1xbf16> to vector<32x1xbf16>
    %c0_3 = arith.constant 0 : index
    %c0_4 = arith.constant 0 : index
    %c0_5 = arith.constant 0 : index
    %2 = vector.load %arg1[%c0_3, %c0_4, %c0_5] : memref<9x64x32xbf16, #tpu.memory_space<vmem>>, vector<1x64x32xbf16>
    %3 = vector.shape_cast %2 : vector<1x64x32xbf16> to vector<64x32xbf16>
    %cst = arith.constant dense<0.000000e+00> : vector<64x1xf32>
    %4 = tpu.matmul %3, %1, %cst {dimension_numbers = #tpu.dot_dimension_numbers<[1], [0], [0], [1], [0, 0, 1, 1], [], []>} : vector<64x32xbf16>, vector<32x1xbf16>, vector<64x1xf32> -> vector<64x1xf32>
    %c0_6 = arith.constant 0 : index
    %c1 = arith.constant 1 : index
    %c0_7 = arith.constant 0 : index
    %c0_8 = arith.constant 0 : index
    %5 = vector.load %arg3[%c0_6, %c1, %c0_7, %c0_8] : memref<1x4x32x4xbf16, #tpu.memory_space<vmem>>, vector<1x1x32x1xbf16>
    %6 = vector.shape_cast %5 : vector<1x1x32x1xbf16> to vector<32x1xbf16>
    %c1_9 = arith.constant 1 : index
    %c0_10 = arith.constant 0 : index
    %c0_11 = arith.constant 0 : index
    %7 = vector.load %arg1[%c1_9, %c0_10, %c0_11] : memref<9x64x32xbf16, #tpu.memory_space<vmem>>, vector<1x64x32xbf16>
    %8 = vector.shape_cast %7 : vector<1x64x32xbf16> to vector<64x32xbf16>
    %cst_12 = arith.constant dense<0.000000e+00> : vector<64x1xf32>
    %9 = tpu.matmul %8, %6, %cst_12 {dimension_numbers = #tpu.dot_dimension_numbers<[1], [0], [0], [1], [0, 0, 1, 1], [], []>} : vector<64x32xbf16>, vector<32x1xbf16>, vector<64x1xf32> -> vector<64x1xf32>
    %10 = arith.addf %4, %9 : vector<64x1xf32>
    %c0_13 = arith.constant 0 : index
    %c0_14 = arith.constant 0 : index
    %c0_15 = arith.constant 0 : index
    %c1_16 = arith.constant 1 : index
    %11 = vector.load %arg3[%c0_13, %c0_14, %c0_15, %c1_16] : memref<1x4x32x4xbf16, #tpu.memory_space<vmem>>, vector<1x1x32x1xbf16>
    %12 = vector.shape_cast %11 : vector<1x1x32x1xbf16> to vector<32x1xbf16>
    %c2 = arith.constant 2 : index
    %c0_17 = arith.constant 0 : index
    %c0_18 = arith.constant 0 : index
    %13 = vector.load %arg1[%c2, %c0_17, %c0_18] : memref<9x64x32xbf16, #tpu.memory_space<vmem>>, vector<1x64x32xbf16>
    %14 = vector.shape_cast %13 : vector<1x64x32xbf16> to vector<64x32xbf16>
    %cst_19 = arith.constant dense<0.000000e+00> : vector<64x1xf32>
    %15 = tpu.matmul %14, %12, %cst_19 {dimension_numbers = #tpu.dot_dimension_numbers<[1], [0], [0], [1], [0, 0, 1, 1], [], []>} : vector<64x32xbf16>, vector<32x1xbf16>, vector<64x1xf32> -> vector<64x1xf32>
    %16 = arith.addf %10, %15 : vector<64x1xf32>
    %c0_20 = arith.constant 0 : index
    %c2_21 = arith.constant 2 : index
    %c0_22 = arith.constant 0 : index
    %c0_23 = arith.constant 0 : index
    %17 = vector.load %arg3[%c0_20, %c2_21, %c0_22, %c0_23] : memref<1x4x32x4xbf16, #tpu.memory_space<vmem>>, vector<1x1x32x1xbf16>
    %18 = vector.shape_cast %17 : vector<1x1x32x1xbf16> to vector<32x1xbf16>
    %c3 = arith.constant 3 : index
    %c0_24 = arith.constant 0 : index
    %c0_25 = arith.constant 0 : index
    %19 = vector.load %arg1[%c3, %c0_24, %c0_25] : memref<9x64x32xbf16, #tpu.memory_space<vmem>>, vector<1x64x32xbf16>
    %20 = vector.shape_cast %19 : vector<1x64x32xbf16> to vector<64x32xbf16>
    %cst_26 = arith.constant dense<0.000000e+00> : vector<64x1xf32>
    %21 = tpu.matmul %20, %18, %cst_26 {dimension_numbers = #tpu.dot_dimension_numbers<[1], [0], [0], [1], [0, 0, 1, 1], [], []>} : vector<64x32xbf16>, vector<32x1xbf16>, vector<64x1xf32> -> vector<64x1xf32>
    %22 = arith.addf %16, %21 : vector<64x1xf32>
    %c0_27 = arith.constant 0 : index
    %c3_28 = arith.constant 3 : index
    %c0_29 = arith.constant 0 : index
    %c0_30 = arith.constant 0 : index
    %23 = vector.load %arg3[%c0_27, %c3_28, %c0_29, %c0_30] : memref<1x4x32x4xbf16, #tpu.memory_space<vmem>>, vector<1x1x32x1xbf16>
    %24 = vector.shape_cast %23 : vector<1x1x32x1xbf16> to vector<32x1xbf16>
    %c4 = arith.constant 4 : index
    %c0_31 = arith.constant 0 : index
    %c0_32 = arith.constant 0 : index
    %25 = vector.load %arg1[%c4, %c0_31, %c0_32] : memref<9x64x32xbf16, #tpu.memory_space<vmem>>, vector<1x64x32xbf16>
    %26 = vector.shape_cast %25 : vector<1x64x32xbf16> to vector<64x32xbf16>
    %cst_33 = arith.constant dense<0.000000e+00> : vector<64x1xf32>
    %27 = tpu.matmul %26, %24, %cst_33 {dimension_numbers = #tpu.dot_dimension_numbers<[1], [0], [0], [1], [0, 0, 1, 1], [], []>} : vector<64x32xbf16>, vector<32x1xbf16>, vector<64x1xf32> -> vector<64x1xf32>
    %28 = arith.addf %22, %27 : vector<64x1xf32>
    %c0_34 = arith.constant 0 : index
    %c2_35 = arith.constant 2 : index
    %c0_36 = arith.constant 0 : index
    %c1_37 = arith.constant 1 : index
    %29 = vector.load %arg3[%c0_34, %c2_35, %c0_36, %c1_37] : memref<1x4x32x4xbf16, #tpu.memory_space<vmem>>, vector<1x1x32x1xbf16>
    %30 = vector.shape_cast %29 : vector<1x1x32x1xbf16> to vector<32x1xbf16>
    %c5 = arith.constant 5 : index
    %c0_38 = arith.constant 0 : index
    %c0_39 = arith.constant 0 : index
    %31 = vector.load %arg1[%c5, %c0_38, %c0_39] : memref<9x64x32xbf16, #tpu.memory_space<vmem>>, vector<1x64x32xbf16>
    %32 = vector.shape_cast %31 : vector<1x64x32xbf16> to vector<64x32xbf16>
    %cst_40 = arith.constant dense<0.000000e+00> : vector<64x1xf32>
    %33 = tpu.matmul %32, %30, %cst_40 {dimension_numbers = #tpu.dot_dimension_numbers<[1], [0], [0], [1], [0, 0, 1, 1], [], []>} : vector<64x32xbf16>, vector<32x1xbf16>, vector<64x1xf32> -> vector<64x1xf32>
    %34 = arith.addf %28, %33 : vector<64x1xf32>
    %c0_41 = arith.constant 0 : index
    %c0_42 = arith.constant 0 : index
    %c0_43 = arith.constant 0 : index
    %c2_44 = arith.constant 2 : index
    %35 = vector.load %arg3[%c0_41, %c0_42, %c0_43, %c2_44] : memref<1x4x32x4xbf16, #tpu.memory_space<vmem>>, vector<1x1x32x1xbf16>
    %36 = vector.shape_cast %35 : vector<1x1x32x1xbf16> to vector<32x1xbf16>
    %c6 = arith.constant 6 : index
    %c0_45 = arith.constant 0 : index
    %c0_46 = arith.constant 0 : index
    %37 = vector.load %arg1[%c6, %c0_45, %c0_46] : memref<9x64x32xbf16, #tpu.memory_space<vmem>>, vector<1x64x32xbf16>
    %38 = vector.shape_cast %37 : vector<1x64x32xbf16> to vector<64x32xbf16>
    %cst_47 = arith.constant dense<0.000000e+00> : vector<64x1xf32>
    %39 = tpu.matmul %38, %36, %cst_47 {dimension_numbers = #tpu.dot_dimension_numbers<[1], [0], [0], [1], [0, 0, 1, 1], [], []>} : vector<64x32xbf16>, vector<32x1xbf16>, vector<64x1xf32> -> vector<64x1xf32>
    %40 = arith.addf %34, %39 : vector<64x1xf32>
    %c0_48 = arith.constant 0 : index
    %c1_49 = arith.constant 1 : index
    %c0_50 = arith.constant 0 : index
    %c2_51 = arith.constant 2 : index
    %41 = vector.load %arg3[%c0_48, %c1_49, %c0_50, %c2_51] : memref<1x4x32x4xbf16, #tpu.memory_space<vmem>>, vector<1x1x32x1xbf16>
    %42 = vector.shape_cast %41 : vector<1x1x32x1xbf16> to vector<32x1xbf16>
    %c7 = arith.constant 7 : index
    %c0_52 = arith.constant 0 : index
    %c0_53 = arith.constant 0 : index
    %43 = vector.load %arg1[%c7, %c0_52, %c0_53] : memref<9x64x32xbf16, #tpu.memory_space<vmem>>, vector<1x64x32xbf16>
    %44 = vector.shape_cast %43 : vector<1x64x32xbf16> to vector<64x32xbf16>
    %cst_54 = arith.constant dense<0.000000e+00> : vector<64x1xf32>
    %45 = tpu.matmul %44, %42, %cst_54 {dimension_numbers = #tpu.dot_dimension_numbers<[1], [0], [0], [1], [0, 0, 1, 1], [], []>} : vector<64x32xbf16>, vector<32x1xbf16>, vector<64x1xf32> -> vector<64x1xf32>
    %46 = arith.addf %40, %45 : vector<64x1xf32>
    %c0_55 = arith.constant 0 : index
    %c0_56 = arith.constant 0 : index
    %c0_57 = arith.constant 0 : index
    %c3_58 = arith.constant 3 : index
    %47 = vector.load %arg3[%c0_55, %c0_56, %c0_57, %c3_58] : memref<1x4x32x4xbf16, #tpu.memory_space<vmem>>, vector<1x1x32x1xbf16>
    %48 = vector.shape_cast %47 : vector<1x1x32x1xbf16> to vector<32x1xbf16>
    %c8 = arith.constant 8 : index
    %c0_59 = arith.constant 0 : index
    %c0_60 = arith.constant 0 : index
    %49 = vector.load %arg1[%c8, %c0_59, %c0_60] : memref<9x64x32xbf16, #tpu.memory_space<vmem>>, vector<1x64x32xbf16>
    %50 = vector.shape_cast %49 : vector<1x64x32xbf16> to vector<64x32xbf16>
    %cst_61 = arith.constant dense<0.000000e+00> : vector<64x1xf32>
    %51 = tpu.matmul %50, %48, %cst_61 {dimension_numbers = #tpu.dot_dimension_numbers<[1], [0], [0], [1], [0, 0, 1, 1], [], []>} : vector<64x32xbf16>, vector<32x1xbf16>, vector<64x1xf32> -> vector<64x1xf32>
    %52 = arith.addf %46, %51 : vector<64x1xf32>
    %c0_62 = arith.constant 0 : index
    %c0_63 = arith.constant 0 : index
    %53 = vector.load %arg2[%c0_62, %c0_63] : memref<64x1xf32, #tpu.memory_space<vmem>>, vector<64x1xf32>
    %54 = arith.addf %52, %53 : vector<64x1xf32>
    %cst_64 = arith.constant 0.000000e+00 : f32
    %55 = vector.broadcast %cst_64 : f32 to vector<64x1xf32>
    %56 = arith.maximumf %54, %55 : vector<64x1xf32>
    %57 = arith.truncf %56 : vector<64x1xf32> to vector<64x1xbf16>
    %c0_65 = arith.constant 0 : index
    %c0_66 = arith.constant 0 : index
    %c0_67 = arith.constant 0 : index
    %58 = vector.load %arg4[%c0_65, %c0_66, %c0_67] : memref<1x64x1xbf16, #tpu.memory_space<vmem>>, vector<1x64x1xbf16>
    %59 = vector.shape_cast %58 : vector<1x64x1xbf16> to vector<64x1xbf16>
    %60 = vector.shape_cast %57 : vector<64x1xbf16> to vector<1x64x1xbf16>
    tpu.vector_store %arg4[%c0_65, %c0_66, %c0_67], %60 {strides = array<i32>} : memref<1x64x1xbf16, #tpu.memory_space<vmem>>, vector<1x64x1xbf16>,
    return
  }
  func.func @transform_0(%arg0: i32) -> (i32, i32, i32) {
    %c0_i32 = arith.constant 0 : i32
    %c0_i32_0 = arith.constant 0 : i32
    %c0_i32_1 = arith.constant 0 : i32
    %c0_i32_2 = arith.constant 0 : i32
    return %c0_i32, %c0_i32_0, %c0_i32_1 : i32, i32, i32
  }
  func.func @transform_1(%arg0: i32) -> (i32, i32) {
    %c0_i32 = arith.constant 0 : i32
    %c0_i32_0 = arith.constant 0 : i32
    %c0_i32_1 = arith.constant 0 : i32
    return %c0_i32, %c0_i32_0 : i32, i32
  }
  func.func @transform_2(%arg0: i32) -> (i32, i32, i32, i32) {
    %c0_i32 = arith.constant 0 : i32
    %c0_i32_0 = arith.constant 0 : i32
    %c0_i32_1 = arith.constant 0 : i32
    %c0_i32_2 = arith.constant 0 : i32
    return %arg0, %c0_i32, %c0_i32_0, %c0_i32_1 : i32, i32, i32, i32
  }
  func.func @transform_3(%arg0: i32) -> (i32, i32, i32) {
    %c0_i32 = arith.constant 0 : i32
    %c0_i32_0 = arith.constant 0 : i32
    %c0_i32_1 = arith.constant 0 : i32
    return %arg0, %c0_i32, %c0_i32_0 : i32, i32, i32
  }
}

module attributes {stable_mosaic.version = 11 : i64} {
  func.func @_tap_gemm_kernel(%arg0: i32, %arg1: memref<9x128x64xbf16, #tpu.memory_space<vmem>>, %arg2: memref<128x1xf32, #tpu.memory_space<vmem>>, %arg3: memref<1x1x64x9xbf16, #tpu.memory_space<vmem>>, %arg4: memref<1x128x1xbf16, #tpu.memory_space<vmem>>) attributes {dimension_semantics = [#tpu.dimension_semantics<parallel>], iteration_bounds = array<i64: 2>, scalar_prefetch = 0 : i64, scratch_operands = 0 : i64, tpu.core_type = #tpu.core_type<tc>, window_params = [{pipeline_mode = #tpu.pipeline_mode<synchronous>, transform_indices = @transform_0, window_bounds = array<i64: 9, 128, 64>}, {pipeline_mode = #tpu.pipeline_mode<synchronous>, transform_indices = @transform_1, window_bounds = array<i64: 128, 1>}, {transform_indices = @transform_2, window_bounds = array<i64: 1, 1, 64, 9>}, {transform_indices = @transform_3, window_bounds = array<i64: 1, 128, 1>}]} {
    %c0 = arith.constant 0 : index
    %c0_0 = arith.constant 0 : index
    %c0_1 = arith.constant 0 : index
    %c0_2 = arith.constant 0 : index
    %0 = vector.load %arg3[%c0, %c0_0, %c0_1, %c0_2] : memref<1x1x64x9xbf16, #tpu.memory_space<vmem>>, vector<1x1x64x1xbf16>
    %1 = vector.shape_cast %0 : vector<1x1x64x1xbf16> to vector<64x1xbf16>
    %c0_3 = arith.constant 0 : index
    %c0_4 = arith.constant 0 : index
    %c0_5 = arith.constant 0 : index
    %2 = vector.load %arg1[%c0_3, %c0_4, %c0_5] : memref<9x128x64xbf16, #tpu.memory_space<vmem>>, vector<1x128x64xbf16>
    %3 = vector.shape_cast %2 : vector<1x128x64xbf16> to vector<128x64xbf16>
    %cst = arith.constant dense<0.000000e+00> : vector<128x1xf32>
    %4 = tpu.matmul %3, %1, %cst {dimension_numbers = #tpu.dot_dimension_numbers<[1], [0], [0], [1], [0, 0, 1, 1], [], []>} : vector<128x64xbf16>, vector<64x1xbf16>, vector<128x1xf32> -> vector<128x1xf32>
    %c0_6 = arith.constant 0 : index
    %c0_7 = arith.constant 0 : index
    %c0_8 = arith.constant 0 : index
    %c1 = arith.constant 1 : index
    %5 = vector.load %arg3[%c0_6, %c0_7, %c0_8, %c1] : memref<1x1x64x9xbf16, #tpu.memory_space<vmem>>, vector<1x1x64x1xbf16>
    %6 = vector.shape_cast %5 : vector<1x1x64x1xbf16> to vector<64x1xbf16>
    %c1_9 = arith.constant 1 : index
    %c0_10 = arith.constant 0 : index
    %c0_11 = arith.constant 0 : index
    %7 = vector.load %arg1[%c1_9, %c0_10, %c0_11] : memref<9x128x64xbf16, #tpu.memory_space<vmem>>, vector<1x128x64xbf16>
    %8 = vector.shape_cast %7 : vector<1x128x64xbf16> to vector<128x64xbf16>
    %cst_12 = arith.constant dense<0.000000e+00> : vector<128x1xf32>
    %9 = tpu.matmul %8, %6, %cst_12 {dimension_numbers = #tpu.dot_dimension_numbers<[1], [0], [0], [1], [0, 0, 1, 1], [], []>} : vector<128x64xbf16>, vector<64x1xbf16>, vector<128x1xf32> -> vector<128x1xf32>
    %10 = arith.addf %4, %9 : vector<128x1xf32>
    %c0_13 = arith.constant 0 : index
    %c0_14 = arith.constant 0 : index
    %c0_15 = arith.constant 0 : index
    %c2 = arith.constant 2 : index
    %11 = vector.load %arg3[%c0_13, %c0_14, %c0_15, %c2] : memref<1x1x64x9xbf16, #tpu.memory_space<vmem>>, vector<1x1x64x1xbf16>
    %12 = vector.shape_cast %11 : vector<1x1x64x1xbf16> to vector<64x1xbf16>
    %c2_16 = arith.constant 2 : index
    %c0_17 = arith.constant 0 : index
    %c0_18 = arith.constant 0 : index
    %13 = vector.load %arg1[%c2_16, %c0_17, %c0_18] : memref<9x128x64xbf16, #tpu.memory_space<vmem>>, vector<1x128x64xbf16>
    %14 = vector.shape_cast %13 : vector<1x128x64xbf16> to vector<128x64xbf16>
    %cst_19 = arith.constant dense<0.000000e+00> : vector<128x1xf32>
    %15 = tpu.matmul %14, %12, %cst_19 {dimension_numbers = #tpu.dot_dimension_numbers<[1], [0], [0], [1], [0, 0, 1, 1], [], []>} : vector<128x64xbf16>, vector<64x1xbf16>, vector<128x1xf32> -> vector<128x1xf32>
    %16 = arith.addf %10, %15 : vector<128x1xf32>
    %c0_20 = arith.constant 0 : index
    %c0_21 = arith.constant 0 : index
    %c0_22 = arith.constant 0 : index
    %c3 = arith.constant 3 : index
    %17 = vector.load %arg3[%c0_20, %c0_21, %c0_22, %c3] : memref<1x1x64x9xbf16, #tpu.memory_space<vmem>>, vector<1x1x64x1xbf16>
    %18 = vector.shape_cast %17 : vector<1x1x64x1xbf16> to vector<64x1xbf16>
    %c3_23 = arith.constant 3 : index
    %c0_24 = arith.constant 0 : index
    %c0_25 = arith.constant 0 : index
    %19 = vector.load %arg1[%c3_23, %c0_24, %c0_25] : memref<9x128x64xbf16, #tpu.memory_space<vmem>>, vector<1x128x64xbf16>
    %20 = vector.shape_cast %19 : vector<1x128x64xbf16> to vector<128x64xbf16>
    %cst_26 = arith.constant dense<0.000000e+00> : vector<128x1xf32>
    %21 = tpu.matmul %20, %18, %cst_26 {dimension_numbers = #tpu.dot_dimension_numbers<[1], [0], [0], [1], [0, 0, 1, 1], [], []>} : vector<128x64xbf16>, vector<64x1xbf16>, vector<128x1xf32> -> vector<128x1xf32>
    %22 = arith.addf %16, %21 : vector<128x1xf32>
    %c0_27 = arith.constant 0 : index
    %c0_28 = arith.constant 0 : index
    %c0_29 = arith.constant 0 : index
    %c4 = arith.constant 4 : index
    %23 = vector.load %arg3[%c0_27, %c0_28, %c0_29, %c4] : memref<1x1x64x9xbf16, #tpu.memory_space<vmem>>, vector<1x1x64x1xbf16>
    %24 = vector.shape_cast %23 : vector<1x1x64x1xbf16> to vector<64x1xbf16>
    %c4_30 = arith.constant 4 : index
    %c0_31 = arith.constant 0 : index
    %c0_32 = arith.constant 0 : index
    %25 = vector.load %arg1[%c4_30, %c0_31, %c0_32] : memref<9x128x64xbf16, #tpu.memory_space<vmem>>, vector<1x128x64xbf16>
    %26 = vector.shape_cast %25 : vector<1x128x64xbf16> to vector<128x64xbf16>
    %cst_33 = arith.constant dense<0.000000e+00> : vector<128x1xf32>
    %27 = tpu.matmul %26, %24, %cst_33 {dimension_numbers = #tpu.dot_dimension_numbers<[1], [0], [0], [1], [0, 0, 1, 1], [], []>} : vector<128x64xbf16>, vector<64x1xbf16>, vector<128x1xf32> -> vector<128x1xf32>
    %28 = arith.addf %22, %27 : vector<128x1xf32>
    %c0_34 = arith.constant 0 : index
    %c0_35 = arith.constant 0 : index
    %c0_36 = arith.constant 0 : index
    %c5 = arith.constant 5 : index
    %29 = vector.load %arg3[%c0_34, %c0_35, %c0_36, %c5] : memref<1x1x64x9xbf16, #tpu.memory_space<vmem>>, vector<1x1x64x1xbf16>
    %30 = vector.shape_cast %29 : vector<1x1x64x1xbf16> to vector<64x1xbf16>
    %c5_37 = arith.constant 5 : index
    %c0_38 = arith.constant 0 : index
    %c0_39 = arith.constant 0 : index
    %31 = vector.load %arg1[%c5_37, %c0_38, %c0_39] : memref<9x128x64xbf16, #tpu.memory_space<vmem>>, vector<1x128x64xbf16>
    %32 = vector.shape_cast %31 : vector<1x128x64xbf16> to vector<128x64xbf16>
    %cst_40 = arith.constant dense<0.000000e+00> : vector<128x1xf32>
    %33 = tpu.matmul %32, %30, %cst_40 {dimension_numbers = #tpu.dot_dimension_numbers<[1], [0], [0], [1], [0, 0, 1, 1], [], []>} : vector<128x64xbf16>, vector<64x1xbf16>, vector<128x1xf32> -> vector<128x1xf32>
    %34 = arith.addf %28, %33 : vector<128x1xf32>
    %c0_41 = arith.constant 0 : index
    %c0_42 = arith.constant 0 : index
    %c0_43 = arith.constant 0 : index
    %c6 = arith.constant 6 : index
    %35 = vector.load %arg3[%c0_41, %c0_42, %c0_43, %c6] : memref<1x1x64x9xbf16, #tpu.memory_space<vmem>>, vector<1x1x64x1xbf16>
    %36 = vector.shape_cast %35 : vector<1x1x64x1xbf16> to vector<64x1xbf16>
    %c6_44 = arith.constant 6 : index
    %c0_45 = arith.constant 0 : index
    %c0_46 = arith.constant 0 : index
    %37 = vector.load %arg1[%c6_44, %c0_45, %c0_46] : memref<9x128x64xbf16, #tpu.memory_space<vmem>>, vector<1x128x64xbf16>
    %38 = vector.shape_cast %37 : vector<1x128x64xbf16> to vector<128x64xbf16>
    %cst_47 = arith.constant dense<0.000000e+00> : vector<128x1xf32>
    %39 = tpu.matmul %38, %36, %cst_47 {dimension_numbers = #tpu.dot_dimension_numbers<[1], [0], [0], [1], [0, 0, 1, 1], [], []>} : vector<128x64xbf16>, vector<64x1xbf16>, vector<128x1xf32> -> vector<128x1xf32>
    %40 = arith.addf %34, %39 : vector<128x1xf32>
    %c0_48 = arith.constant 0 : index
    %c0_49 = arith.constant 0 : index
    %c0_50 = arith.constant 0 : index
    %c7 = arith.constant 7 : index
    %41 = vector.load %arg3[%c0_48, %c0_49, %c0_50, %c7] : memref<1x1x64x9xbf16, #tpu.memory_space<vmem>>, vector<1x1x64x1xbf16>
    %42 = vector.shape_cast %41 : vector<1x1x64x1xbf16> to vector<64x1xbf16>
    %c7_51 = arith.constant 7 : index
    %c0_52 = arith.constant 0 : index
    %c0_53 = arith.constant 0 : index
    %43 = vector.load %arg1[%c7_51, %c0_52, %c0_53] : memref<9x128x64xbf16, #tpu.memory_space<vmem>>, vector<1x128x64xbf16>
    %44 = vector.shape_cast %43 : vector<1x128x64xbf16> to vector<128x64xbf16>
    %cst_54 = arith.constant dense<0.000000e+00> : vector<128x1xf32>
    %45 = tpu.matmul %44, %42, %cst_54 {dimension_numbers = #tpu.dot_dimension_numbers<[1], [0], [0], [1], [0, 0, 1, 1], [], []>} : vector<128x64xbf16>, vector<64x1xbf16>, vector<128x1xf32> -> vector<128x1xf32>
    %46 = arith.addf %40, %45 : vector<128x1xf32>
    %c0_55 = arith.constant 0 : index
    %c0_56 = arith.constant 0 : index
    %c0_57 = arith.constant 0 : index
    %c8 = arith.constant 8 : index
    %47 = vector.load %arg3[%c0_55, %c0_56, %c0_57, %c8] : memref<1x1x64x9xbf16, #tpu.memory_space<vmem>>, vector<1x1x64x1xbf16>
    %48 = vector.shape_cast %47 : vector<1x1x64x1xbf16> to vector<64x1xbf16>
    %c8_58 = arith.constant 8 : index
    %c0_59 = arith.constant 0 : index
    %c0_60 = arith.constant 0 : index
    %49 = vector.load %arg1[%c8_58, %c0_59, %c0_60] : memref<9x128x64xbf16, #tpu.memory_space<vmem>>, vector<1x128x64xbf16>
    %50 = vector.shape_cast %49 : vector<1x128x64xbf16> to vector<128x64xbf16>
    %cst_61 = arith.constant dense<0.000000e+00> : vector<128x1xf32>
    %51 = tpu.matmul %50, %48, %cst_61 {dimension_numbers = #tpu.dot_dimension_numbers<[1], [0], [0], [1], [0, 0, 1, 1], [], []>} : vector<128x64xbf16>, vector<64x1xbf16>, vector<128x1xf32> -> vector<128x1xf32>
    %52 = arith.addf %46, %51 : vector<128x1xf32>
    %c0_62 = arith.constant 0 : index
    %c0_63 = arith.constant 0 : index
    %53 = vector.load %arg2[%c0_62, %c0_63] : memref<128x1xf32, #tpu.memory_space<vmem>>, vector<128x1xf32>
    %54 = arith.addf %52, %53 : vector<128x1xf32>
    %cst_64 = arith.constant 0.000000e+00 : f32
    %55 = vector.broadcast %cst_64 : f32 to vector<128x1xf32>
    %56 = arith.maximumf %54, %55 : vector<128x1xf32>
    %57 = arith.truncf %56 : vector<128x1xf32> to vector<128x1xbf16>
    %c0_65 = arith.constant 0 : index
    %c0_66 = arith.constant 0 : index
    %c0_67 = arith.constant 0 : index
    %58 = vector.load %arg4[%c0_65, %c0_66, %c0_67] : memref<1x128x1xbf16, #tpu.memory_space<vmem>>, vector<1x128x1xbf16>
    %59 = vector.shape_cast %58 : vector<1x128x1xbf16> to vector<128x1xbf16>
    %60 = vector.shape_cast %57 : vector<128x1xbf16> to vector<1x128x1xbf16>
    tpu.vector_store %arg4[%c0_65, %c0_66, %c0_67], %60 {strides = array<i32>} : memref<1x128x1xbf16, #tpu.memory_space<vmem>>, vector<1x128x1xbf16>,
    return
  }
  func.func @transform_0(%arg0: i32) -> (i32, i32, i32) {
    %c0_i32 = arith.constant 0 : i32
    %c0_i32_0 = arith.constant 0 : i32
    %c0_i32_1 = arith.constant 0 : i32
    %c0_i32_2 = arith.constant 0 : i32
    return %c0_i32, %c0_i32_0, %c0_i32_1 : i32, i32, i32
  }
  func.func @transform_1(%arg0: i32) -> (i32, i32) {
    %c0_i32 = arith.constant 0 : i32
    %c0_i32_0 = arith.constant 0 : i32
    %c0_i32_1 = arith.constant 0 : i32
    return %c0_i32, %c0_i32_0 : i32, i32
  }
  func.func @transform_2(%arg0: i32) -> (i32, i32, i32, i32) {
    %c0_i32 = arith.constant 0 : i32
    %c0_i32_0 = arith.constant 0 : i32
    %c0_i32_1 = arith.constant 0 : i32
    %c0_i32_2 = arith.constant 0 : i32
    return %arg0, %c0_i32, %c0_i32_0, %c0_i32_1 : i32, i32, i32, i32
  }
  func.func @transform_3(%arg0: i32) -> (i32, i32, i32) {
    %c0_i32 = arith.constant 0 : i32
    %c0_i32_0 = arith.constant 0 : i32
    %c0_i32_1 = arith.constant 0 : i32
    return %arg0, %c0_i32, %c0_i32_0 : i32, i32, i32
  }
}

module attributes {stable_mosaic.version = 11 : i64} {
  func.func @_tap_gemm_kernel(%arg0: i32, %arg1: memref<9x64x32xbf16, #tpu.memory_space<vmem>>, %arg2: memref<64x1xf32, #tpu.memory_space<vmem>>, %arg3: memref<1x1x32x16xbf16, #tpu.memory_space<vmem>>, %arg4: memref<1x64x6xbf16, #tpu.memory_space<vmem>>) attributes {dimension_semantics = [#tpu.dimension_semantics<parallel>], iteration_bounds = array<i64: 2>, scalar_prefetch = 0 : i64, scratch_operands = 0 : i64, tpu.core_type = #tpu.core_type<tc>, window_params = [{pipeline_mode = #tpu.pipeline_mode<synchronous>, transform_indices = @transform_0, window_bounds = array<i64: 9, 64, 32>}, {pipeline_mode = #tpu.pipeline_mode<synchronous>, transform_indices = @transform_1, window_bounds = array<i64: 64, 1>}, {transform_indices = @transform_2, window_bounds = array<i64: 1, 1, 32, 16>}, {transform_indices = @transform_3, window_bounds = array<i64: 1, 64, 6>}]} {
    %c0 = arith.constant 0 : index
    %c0_0 = arith.constant 0 : index
    %c0_1 = arith.constant 0 : index
    %c0_2 = arith.constant 0 : index
    %0 = vector.load %arg3[%c0, %c0_0, %c0_1, %c0_2] : memref<1x1x32x16xbf16, #tpu.memory_space<vmem>>, vector<1x1x32x6xbf16>
    %1 = vector.shape_cast %0 : vector<1x1x32x6xbf16> to vector<32x6xbf16>
    %c0_3 = arith.constant 0 : index
    %c0_4 = arith.constant 0 : index
    %c0_5 = arith.constant 0 : index
    %2 = vector.load %arg1[%c0_3, %c0_4, %c0_5] : memref<9x64x32xbf16, #tpu.memory_space<vmem>>, vector<1x64x32xbf16>
    %3 = vector.shape_cast %2 : vector<1x64x32xbf16> to vector<64x32xbf16>
    %cst = arith.constant dense<0.000000e+00> : vector<64x6xf32>
    %4 = tpu.matmul %3, %1, %cst {dimension_numbers = #tpu.dot_dimension_numbers<[1], [0], [0], [1], [0, 0, 1, 1], [], []>} : vector<64x32xbf16>, vector<32x6xbf16>, vector<64x6xf32> -> vector<64x6xf32>
    %c0_6 = arith.constant 0 : index
    %c0_7 = arith.constant 0 : index
    %c0_8 = arith.constant 0 : index
    %c1 = arith.constant 1 : index
    %5 = vector.load %arg3[%c0_6, %c0_7, %c0_8, %c1] : memref<1x1x32x16xbf16, #tpu.memory_space<vmem>>, vector<1x1x32x6xbf16>
    %6 = vector.shape_cast %5 : vector<1x1x32x6xbf16> to vector<32x6xbf16>
    %c1_9 = arith.constant 1 : index
    %c0_10 = arith.constant 0 : index
    %c0_11 = arith.constant 0 : index
    %7 = vector.load %arg1[%c1_9, %c0_10, %c0_11] : memref<9x64x32xbf16, #tpu.memory_space<vmem>>, vector<1x64x32xbf16>
    %8 = vector.shape_cast %7 : vector<1x64x32xbf16> to vector<64x32xbf16>
    %cst_12 = arith.constant dense<0.000000e+00> : vector<64x6xf32>
    %9 = tpu.matmul %8, %6, %cst_12 {dimension_numbers = #tpu.dot_dimension_numbers<[1], [0], [0], [1], [0, 0, 1, 1], [], []>} : vector<64x32xbf16>, vector<32x6xbf16>, vector<64x6xf32> -> vector<64x6xf32>
    %10 = arith.addf %4, %9 : vector<64x6xf32>
    %c0_13 = arith.constant 0 : index
    %c0_14 = arith.constant 0 : index
    %c0_15 = arith.constant 0 : index
    %c2 = arith.constant 2 : index
    %11 = vector.load %arg3[%c0_13, %c0_14, %c0_15, %c2] : memref<1x1x32x16xbf16, #tpu.memory_space<vmem>>, vector<1x1x32x6xbf16>
    %12 = vector.shape_cast %11 : vector<1x1x32x6xbf16> to vector<32x6xbf16>
    %c2_16 = arith.constant 2 : index
    %c0_17 = arith.constant 0 : index
    %c0_18 = arith.constant 0 : index
    %13 = vector.load %arg1[%c2_16, %c0_17, %c0_18] : memref<9x64x32xbf16, #tpu.memory_space<vmem>>, vector<1x64x32xbf16>
    %14 = vector.shape_cast %13 : vector<1x64x32xbf16> to vector<64x32xbf16>
    %cst_19 = arith.constant dense<0.000000e+00> : vector<64x6xf32>
    %15 = tpu.matmul %14, %12, %cst_19 {dimension_numbers = #tpu.dot_dimension_numbers<[1], [0], [0], [1], [0, 0, 1, 1], [], []>} : vector<64x32xbf16>, vector<32x6xbf16>, vector<64x6xf32> -> vector<64x6xf32>
    %16 = arith.addf %10, %15 : vector<64x6xf32>
    %c0_20 = arith.constant 0 : index
    %c0_21 = arith.constant 0 : index
    %c0_22 = arith.constant 0 : index
    %c4 = arith.constant 4 : index
    %17 = vector.load %arg3[%c0_20, %c0_21, %c0_22, %c4] : memref<1x1x32x16xbf16, #tpu.memory_space<vmem>>, vector<1x1x32x6xbf16>
    %18 = vector.shape_cast %17 : vector<1x1x32x6xbf16> to vector<32x6xbf16>
    %c3 = arith.constant 3 : index
    %c0_23 = arith.constant 0 : index
    %c0_24 = arith.constant 0 : index
    %19 = vector.load %arg1[%c3, %c0_23, %c0_24] : memref<9x64x32xbf16, #tpu.memory_space<vmem>>, vector<1x64x32xbf16>
    %20 = vector.shape_cast %19 : vector<1x64x32xbf16> to vector<64x32xbf16>
    %cst_25 = arith.constant dense<0.000000e+00> : vector<64x6xf32>
    %21 = tpu.matmul %20, %18, %cst_25 {dimension_numbers = #tpu.dot_dimension_numbers<[1], [0], [0], [1], [0, 0, 1, 1], [], []>} : vector<64x32xbf16>, vector<32x6xbf16>, vector<64x6xf32> -> vector<64x6xf32>
    %22 = arith.addf %16, %21 : vector<64x6xf32>
    %c0_26 = arith.constant 0 : index
    %c0_27 = arith.constant 0 : index
    %c0_28 = arith.constant 0 : index
    %c5 = arith.constant 5 : index
    %23 = vector.load %arg3[%c0_26, %c0_27, %c0_28, %c5] : memref<1x1x32x16xbf16, #tpu.memory_space<vmem>>, vector<1x1x32x6xbf16>
    %24 = vector.shape_cast %23 : vector<1x1x32x6xbf16> to vector<32x6xbf16>
    %c4_29 = arith.constant 4 : index
    %c0_30 = arith.constant 0 : index
    %c0_31 = arith.constant 0 : index
    %25 = vector.load %arg1[%c4_29, %c0_30, %c0_31] : memref<9x64x32xbf16, #tpu.memory_space<vmem>>, vector<1x64x32xbf16>
    %26 = vector.shape_cast %25 : vector<1x64x32xbf16> to vector<64x32xbf16>
    %cst_32 = arith.constant dense<0.000000e+00> : vector<64x6xf32>
    %27 = tpu.matmul %26, %24, %cst_32 {dimension_numbers = #tpu.dot_dimension_numbers<[1], [0], [0], [1], [0, 0, 1, 1], [], []>} : vector<64x32xbf16>, vector<32x6xbf16>, vector<64x6xf32> -> vector<64x6xf32>
    %28 = arith.addf %22, %27 : vector<64x6xf32>
    %c0_33 = arith.constant 0 : index
    %c0_34 = arith.constant 0 : index
    %c0_35 = arith.constant 0 : index
    %c6 = arith.constant 6 : index
    %29 = vector.load %arg3[%c0_33, %c0_34, %c0_35, %c6] : memref<1x1x32x16xbf16, #tpu.memory_space<vmem>>, vector<1x1x32x6xbf16>
    %30 = vector.shape_cast %29 : vector<1x1x32x6xbf16> to vector<32x6xbf16>
    %c5_36 = arith.constant 5 : index
    %c0_37 = arith.constant 0 : index
    %c0_38 = arith.constant 0 : index
    %31 = vector.load %arg1[%c5_36, %c0_37, %c0_38] : memref<9x64x32xbf16, #tpu.memory_space<vmem>>, vector<1x64x32xbf16>
    %32 = vector.shape_cast %31 : vector<1x64x32xbf16> to vector<64x32xbf16>
    %cst_39 = arith.constant dense<0.000000e+00> : vector<64x6xf32>
    %33 = tpu.matmul %32, %30, %cst_39 {dimension_numbers = #tpu.dot_dimension_numbers<[1], [0], [0], [1], [0, 0, 1, 1], [], []>} : vector<64x32xbf16>, vector<32x6xbf16>, vector<64x6xf32> -> vector<64x6xf32>
    %34 = arith.addf %28, %33 : vector<64x6xf32>
    %c0_40 = arith.constant 0 : index
    %c0_41 = arith.constant 0 : index
    %c0_42 = arith.constant 0 : index
    %c8 = arith.constant 8 : index
    %35 = vector.load %arg3[%c0_40, %c0_41, %c0_42, %c8] : memref<1x1x32x16xbf16, #tpu.memory_space<vmem>>, vector<1x1x32x6xbf16>
    %36 = vector.shape_cast %35 : vector<1x1x32x6xbf16> to vector<32x6xbf16>
    %c6_43 = arith.constant 6 : index
    %c0_44 = arith.constant 0 : index
    %c0_45 = arith.constant 0 : index
    %37 = vector.load %arg1[%c6_43, %c0_44, %c0_45] : memref<9x64x32xbf16, #tpu.memory_space<vmem>>, vector<1x64x32xbf16>
    %38 = vector.shape_cast %37 : vector<1x64x32xbf16> to vector<64x32xbf16>
    %cst_46 = arith.constant dense<0.000000e+00> : vector<64x6xf32>
    %39 = tpu.matmul %38, %36, %cst_46 {dimension_numbers = #tpu.dot_dimension_numbers<[1], [0], [0], [1], [0, 0, 1, 1], [], []>} : vector<64x32xbf16>, vector<32x6xbf16>, vector<64x6xf32> -> vector<64x6xf32>
    %40 = arith.addf %34, %39 : vector<64x6xf32>
    %c0_47 = arith.constant 0 : index
    %c0_48 = arith.constant 0 : index
    %c0_49 = arith.constant 0 : index
    %c9 = arith.constant 9 : index
    %41 = vector.load %arg3[%c0_47, %c0_48, %c0_49, %c9] : memref<1x1x32x16xbf16, #tpu.memory_space<vmem>>, vector<1x1x32x6xbf16>
    %42 = vector.shape_cast %41 : vector<1x1x32x6xbf16> to vector<32x6xbf16>
    %c7 = arith.constant 7 : index
    %c0_50 = arith.constant 0 : index
    %c0_51 = arith.constant 0 : index
    %43 = vector.load %arg1[%c7, %c0_50, %c0_51] : memref<9x64x32xbf16, #tpu.memory_space<vmem>>, vector<1x64x32xbf16>
    %44 = vector.shape_cast %43 : vector<1x64x32xbf16> to vector<64x32xbf16>
    %cst_52 = arith.constant dense<0.000000e+00> : vector<64x6xf32>
    %45 = tpu.matmul %44, %42, %cst_52 {dimension_numbers = #tpu.dot_dimension_numbers<[1], [0], [0], [1], [0, 0, 1, 1], [], []>} : vector<64x32xbf16>, vector<32x6xbf16>, vector<64x6xf32> -> vector<64x6xf32>
    %46 = arith.addf %40, %45 : vector<64x6xf32>
    %c0_53 = arith.constant 0 : index
    %c0_54 = arith.constant 0 : index
    %c0_55 = arith.constant 0 : index
    %c10 = arith.constant 10 : index
    %47 = vector.load %arg3[%c0_53, %c0_54, %c0_55, %c10] : memref<1x1x32x16xbf16, #tpu.memory_space<vmem>>, vector<1x1x32x6xbf16>
    %48 = vector.shape_cast %47 : vector<1x1x32x6xbf16> to vector<32x6xbf16>
    %c8_56 = arith.constant 8 : index
    %c0_57 = arith.constant 0 : index
    %c0_58 = arith.constant 0 : index
    %49 = vector.load %arg1[%c8_56, %c0_57, %c0_58] : memref<9x64x32xbf16, #tpu.memory_space<vmem>>, vector<1x64x32xbf16>
    %50 = vector.shape_cast %49 : vector<1x64x32xbf16> to vector<64x32xbf16>
    %cst_59 = arith.constant dense<0.000000e+00> : vector<64x6xf32>
    %51 = tpu.matmul %50, %48, %cst_59 {dimension_numbers = #tpu.dot_dimension_numbers<[1], [0], [0], [1], [0, 0, 1, 1], [], []>} : vector<64x32xbf16>, vector<32x6xbf16>, vector<64x6xf32> -> vector<64x6xf32>
    %52 = arith.addf %46, %51 : vector<64x6xf32>
    %c0_60 = arith.constant 0 : index
    %c0_61 = arith.constant 0 : index
    %53 = vector.load %arg2[%c0_60, %c0_61] : memref<64x1xf32, #tpu.memory_space<vmem>>, vector<64x1xf32>
    %54 = vector.broadcast %53 : vector<64x1xf32> to vector<64x6xf32>
    %55 = arith.addf %52, %54 : vector<64x6xf32>
    %cst_62 = arith.constant 0.000000e+00 : f32
    %56 = vector.broadcast %cst_62 : f32 to vector<64x6xf32>
    %57 = arith.maximumf %55, %56 : vector<64x6xf32>
    %58 = arith.truncf %57 : vector<64x6xf32> to vector<64x6xbf16>
    %c0_63 = arith.constant 0 : index
    %c0_64 = arith.constant 0 : index
    %c0_65 = arith.constant 0 : index
    %59 = vector.load %arg4[%c0_63, %c0_64, %c0_65] : memref<1x64x6xbf16, #tpu.memory_space<vmem>>, vector<1x64x6xbf16>
    %60 = vector.shape_cast %59 : vector<1x64x6xbf16> to vector<64x6xbf16>
    %61 = vector.shape_cast %58 : vector<64x6xbf16> to vector<1x64x6xbf16>
    tpu.vector_store %arg4[%c0_63, %c0_64, %c0_65], %61 {strides = array<i32>} : memref<1x64x6xbf16, #tpu.memory_space<vmem>>, vector<1x64x6xbf16>,
    return
  }
  func.func @transform_0(%arg0: i32) -> (i32, i32, i32) {
    %c0_i32 = arith.constant 0 : i32
    %c0_i32_0 = arith.constant 0 : i32
    %c0_i32_1 = arith.constant 0 : i32
    %c0_i32_2 = arith.constant 0 : i32
    return %c0_i32, %c0_i32_0, %c0_i32_1 : i32, i32, i32
  }
  func.func @transform_1(%arg0: i32) -> (i32, i32) {
    %c0_i32 = arith.constant 0 : i32
    %c0_i32_0 = arith.constant 0 : i32
    %c0_i32_1 = arith.constant 0 : i32
    return %c0_i32, %c0_i32_0 : i32, i32
  }
  func.func @transform_2(%arg0: i32) -> (i32, i32, i32, i32) {
    %c0_i32 = arith.constant 0 : i32
    %c0_i32_0 = arith.constant 0 : i32
    %c0_i32_1 = arith.constant 0 : i32
    %c0_i32_2 = arith.constant 0 : i32
    return %arg0, %c0_i32, %c0_i32_0, %c0_i32_1 : i32, i32, i32, i32
  }
  func.func @transform_3(%arg0: i32) -> (i32, i32, i32) {
    %c0_i32 = arith.constant 0 : i32
    %c0_i32_0 = arith.constant 0 : i32
    %c0_i32_1 = arith.constant 0 : i32
    return %arg0, %c0_i32, %c0_i32_0 : i32, i32, i32
  }
}

module attributes {stable_mosaic.version = 11 : i64} {
  func.func @_tap_gemm_kernel(%arg0: i32, %arg1: memref<9x32x16xbf16, #tpu.memory_space<vmem>>, %arg2: memref<32x1xf32, #tpu.memory_space<vmem>>, %arg3: memref<1x1x16x36xbf16, #tpu.memory_space<vmem>>, %arg4: memref<1x32x22xbf16, #tpu.memory_space<vmem>>) attributes {dimension_semantics = [#tpu.dimension_semantics<parallel>], iteration_bounds = array<i64: 2>, scalar_prefetch = 0 : i64, scratch_operands = 0 : i64, tpu.core_type = #tpu.core_type<tc>, window_params = [{pipeline_mode = #tpu.pipeline_mode<synchronous>, transform_indices = @transform_0, window_bounds = array<i64: 9, 32, 16>}, {pipeline_mode = #tpu.pipeline_mode<synchronous>, transform_indices = @transform_1, window_bounds = array<i64: 32, 1>}, {transform_indices = @transform_2, window_bounds = array<i64: 1, 1, 16, 36>}, {transform_indices = @transform_3, window_bounds = array<i64: 1, 32, 22>}]} {
    %c0 = arith.constant 0 : index
    %c0_0 = arith.constant 0 : index
    %c0_1 = arith.constant 0 : index
    %c0_2 = arith.constant 0 : index
    %0 = vector.load %arg3[%c0, %c0_0, %c0_1, %c0_2] : memref<1x1x16x36xbf16, #tpu.memory_space<vmem>>, vector<1x1x16x22xbf16>
    %1 = vector.shape_cast %0 : vector<1x1x16x22xbf16> to vector<16x22xbf16>
    %c0_3 = arith.constant 0 : index
    %c0_4 = arith.constant 0 : index
    %c0_5 = arith.constant 0 : index
    %2 = vector.load %arg1[%c0_3, %c0_4, %c0_5] : memref<9x32x16xbf16, #tpu.memory_space<vmem>>, vector<1x32x16xbf16>
    %3 = vector.shape_cast %2 : vector<1x32x16xbf16> to vector<32x16xbf16>
    %cst = arith.constant dense<0.000000e+00> : vector<32x22xf32>
    %4 = tpu.matmul %3, %1, %cst {dimension_numbers = #tpu.dot_dimension_numbers<[1], [0], [0], [1], [0, 0, 1, 1], [], []>} : vector<32x16xbf16>, vector<16x22xbf16>, vector<32x22xf32> -> vector<32x22xf32>
    %c0_6 = arith.constant 0 : index
    %c0_7 = arith.constant 0 : index
    %c0_8 = arith.constant 0 : index
    %c1 = arith.constant 1 : index
    %5 = vector.load %arg3[%c0_6, %c0_7, %c0_8, %c1] : memref<1x1x16x36xbf16, #tpu.memory_space<vmem>>, vector<1x1x16x22xbf16>
    %6 = vector.shape_cast %5 : vector<1x1x16x22xbf16> to vector<16x22xbf16>
    %c1_9 = arith.constant 1 : index
    %c0_10 = arith.constant 0 : index
    %c0_11 = arith.constant 0 : index
    %7 = vector.load %arg1[%c1_9, %c0_10, %c0_11] : memref<9x32x16xbf16, #tpu.memory_space<vmem>>, vector<1x32x16xbf16>
    %8 = vector.shape_cast %7 : vector<1x32x16xbf16> to vector<32x16xbf16>
    %cst_12 = arith.constant dense<0.000000e+00> : vector<32x22xf32>
    %9 = tpu.matmul %8, %6, %cst_12 {dimension_numbers = #tpu.dot_dimension_numbers<[1], [0], [0], [1], [0, 0, 1, 1], [], []>} : vector<32x16xbf16>, vector<16x22xbf16>, vector<32x22xf32> -> vector<32x22xf32>
    %10 = arith.addf %4, %9 : vector<32x22xf32>
    %c0_13 = arith.constant 0 : index
    %c0_14 = arith.constant 0 : index
    %c0_15 = arith.constant 0 : index
    %c2 = arith.constant 2 : index
    %11 = vector.load %arg3[%c0_13, %c0_14, %c0_15, %c2] : memref<1x1x16x36xbf16, #tpu.memory_space<vmem>>, vector<1x1x16x22xbf16>
    %12 = vector.shape_cast %11 : vector<1x1x16x22xbf16> to vector<16x22xbf16>
    %c2_16 = arith.constant 2 : index
    %c0_17 = arith.constant 0 : index
    %c0_18 = arith.constant 0 : index
    %13 = vector.load %arg1[%c2_16, %c0_17, %c0_18] : memref<9x32x16xbf16, #tpu.memory_space<vmem>>, vector<1x32x16xbf16>
    %14 = vector.shape_cast %13 : vector<1x32x16xbf16> to vector<32x16xbf16>
    %cst_19 = arith.constant dense<0.000000e+00> : vector<32x22xf32>
    %15 = tpu.matmul %14, %12, %cst_19 {dimension_numbers = #tpu.dot_dimension_numbers<[1], [0], [0], [1], [0, 0, 1, 1], [], []>} : vector<32x16xbf16>, vector<16x22xbf16>, vector<32x22xf32> -> vector<32x22xf32>
    %16 = arith.addf %10, %15 : vector<32x22xf32>
    %c0_20 = arith.constant 0 : index
    %c0_21 = arith.constant 0 : index
    %c0_22 = arith.constant 0 : index
    %c6 = arith.constant 6 : index
    %17 = vector.load %arg3[%c0_20, %c0_21, %c0_22, %c6] : memref<1x1x16x36xbf16, #tpu.memory_space<vmem>>, vector<1x1x16x22xbf16>
    %18 = vector.shape_cast %17 : vector<1x1x16x22xbf16> to vector<16x22xbf16>
    %c3 = arith.constant 3 : index
    %c0_23 = arith.constant 0 : index
    %c0_24 = arith.constant 0 : index
    %19 = vector.load %arg1[%c3, %c0_23, %c0_24] : memref<9x32x16xbf16, #tpu.memory_space<vmem>>, vector<1x32x16xbf16>
    %20 = vector.shape_cast %19 : vector<1x32x16xbf16> to vector<32x16xbf16>
    %cst_25 = arith.constant dense<0.000000e+00> : vector<32x22xf32>
    %21 = tpu.matmul %20, %18, %cst_25 {dimension_numbers = #tpu.dot_dimension_numbers<[1], [0], [0], [1], [0, 0, 1, 1], [], []>} : vector<32x16xbf16>, vector<16x22xbf16>, vector<32x22xf32> -> vector<32x22xf32>
    %22 = arith.addf %16, %21 : vector<32x22xf32>
    %c0_26 = arith.constant 0 : index
    %c0_27 = arith.constant 0 : index
    %c0_28 = arith.constant 0 : index
    %c7 = arith.constant 7 : index
    %23 = vector.load %arg3[%c0_26, %c0_27, %c0_28, %c7] : memref<1x1x16x36xbf16, #tpu.memory_space<vmem>>, vector<1x1x16x22xbf16>
    %24 = vector.shape_cast %23 : vector<1x1x16x22xbf16> to vector<16x22xbf16>
    %c4 = arith.constant 4 : index
    %c0_29 = arith.constant 0 : index
    %c0_30 = arith.constant 0 : index
    %25 = vector.load %arg1[%c4, %c0_29, %c0_30] : memref<9x32x16xbf16, #tpu.memory_space<vmem>>, vector<1x32x16xbf16>
    %26 = vector.shape_cast %25 : vector<1x32x16xbf16> to vector<32x16xbf16>
    %cst_31 = arith.constant dense<0.000000e+00> : vector<32x22xf32>
    %27 = tpu.matmul %26, %24, %cst_31 {dimension_numbers = #tpu.dot_dimension_numbers<[1], [0], [0], [1], [0, 0, 1, 1], [], []>} : vector<32x16xbf16>, vector<16x22xbf16>, vector<32x22xf32> -> vector<32x22xf32>
    %28 = arith.addf %22, %27 : vector<32x22xf32>
    %c0_32 = arith.constant 0 : index
    %c0_33 = arith.constant 0 : index
    %c0_34 = arith.constant 0 : index
    %c8 = arith.constant 8 : index
    %29 = vector.load %arg3[%c0_32, %c0_33, %c0_34, %c8] : memref<1x1x16x36xbf16, #tpu.memory_space<vmem>>, vector<1x1x16x22xbf16>
    %30 = vector.shape_cast %29 : vector<1x1x16x22xbf16> to vector<16x22xbf16>
    %c5 = arith.constant 5 : index
    %c0_35 = arith.constant 0 : index
    %c0_36 = arith.constant 0 : index
    %31 = vector.load %arg1[%c5, %c0_35, %c0_36] : memref<9x32x16xbf16, #tpu.memory_space<vmem>>, vector<1x32x16xbf16>
    %32 = vector.shape_cast %31 : vector<1x32x16xbf16> to vector<32x16xbf16>
    %cst_37 = arith.constant dense<0.000000e+00> : vector<32x22xf32>
    %33 = tpu.matmul %32, %30, %cst_37 {dimension_numbers = #tpu.dot_dimension_numbers<[1], [0], [0], [1], [0, 0, 1, 1], [], []>} : vector<32x16xbf16>, vector<16x22xbf16>, vector<32x22xf32> -> vector<32x22xf32>
    %34 = arith.addf %28, %33 : vector<32x22xf32>
    %c0_38 = arith.constant 0 : index
    %c0_39 = arith.constant 0 : index
    %c0_40 = arith.constant 0 : index
    %c12 = arith.constant 12 : index
    %35 = vector.load %arg3[%c0_38, %c0_39, %c0_40, %c12] : memref<1x1x16x36xbf16, #tpu.memory_space<vmem>>, vector<1x1x16x22xbf16>
    %36 = vector.shape_cast %35 : vector<1x1x16x22xbf16> to vector<16x22xbf16>
    %c6_41 = arith.constant 6 : index
    %c0_42 = arith.constant 0 : index
    %c0_43 = arith.constant 0 : index
    %37 = vector.load %arg1[%c6_41, %c0_42, %c0_43] : memref<9x32x16xbf16, #tpu.memory_space<vmem>>, vector<1x32x16xbf16>
    %38 = vector.shape_cast %37 : vector<1x32x16xbf16> to vector<32x16xbf16>
    %cst_44 = arith.constant dense<0.000000e+00> : vector<32x22xf32>
    %39 = tpu.matmul %38, %36, %cst_44 {dimension_numbers = #tpu.dot_dimension_numbers<[1], [0], [0], [1], [0, 0, 1, 1], [], []>} : vector<32x16xbf16>, vector<16x22xbf16>, vector<32x22xf32> -> vector<32x22xf32>
    %40 = arith.addf %34, %39 : vector<32x22xf32>
    %c0_45 = arith.constant 0 : index
    %c0_46 = arith.constant 0 : index
    %c0_47 = arith.constant 0 : index
    %c13 = arith.constant 13 : index
    %41 = vector.load %arg3[%c0_45, %c0_46, %c0_47, %c13] : memref<1x1x16x36xbf16, #tpu.memory_space<vmem>>, vector<1x1x16x22xbf16>
    %42 = vector.shape_cast %41 : vector<1x1x16x22xbf16> to vector<16x22xbf16>
    %c7_48 = arith.constant 7 : index
    %c0_49 = arith.constant 0 : index
    %c0_50 = arith.constant 0 : index
    %43 = vector.load %arg1[%c7_48, %c0_49, %c0_50] : memref<9x32x16xbf16, #tpu.memory_space<vmem>>, vector<1x32x16xbf16>
    %44 = vector.shape_cast %43 : vector<1x32x16xbf16> to vector<32x16xbf16>
    %cst_51 = arith.constant dense<0.000000e+00> : vector<32x22xf32>
    %45 = tpu.matmul %44, %42, %cst_51 {dimension_numbers = #tpu.dot_dimension_numbers<[1], [0], [0], [1], [0, 0, 1, 1], [], []>} : vector<32x16xbf16>, vector<16x22xbf16>, vector<32x22xf32> -> vector<32x22xf32>
    %46 = arith.addf %40, %45 : vector<32x22xf32>
    %c0_52 = arith.constant 0 : index
    %c0_53 = arith.constant 0 : index
    %c0_54 = arith.constant 0 : index
    %c14 = arith.constant 14 : index
    %47 = vector.load %arg3[%c0_52, %c0_53, %c0_54, %c14] : memref<1x1x16x36xbf16, #tpu.memory_space<vmem>>, vector<1x1x16x22xbf16>
    %48 = vector.shape_cast %47 : vector<1x1x16x22xbf16> to vector<16x22xbf16>
    %c8_55 = arith.constant 8 : index
    %c0_56 = arith.constant 0 : index
    %c0_57 = arith.constant 0 : index
    %49 = vector.load %arg1[%c8_55, %c0_56, %c0_57] : memref<9x32x16xbf16, #tpu.memory_space<vmem>>, vector<1x32x16xbf16>
    %50 = vector.shape_cast %49 : vector<1x32x16xbf16> to vector<32x16xbf16>
    %cst_58 = arith.constant dense<0.000000e+00> : vector<32x22xf32>
    %51 = tpu.matmul %50, %48, %cst_58 {dimension_numbers = #tpu.dot_dimension_numbers<[1], [0], [0], [1], [0, 0, 1, 1], [], []>} : vector<32x16xbf16>, vector<16x22xbf16>, vector<32x22xf32> -> vector<32x22xf32>
    %52 = arith.addf %46, %51 : vector<32x22xf32>
    %c0_59 = arith.constant 0 : index
    %c0_60 = arith.constant 0 : index
    %53 = vector.load %arg2[%c0_59, %c0_60] : memref<32x1xf32, #tpu.memory_space<vmem>>, vector<32x1xf32>
    %54 = vector.broadcast %53 : vector<32x1xf32> to vector<32x22xf32>
    %55 = arith.addf %52, %54 : vector<32x22xf32>
    %cst_61 = arith.constant 0.000000e+00 : f32
    %56 = vector.broadcast %cst_61 : f32 to vector<32x22xf32>
    %57 = arith.maximumf %55, %56 : vector<32x22xf32>
    %58 = arith.truncf %57 : vector<32x22xf32> to vector<32x22xbf16>
    %c0_62 = arith.constant 0 : index
    %c0_63 = arith.constant 0 : index
    %c0_64 = arith.constant 0 : index
    %59 = vector.load %arg4[%c0_62, %c0_63, %c0_64] : memref<1x32x22xbf16, #tpu.memory_space<vmem>>, vector<1x32x22xbf16>
    %60 = vector.shape_cast %59 : vector<1x32x22xbf16> to vector<32x22xbf16>
    %61 = vector.shape_cast %58 : vector<32x22xbf16> to vector<1x32x22xbf16>
    tpu.vector_store %arg4[%c0_62, %c0_63, %c0_64], %61 {strides = array<i32>} : memref<1x32x22xbf16, #tpu.memory_space<vmem>>, vector<1x32x22xbf16>,
    return
  }
  func.func @transform_0(%arg0: i32) -> (i32, i32, i32) {
    %c0_i32 = arith.constant 0 : i32
    %c0_i32_0 = arith.constant 0 : i32
    %c0_i32_1 = arith.constant 0 : i32
    %c0_i32_2 = arith.constant 0 : i32
    return %c0_i32, %c0_i32_0, %c0_i32_1 : i32, i32, i32
  }
  func.func @transform_1(%arg0: i32) -> (i32, i32) {
    %c0_i32 = arith.constant 0 : i32
    %c0_i32_0 = arith.constant 0 : i32
    %c0_i32_1 = arith.constant 0 : i32
    return %c0_i32, %c0_i32_0 : i32, i32
  }
  func.func @transform_2(%arg0: i32) -> (i32, i32, i32, i32) {
    %c0_i32 = arith.constant 0 : i32
    %c0_i32_0 = arith.constant 0 : i32
    %c0_i32_1 = arith.constant 0 : i32
    %c0_i32_2 = arith.constant 0 : i32
    return %arg0, %c0_i32, %c0_i32_0, %c0_i32_1 : i32, i32, i32, i32
  }
  func.func @transform_3(%arg0: i32) -> (i32, i32, i32) {
    %c0_i32 = arith.constant 0 : i32
    %c0_i32_0 = arith.constant 0 : i32
    %c0_i32_1 = arith.constant 0 : i32
    return %arg0, %c0_i32, %c0_i32_0 : i32, i32, i32
  }
}

module attributes {stable_mosaic.version = 11 : i64} {
  func.func @_tap_gemm_kernel(%arg0: i32, %arg1: memref<9x8x8xbf16, #tpu.memory_space<vmem>>, %arg2: memref<8x1xf32, #tpu.memory_space<vmem>>, %arg3: memref<1x1x8x100xbf16, #tpu.memory_space<vmem>>, %arg4: memref<1x8x78xbf16, #tpu.memory_space<vmem>>) attributes {dimension_semantics = [#tpu.dimension_semantics<parallel>], iteration_bounds = array<i64: 2>, scalar_prefetch = 0 : i64, scratch_operands = 0 : i64, tpu.core_type = #tpu.core_type<tc>, window_params = [{pipeline_mode = #tpu.pipeline_mode<synchronous>, transform_indices = @transform_0, window_bounds = array<i64: 9, 8, 8>}, {pipeline_mode = #tpu.pipeline_mode<synchronous>, transform_indices = @transform_1, window_bounds = array<i64: 8, 1>}, {transform_indices = @transform_2, window_bounds = array<i64: 1, 1, 8, 100>}, {transform_indices = @transform_3, window_bounds = array<i64: 1, 8, 78>}]} {
    %c0 = arith.constant 0 : index
    %c0_0 = arith.constant 0 : index
    %c0_1 = arith.constant 0 : index
    %c0_2 = arith.constant 0 : index
    %0 = vector.load %arg3[%c0, %c0_0, %c0_1, %c0_2] : memref<1x1x8x100xbf16, #tpu.memory_space<vmem>>, vector<1x1x8x78xbf16>
    %1 = vector.shape_cast %0 : vector<1x1x8x78xbf16> to vector<8x78xbf16>
    %c0_3 = arith.constant 0 : index
    %c0_4 = arith.constant 0 : index
    %c0_5 = arith.constant 0 : index
    %2 = vector.load %arg1[%c0_3, %c0_4, %c0_5] : memref<9x8x8xbf16, #tpu.memory_space<vmem>>, vector<1x8x8xbf16>
    %3 = vector.shape_cast %2 : vector<1x8x8xbf16> to vector<8x8xbf16>
    %cst = arith.constant dense<0.000000e+00> : vector<8x78xf32>
    %4 = tpu.matmul %3, %1, %cst {dimension_numbers = #tpu.dot_dimension_numbers<[1], [0], [0], [1], [0, 0, 1, 1], [], []>} : vector<8x8xbf16>, vector<8x78xbf16>, vector<8x78xf32> -> vector<8x78xf32>
    %c0_6 = arith.constant 0 : index
    %c0_7 = arith.constant 0 : index
    %c0_8 = arith.constant 0 : index
    %c1 = arith.constant 1 : index
    %5 = vector.load %arg3[%c0_6, %c0_7, %c0_8, %c1] : memref<1x1x8x100xbf16, #tpu.memory_space<vmem>>, vector<1x1x8x78xbf16>
    %6 = vector.shape_cast %5 : vector<1x1x8x78xbf16> to vector<8x78xbf16>
    %c1_9 = arith.constant 1 : index
    %c0_10 = arith.constant 0 : index
    %c0_11 = arith.constant 0 : index
    %7 = vector.load %arg1[%c1_9, %c0_10, %c0_11] : memref<9x8x8xbf16, #tpu.memory_space<vmem>>, vector<1x8x8xbf16>
    %8 = vector.shape_cast %7 : vector<1x8x8xbf16> to vector<8x8xbf16>
    %cst_12 = arith.constant dense<0.000000e+00> : vector<8x78xf32>
    %9 = tpu.matmul %8, %6, %cst_12 {dimension_numbers = #tpu.dot_dimension_numbers<[1], [0], [0], [1], [0, 0, 1, 1], [], []>} : vector<8x8xbf16>, vector<8x78xbf16>, vector<8x78xf32> -> vector<8x78xf32>
    %10 = arith.addf %4, %9 : vector<8x78xf32>
    %c0_13 = arith.constant 0 : index
    %c0_14 = arith.constant 0 : index
    %c0_15 = arith.constant 0 : index
    %c2 = arith.constant 2 : index
    %11 = vector.load %arg3[%c0_13, %c0_14, %c0_15, %c2] : memref<1x1x8x100xbf16, #tpu.memory_space<vmem>>, vector<1x1x8x78xbf16>
    %12 = vector.shape_cast %11 : vector<1x1x8x78xbf16> to vector<8x78xbf16>
    %c2_16 = arith.constant 2 : index
    %c0_17 = arith.constant 0 : index
    %c0_18 = arith.constant 0 : index
    %13 = vector.load %arg1[%c2_16, %c0_17, %c0_18] : memref<9x8x8xbf16, #tpu.memory_space<vmem>>, vector<1x8x8xbf16>
    %14 = vector.shape_cast %13 : vector<1x8x8xbf16> to vector<8x8xbf16>
    %cst_19 = arith.constant dense<0.000000e+00> : vector<8x78xf32>
    %15 = tpu.matmul %14, %12, %cst_19 {dimension_numbers = #tpu.dot_dimension_numbers<[1], [0], [0], [1], [0, 0, 1, 1], [], []>} : vector<8x8xbf16>, vector<8x78xbf16>, vector<8x78xf32> -> vector<8x78xf32>
    %16 = arith.addf %10, %15 : vector<8x78xf32>
    %c0_20 = arith.constant 0 : index
    %c0_21 = arith.constant 0 : index
    %c0_22 = arith.constant 0 : index
    %c10 = arith.constant 10 : index
    %17 = vector.load %arg3[%c0_20, %c0_21, %c0_22, %c10] : memref<1x1x8x100xbf16, #tpu.memory_space<vmem>>, vector<1x1x8x78xbf16>
    %18 = vector.shape_cast %17 : vector<1x1x8x78xbf16> to vector<8x78xbf16>
    %c3 = arith.constant 3 : index
    %c0_23 = arith.constant 0 : index
    %c0_24 = arith.constant 0 : index
    %19 = vector.load %arg1[%c3, %c0_23, %c0_24] : memref<9x8x8xbf16, #tpu.memory_space<vmem>>, vector<1x8x8xbf16>
    %20 = vector.shape_cast %19 : vector<1x8x8xbf16> to vector<8x8xbf16>
    %cst_25 = arith.constant dense<0.000000e+00> : vector<8x78xf32>
    %21 = tpu.matmul %20, %18, %cst_25 {dimension_numbers = #tpu.dot_dimension_numbers<[1], [0], [0], [1], [0, 0, 1, 1], [], []>} : vector<8x8xbf16>, vector<8x78xbf16>, vector<8x78xf32> -> vector<8x78xf32>
    %22 = arith.addf %16, %21 : vector<8x78xf32>
    %c0_26 = arith.constant 0 : index
    %c0_27 = arith.constant 0 : index
    %c0_28 = arith.constant 0 : index
    %c11 = arith.constant 11 : index
    %23 = vector.load %arg3[%c0_26, %c0_27, %c0_28, %c11] : memref<1x1x8x100xbf16, #tpu.memory_space<vmem>>, vector<1x1x8x78xbf16>
    %24 = vector.shape_cast %23 : vector<1x1x8x78xbf16> to vector<8x78xbf16>
    %c4 = arith.constant 4 : index
    %c0_29 = arith.constant 0 : index
    %c0_30 = arith.constant 0 : index
    %25 = vector.load %arg1[%c4, %c0_29, %c0_30] : memref<9x8x8xbf16, #tpu.memory_space<vmem>>, vector<1x8x8xbf16>
    %26 = vector.shape_cast %25 : vector<1x8x8xbf16> to vector<8x8xbf16>
    %cst_31 = arith.constant dense<0.000000e+00> : vector<8x78xf32>
    %27 = tpu.matmul %26, %24, %cst_31 {dimension_numbers = #tpu.dot_dimension_numbers<[1], [0], [0], [1], [0, 0, 1, 1], [], []>} : vector<8x8xbf16>, vector<8x78xbf16>, vector<8x78xf32> -> vector<8x78xf32>
    %28 = arith.addf %22, %27 : vector<8x78xf32>
    %c0_32 = arith.constant 0 : index
    %c0_33 = arith.constant 0 : index
    %c0_34 = arith.constant 0 : index
    %c12 = arith.constant 12 : index
    %29 = vector.load %arg3[%c0_32, %c0_33, %c0_34, %c12] : memref<1x1x8x100xbf16, #tpu.memory_space<vmem>>, vector<1x1x8x78xbf16>
    %30 = vector.shape_cast %29 : vector<1x1x8x78xbf16> to vector<8x78xbf16>
    %c5 = arith.constant 5 : index
    %c0_35 = arith.constant 0 : index
    %c0_36 = arith.constant 0 : index
    %31 = vector.load %arg1[%c5, %c0_35, %c0_36] : memref<9x8x8xbf16, #tpu.memory_space<vmem>>, vector<1x8x8xbf16>
    %32 = vector.shape_cast %31 : vector<1x8x8xbf16> to vector<8x8xbf16>
    %cst_37 = arith.constant dense<0.000000e+00> : vector<8x78xf32>
    %33 = tpu.matmul %32, %30, %cst_37 {dimension_numbers = #tpu.dot_dimension_numbers<[1], [0], [0], [1], [0, 0, 1, 1], [], []>} : vector<8x8xbf16>, vector<8x78xbf16>, vector<8x78xf32> -> vector<8x78xf32>
    %34 = arith.addf %28, %33 : vector<8x78xf32>
    %c0_38 = arith.constant 0 : index
    %c0_39 = arith.constant 0 : index
    %c0_40 = arith.constant 0 : index
    %c20 = arith.constant 20 : index
    %35 = vector.load %arg3[%c0_38, %c0_39, %c0_40, %c20] : memref<1x1x8x100xbf16, #tpu.memory_space<vmem>>, vector<1x1x8x78xbf16>
    %36 = vector.shape_cast %35 : vector<1x1x8x78xbf16> to vector<8x78xbf16>
    %c6 = arith.constant 6 : index
    %c0_41 = arith.constant 0 : index
    %c0_42 = arith.constant 0 : index
    %37 = vector.load %arg1[%c6, %c0_41, %c0_42] : memref<9x8x8xbf16, #tpu.memory_space<vmem>>, vector<1x8x8xbf16>
    %38 = vector.shape_cast %37 : vector<1x8x8xbf16> to vector<8x8xbf16>
    %cst_43 = arith.constant dense<0.000000e+00> : vector<8x78xf32>
    %39 = tpu.matmul %38, %36, %cst_43 {dimension_numbers = #tpu.dot_dimension_numbers<[1], [0], [0], [1], [0, 0, 1, 1], [], []>} : vector<8x8xbf16>, vector<8x78xbf16>, vector<8x78xf32> -> vector<8x78xf32>
    %40 = arith.addf %34, %39 : vector<8x78xf32>
    %c0_44 = arith.constant 0 : index
    %c0_45 = arith.constant 0 : index
    %c0_46 = arith.constant 0 : index
    %c21 = arith.constant 21 : index
    %41 = vector.load %arg3[%c0_44, %c0_45, %c0_46, %c21] : memref<1x1x8x100xbf16, #tpu.memory_space<vmem>>, vector<1x1x8x78xbf16>
    %42 = vector.shape_cast %41 : vector<1x1x8x78xbf16> to vector<8x78xbf16>
    %c7 = arith.constant 7 : index
    %c0_47 = arith.constant 0 : index
    %c0_48 = arith.constant 0 : index
    %43 = vector.load %arg1[%c7, %c0_47, %c0_48] : memref<9x8x8xbf16, #tpu.memory_space<vmem>>, vector<1x8x8xbf16>
    %44 = vector.shape_cast %43 : vector<1x8x8xbf16> to vector<8x8xbf16>
    %cst_49 = arith.constant dense<0.000000e+00> : vector<8x78xf32>
    %45 = tpu.matmul %44, %42, %cst_49 {dimension_numbers = #tpu.dot_dimension_numbers<[1], [0], [0], [1], [0, 0, 1, 1], [], []>} : vector<8x8xbf16>, vector<8x78xbf16>, vector<8x78xf32> -> vector<8x78xf32>
    %46 = arith.addf %40, %45 : vector<8x78xf32>
    %c0_50 = arith.constant 0 : index
    %c0_51 = arith.constant 0 : index
    %c0_52 = arith.constant 0 : index
    %c22 = arith.constant 22 : index
    %47 = vector.load %arg3[%c0_50, %c0_51, %c0_52, %c22] : memref<1x1x8x100xbf16, #tpu.memory_space<vmem>>, vector<1x1x8x78xbf16>
    %48 = vector.shape_cast %47 : vector<1x1x8x78xbf16> to vector<8x78xbf16>
    %c8 = arith.constant 8 : index
    %c0_53 = arith.constant 0 : index
    %c0_54 = arith.constant 0 : index
    %49 = vector.load %arg1[%c8, %c0_53, %c0_54] : memref<9x8x8xbf16, #tpu.memory_space<vmem>>, vector<1x8x8xbf16>
    %50 = vector.shape_cast %49 : vector<1x8x8xbf16> to vector<8x8xbf16>
    %cst_55 = arith.constant dense<0.000000e+00> : vector<8x78xf32>
    %51 = tpu.matmul %50, %48, %cst_55 {dimension_numbers = #tpu.dot_dimension_numbers<[1], [0], [0], [1], [0, 0, 1, 1], [], []>} : vector<8x8xbf16>, vector<8x78xbf16>, vector<8x78xf32> -> vector<8x78xf32>
    %52 = arith.addf %46, %51 : vector<8x78xf32>
    %c0_56 = arith.constant 0 : index
    %c0_57 = arith.constant 0 : index
    %53 = vector.load %arg2[%c0_56, %c0_57] : memref<8x1xf32, #tpu.memory_space<vmem>>, vector<8x1xf32>
    %54 = vector.broadcast %53 : vector<8x1xf32> to vector<8x78xf32>
    %55 = arith.addf %52, %54 : vector<8x78xf32>
    %56 = arith.truncf %55 : vector<8x78xf32> to vector<8x78xbf16>
    %c0_58 = arith.constant 0 : index
    %c0_59 = arith.constant 0 : index
    %c0_60 = arith.constant 0 : index
    %57 = vector.load %arg4[%c0_58, %c0_59, %c0_60] : memref<1x8x78xbf16, #tpu.memory_space<vmem>>, vector<1x8x78xbf16>
    %58 = vector.shape_cast %57 : vector<1x8x78xbf16> to vector<8x78xbf16>
    %59 = vector.shape_cast %56 : vector<8x78xbf16> to vector<1x8x78xbf16>
    tpu.vector_store %arg4[%c0_58, %c0_59, %c0_60], %59 {strides = array<i32>} : memref<1x8x78xbf16, #tpu.memory_space<vmem>>, vector<1x8x78xbf16>,
    return
  }
  func.func @transform_0(%arg0: i32) -> (i32, i32, i32) {
    %c0_i32 = arith.constant 0 : i32
    %c0_i32_0 = arith.constant 0 : i32
    %c0_i32_1 = arith.constant 0 : i32
    %c0_i32_2 = arith.constant 0 : i32
    return %c0_i32, %c0_i32_0, %c0_i32_1 : i32, i32, i32
  }
  func.func @transform_1(%arg0: i32) -> (i32, i32) {
    %c0_i32 = arith.constant 0 : i32
    %c0_i32_0 = arith.constant 0 : i32
    %c0_i32_1 = arith.constant 0 : i32
    return %c0_i32, %c0_i32_0 : i32, i32
  }
  func.func @transform_2(%arg0: i32) -> (i32, i32, i32, i32) {
    %c0_i32 = arith.constant 0 : i32
    %c0_i32_0 = arith.constant 0 : i32
    %c0_i32_1 = arith.constant 0 : i32
    %c0_i32_2 = arith.constant 0 : i32
    return %arg0, %c0_i32, %c0_i32_0, %c0_i32_1 : i32, i32, i32, i32
  }
  func.func @transform_3(%arg0: i32) -> (i32, i32, i32) {
    %c0_i32 = arith.constant 0 : i32
    %c0_i32_0 = arith.constant 0 : i32
    %c0_i32_1 = arith.constant 0 : i32
    return %arg0, %c0_i32, %c0_i32_0 : i32, i32, i32
  }
}

</mosaic_0001>

<llo_original>
// kernel: ccnn1_forward.8
$region0: #{ccnn1_forward.8}
  #allocation0 [shape = 'u32[]', space=smem, size = 0x4, offset = 0x4, fixed_abs, tag = 'smem constant byte address 0x4 - core index']
  #allocation1 [shape = 'u32[72,128]{1,0:T(1,128)}', space=vmem, size = 0x9000, scoped, tag = 'internal scratch']
  %s0 = inlined_call_operand.vmem [shape: bf16[9,8,2], index: 0, kind: input, shape index: {}]
  %s1 = inlined_call_operand.vmem [shape: f32[8,1], index: 1, kind: input, shape index: {}]
  %s2 = inlined_call_operand.vmem [shape: bf16[2,4,2,81], index: 2, kind: input, shape index: {}]
  %s3 = inlined_call_operand.vmem [shape: bf16[2,8,71], index: 3, kind: output, shape index: {}]
  %s4 = sld [smem:[#allocation0]]
  $region45: #{ccnn1_forward.8} parent=0
    _
  %s6 = ssub.s32 1, %s4
  %s7 = scalar_select 0, %s6, %s4
  loop: start=0, step=1, limit=4
  $region2: #{ccnn1_forward.8} parent=0 // loop_pre_header
    _
  $region3: #{ccnn1_forward.8} parent=0 // loop_header
    %s9 = sphi 0, %s13
    %p10 = scmp.ge.s32.totalorder %s9, 4
    %s17 = sphi 0, %s17
    %s19 = sphi 0, %s17
    %s20 = sphi 0, %s19
    %s34 = sphi 0, %s20
    %s38 = sphi 0, %s38
    %s40 = sphi 0, %s38
    %s41 = sphi 0, %s40
    %s55 = sphi 0, %s41
    %s61 = sphi 0, %s63
    %s64 = sphi 0, %s61
    %s65 = sphi 0, %s64
    %s81 = sphi 0, %s65
    %s87 = sphi 0, %s89
    %s90 = sphi 0, %s87
    %s91 = sphi 0, %s90
    %s107 = sphi 0, %s91
  $region4: #{ccnn1_forward.8} parent=0 // loop_header_branch
    %12 = sbr.rel (%p10) target = $region8
  $region5: #{ccnn1_forward.8} parent=0 // loop_body
    %s14 = ssub.s32 %s9, 1
    %s15 = ssub.s32 %s9, 2
    %s16 = sadd.s32 %s9, 1
    %s18 = sadd.s32 %s17, 1
    %p21 = scmp.eq.s32.totalorder %s9, 1
    %p22 = scmp.ne.s32.totalorder %s17, %s19
    %p23 = scmp.eq.s32.totalorder %s9, 0
    %p24 = por %p22, %p23
    %p25 = scmp.ne.s32.totalorder %s17, %s19
    %p26 = scmp.eq.s32.totalorder %s14, 1
    %p27 = por %p25, %p26
    %p28 = scmp.ne.s32.totalorder %s19, %s20
    %p29 = scmp.eq.s32.totalorder %s14, 0
    %p30 = por %p28, %p29
    %p31 = scmp.ne.s32.totalorder %s19, %s20
    %p32 = scmp.eq.s32.totalorder %s15, 1
    %p33 = por %p31, %p32
    %p35 = scmp.ne.s32.totalorder %s20, %s34
    %p36 = scmp.eq.s32.totalorder %s15, 0
    %p37 = por %p35, %p36
    %s39 = sadd.s32 %s38, 1
    %p42 = scmp.eq.s32.totalorder %s9, 1
    %p43 = scmp.ne.s32.totalorder %s38, %s40
    %p44 = scmp.eq.s32.totalorder %s9, 0
    %p45 = por %p43, %p44
    %p46 = scmp.ne.s32.totalorder %s38, %s40
    %p47 = scmp.eq.s32.totalorder %s14, 1
    %p48 = por %p46, %p47
    %p49 = scmp.ne.s32.totalorder %s40, %s41
    %p50 = scmp.eq.s32.totalorder %s14, 0
    %p51 = por %p49, %p50
    %p52 = scmp.ne.s32.totalorder %s40, %s41
    %p53 = scmp.eq.s32.totalorder %s15, 1
    %p54 = por %p52, %p53
    %p56 = scmp.ne.s32.totalorder %s41, %s55
    %p57 = scmp.eq.s32.totalorder %s15, 0
    %p58 = por %p56, %p57
    %s59 = ssub.s32 %s9, %s16
    %p60 = scmp.eq.s32.totalorder %s59, 0
    %s62 = sadd.s32 %s61, 1
    %s63 = scalar_select %p60, %s61, %s62
    %p66 = pneg %p60
    %p67 = scmp.eq.s32.totalorder %s9, 1
    %p68 = por %p66, %p67
    %p69 = scmp.ne.s32.totalorder %s61, %s64
    %p70 = scmp.eq.s32.totalorder %s9, 0
    %p71 = por %p69, %p70
    %p72 = scmp.ne.s32.totalorder %s61, %s64
    %p73 = scmp.eq.s32.totalorder %s14, 1
    %p74 = por %p72, %p73
    %p75 = scmp.ne.s32.totalorder %s64, %s65
    %p76 = scmp.eq.s32.totalorder %s14, 0
    %p77 = por %p75, %p76
    %p78 = scmp.ne.s32.totalorder %s64, %s65
    %p79 = scmp.eq.s32.totalorder %s15, 1
    %p80 = por %p78, %p79
    %p82 = scmp.ne.s32.totalorder %s65, %s81
    %p83 = scmp.eq.s32.totalorder %s15, 0
    %p84 = por %p82, %p83
    %s85 = ssub.s32 %s9, %s16
    %p86 = scmp.eq.s32.totalorder %s85, 0
    %s88 = sadd.s32 %s87, 1
    %s89 = scalar_select %p86, %s87, %s88
    %p92 = pneg %p86
    %p93 = scmp.eq.s32.totalorder %s9, 1
    %p94 = por %p92, %p93
    %p95 = scmp.ne.s32.totalorder %s87, %s90
    %p96 = scmp.eq.s32.totalorder %s9, 0
    %p97 = por %p95, %p96
    %p98 = scmp.ne.s32.totalorder %s87, %s90
    %p99 = scmp.eq.s32.totalorder %s14, 1
    %p100 = por %p98, %p99
    %p101 = scmp.ne.s32.totalorder %s90, %s91
    %p102 = scmp.eq.s32.totalorder %s14, 0
    %p103 = por %p101, %p102
    %p104 = scmp.ne.s32.totalorder %s90, %s91
    %p105 = scmp.eq.s32.totalorder %s15, 1
    %p106 = por %p104, %p105
    %p108 = scmp.ne.s32.totalorder %s91, %s107
    %p109 = scmp.eq.s32.totalorder %s15, 0
    %p110 = por %p108, %p109
    %p111 = scmp.le.s32.totalorder 1, %s9
    %p112 = scmp.lt.s32.totalorder %s9, 3
    %p113 = pnand %p111, %p112
    %p114 = pneg %p113
    // Predicated region
    $region9: #{ccnn1_forward.8} parent=5 // pred_check
      _
    $region10: #{ccnn1_forward.8} parent=5 // pred_check_branch
      %116 = sbr.rel (%p113) target = $region12
    $region11: #{ccnn1_forward.8} parent=5 // pred_region
      %s117 = ssub.s32 %s9, 1
      // Predicated region
      $region13: #{ccnn1_forward.8} parent=11 // pred_check
        %p118 = pneg %p30
      $region14: #{ccnn1_forward.8} parent=11 // pred_check_branch
        %120 = sbr.rel (%p118) target = $region16
      $region15: #{ccnn1_forward.8} parent=11 // pred_region
        _
      $region16: #{ccnn1_forward.8} parent=11 // pred_fallthru
        _
      // Predicated region
      $region17: #{ccnn1_forward.8} parent=11 // pred_check
        %p121 = pneg %p51
      $region18: #{ccnn1_forward.8} parent=11 // pred_check_branch
        %123 = sbr.rel (%p121) target = $region20
      $region19: #{ccnn1_forward.8} parent=11 // pred_region
        _
      $region20: #{ccnn1_forward.8} parent=11 // pred_fallthru
        _
    $region12: #{ccnn1_forward.8} parent=5 // pred_fallthru
      _
    %p124 = scmp.lt.s32.totalorder %s9, 2
    // Predicated region
    $region21: #{ccnn1_forward.8} parent=5 // pred_check
      %p125 = pneg %p124
    $region22: #{ccnn1_forward.8} parent=5 // pred_check_branch
      %127 = sbr.rel (%p125) target = $region24
    $region23: #{ccnn1_forward.8} parent=5 // pred_region
      // Predicated region
      $region25: #{ccnn1_forward.8} parent=23 // pred_check
        %p128 = pneg %p71
      $region26: #{ccnn1_forward.8} parent=23 // pred_check_branch
        %130 = sbr.rel (%p128) target = $region28
      $region27: #{ccnn1_forward.8} parent=23 // pred_region
        %p131 = scmp.lt.s32.totalorder %s9, 1
        %s132 = scalar_select %p131, %s9, 1
        %s133 = smul.addr %s132, 4
        %s134 = scalar_lea.vmem %s2, %s133
      $region28: #{ccnn1_forward.8} parent=23 // pred_fallthru
        _
    $region24: #{ccnn1_forward.8} parent=5 // pred_fallthru
      _
    %p135 = scmp.le.s32.totalorder 1, %s9
    %p136 = scmp.lt.s32.totalorder %s9, 3
    %p137 = pnand %p135, %p136
    %p138 = pneg %p137
    // Predicated region
    $region29: #{ccnn1_forward.8} parent=5 // pred_check
      _
    $region30: #{ccnn1_forward.8} parent=5 // pred_check_branch
      %140 = sbr.rel (%p137) target = $region32
    $region31: #{ccnn1_forward.8} parent=5 // pred_region
      %s141 = ssub.s32 %s9, 1
      %p142 = pneg %p30
      %p143 = pneg %p27
      %p144 = pneg %p51
      %p145 = pneg %p48
      %p146 = scmp.lt.s32.totalorder %s14, 1
      %s147 = scalar_select %p146, %s14, 1
      %s148 = smul.addr %s147, 4
      %s149 = scalar_lea.vmem %s2, %s148
      %p150 = pneg %p77
      %p151 = pneg %p74
      %p152 = pneg %p103
      %p153 = pneg %p100
      %p154 = scmp.lt.s32.totalorder %s14, 1
      %s155 = scalar_select %p154, %s14, 1
      %s156 = smul.addr %s155, 4
      %s157 = scalar_lea.vmem %s3, %s156
      %p158 = scmp.lt.s32.totalorder %s14, 1
      %s159 = scalar_select %p158, %s14, 1
      %s160 = smul.addr %s159, 4
      %s161 = scalar_lea.vmem %s2, %s160
      %p162 = scmp.lt.s32.totalorder %s14, 1
      %s163 = scalar_select %p162, %s14, 1
      %s164 = smul.addr %s163, 4
      %s165 = scalar_lea.vmem %s3, %s164
      %v167 = vld [vmem:[%s161] sm:$0x1]
      %v168 = vld [vmem:[%s0] sm:$0xf]
      %s169 = scalar_lea.vmem %s161, 1
      %v170 = vld [vmem:[%s169] sm:$0x1]
      %s171 = scalar_lea.vmem %s0, 4
      %v172 = vld [vmem:[%s171] sm:$0xf]
      %vm173 = vcmask 15360
      %v175 = vsel %vm173, %v172, 0
      %vm177 = vcmask 1040384
      %v179 = vsel %vm177, %v170, 0
      %181 = vmatpush.bf16.msra.mxu0 0
      %182 = vmatpush.bf16.msra.mxu0 0
      %183 = vmatpush.bf16.msra.mxu0 0
      %184 = vmatpush.bf16.msra.mxu0 0
      %185 = vmatpush.bf16.msra.mxu0 0
      %186 = vmatpush.bf16.msra.mxu0 0
      %187 = vmatpush.bf16.msra.mxu0 0
      %188 = vmatpush.bf16.msra.mxu0 %v179
      %189 = vmatmul.bf16.gmra.mxu0 %v175
      %v190 = vpop.f32.mrf.mxu0
      %v191 = vadd.f32 0.0, %v190
      %v192 = vpop.f32.mrf.mxu0
      %193 = vdwg.mxu0
      %v195 = vsel %vm173, %v168, 0
      %v198 = vsel %vm177, %v167, 0
      %200 = vmatpush.bf16.msra.mxu0 0
      %201 = vmatpush.bf16.msra.mxu0 0
      %202 = vmatpush.bf16.msra.mxu0 0
      %203 = vmatpush.bf16.msra.mxu0 0
      %204 = vmatpush.bf16.msra.mxu0 0
      %205 = vmatpush.bf16.msra.mxu0 0
      %206 = vmatpush.bf16.msra.mxu0 0
      %207 = vmatpush.bf16.msra.mxu0 %v198
      %208 = vmatmul.bf16.gmra.mxu0 %v195
      %v209 = vpop.f32.mrf.mxu0
      %v210 = vadd.f32 %v191, %v209
      %v211 = vpop.f32.mrf.mxu0
      %212 = vdwg.mxu0
      %s213 = scalar_lea.vmem %s0, 8
      %v214 = vld [vmem:[%s213] sm:$0xf]
      %215 = vst [vmem:[#allocation1] ss:$9 sm:$0xff] %v167
      %v216 = vld [vmem:[#allocation1] sm:$0xff]
      %218 = vrot.lane.b32.xlu0 %v216, 127
      %v219 = vpop.permute.xlu0 %218
      %v221 = vsel %vm173, %v214, 0
      %v224 = vsel %vm177, %v219, 0
      %226 = vmatpush.bf16.msra.mxu0 0
      %227 = vmatpush.bf16.msra.mxu0 0
      %228 = vmatpush.bf16.msra.mxu0 0
      %229 = vmatpush.bf16.msra.mxu0 0
      %230 = vmatpush.bf16.msra.mxu0 0
      %231 = vmatpush.bf16.msra.mxu0 0
      %232 = vmatpush.bf16.msra.mxu0 0
      %233 = vmatpush.bf16.msra.mxu0 %v224
      %234 = vmatmul.bf16.gmra.mxu0 %v221
      %v235 = vpop.f32.mrf.mxu0
      %v236 = vadd.f32 0.0, %v235
      %v237 = vpop.f32.mrf.mxu0
      %238 = vdwg.mxu0
      %v239 = vadd.f32 %v210, %v236
      %s240 = scalar_lea.vmem %s161, 2
      %v241 = vld [vmem:[%s240] sm:$0x1]
      %s242 = scalar_lea.vmem %s0, 12
      %v243 = vld [vmem:[%s242] sm:$0xf]
      %v245 = vsel %vm173, %v243, 0
      %v248 = vsel %vm177, %v241, 0
      %250 = vmatpush.bf16.msra.mxu0 0
      %251 = vmatpush.bf16.msra.mxu0 0
      %252 = vmatpush.bf16.msra.mxu0 0
      %253 = vmatpush.bf16.msra.mxu0 0
      %254 = vmatpush.bf16.msra.mxu0 0
      %255 = vmatpush.bf16.msra.mxu0 0
      %256 = vmatpush.bf16.msra.mxu0 0
      %257 = vmatpush.bf16.msra.mxu0 %v248
      %258 = vmatmul.bf16.gmra.mxu0 %v245
      %v259 = vpop.f32.mrf.mxu0
      %v260 = vadd.f32 0.0, %v259
      %v261 = vpop.f32.mrf.mxu0
      %262 = vdwg.mxu0
      %v263 = vadd.f32 %v239, %v260
      %s264 = scalar_lea.vmem %s161, 3
      %v265 = vld [vmem:[%s264] sm:$0x1]
      %s266 = scalar_lea.vmem %s0, 16
      %v267 = vld [vmem:[%s266] sm:$0xf]
      %v269 = vsel %vm173, %v267, 0
      %v272 = vsel %vm177, %v265, 0
      %274 = vmatpush.bf16.msra.mxu0 0
      %275 = vmatpush.bf16.msra.mxu0 0
      %276 = vmatpush.bf16.msra.mxu0 0
      %277 = vmatpush.bf16.msra.mxu0 0
      %278 = vmatpush.bf16.msra.mxu0 0
      %279 = vmatpush.bf16.msra.mxu0 0
      %280 = vmatpush.bf16.msra.mxu0 0
      %281 = vmatpush.bf16.msra.mxu0 %v272
      %282 = vmatmul.bf16.gmra.mxu0 %v269
      %v283 = vpop.f32.mrf.mxu0
      %v284 = vadd.f32 0.0, %v283
      %v285 = vpop.f32.mrf.mxu0
      %286 = vdwg.mxu0
      %v287 = vadd.f32 %v263, %v284
      %s288 = scalar_lea.vmem %s0, 20
      %v289 = vld [vmem:[%s288] sm:$0xf]
      %290 = vst [vmem:[#allocation1] ss:$9 sm:$0xff] %v241
      %v291 = vld [vmem:[#allocation1] sm:$0xff]
      %293 = vrot.lane.b32.xlu0 %v291, 127
      %v294 = vpop.permute.xlu0 %293
      %v296 = vsel %vm173, %v289, 0
      %v299 = vsel %vm177, %v294, 0
      %301 = vmatpush.bf16.msra.mxu0 0
      %302 = vmatpush.bf16.msra.mxu0 0
      %303 = vmatpush.bf16.msra.mxu0 0
      %304 = vmatpush.bf16.msra.mxu0 0
      %305 = vmatpush.bf16.msra.mxu0 0
      %306 = vmatpush.bf16.msra.mxu0 0
      %307 = vmatpush.bf16.msra.mxu0 0
      %308 = vmatpush.bf16.msra.mxu0 %v299
      %309 = vmatmul.bf16.gmra.mxu0 %v296
      %v310 = vpop.f32.mrf.mxu0
      %v311 = vadd.f32 0.0, %v310
      %v312 = vpop.f32.mrf.mxu0
      %313 = vdwg.mxu0
      %v314 = vadd.f32 %v287, %v311
      %v315 = vld [vmem:[%s161] sm:$0x1]
      %s316 = scalar_lea.vmem %s0, 24
      %v317 = vld [vmem:[%s316] sm:$0xf]
      %319 = vst [vmem:[#allocation1] ss:$9 sm:$0xff] %v315
      %v320 = vld [vmem:[#allocation1] sm:$0xff]
      %322 = vrot.lane.b32.xlu0 %v320, 119
      %v323 = vpop.permute.xlu0 %322
      %v325 = vsel %vm173, %v317, 0
      %v328 = vsel %vm177, %v323, 0
      %330 = vmatpush.bf16.msra.mxu0 0
      %331 = vmatpush.bf16.msra.mxu0 0
      %332 = vmatpush.bf16.msra.mxu0 0
      %333 = vmatpush.bf16.msra.mxu0 0
      %334 = vmatpush.bf16.msra.mxu0 0
      %335 = vmatpush.bf16.msra.mxu0 0
      %336 = vmatpush.bf16.msra.mxu0 0
      %337 = vmatpush.bf16.msra.mxu0 %v328
      %338 = vmatmul.bf16.gmra.mxu0 %v325
      %v339 = vpop.f32.mrf.mxu0
      %v340 = vadd.f32 0.0, %v339
      %v341 = vpop.f32.mrf.mxu0
      %342 = vdwg.mxu0
      %v343 = vadd.f32 %v314, %v340
      %v344 = vld [vmem:[%s169] sm:$0x1]
      %s345 = scalar_lea.vmem %s0, 28
      %v346 = vld [vmem:[%s345] sm:$0xf]
      %348 = vst [vmem:[#allocation1] ss:$9 sm:$0xff] %v344
      %v349 = vld [vmem:[#allocation1] sm:$0xff]
      %351 = vrot.lane.b32.xlu0 %v349, 119
      %v352 = vpop.permute.xlu0 %351
      %v354 = vsel %vm173, %v346, 0
      %v357 = vsel %vm177, %v352, 0
      %359 = vmatpush.bf16.msra.mxu0 0
      %360 = vmatpush.bf16.msra.mxu0 0
      %361 = vmatpush.bf16.msra.mxu0 0
      %362 = vmatpush.bf16.msra.mxu0 0
      %363 = vmatpush.bf16.msra.mxu0 0
      %364 = vmatpush.bf16.msra.mxu0 0
      %365 = vmatpush.bf16.msra.mxu0 0
      %366 = vmatpush.bf16.msra.mxu0 %v357
      %367 = vmatmul.bf16.gmra.mxu0 %v354
      %v368 = vpop.f32.mrf.mxu0
      %v369 = vadd.f32 0.0, %v368
      %v370 = vpop.f32.mrf.mxu0
      %371 = vdwg.mxu0
      %v372 = vadd.f32 %v343, %v369
      %v373 = vld [vmem:[%s161] sm:$0x1]
      %s374 = scalar_lea.vmem %s0, 32
      %v375 = vld [vmem:[%s374] sm:$0xf]
      %377 = vst [vmem:[#allocation1] ss:$9 sm:$0xff] %v373
      %v378 = vld [vmem:[#allocation1] sm:$0xff]
      %380 = vrot.lane.b32.xlu0 %v378, 118
      %v381 = vpop.permute.xlu0 %380
      %v383 = vsel %vm173, %v375, 0
      %v386 = vsel %vm177, %v381, 0
      %388 = vmatpush.bf16.msra.mxu0 0
      %389 = vmatpush.bf16.msra.mxu0 0
      %390 = vmatpush.bf16.msra.mxu0 0
      %391 = vmatpush.bf16.msra.mxu0 0
      %392 = vmatpush.bf16.msra.mxu0 0
      %393 = vmatpush.bf16.msra.mxu0 0
      %394 = vmatpush.bf16.msra.mxu0 0
      %395 = vmatpush.bf16.msra.mxu0 %v386
      %396 = vmatmul.bf16.gmra.mxu0 %v383
      %v397 = vpop.f32.mrf.mxu0
      %v398 = vadd.f32 0.0, %v397
      %v399 = vpop.f32.mrf.mxu0
      %400 = vdwg.mxu0
      %v401 = vadd.f32 %v372, %v398
      %v402 = vld [vmem:[%s1] sm:$0xff]
      %404 = vset.pattern.permute.xlu0 0
      %405 = vperm.xlu0 %404, %v402
      %v406 = vpop.permute.xlu0 %405
      %v408 = vadd.f32 %v401, %v406
      %v409 = vmax.f32 %v408, 0.0
      %v410 = vpack.c.bf16 %v409, %v409
      %vm411 = vcmask 576512
      %412 = vst.msk [vmem:[%s165] sm:$0xf] %vm411, %v410
      %p413 = scmp.lt.s32.totalorder %s14, 1
      %s414 = scalar_select %p413, %s14, 1
      %s415 = smul.addr %s414, 4
      %s416 = scalar_lea.vmem %s3, %s415
      // Predicated region
      $region33: #{ccnn1_forward.8} parent=31 // pred_check
        %p417 = pneg %p100
      $region34: #{ccnn1_forward.8} parent=31 // pred_check_branch
        %419 = sbr.rel (%p417) target = $region36
      $region35: #{ccnn1_forward.8} parent=31 // pred_region
        _
      $region36: #{ccnn1_forward.8} parent=31 // pred_fallthru
        _
    $region32: #{ccnn1_forward.8} parent=5 // pred_fallthru
      _
    %p420 = scmp.le.s32.totalorder 2, %s9
    // Predicated region
    $region37: #{ccnn1_forward.8} parent=5 // pred_check
      %p421 = pneg %p420
    $region38: #{ccnn1_forward.8} parent=5 // pred_check_branch
      %423 = sbr.rel (%p421) target = $region40
    $region39: #{ccnn1_forward.8} parent=5 // pred_region
      %s424 = ssub.s32 %s9, 2
      // Predicated region
      $region41: #{ccnn1_forward.8} parent=39 // pred_check
        %p425 = pneg %p106
      $region42: #{ccnn1_forward.8} parent=39 // pred_check_branch
        %427 = sbr.rel (%p425) target = $region44
      $region43: #{ccnn1_forward.8} parent=39 // pred_region
        %p428 = scmp.lt.s32.totalorder %s15, 1
        %s429 = scalar_select %p428, %s15, 1
        %s430 = smul.addr %s429, 4
        %s431 = scalar_lea.vmem %s3, %s430
      $region44: #{ccnn1_forward.8} parent=39 // pred_fallthru
        _
    $region40: #{ccnn1_forward.8} parent=5 // pred_fallthru
      _
  $region6: #{ccnn1_forward.8} parent=0 // loop_footer
    %s13 = sadd.s32 1, %s9
  $region7: #{ccnn1_forward.8} parent=0 // loop_footer_branch
    %8 = sbr.rel target = $region3
  $region8: #{ccnn1_forward.8} parent=0 // loop_exit
    _

// kernel: ccnn1_forward.9
$region0: #{ccnn1_forward.9}
  #allocation0 [shape = 'u32[]', space=smem, size = 0x4, offset = 0x4, fixed_abs, tag = 'smem constant byte address 0x4 - core index']
  #allocation1 [shape = 'u32[72,128]{1,0:T(1,128)}', space=vmem, size = 0x9000, scoped, tag = 'internal scratch']
  %s0 = inlined_call_operand.vmem [shape: bf16[9,16,8], index: 0, kind: input, shape index: {}]
  %s1 = inlined_call_operand.vmem [shape: f32[16,1], index: 1, kind: input, shape index: {}]
  %s2 = inlined_call_operand.vmem [shape: bf16[2,4,8,25], index: 2, kind: input, shape index: {}]
  %s3 = inlined_call_operand.vmem [shape: bf16[2,16,19], index: 3, kind: output, shape index: {}]
  %s4 = sld [smem:[#allocation0]]
  $region45: #{ccnn1_forward.9} parent=0
    _
  %s6 = ssub.s32 1, %s4
  %s7 = scalar_select 0, %s6, %s4
  loop: start=0, step=1, limit=4
  $region2: #{ccnn1_forward.9} parent=0 // loop_pre_header
    _
  $region3: #{ccnn1_forward.9} parent=0 // loop_header
    %s9 = sphi 0, %s13
    %p10 = scmp.ge.s32.totalorder %s9, 4
    %s17 = sphi 0, %s17
    %s19 = sphi 0, %s17
    %s20 = sphi 0, %s19
    %s34 = sphi 0, %s20
    %s38 = sphi 0, %s38
    %s40 = sphi 0, %s38
    %s41 = sphi 0, %s40
    %s55 = sphi 0, %s41
    %s61 = sphi 0, %s63
    %s64 = sphi 0, %s61
    %s65 = sphi 0, %s64
    %s81 = sphi 0, %s65
    %s87 = sphi 0, %s89
    %s90 = sphi 0, %s87
    %s91 = sphi 0, %s90
    %s107 = sphi 0, %s91
  $region4: #{ccnn1_forward.9} parent=0 // loop_header_branch
    %12 = sbr.rel (%p10) target = $region8
  $region5: #{ccnn1_forward.9} parent=0 // loop_body
    %s14 = ssub.s32 %s9, 1
    %s15 = ssub.s32 %s9, 2
    %s16 = sadd.s32 %s9, 1
    %s18 = sadd.s32 %s17, 1
    %p21 = scmp.eq.s32.totalorder %s9, 1
    %p22 = scmp.ne.s32.totalorder %s17, %s19
    %p23 = scmp.eq.s32.totalorder %s9, 0
    %p24 = por %p22, %p23
    %p25 = scmp.ne.s32.totalorder %s17, %s19
    %p26 = scmp.eq.s32.totalorder %s14, 1
    %p27 = por %p25, %p26
    %p28 = scmp.ne.s32.totalorder %s19, %s20
    %p29 = scmp.eq.s32.totalorder %s14, 0
    %p30 = por %p28, %p29
    %p31 = scmp.ne.s32.totalorder %s19, %s20
    %p32 = scmp.eq.s32.totalorder %s15, 1
    %p33 = por %p31, %p32
    %p35 = scmp.ne.s32.totalorder %s20, %s34
    %p36 = scmp.eq.s32.totalorder %s15, 0
    %p37 = por %p35, %p36
    %s39 = sadd.s32 %s38, 1
    %p42 = scmp.eq.s32.totalorder %s9, 1
    %p43 = scmp.ne.s32.totalorder %s38, %s40
    %p44 = scmp.eq.s32.totalorder %s9, 0
    %p45 = por %p43, %p44
    %p46 = scmp.ne.s32.totalorder %s38, %s40
    %p47 = scmp.eq.s32.totalorder %s14, 1
    %p48 = por %p46, %p47
    %p49 = scmp.ne.s32.totalorder %s40, %s41
    %p50 = scmp.eq.s32.totalorder %s14, 0
    %p51 = por %p49, %p50
    %p52 = scmp.ne.s32.totalorder %s40, %s41
    %p53 = scmp.eq.s32.totalorder %s15, 1
    %p54 = por %p52, %p53
    %p56 = scmp.ne.s32.totalorder %s41, %s55
    %p57 = scmp.eq.s32.totalorder %s15, 0
    %p58 = por %p56, %p57
    %s59 = ssub.s32 %s9, %s16
    %p60 = scmp.eq.s32.totalorder %s59, 0
    %s62 = sadd.s32 %s61, 1
    %s63 = scalar_select %p60, %s61, %s62
    %p66 = pneg %p60
    %p67 = scmp.eq.s32.totalorder %s9, 1
    %p68 = por %p66, %p67
    %p69 = scmp.ne.s32.totalorder %s61, %s64
    %p70 = scmp.eq.s32.totalorder %s9, 0
    %p71 = por %p69, %p70
    %p72 = scmp.ne.s32.totalorder %s61, %s64
    %p73 = scmp.eq.s32.totalorder %s14, 1
    %p74 = por %p72, %p73
    %p75 = scmp.ne.s32.totalorder %s64, %s65
    %p76 = scmp.eq.s32.totalorder %s14, 0
    %p77 = por %p75, %p76
    %p78 = scmp.ne.s32.totalorder %s64, %s65
    %p79 = scmp.eq.s32.totalorder %s15, 1
    %p80 = por %p78, %p79
    %p82 = scmp.ne.s32.totalorder %s65, %s81
    %p83 = scmp.eq.s32.totalorder %s15, 0
    %p84 = por %p82, %p83
    %s85 = ssub.s32 %s9, %s16
    %p86 = scmp.eq.s32.totalorder %s85, 0
    %s88 = sadd.s32 %s87, 1
    %s89 = scalar_select %p86, %s87, %s88
    %p92 = pneg %p86
    %p93 = scmp.eq.s32.totalorder %s9, 1
    %p94 = por %p92, %p93
    %p95 = scmp.ne.s32.totalorder %s87, %s90
    %p96 = scmp.eq.s32.totalorder %s9, 0
    %p97 = por %p95, %p96
    %p98 = scmp.ne.s32.totalorder %s87, %s90
    %p99 = scmp.eq.s32.totalorder %s14, 1
    %p100 = por %p98, %p99
    %p101 = scmp.ne.s32.totalorder %s90, %s91
    %p102 = scmp.eq.s32.totalorder %s14, 0
    %p103 = por %p101, %p102
    %p104 = scmp.ne.s32.totalorder %s90, %s91
    %p105 = scmp.eq.s32.totalorder %s15, 1
    %p106 = por %p104, %p105
    %p108 = scmp.ne.s32.totalorder %s91, %s107
    %p109 = scmp.eq.s32.totalorder %s15, 0
    %p110 = por %p108, %p109
    %p111 = scmp.le.s32.totalorder 1, %s9
    %p112 = scmp.lt.s32.totalorder %s9, 3
    %p113 = pnand %p111, %p112
    %p114 = pneg %p113
    // Predicated region
    $region9: #{ccnn1_forward.9} parent=5 // pred_check
      _
    $region10: #{ccnn1_forward.9} parent=5 // pred_check_branch
      %116 = sbr.rel (%p113) target = $region12
    $region11: #{ccnn1_forward.9} parent=5 // pred_region
      %s117 = ssub.s32 %s9, 1
      // Predicated region
      $region13: #{ccnn1_forward.9} parent=11 // pred_check
        %p118 = pneg %p30
      $region14: #{ccnn1_forward.9} parent=11 // pred_check_branch
        %120 = sbr.rel (%p118) target = $region16
      $region15: #{ccnn1_forward.9} parent=11 // pred_region
        _
      $region16: #{ccnn1_forward.9} parent=11 // pred_fallthru
        _
      // Predicated region
      $region17: #{ccnn1_forward.9} parent=11 // pred_check
        %p121 = pneg %p51
      $region18: #{ccnn1_forward.9} parent=11 // pred_check_branch
        %123 = sbr.rel (%p121) target = $region20
      $region19: #{ccnn1_forward.9} parent=11 // pred_region
        _
      $region20: #{ccnn1_forward.9} parent=11 // pred_fallthru
        _
    $region12: #{ccnn1_forward.9} parent=5 // pred_fallthru
      _
    %p124 = scmp.lt.s32.totalorder %s9, 2
    // Predicated region
    $region21: #{ccnn1_forward.9} parent=5 // pred_check
      %p125 = pneg %p124
    $region22: #{ccnn1_forward.9} parent=5 // pred_check_branch
      %127 = sbr.rel (%p125) target = $region24
    $region23: #{ccnn1_forward.9} parent=5 // pred_region
      // Predicated region
      $region25: #{ccnn1_forward.9} parent=23 // pred_check
        %p128 = pneg %p71
      $region26: #{ccnn1_forward.9} parent=23 // pred_check_branch
        %130 = sbr.rel (%p128) target = $region28
      $region27: #{ccnn1_forward.9} parent=23 // pred_region
        %p131 = scmp.lt.s32.totalorder %s9, 1
        %s132 = scalar_select %p131, %s9, 1
        %s133 = smul.addr %s132, 4
        %s134 = smul.addr %s133, 4
        %s135 = scalar_lea.vmem %s2, %s134
      $region28: #{ccnn1_forward.9} parent=23 // pred_fallthru
        _
    $region24: #{ccnn1_forward.9} parent=5 // pred_fallthru
      _
    %p136 = scmp.le.s32.totalorder 1, %s9
    %p137 = scmp.lt.s32.totalorder %s9, 3
    %p138 = pnand %p136, %p137
    %p139 = pneg %p138
    // Predicated region
    $region29: #{ccnn1_forward.9} parent=5 // pred_check
      _
    $region30: #{ccnn1_forward.9} parent=5 // pred_check_branch
      %141 = sbr.rel (%p138) target = $region32
    $region31: #{ccnn1_forward.9} parent=5 // pred_region
      %s142 = ssub.s32 %s9, 1
      %p143 = pneg %p30
      %p144 = pneg %p27
      %p145 = pneg %p51
      %p146 = pneg %p48
      %p147 = scmp.lt.s32.totalorder %s14, 1
      %s148 = scalar_select %p147, %s14, 1
      %s149 = smul.addr %s148, 4
      %s150 = smul.addr %s149, 4
      %s151 = scalar_lea.vmem %s2, %s150
      %p152 = pneg %p77
      %p153 = pneg %p74
      %p154 = pneg %p103
      %p155 = pneg %p100
      %p156 = scmp.lt.s32.totalorder %s14, 1
      %s157 = scalar_select %p156, %s14, 1
      %s158 = smul.addr %s157, 2
      %s159 = smul.addr %s158, 4
      %s160 = scalar_lea.vmem %s3, %s159
      %p161 = scmp.lt.s32.totalorder %s14, 1
      %s162 = scalar_select %p161, %s14, 1
      %s163 = smul.addr %s162, 4
      %s164 = smul.addr %s163, 4
      %s165 = scalar_lea.vmem %s2, %s164
      %p166 = scmp.lt.s32.totalorder %s14, 1
      %s167 = scalar_select %p166, %s14, 1
      %s168 = smul.addr %s167, 2
      %s169 = smul.addr %s168, 4
      %s170 = scalar_lea.vmem %s3, %s169
      %v172 = vld [vmem:[%s165] sm:$0xf]
      %v173 = vld [vmem:[%s0] sm:$0xf]
      %v174 = vld [vmem:[%s0 + $0x4] sm:$0xf]
      %s175 = scalar_lea.vmem %s165, 4
      %v176 = vld [vmem:[%s175] sm:$0xf]
      %s177 = scalar_lea.vmem %s0, 8
      %v178 = vld [vmem:[%s177] sm:$0xf]
      %v179 = vld [vmem:[%s177 + $0x4] sm:$0xf]
      %v182 = vunpack.c.l.b16 %v178
      %v183 = vunpack.c.l.b16 %v179
      %v184 = vpack.c.b16 %v183, %v182
      %vm185 = vcmask 64512
      %v187 = vsel %vm185, %v184, 0
      %vm189 = vcmask 1043456
      %v191 = vsel %vm189, %v176, 0
      %193 = vmatpush.bf16.msra.mxu0 0
      %194 = vmatpush.bf16.msra.mxu0 0
      %195 = vmatpush.bf16.msra.mxu0 0
      %196 = vmatpush.bf16.msra.mxu0 0
      %197 = vmatpush.bf16.msra.mxu0 0
      %198 = vmatpush.bf16.msra.mxu0 0
      %199 = vmatpush.bf16.msra.mxu0 0
      %200 = vmatpush.bf16.msra.mxu0 %v191
      %201 = vmatmul.bf16.gmra.mxu0 %v187
      %v202 = vpop.f32.mrf.mxu0
      %v203 = vadd.f32 0.0, %v202
      %v204 = vpop.f32.mrf.mxu0
      %v205 = vadd.f32 0.0, %v204
      %206 = vdwg.mxu0
      %v209 = vunpack.c.l.b16 %v173
      %v210 = vunpack.c.l.b16 %v174
      %v211 = vpack.c.b16 %v210, %v209
      %v213 = vsel %vm185, %v211, 0
      %v216 = vsel %vm189, %v172, 0
      %218 = vmatpush.bf16.msra.mxu0 0
      %219 = vmatpush.bf16.msra.mxu0 0
      %220 = vmatpush.bf16.msra.mxu0 0
      %221 = vmatpush.bf16.msra.mxu0 0
      %222 = vmatpush.bf16.msra.mxu0 0
      %223 = vmatpush.bf16.msra.mxu0 0
      %224 = vmatpush.bf16.msra.mxu0 0
      %225 = vmatpush.bf16.msra.mxu0 %v216
      %226 = vmatmul.bf16.gmra.mxu0 %v213
      %v227 = vpop.f32.mrf.mxu0
      %v228 = vadd.f32 %v203, %v227
      %v229 = vpop.f32.mrf.mxu0
      %v230 = vadd.f32 %v205, %v229
      %231 = vdwg.mxu0
      %s232 = scalar_lea.vmem %s0, 16
      %v233 = vld [vmem:[%s232] sm:$0xf]
      %v234 = vld [vmem:[%s232 + $0x4] sm:$0xf]
      %v237 = vunpack.c.l.b16 %v233
      %v238 = vunpack.c.l.b16 %v234
      %v239 = vpack.c.b16 %v238, %v237
      %v241 = vunpack.c.l.b16 %v172
      %v242 = vpack.c.b16 %v241, %v241
      %243 = vrot.lane.b32.xlu0 %v242, 127
      %v244 = vpop.permute.xlu0 %243
      %v246 = vsel %vm185, %v239, 0
      %v249 = vsel %vm189, %v244, 0
      %251 = vmatpush.bf16.msra.mxu0 0
      %252 = vmatpush.bf16.msra.mxu0 0
      %253 = vmatpush.bf16.msra.mxu0 0
      %254 = vmatpush.bf16.msra.mxu0 0
      %255 = vmatpush.bf16.msra.mxu0 0
      %256 = vmatpush.bf16.msra.mxu0 0
      %257 = vmatpush.bf16.msra.mxu0 0
      %258 = vmatpush.bf16.msra.mxu0 %v249
      %259 = vmatmul.bf16.gmra.mxu0 %v246
      %v260 = vpop.f32.mrf.mxu0
      %v261 = vadd.f32 0.0, %v260
      %v262 = vpop.f32.mrf.mxu0
      %v263 = vadd.f32 0.0, %v262
      %264 = vdwg.mxu0
      %v265 = vadd.f32 %v228, %v261
      %v266 = vadd.f32 %v230, %v263
      %s267 = scalar_lea.vmem %s165, 8
      %v268 = vld [vmem:[%s267] sm:$0xf]
      %s269 = scalar_lea.vmem %s0, 24
      %v270 = vld [vmem:[%s269] sm:$0xf]
      %v271 = vld [vmem:[%s269 + $0x4] sm:$0xf]
      %v274 = vunpack.c.l.b16 %v270
      %v275 = vunpack.c.l.b16 %v271
      %v276 = vpack.c.b16 %v275, %v274
      %v278 = vsel %vm185, %v276, 0
      %v281 = vsel %vm189, %v268, 0
      %283 = vmatpush.bf16.msra.mxu0 0
      %284 = vmatpush.bf16.msra.mxu0 0
      %285 = vmatpush.bf16.msra.mxu0 0
      %286 = vmatpush.bf16.msra.mxu0 0
      %287 = vmatpush.bf16.msra.mxu0 0
      %288 = vmatpush.bf16.msra.mxu0 0
      %289 = vmatpush.bf16.msra.mxu0 0
      %290 = vmatpush.bf16.msra.mxu0 %v281
      %291 = vmatmul.bf16.gmra.mxu0 %v278
      %v292 = vpop.f32.mrf.mxu0
      %v293 = vadd.f32 0.0, %v292
      %v294 = vpop.f32.mrf.mxu0
      %v295 = vadd.f32 0.0, %v294
      %296 = vdwg.mxu0
      %v297 = vadd.f32 %v265, %v293
      %v298 = vadd.f32 %v266, %v295
      %s299 = scalar_lea.vmem %s165, 12
      %v300 = vld [vmem:[%s299] sm:$0xf]
      %s301 = scalar_lea.vmem %s0, 32
      %v302 = vld [vmem:[%s301] sm:$0xf]
      %v303 = vld [vmem:[%s301 + $0x4] sm:$0xf]
      %v306 = vunpack.c.l.b16 %v302
      %v307 = vunpack.c.l.b16 %v303
      %v308 = vpack.c.b16 %v307, %v306
      %v310 = vsel %vm185, %v308, 0
      %v313 = vsel %vm189, %v300, 0
      %315 = vmatpush.bf16.msra.mxu0 0
      %316 = vmatpush.bf16.msra.mxu0 0
      %317 = vmatpush.bf16.msra.mxu0 0
      %318 = vmatpush.bf16.msra.mxu0 0
      %319 = vmatpush.bf16.msra.mxu0 0
      %320 = vmatpush.bf16.msra.mxu0 0
      %321 = vmatpush.bf16.msra.mxu0 0
      %322 = vmatpush.bf16.msra.mxu0 %v313
      %323 = vmatmul.bf16.gmra.mxu0 %v310
      %v324 = vpop.f32.mrf.mxu0
      %v325 = vadd.f32 0.0, %v324
      %v326 = vpop.f32.mrf.mxu0
      %v327 = vadd.f32 0.0, %v326
      %328 = vdwg.mxu0
      %v329 = vadd.f32 %v297, %v325
      %v330 = vadd.f32 %v298, %v327
      %s331 = scalar_lea.vmem %s0, 40
      %v332 = vld [vmem:[%s331] sm:$0xf]
      %v333 = vld [vmem:[%s331 + $0x4] sm:$0xf]
      %v336 = vunpack.c.l.b16 %v332
      %v337 = vunpack.c.l.b16 %v333
      %v338 = vpack.c.b16 %v337, %v336
      %v340 = vunpack.c.l.b16 %v268
      %v341 = vpack.c.b16 %v340, %v340
      %342 = vrot.lane.b32.xlu0 %v341, 127
      %v343 = vpop.permute.xlu0 %342
      %v345 = vsel %vm185, %v338, 0
      %v348 = vsel %vm189, %v343, 0
      %350 = vmatpush.bf16.msra.mxu0 0
      %351 = vmatpush.bf16.msra.mxu0 0
      %352 = vmatpush.bf16.msra.mxu0 0
      %353 = vmatpush.bf16.msra.mxu0 0
      %354 = vmatpush.bf16.msra.mxu0 0
      %355 = vmatpush.bf16.msra.mxu0 0
      %356 = vmatpush.bf16.msra.mxu0 0
      %357 = vmatpush.bf16.msra.mxu0 %v348
      %358 = vmatmul.bf16.gmra.mxu0 %v345
      %v359 = vpop.f32.mrf.mxu0
      %v360 = vadd.f32 0.0, %v359
      %v361 = vpop.f32.mrf.mxu0
      %v362 = vadd.f32 0.0, %v361
      %363 = vdwg.mxu0
      %v364 = vadd.f32 %v329, %v360
      %v365 = vadd.f32 %v330, %v362
      %s366 = scalar_lea.vmem %s0, 48
      %v367 = vld [vmem:[%s366] sm:$0xf]
      %v368 = vld [vmem:[%s366 + $0x4] sm:$0xf]
      %v371 = vunpack.c.l.b16 %v367
      %v372 = vunpack.c.l.b16 %v368
      %v373 = vpack.c.b16 %v372, %v371
      %374 = vrot.lane.b32.xlu0 %v242, 123
      %v375 = vpop.permute.xlu0 %374
      %v377 = vsel %vm185, %v373, 0
      %v380 = vsel %vm189, %v375, 0
      %382 = vmatpush.bf16.msra.mxu0 0
      %383 = vmatpush.bf16.msra.mxu0 0
      %384 = vmatpush.bf16.msra.mxu0 0
      %385 = vmatpush.bf16.msra.mxu0 0
      %386 = vmatpush.bf16.msra.mxu0 0
      %387 = vmatpush.bf16.msra.mxu0 0
      %388 = vmatpush.bf16.msra.mxu0 0
      %389 = vmatpush.bf16.msra.mxu0 %v380
      %390 = vmatmul.bf16.gmra.mxu0 %v377
      %v391 = vpop.f32.mrf.mxu0
      %v392 = vadd.f32 0.0, %v391
      %v393 = vpop.f32.mrf.mxu0
      %v394 = vadd.f32 0.0, %v393
      %395 = vdwg.mxu0
      %v396 = vadd.f32 %v364, %v392
      %v397 = vadd.f32 %v365, %v394
      %s398 = scalar_lea.vmem %s0, 56
      %v399 = vld [vmem:[%s398] sm:$0xf]
      %v400 = vld [vmem:[%s398 + $0x4] sm:$0xf]
      %v403 = vunpack.c.l.b16 %v399
      %v404 = vunpack.c.l.b16 %v400
      %v405 = vpack.c.b16 %v404, %v403
      %v407 = vunpack.c.l.b16 %v176
      %v408 = vpack.c.b16 %v407, %v407
      %409 = vrot.lane.b32.xlu0 %v408, 123
      %v410 = vpop.permute.xlu0 %409
      %v412 = vsel %vm185, %v405, 0
      %v415 = vsel %vm189, %v410, 0
      %417 = vmatpush.bf16.msra.mxu0 0
      %418 = vmatpush.bf16.msra.mxu0 0
      %419 = vmatpush.bf16.msra.mxu0 0
      %420 = vmatpush.bf16.msra.mxu0 0
      %421 = vmatpush.bf16.msra.mxu0 0
      %422 = vmatpush.bf16.msra.mxu0 0
      %423 = vmatpush.bf16.msra.mxu0 0
      %424 = vmatpush.bf16.msra.mxu0 %v415
      %425 = vmatmul.bf16.gmra.mxu0 %v412
      %v426 = vpop.f32.mrf.mxu0
      %v427 = vadd.f32 0.0, %v426
      %v428 = vpop.f32.mrf.mxu0
      %v429 = vadd.f32 0.0, %v428
      %430 = vdwg.mxu0
      %v431 = vadd.f32 %v396, %v427
      %v432 = vadd.f32 %v397, %v429
      %s433 = scalar_lea.vmem %s0, 64
      %v434 = vld [vmem:[%s433] sm:$0xf]
      %v435 = vld [vmem:[%s433 + $0x4] sm:$0xf]
      %v438 = vunpack.c.l.b16 %v434
      %v439 = vunpack.c.l.b16 %v435
      %v440 = vpack.c.b16 %v439, %v438
      %441 = vrot.lane.b32.xlu0 %v242, 122
      %v442 = vpop.permute.xlu0 %441
      %v444 = vsel %vm185, %v440, 0
      %v447 = vsel %vm189, %v442, 0
      %449 = vmatpush.bf16.msra.mxu0 0
      %450 = vmatpush.bf16.msra.mxu0 0
      %451 = vmatpush.bf16.msra.mxu0 0
      %452 = vmatpush.bf16.msra.mxu0 0
      %453 = vmatpush.bf16.msra.mxu0 0
      %454 = vmatpush.bf16.msra.mxu0 0
      %455 = vmatpush.bf16.msra.mxu0 0
      %456 = vmatpush.bf16.msra.mxu0 %v447
      %457 = vmatmul.bf16.gmra.mxu0 %v444
      %v458 = vpop.f32.mrf.mxu0
      %v459 = vadd.f32 0.0, %v458
      %v460 = vpop.f32.mrf.mxu0
      %v461 = vadd.f32 0.0, %v460
      %462 = vdwg.mxu0
      %v463 = vadd.f32 %v431, %v459
      %v464 = vadd.f32 %v432, %v461
      %v465 = vld [vmem:[%s1] sm:$0xff]
      %v466 = vld [vmem:[%s1 + $0x8] sm:$0xff]
      %468 = vset.pattern.permute.xlu0 0
      %469 = vperm.xlu0 %468, %v465
      %v470 = vpop.permute.xlu0 %469
      %473 = vset.pattern.permute.xlu0 0
      %474 = vperm.xlu0 %473, %v466
      %v475 = vpop.permute.xlu0 %474
      %v477 = vadd.f32 %v463, %v470
      %v478 = vadd.f32 %v464, %v475
      %v479 = vmax.f32 %v477, 0.0
      %v480 = vmax.f32 %v478, 0.0
      %v481 = vpack.c.bf16 %v479, %v479
      %v482 = vpack.c.bf16 %v480, %v480
      %vm483 = vcmask 150528
      %484 = vst.msk [vmem:[%s170] sm:$0xf] %vm483, %v481
      %485 = vst.msk [vmem:[%s170 + $0x4] sm:$0xf] %vm483, %v482
      %p486 = scmp.lt.s32.totalorder %s14, 1
      %s487 = scalar_select %p486, %s14, 1
      %s488 = smul.addr %s487, 2
      %s489 = smul.addr %s488, 4
      %s490 = scalar_lea.vmem %s3, %s489
      // Predicated region
      $region33: #{ccnn1_forward.9} parent=31 // pred_check
        %p491 = pneg %p100
      $region34: #{ccnn1_forward.9} parent=31 // pred_check_branch
        %493 = sbr.rel (%p491) target = $region36
      $region35: #{ccnn1_forward.9} parent=31 // pred_region
        _
      $region36: #{ccnn1_forward.9} parent=31 // pred_fallthru
        _
    $region32: #{ccnn1_forward.9} parent=5 // pred_fallthru
      _
    %p494 = scmp.le.s32.totalorder 2, %s9
    // Predicated region
    $region37: #{ccnn1_forward.9} parent=5 // pred_check
      %p495 = pneg %p494
    $region38: #{ccnn1_forward.9} parent=5 // pred_check_branch
      %497 = sbr.rel (%p495) target = $region40
    $region39: #{ccnn1_forward.9} parent=5 // pred_region
      %s498 = ssub.s32 %s9, 2
      // Predicated region
      $region41: #{ccnn1_forward.9} parent=39 // pred_check
        %p499 = pneg %p106
      $region42: #{ccnn1_forward.9} parent=39 // pred_check_branch
        %501 = sbr.rel (%p499) target = $region44
      $region43: #{ccnn1_forward.9} parent=39 // pred_region
        %p502 = scmp.lt.s32.totalorder %s15, 1
        %s503 = scalar_select %p502, %s15, 1
        %s504 = smul.addr %s503, 2
        %s505 = smul.addr %s504, 4
        %s506 = scalar_lea.vmem %s3, %s505
      $region44: #{ccnn1_forward.9} parent=39 // pred_fallthru
        _
    $region40: #{ccnn1_forward.9} parent=5 // pred_fallthru
      _
  $region6: #{ccnn1_forward.9} parent=0 // loop_footer
    %s13 = sadd.s32 1, %s9
  $region7: #{ccnn1_forward.9} parent=0 // loop_footer_branch
    %8 = sbr.rel target = $region3
  $region8: #{ccnn1_forward.9} parent=0 // loop_exit
    _

// kernel: ccnn1_forward.10
$region0: #{ccnn1_forward.10}
  #allocation0 [shape = 'u32[]', space=smem, size = 0x4, offset = 0x4, fixed_abs, tag = 'smem constant byte address 0x4 - core index']
  #allocation1 [shape = 'u32[72,128]{1,0:T(1,128)}', space=vmem, size = 0x9000, scoped, tag = 'internal scratch']
  %s0 = inlined_call_operand.vmem [shape: bf16[9,32,16], index: 0, kind: input, shape index: {}]
  %s1 = inlined_call_operand.vmem [shape: f32[32,1], index: 1, kind: input, shape index: {}]
  %s2 = inlined_call_operand.vmem [shape: bf16[2,4,16,9], index: 2, kind: input, shape index: {}]
  %s3 = inlined_call_operand.vmem [shape: bf16[2,32,5], index: 3, kind: output, shape index: {}]
  %s4 = sld [smem:[#allocation0]]
  $region45: #{ccnn1_forward.10} parent=0
    _
  %s6 = ssub.s32 1, %s4
  %s7 = scalar_select 0, %s6, %s4
  loop: start=0, step=1, limit=4
  $region2: #{ccnn1_forward.10} parent=0 // loop_pre_header
    _
  $region3: #{ccnn1_forward.10} parent=0 // loop_header
    %s9 = sphi 0, %s13
    %p10 = scmp.ge.s32.totalorder %s9, 4
    %s17 = sphi 0, %s17
    %s19 = sphi 0, %s17
    %s20 = sphi 0, %s19
    %s34 = sphi 0, %s20
    %s38 = sphi 0, %s38
    %s40 = sphi 0, %s38
    %s41 = sphi 0, %s40
    %s55 = sphi 0, %s41
    %s61 = sphi 0, %s63
    %s64 = sphi 0, %s61
    %s65 = sphi 0, %s64
    %s81 = sphi 0, %s65
    %s87 = sphi 0, %s89
    %s90 = sphi 0, %s87
    %s91 = sphi 0, %s90
    %s107 = sphi 0, %s91
  $region4: #{ccnn1_forward.10} parent=0 // loop_header_branch
    %12 = sbr.rel (%p10) target = $region8
  $region5: #{ccnn1_forward.10} parent=0 // loop_body
    %s14 = ssub.s32 %s9, 1
    %s15 = ssub.s32 %s9, 2
    %s16 = sadd.s32 %s9, 1
    %s18 = sadd.s32 %s17, 1
    %p21 = scmp.eq.s32.totalorder %s9, 1
    %p22 = scmp.ne.s32.totalorder %s17, %s19
    %p23 = scmp.eq.s32.totalorder %s9, 0
    %p24 = por %p22, %p23
    %p25 = scmp.ne.s32.totalorder %s17, %s19
    %p26 = scmp.eq.s32.totalorder %s14, 1
    %p27 = por %p25, %p26
    %p28 = scmp.ne.s32.totalorder %s19, %s20
    %p29 = scmp.eq.s32.totalorder %s14, 0
    %p30 = por %p28, %p29
    %p31 = scmp.ne.s32.totalorder %s19, %s20
    %p32 = scmp.eq.s32.totalorder %s15, 1
    %p33 = por %p31, %p32
    %p35 = scmp.ne.s32.totalorder %s20, %s34
    %p36 = scmp.eq.s32.totalorder %s15, 0
    %p37 = por %p35, %p36
    %s39 = sadd.s32 %s38, 1
    %p42 = scmp.eq.s32.totalorder %s9, 1
    %p43 = scmp.ne.s32.totalorder %s38, %s40
    %p44 = scmp.eq.s32.totalorder %s9, 0
    %p45 = por %p43, %p44
    %p46 = scmp.ne.s32.totalorder %s38, %s40
    %p47 = scmp.eq.s32.totalorder %s14, 1
    %p48 = por %p46, %p47
    %p49 = scmp.ne.s32.totalorder %s40, %s41
    %p50 = scmp.eq.s32.totalorder %s14, 0
    %p51 = por %p49, %p50
    %p52 = scmp.ne.s32.totalorder %s40, %s41
    %p53 = scmp.eq.s32.totalorder %s15, 1
    %p54 = por %p52, %p53
    %p56 = scmp.ne.s32.totalorder %s41, %s55
    %p57 = scmp.eq.s32.totalorder %s15, 0
    %p58 = por %p56, %p57
    %s59 = ssub.s32 %s9, %s16
    %p60 = scmp.eq.s32.totalorder %s59, 0
    %s62 = sadd.s32 %s61, 1
    %s63 = scalar_select %p60, %s61, %s62
    %p66 = pneg %p60
    %p67 = scmp.eq.s32.totalorder %s9, 1
    %p68 = por %p66, %p67
    %p69 = scmp.ne.s32.totalorder %s61, %s64
    %p70 = scmp.eq.s32.totalorder %s9, 0
    %p71 = por %p69, %p70
    %p72 = scmp.ne.s32.totalorder %s61, %s64
    %p73 = scmp.eq.s32.totalorder %s14, 1
    %p74 = por %p72, %p73
    %p75 = scmp.ne.s32.totalorder %s64, %s65
    %p76 = scmp.eq.s32.totalorder %s14, 0
    %p77 = por %p75, %p76
    %p78 = scmp.ne.s32.totalorder %s64, %s65
    %p79 = scmp.eq.s32.totalorder %s15, 1
    %p80 = por %p78, %p79
    %p82 = scmp.ne.s32.totalorder %s65, %s81
    %p83 = scmp.eq.s32.totalorder %s15, 0
    %p84 = por %p82, %p83
    %s85 = ssub.s32 %s9, %s16
    %p86 = scmp.eq.s32.totalorder %s85, 0
    %s88 = sadd.s32 %s87, 1
    %s89 = scalar_select %p86, %s87, %s88
    %p92 = pneg %p86
    %p93 = scmp.eq.s32.totalorder %s9, 1
    %p94 = por %p92, %p93
    %p95 = scmp.ne.s32.totalorder %s87, %s90
    %p96 = scmp.eq.s32.totalorder %s9, 0
    %p97 = por %p95, %p96
    %p98 = scmp.ne.s32.totalorder %s87, %s90
    %p99 = scmp.eq.s32.totalorder %s14, 1
    %p100 = por %p98, %p99
    %p101 = scmp.ne.s32.totalorder %s90, %s91
    %p102 = scmp.eq.s32.totalorder %s14, 0
    %p103 = por %p101, %p102
    %p104 = scmp.ne.s32.totalorder %s90, %s91
    %p105 = scmp.eq.s32.totalorder %s15, 1
    %p106 = por %p104, %p105
    %p108 = scmp.ne.s32.totalorder %s91, %s107
    %p109 = scmp.eq.s32.totalorder %s15, 0
    %p110 = por %p108, %p109
    %p111 = scmp.le.s32.totalorder 1, %s9
    %p112 = scmp.lt.s32.totalorder %s9, 3
    %p113 = pnand %p111, %p112
    %p114 = pneg %p113
    // Predicated region
    $region9: #{ccnn1_forward.10} parent=5 // pred_check
      _
    $region10: #{ccnn1_forward.10} parent=5 // pred_check_branch
      %116 = sbr.rel (%p113) target = $region12
    $region11: #{ccnn1_forward.10} parent=5 // pred_region
      %s117 = ssub.s32 %s9, 1
      // Predicated region
      $region13: #{ccnn1_forward.10} parent=11 // pred_check
        %p118 = pneg %p30
      $region14: #{ccnn1_forward.10} parent=11 // pred_check_branch
        %120 = sbr.rel (%p118) target = $region16
      $region15: #{ccnn1_forward.10} parent=11 // pred_region
        _
      $region16: #{ccnn1_forward.10} parent=11 // pred_fallthru
        _
      // Predicated region
      $region17: #{ccnn1_forward.10} parent=11 // pred_check
        %p121 = pneg %p51
      $region18: #{ccnn1_forward.10} parent=11 // pred_check_branch
        %123 = sbr.rel (%p121) target = $region20
      $region19: #{ccnn1_forward.10} parent=11 // pred_region
        _
      $region20: #{ccnn1_forward.10} parent=11 // pred_fallthru
        _
    $region12: #{ccnn1_forward.10} parent=5 // pred_fallthru
      _
    %p124 = scmp.lt.s32.totalorder %s9, 2
    // Predicated region
    $region21: #{ccnn1_forward.10} parent=5 // pred_check
      %p125 = pneg %p124
    $region22: #{ccnn1_forward.10} parent=5 // pred_check_branch
      %127 = sbr.rel (%p125) target = $region24
    $region23: #{ccnn1_forward.10} parent=5 // pred_region
      // Predicated region
      $region25: #{ccnn1_forward.10} parent=23 // pred_check
        %p128 = pneg %p71
      $region26: #{ccnn1_forward.10} parent=23 // pred_check_branch
        %130 = sbr.rel (%p128) target = $region28
      $region27: #{ccnn1_forward.10} parent=23 // pred_region
        %p131 = scmp.lt.s32.totalorder %s9, 1
        %s132 = scalar_select %p131, %s9, 1
        %s133 = smul.addr %s132, 8
        %s134 = smul.addr %s133, 4
        %s135 = scalar_lea.vmem %s2, %s134
      $region28: #{ccnn1_forward.10} parent=23 // pred_fallthru
        _
    $region24: #{ccnn1_forward.10} parent=5 // pred_fallthru
      _
    %p136 = scmp.le.s32.totalorder 1, %s9
    %p137 = scmp.lt.s32.totalorder %s9, 3
    %p138 = pnand %p136, %p137
    %p139 = pneg %p138
    // Predicated region
    $region29: #{ccnn1_forward.10} parent=5 // pred_check
      _
    $region30: #{ccnn1_forward.10} parent=5 // pred_check_branch
      %141 = sbr.rel (%p138) target = $region32
    $region31: #{ccnn1_forward.10} parent=5 // pred_region
      %s142 = ssub.s32 %s9, 1
      %p143 = pneg %p30
      %p144 = pneg %p27
      %p145 = pneg %p51
      %p146 = pneg %p48
      %p147 = scmp.lt.s32.totalorder %s14, 1
      %s148 = scalar_select %p147, %s14, 1
      %s149 = smul.addr %s148, 8
      %s150 = smul.addr %s149, 4
      %s151 = scalar_lea.vmem %s2, %s150
      %p152 = pneg %p77
      %p153 = pneg %p74
      %p154 = pneg %p103
      %p155 = pneg %p100
      %p156 = scmp.lt.s32.totalorder %s14, 1
      %s157 = scalar_select %p156, %s14, 1
      %s158 = smul.addr %s157, 4
      %s159 = smul.addr %s158, 4
      %s160 = scalar_lea.vmem %s3, %s159
      %p161 = scmp.lt.s32.totalorder %s14, 1
      %s162 = scalar_select %p161, %s14, 1
      %s163 = smul.addr %s162, 8
      %s164 = smul.addr %s163, 4
      %s165 = scalar_lea.vmem %s2, %s164
      %p166 = scmp.lt.s32.totalorder %s14, 1
      %s167 = scalar_select %p166, %s14, 1
      %s168 = smul.addr %s167, 4
      %s169 = smul.addr %s168, 4
      %s170 = scalar_lea.vmem %s3, %s169
      %v172 = vld [vmem:[%s165] sm:$0xf]
      %v173 = vld [vmem:[%s165 + $0x4] sm:$0xf]
      %v174 = vld [vmem:[%s0] sm:$0xf]
      %v175 = vld [vmem:[%s0 + $0x4] sm:$0xf]
      %v176 = vld [vmem:[%s0 + $0x8] sm:$0xf]
      %v177 = vld [vmem:[%s0 + $0xc] sm:$0xf]
      %s178 = scalar_lea.vmem %s165, 8
      %v179 = vld [vmem:[%s178] sm:$0xf]
      %v180 = vld [vmem:[%s178 + $0x4] sm:$0xf]
      %s181 = scalar_lea.vmem %s0, 16
      %v182 = vld [vmem:[%s181] sm:$0xf]
      %v183 = vld [vmem:[%s181 + $0x4] sm:$0xf]
      %v184 = vld [vmem:[%s181 + $0x8] sm:$0xf]
      %v185 = vld [vmem:[%s181 + $0xc] sm:$0xf]
      %v190 = vunpack.c.l.b16 %v182
      %v191 = vunpack.c.l.b16 %v183
      %v192 = vunpack.c.l.b16 %v184
      %v193 = vunpack.c.l.b16 %v185
      %v194 = vpack.c.b16 %v191, %v190
      %v195 = vpack.c.b16 %v193, %v192
      %v198 = vunpack.c.l.b16 %v179
      %v199 = vunpack.c.l.b16 %v180
      %v200 = vpack.c.b16 %v199, %v198
      %vm202 = vcmask 130048
      %v204 = vsel %vm202, %v194, 0
      %v207 = vsel %vm202, %v195, 0
      %209 = vmatpush.bf16.msra.mxu0 0
      %210 = vmatpush.bf16.msra.mxu0 0
      %211 = vmatpush.bf16.msra.mxu0 0
      %212 = vmatpush.bf16.msra.mxu0 0
      %213 = vmatpush.bf16.msra.mxu0 0
      %214 = vmatpush.bf16.msra.mxu0 0
      %215 = vmatpush.bf16.msra.mxu0 0
      %216 = vmatpush.bf16.msra.mxu0 %v200
      %217 = vmatmul.bf16.gmra.mxu0 %v204
      %v218 = vpop.f32.mrf.mxu0
      %v219 = vadd.f32 0.0, %v218
      %v220 = vpop.f32.mrf.mxu0
      %v221 = vadd.f32 0.0, %v220
      %222 = vmatmul.bf16.gmra.mxu0 %v207
      %v223 = vpop.f32.mrf.mxu0
      %v224 = vadd.f32 0.0, %v223
      %v225 = vpop.f32.mrf.mxu0
      %v226 = vadd.f32 0.0, %v225
      %227 = vdwg.mxu0
      %v232 = vunpack.c.l.b16 %v174
      %v233 = vunpack.c.l.b16 %v175
      %v234 = vunpack.c.l.b16 %v176
      %v235 = vunpack.c.l.b16 %v177
      %v236 = vpack.c.b16 %v233, %v232
      %v237 = vpack.c.b16 %v235, %v234
      %v240 = vunpack.c.l.b16 %v172
      %v241 = vunpack.c.l.b16 %v173
      %v242 = vpack.c.b16 %v241, %v240
      %v245 = vsel %vm202, %v236, 0
      %v248 = vsel %vm202, %v237, 0
      %250 = vmatpush.bf16.msra.mxu0 0
      %251 = vmatpush.bf16.msra.mxu0 0
      %252 = vmatpush.bf16.msra.mxu0 0
      %253 = vmatpush.bf16.msra.mxu0 0
      %254 = vmatpush.bf16.msra.mxu0 0
      %255 = vmatpush.bf16.msra.mxu0 0
      %256 = vmatpush.bf16.msra.mxu0 0
      %257 = vmatpush.bf16.msra.mxu0 %v242
      %258 = vmatmul.bf16.gmra.mxu0 %v245
      %v259 = vpop.f32.mrf.mxu0
      %v260 = vadd.f32 %v219, %v259
      %v261 = vpop.f32.mrf.mxu0
      %v262 = vadd.f32 %v221, %v261
      %263 = vmatmul.bf16.gmra.mxu0 %v248
      %v264 = vpop.f32.mrf.mxu0
      %v265 = vadd.f32 %v224, %v264
      %v266 = vpop.f32.mrf.mxu0
      %v267 = vadd.f32 %v226, %v266
      %268 = vdwg.mxu0
      %s269 = scalar_lea.vmem %s0, 32
      %v270 = vld [vmem:[%s269] sm:$0xf]
      %v271 = vld [vmem:[%s269 + $0x4] sm:$0xf]
      %v272 = vld [vmem:[%s269 + $0x8] sm:$0xf]
      %v273 = vld [vmem:[%s269 + $0xc] sm:$0xf]
      %v278 = vunpack.c.l.b16 %v270
      %v279 = vunpack.c.l.b16 %v271
      %v280 = vunpack.c.l.b16 %v272
      %v281 = vunpack.c.l.b16 %v273
      %v282 = vpack.c.b16 %v279, %v278
      %v283 = vpack.c.b16 %v281, %v280
      %284 = vrot.lane.b32.xlu0 %v242, 127
      %v285 = vpop.permute.xlu0 %284
      %v288 = vsel %vm202, %v282, 0
      %v291 = vsel %vm202, %v283, 0
      %293 = vmatpush.bf16.msra.mxu0 0
      %294 = vmatpush.bf16.msra.mxu0 0
      %295 = vmatpush.bf16.msra.mxu0 0
      %296 = vmatpush.bf16.msra.mxu0 0
      %297 = vmatpush.bf16.msra.mxu0 0
      %298 = vmatpush.bf16.msra.mxu0 0
      %299 = vmatpush.bf16.msra.mxu0 0
      %300 = vmatpush.bf16.msra.mxu0 %v285
      %301 = vmatmul.bf16.gmra.mxu0 %v288
      %v302 = vpop.f32.mrf.mxu0
      %v303 = vadd.f32 0.0, %v302
      %v304 = vpop.f32.mrf.mxu0
      %v305 = vadd.f32 0.0, %v304
      %306 = vmatmul.bf16.gmra.mxu0 %v291
      %v307 = vpop.f32.mrf.mxu0
      %v308 = vadd.f32 0.0, %v307
      %v309 = vpop.f32.mrf.mxu0
      %v310 = vadd.f32 0.0, %v309
      %311 = vdwg.mxu0
      %v312 = vadd.f32 %v260, %v303
      %v313 = vadd.f32 %v262, %v305
      %v314 = vadd.f32 %v265, %v308
      %v315 = vadd.f32 %v267, %v310
      %s316 = scalar_lea.vmem %s165, 16
      %v317 = vld [vmem:[%s316] sm:$0xf]
      %v318 = vld [vmem:[%s316 + $0x4] sm:$0xf]
      %s319 = scalar_lea.vmem %s0, 48
      %v320 = vld [vmem:[%s319] sm:$0xf]
      %v321 = vld [vmem:[%s319 + $0x4] sm:$0xf]
      %v322 = vld [vmem:[%s319 + $0x8] sm:$0xf]
      %v323 = vld [vmem:[%s319 + $0xc] sm:$0xf]
      %v328 = vunpack.c.l.b16 %v320
      %v329 = vunpack.c.l.b16 %v321
      %v330 = vunpack.c.l.b16 %v322
      %v331 = vunpack.c.l.b16 %v323
      %v332 = vpack.c.b16 %v329, %v328
      %v333 = vpack.c.b16 %v331, %v330
      %v336 = vunpack.c.l.b16 %v317
      %v337 = vunpack.c.l.b16 %v318
      %v338 = vpack.c.b16 %v337, %v336
      %v341 = vsel %vm202, %v332, 0
      %v344 = vsel %vm202, %v333, 0
      %346 = vmatpush.bf16.msra.mxu0 0
      %347 = vmatpush.bf16.msra.mxu0 0
      %348 = vmatpush.bf16.msra.mxu0 0
      %349 = vmatpush.bf16.msra.mxu0 0
      %350 = vmatpush.bf16.msra.mxu0 0
      %351 = vmatpush.bf16.msra.mxu0 0
      %352 = vmatpush.bf16.msra.mxu0 0
      %353 = vmatpush.bf16.msra.mxu0 %v338
      %354 = vmatmul.bf16.gmra.mxu0 %v341
      %v355 = vpop.f32.mrf.mxu0
      %v356 = vadd.f32 0.0, %v355
      %v357 = vpop.f32.mrf.mxu0
      %v358 = vadd.f32 0.0, %v357
      %359 = vmatmul.bf16.gmra.mxu0 %v344
      %v360 = vpop.f32.mrf.mxu0
      %v361 = vadd.f32 0.0, %v360
      %v362 = vpop.f32.mrf.mxu0
      %v363 = vadd.f32 0.0, %v362
      %364 = vdwg.mxu0
      %v365 = vadd.f32 %v312, %v356
      %v366 = vadd.f32 %v313, %v358
      %v367 = vadd.f32 %v314, %v361
      %v368 = vadd.f32 %v315, %v363
      %s369 = scalar_lea.vmem %s165, 24
      %v370 = vld [vmem:[%s369] sm:$0xf]
      %v371 = vld [vmem:[%s369 + $0x4] sm:$0xf]
      %s372 = scalar_lea.vmem %s0, 64
      %v373 = vld [vmem:[%s372] sm:$0xf]
      %v374 = vld [vmem:[%s372 + $0x4] sm:$0xf]
      %v375 = vld [vmem:[%s372 + $0x8] sm:$0xf]
      %v376 = vld [vmem:[%s372 + $0xc] sm:$0xf]
      %v381 = vunpack.c.l.b16 %v373
      %v382 = vunpack.c.l.b16 %v374
      %v383 = vunpack.c.l.b16 %v375
      %v384 = vunpack.c.l.b16 %v376
      %v385 = vpack.c.b16 %v382, %v381
      %v386 = vpack.c.b16 %v384, %v383
      %v389 = vunpack.c.l.b16 %v370
      %v390 = vunpack.c.l.b16 %v371
      %v391 = vpack.c.b16 %v390, %v389
      %v394 = vsel %vm202, %v385, 0
      %v397 = vsel %vm202, %v386, 0
      %399 = vmatpush.bf16.msra.mxu0 0
      %400 = vmatpush.bf16.msra.mxu0 0
      %401 = vmatpush.bf16.msra.mxu0 0
      %402 = vmatpush.bf16.msra.mxu0 0
      %403 = vmatpush.bf16.msra.mxu0 0
      %404 = vmatpush.bf16.msra.mxu0 0
      %405 = vmatpush.bf16.msra.mxu0 0
      %406 = vmatpush.bf16.msra.mxu0 %v391
      %407 = vmatmul.bf16.gmra.mxu0 %v394
      %v408 = vpop.f32.mrf.mxu0
      %v409 = vadd.f32 0.0, %v408
      %v410 = vpop.f32.mrf.mxu0
      %v411 = vadd.f32 0.0, %v410
      %412 = vmatmul.bf16.gmra.mxu0 %v397
      %v413 = vpop.f32.mrf.mxu0
      %v414 = vadd.f32 0.0, %v413
      %v415 = vpop.f32.mrf.mxu0
      %v416 = vadd.f32 0.0, %v415
      %417 = vdwg.mxu0
      %v418 = vadd.f32 %v365, %v409
      %v419 = vadd.f32 %v366, %v411
      %v420 = vadd.f32 %v367, %v414
      %v421 = vadd.f32 %v368, %v416
      %s422 = scalar_lea.vmem %s0, 80
      %v423 = vld [vmem:[%s422] sm:$0xf]
      %v424 = vld [vmem:[%s422 + $0x4] sm:$0xf]
      %v425 = vld [vmem:[%s422 + $0x8] sm:$0xf]
      %v426 = vld [vmem:[%s422 + $0xc] sm:$0xf]
      %v431 = vunpack.c.l.b16 %v423
      %v432 = vunpack.c.l.b16 %v424
      %v433 = vunpack.c.l.b16 %v425
      %v434 = vunpack.c.l.b16 %v426
      %v435 = vpack.c.b16 %v432, %v431
      %v436 = vpack.c.b16 %v434, %v433
      %437 = vrot.lane.b32.xlu0 %v338, 127
      %v438 = vpop.permute.xlu0 %437
      %v441 = vsel %vm202, %v435, 0
      %v444 = vsel %vm202, %v436, 0
      %446 = vmatpush.bf16.msra.mxu0 0
      %447 = vmatpush.bf16.msra.mxu0 0
      %448 = vmatpush.bf16.msra.mxu0 0
      %449 = vmatpush.bf16.msra.mxu0 0
      %450 = vmatpush.bf16.msra.mxu0 0
      %451 = vmatpush.bf16.msra.mxu0 0
      %452 = vmatpush.bf16.msra.mxu0 0
      %453 = vmatpush.bf16.msra.mxu0 %v438
      %454 = vmatmul.bf16.gmra.mxu0 %v441
      %v455 = vpop.f32.mrf.mxu0
      %v456 = vadd.f32 0.0, %v455
      %v457 = vpop.f32.mrf.mxu0
      %v458 = vadd.f32 0.0, %v457
      %459 = vmatmul.bf16.gmra.mxu0 %v444
      %v460 = vpop.f32.mrf.mxu0
      %v461 = vadd.f32 0.0, %v460
      %v462 = vpop.f32.mrf.mxu0
      %v463 = vadd.f32 0.0, %v462
      %464 = vdwg.mxu0
      %v465 = vadd.f32 %v418, %v456
      %v466 = vadd.f32 %v419, %v458
      %v467 = vadd.f32 %v420, %v461
      %v468 = vadd.f32 %v421, %v463
      %s469 = scalar_lea.vmem %s0, 96
      %v470 = vld [vmem:[%s469] sm:$0xf]
      %v471 = vld [vmem:[%s469 + $0x4] sm:$0xf]
      %v472 = vld [vmem:[%s469 + $0x8] sm:$0xf]
      %v473 = vld [vmem:[%s469 + $0xc] sm:$0xf]
      %v478 = vunpack.c.l.b16 %v470
      %v479 = vunpack.c.l.b16 %v471
      %v480 = vunpack.c.l.b16 %v472
      %v481 = vunpack.c.l.b16 %v473
      %v482 = vpack.c.b16 %v479, %v478
      %v483 = vpack.c.b16 %v481, %v480
      %484 = vrot.lane.b32.xlu0 %v242, 125
      %v485 = vpop.permute.xlu0 %484
      %v488 = vsel %vm202, %v482, 0
      %v491 = vsel %vm202, %v483, 0
      %493 = vmatpush.bf16.msra.mxu0 0
      %494 = vmatpush.bf16.msra.mxu0 0
      %495 = vmatpush.bf16.msra.mxu0 0
      %496 = vmatpush.bf16.msra.mxu0 0
      %497 = vmatpush.bf16.msra.mxu0 0
      %498 = vmatpush.bf16.msra.mxu0 0
      %499 = vmatpush.bf16.msra.mxu0 0
      %500 = vmatpush.bf16.msra.mxu0 %v485
      %501 = vmatmul.bf16.gmra.mxu0 %v488
      %v502 = vpop.f32.mrf.mxu0
      %v503 = vadd.f32 0.0, %v502
      %v504 = vpop.f32.mrf.mxu0
      %v505 = vadd.f32 0.0, %v504
      %506 = vmatmul.bf16.gmra.mxu0 %v491
      %v507 = vpop.f32.mrf.mxu0
      %v508 = vadd.f32 0.0, %v507
      %v509 = vpop.f32.mrf.mxu0
      %v510 = vadd.f32 0.0, %v509
      %511 = vdwg.mxu0
      %v512 = vadd.f32 %v465, %v503
      %v513 = vadd.f32 %v466, %v505
      %v514 = vadd.f32 %v467, %v508
      %v515 = vadd.f32 %v468, %v510
      %s516 = scalar_lea.vmem %s0, 112
      %v517 = vld [vmem:[%s516] sm:$0xf]
      %v518 = vld [vmem:[%s516 + $0x4] sm:$0xf]
      %v519 = vld [vmem:[%s516 + $0x8] sm:$0xf]
      %v520 = vld [vmem:[%s516 + $0xc] sm:$0xf]
      %v525 = vunpack.c.l.b16 %v517
      %v526 = vunpack.c.l.b16 %v518
      %v527 = vunpack.c.l.b16 %v519
      %v528 = vunpack.c.l.b16 %v520
      %v529 = vpack.c.b16 %v526, %v525
      %v530 = vpack.c.b16 %v528, %v527
      %531 = vrot.lane.b32.xlu0 %v200, 125
      %v532 = vpop.permute.xlu0 %531
      %v535 = vsel %vm202, %v529, 0
      %v538 = vsel %vm202, %v530, 0
      %540 = vmatpush.bf16.msra.mxu0 0
      %541 = vmatpush.bf16.msra.mxu0 0
      %542 = vmatpush.bf16.msra.mxu0 0
      %543 = vmatpush.bf16.msra.mxu0 0
      %544 = vmatpush.bf16.msra.mxu0 0
      %545 = vmatpush.bf16.msra.mxu0 0
      %546 = vmatpush.bf16.msra.mxu0 0
      %547 = vmatpush.bf16.msra.mxu0 %v532
      %548 = vmatmul.bf16.gmra.mxu0 %v535
      %v549 = vpop.f32.mrf.mxu0
      %v550 = vadd.f32 0.0, %v549
      %v551 = vpop.f32.mrf.mxu0
      %v552 = vadd.f32 0.0, %v551
      %553 = vmatmul.bf16.gmra.mxu0 %v538
      %v554 = vpop.f32.mrf.mxu0
      %v555 = vadd.f32 0.0, %v554
      %v556 = vpop.f32.mrf.mxu0
      %v557 = vadd.f32 0.0, %v556
      %558 = vdwg.mxu0
      %v559 = vadd.f32 %v512, %v550
      %v560 = vadd.f32 %v513, %v552
      %v561 = vadd.f32 %v514, %v555
      %v562 = vadd.f32 %v515, %v557
      %s563 = scalar_lea.vmem %s0, 128
      %v564 = vld [vmem:[%s563] sm:$0xf]
      %v565 = vld [vmem:[%s563 + $0x4] sm:$0xf]
      %v566 = vld [vmem:[%s563 + $0x8] sm:$0xf]
      %v567 = vld [vmem:[%s563 + $0xc] sm:$0xf]
      %v572 = vunpack.c.l.b16 %v564
      %v573 = vunpack.c.l.b16 %v565
      %v574 = vunpack.c.l.b16 %v566
      %v575 = vunpack.c.l.b16 %v567
      %v576 = vpack.c.b16 %v573, %v572
      %v577 = vpack.c.b16 %v575, %v574
      %578 = vrot.lane.b32.xlu0 %v242, 124
      %v579 = vpop.permute.xlu0 %578
      %v582 = vsel %vm202, %v576, 0
      %v585 = vsel %vm202, %v577, 0
      %587 = vmatpush.bf16.msra.mxu0 0
      %588 = vmatpush.bf16.msra.mxu0 0
      %589 = vmatpush.bf16.msra.mxu0 0
      %590 = vmatpush.bf16.msra.mxu0 0
      %591 = vmatpush.bf16.msra.mxu0 0
      %592 = vmatpush.bf16.msra.mxu0 0
      %593 = vmatpush.bf16.msra.mxu0 0
      %594 = vmatpush.bf16.msra.mxu0 %v579
      %595 = vmatmul.bf16.gmra.mxu0 %v582
      %v596 = vpop.f32.mrf.mxu0
      %v597 = vadd.f32 0.0, %v596
      %v598 = vpop.f32.mrf.mxu0
      %v599 = vadd.f32 0.0, %v598
      %600 = vmatmul.bf16.gmra.mxu0 %v585
      %v601 = vpop.f32.mrf.mxu0
      %v602 = vadd.f32 0.0, %v601
      %v603 = vpop.f32.mrf.mxu0
      %v604 = vadd.f32 0.0, %v603
      %605 = vdwg.mxu0
      %v606 = vadd.f32 %v559, %v597
      %v607 = vadd.f32 %v560, %v599
      %v608 = vadd.f32 %v561, %v602
      %v609 = vadd.f32 %v562, %v604
      %v610 = vld [vmem:[%s1] sm:$0xff]
      %v611 = vld [vmem:[%s1 + $0x8] sm:$0xff]
      %v612 = vld [vmem:[%s1 + $0x10] sm:$0xff]
      %v613 = vld [vmem:[%s1 + $0x18] sm:$0xff]
      %615 = vset.pattern.permute.xlu0 0
      %616 = vperm.xlu0 %615, %v610
      %v617 = vpop.permute.xlu0 %616
      %620 = vset.pattern.permute.xlu0 0
      %621 = vperm.xlu0 %620, %v611
      %v622 = vpop.permute.xlu0 %621
      %625 = vset.pattern.permute.xlu0 0
      %626 = vperm.xlu0 %625, %v612
      %v627 = vpop.permute.xlu0 %626
      %630 = vset.pattern.permute.xlu0 0
      %631 = vperm.xlu0 %630, %v613
      %v632 = vpop.permute.xlu0 %631
      %v634 = vadd.f32 %v606, %v617
      %v635 = vadd.f32 %v607, %v622
      %v636 = vadd.f32 %v608, %v627
      %v637 = vadd.f32 %v609, %v632
      %v638 = vmax.f32 %v634, 0.0
      %v639 = vmax.f32 %v635, 0.0
      %v640 = vmax.f32 %v636, 0.0
      %v641 = vmax.f32 %v637, 0.0
      %v642 = vpack.c.bf16 %v638, %v638
      %v643 = vpack.c.bf16 %v639, %v639
      %v644 = vpack.c.bf16 %v640, %v640
      %v645 = vpack.c.bf16 %v641, %v641
      %vm646 = vcmask 35840
      %647 = vst.msk [vmem:[%s170] sm:$0xf] %vm646, %v642
      %648 = vst.msk [vmem:[%s170 + $0x4] sm:$0xf] %vm646, %v643
      %649 = vst.msk [vmem:[%s170 + $0x8] sm:$0xf] %vm646, %v644
      %650 = vst.msk [vmem:[%s170 + $0xc] sm:$0xf] %vm646, %v645
      %p651 = scmp.lt.s32.totalorder %s14, 1
      %s652 = scalar_select %p651, %s14, 1
      %s653 = smul.addr %s652, 4
      %s654 = smul.addr %s653, 4
      %s655 = scalar_lea.vmem %s3, %s654
      // Predicated region
      $region33: #{ccnn1_forward.10} parent=31 // pred_check
        %p656 = pneg %p100
      $region34: #{ccnn1_forward.10} parent=31 // pred_check_branch
        %658 = sbr.rel (%p656) target = $region36
      $region35: #{ccnn1_forward.10} parent=31 // pred_region
        _
      $region36: #{ccnn1_forward.10} parent=31 // pred_fallthru
        _
    $region32: #{ccnn1_forward.10} parent=5 // pred_fallthru
      _
    %p659 = scmp.le.s32.totalorder 2, %s9
    // Predicated region
    $region37: #{ccnn1_forward.10} parent=5 // pred_check
      %p660 = pneg %p659
    $region38: #{ccnn1_forward.10} parent=5 // pred_check_branch
      %662 = sbr.rel (%p660) target = $region40
    $region39: #{ccnn1_forward.10} parent=5 // pred_region
      %s663 = ssub.s32 %s9, 2
      // Predicated region
      $region41: #{ccnn1_forward.10} parent=39 // pred_check
        %p664 = pneg %p106
      $region42: #{ccnn1_forward.10} parent=39 // pred_check_branch
        %666 = sbr.rel (%p664) target = $region44
      $region43: #{ccnn1_forward.10} parent=39 // pred_region
        %p667 = scmp.lt.s32.totalorder %s15, 1
        %s668 = scalar_select %p667, %s15, 1
        %s669 = smul.addr %s668, 4
        %s670 = smul.addr %s669, 4
        %s671 = scalar_lea.vmem %s3, %s670
      $region44: #{ccnn1_forward.10} parent=39 // pred_fallthru
        _
    $region40: #{ccnn1_forward.10} parent=5 // pred_fallthru
      _
  $region6: #{ccnn1_forward.10} parent=0 // loop_footer
    %s13 = sadd.s32 1, %s9
  $region7: #{ccnn1_forward.10} parent=0 // loop_footer_branch
    %8 = sbr.rel target = $region3
  $region8: #{ccnn1_forward.10} parent=0 // loop_exit
    _

// kernel: ccnn1_forward.11
$region0: #{ccnn1_forward.11}
  #allocation0 [shape = 'u32[]', space=smem, size = 0x4, offset = 0x4, fixed_abs, tag = 'smem constant byte address 0x4 - core index']
  #allocation1 [shape = 'u32[72,128]{1,0:T(1,128)}', space=vmem, size = 0x9000, scoped, tag = 'internal scratch']
  %s0 = inlined_call_operand.vmem [shape: bf16[9,64,32], index: 0, kind: input, shape index: {}]
  %s1 = inlined_call_operand.vmem [shape: f32[64,1], index: 1, kind: input, shape index: {}]
  %s2 = inlined_call_operand.vmem [shape: bf16[2,4,32,4], index: 2, kind: input, shape index: {}]
  %s3 = inlined_call_operand.vmem [shape: bf16[2,64,1], index: 3, kind: output, shape index: {}]
  %s4 = sld [smem:[#allocation0]]
  $region45: #{ccnn1_forward.11} parent=0
    _
  %s6 = ssub.s32 1, %s4
  %s7 = scalar_select 0, %s6, %s4
  loop: start=0, step=1, limit=4
  $region2: #{ccnn1_forward.11} parent=0 // loop_pre_header
    _
  $region3: #{ccnn1_forward.11} parent=0 // loop_header
    %s9 = sphi 0, %s13
    %p10 = scmp.ge.s32.totalorder %s9, 4
    %s17 = sphi 0, %s17
    %s19 = sphi 0, %s17
    %s20 = sphi 0, %s19
    %s34 = sphi 0, %s20
    %s38 = sphi 0, %s38
    %s40 = sphi 0, %s38
    %s41 = sphi 0, %s40
    %s55 = sphi 0, %s41
    %s61 = sphi 0, %s63
    %s64 = sphi 0, %s61
    %s65 = sphi 0, %s64
    %s81 = sphi 0, %s65
    %s87 = sphi 0, %s89
    %s90 = sphi 0, %s87
    %s91 = sphi 0, %s90
    %s107 = sphi 0, %s91
  $region4: #{ccnn1_forward.11} parent=0 // loop_header_branch
    %12 = sbr.rel (%p10) target = $region8
  $region5: #{ccnn1_forward.11} parent=0 // loop_body
    %s14 = ssub.s32 %s9, 1
    %s15 = ssub.s32 %s9, 2
    %s16 = sadd.s32 %s9, 1
    %s18 = sadd.s32 %s17, 1
    %p21 = scmp.eq.s32.totalorder %s9, 1
    %p22 = scmp.ne.s32.totalorder %s17, %s19
    %p23 = scmp.eq.s32.totalorder %s9, 0
    %p24 = por %p22, %p23
    %p25 = scmp.ne.s32.totalorder %s17, %s19
    %p26 = scmp.eq.s32.totalorder %s14, 1
    %p27 = por %p25, %p26
    %p28 = scmp.ne.s32.totalorder %s19, %s20
    %p29 = scmp.eq.s32.totalorder %s14, 0
    %p30 = por %p28, %p29
    %p31 = scmp.ne.s32.totalorder %s19, %s20
    %p32 = scmp.eq.s32.totalorder %s15, 1
    %p33 = por %p31, %p32
    %p35 = scmp.ne.s32.totalorder %s20, %s34
    %p36 = scmp.eq.s32.totalorder %s15, 0
    %p37 = por %p35, %p36
    %s39 = sadd.s32 %s38, 1
    %p42 = scmp.eq.s32.totalorder %s9, 1
    %p43 = scmp.ne.s32.totalorder %s38, %s40
    %p44 = scmp.eq.s32.totalorder %s9, 0
    %p45 = por %p43, %p44
    %p46 = scmp.ne.s32.totalorder %s38, %s40
    %p47 = scmp.eq.s32.totalorder %s14, 1
    %p48 = por %p46, %p47
    %p49 = scmp.ne.s32.totalorder %s40, %s41
    %p50 = scmp.eq.s32.totalorder %s14, 0
    %p51 = por %p49, %p50
    %p52 = scmp.ne.s32.totalorder %s40, %s41
    %p53 = scmp.eq.s32.totalorder %s15, 1
    %p54 = por %p52, %p53
    %p56 = scmp.ne.s32.totalorder %s41, %s55
    %p57 = scmp.eq.s32.totalorder %s15, 0
    %p58 = por %p56, %p57
    %s59 = ssub.s32 %s9, %s16
    %p60 = scmp.eq.s32.totalorder %s59, 0
    %s62 = sadd.s32 %s61, 1
    %s63 = scalar_select %p60, %s61, %s62
    %p66 = pneg %p60
    %p67 = scmp.eq.s32.totalorder %s9, 1
    %p68 = por %p66, %p67
    %p69 = scmp.ne.s32.totalorder %s61, %s64
    %p70 = scmp.eq.s32.totalorder %s9, 0
    %p71 = por %p69, %p70
    %p72 = scmp.ne.s32.totalorder %s61, %s64
    %p73 = scmp.eq.s32.totalorder %s14, 1
    %p74 = por %p72, %p73
    %p75 = scmp.ne.s32.totalorder %s64, %s65
    %p76 = scmp.eq.s32.totalorder %s14, 0
    %p77 = por %p75, %p76
    %p78 = scmp.ne.s32.totalorder %s64, %s65
    %p79 = scmp.eq.s32.totalorder %s15, 1
    %p80 = por %p78, %p79
    %p82 = scmp.ne.s32.totalorder %s65, %s81
    %p83 = scmp.eq.s32.totalorder %s15, 0
    %p84 = por %p82, %p83
    %s85 = ssub.s32 %s9, %s16
    %p86 = scmp.eq.s32.totalorder %s85, 0
    %s88 = sadd.s32 %s87, 1
    %s89 = scalar_select %p86, %s87, %s88
    %p92 = pneg %p86
    %p93 = scmp.eq.s32.totalorder %s9, 1
    %p94 = por %p92, %p93
    %p95 = scmp.ne.s32.totalorder %s87, %s90
    %p96 = scmp.eq.s32.totalorder %s9, 0
    %p97 = por %p95, %p96
    %p98 = scmp.ne.s32.totalorder %s87, %s90
    %p99 = scmp.eq.s32.totalorder %s14, 1
    %p100 = por %p98, %p99
    %p101 = scmp.ne.s32.totalorder %s90, %s91
    %p102 = scmp.eq.s32.totalorder %s14, 0
    %p103 = por %p101, %p102
    %p104 = scmp.ne.s32.totalorder %s90, %s91
    %p105 = scmp.eq.s32.totalorder %s15, 1
    %p106 = por %p104, %p105
    %p108 = scmp.ne.s32.totalorder %s91, %s107
    %p109 = scmp.eq.s32.totalorder %s15, 0
    %p110 = por %p108, %p109
    %p111 = scmp.le.s32.totalorder 1, %s9
    %p112 = scmp.lt.s32.totalorder %s9, 3
    %p113 = pnand %p111, %p112
    %p114 = pneg %p113
    // Predicated region
    $region9: #{ccnn1_forward.11} parent=5 // pred_check
      _
    $region10: #{ccnn1_forward.11} parent=5 // pred_check_branch
      %116 = sbr.rel (%p113) target = $region12
    $region11: #{ccnn1_forward.11} parent=5 // pred_region
      %s117 = ssub.s32 %s9, 1
      // Predicated region
      $region13: #{ccnn1_forward.11} parent=11 // pred_check
        %p118 = pneg %p30
      $region14: #{ccnn1_forward.11} parent=11 // pred_check_branch
        %120 = sbr.rel (%p118) target = $region16
      $region15: #{ccnn1_forward.11} parent=11 // pred_region
        _
      $region16: #{ccnn1_forward.11} parent=11 // pred_fallthru
        _
      // Predicated region
      $region17: #{ccnn1_forward.11} parent=11 // pred_check
        %p121 = pneg %p51
      $region18: #{ccnn1_forward.11} parent=11 // pred_check_branch
        %123 = sbr.rel (%p121) target = $region20
      $region19: #{ccnn1_forward.11} parent=11 // pred_region
        _
      $region20: #{ccnn1_forward.11} parent=11 // pred_fallthru
        _
    $region12: #{ccnn1_forward.11} parent=5 // pred_fallthru
      _
    %p124 = scmp.lt.s32.totalorder %s9, 2
    // Predicated region
    $region21: #{ccnn1_forward.11} parent=5 // pred_check
      %p125 = pneg %p124
    $region22: #{ccnn1_forward.11} parent=5 // pred_check_branch
      %127 = sbr.rel (%p125) target = $region24
    $region23: #{ccnn1_forward.11} parent=5 // pred_region
      // Predicated region
      $region25: #{ccnn1_forward.11} parent=23 // pred_check
        %p128 = pneg %p71
      $region26: #{ccnn1_forward.11} parent=23 // pred_check_branch
        %130 = sbr.rel (%p128) target = $region28
      $region27: #{ccnn1_forward.11} parent=23 // pred_region
        %p131 = scmp.lt.s32.totalorder %s9, 1
        %s132 = scalar_select %p131, %s9, 1
        %s133 = smul.addr %s132, 16
        %s134 = smul.addr %s133, 4
        %s135 = scalar_lea.vmem %s2, %s134
      $region28: #{ccnn1_forward.11} parent=23 // pred_fallthru
        _
    $region24: #{ccnn1_forward.11} parent=5 // pred_fallthru
      _
    %p136 = scmp.le.s32.totalorder 1, %s9
    %p137 = scmp.lt.s32.totalorder %s9, 3
    %p138 = pnand %p136, %p137
    %p139 = pneg %p138
    // Predicated region
    $region29: #{ccnn1_forward.11} parent=5 // pred_check
      _
    $region30: #{ccnn1_forward.11} parent=5 // pred_check_branch
      %141 = sbr.rel (%p138) target = $region32
    $region31: #{ccnn1_forward.11} parent=5 // pred_region
      %s142 = ssub.s32 %s9, 1
      %p143 = pneg %p30
      %p144 = pneg %p27
      %p145 = pneg %p51
      %p146 = pneg %p48
      %p147 = scmp.lt.s32.totalorder %s14, 1
      %s148 = scalar_select %p147, %s14, 1
      %s149 = smul.addr %s148, 16
      %s150 = smul.addr %s149, 4
      %s151 = scalar_lea.vmem %s2, %s150
      %p152 = pneg %p77
      %p153 = pneg %p74
      %p154 = pneg %p103
      %p155 = pneg %p100
      %p156 = scmp.lt.s32.totalorder %s14, 1
      %s157 = scalar_select %p156, %s14, 1
      %s158 = smul.addr %s157, 8
      %s159 = smul.addr %s158, 4
      %s160 = scalar_lea.vmem %s3, %s159
      %p161 = scmp.lt.s32.totalorder %s14, 1
      %s162 = scalar_select %p161, %s14, 1
      %s163 = smul.addr %s162, 16
      %s164 = smul.addr %s163, 4
      %s165 = scalar_lea.vmem %s2, %s164
      %p166 = scmp.lt.s32.totalorder %s14, 1
      %s167 = scalar_select %p166, %s14, 1
      %s168 = smul.addr %s167, 8
      %s169 = smul.addr %s168, 4
      %s170 = scalar_lea.vmem %s3, %s169
      %v172 = vld [vmem:[%s165] sm:$0xf]
      %v173 = vld [vmem:[%s165 + $0x4] sm:$0xf]
      %v174 = vld [vmem:[%s165 + $0x8] sm:$0xf]
      %v175 = vld [vmem:[%s165 + $0xc] sm:$0xf]
      %v176 = vld [vmem:[%s0] sm:$0xf]
      %v177 = vld [vmem:[%s0 + $0x4] sm:$0xf]
      %v178 = vld [vmem:[%s0 + $0x8] sm:$0xf]
      %v179 = vld [vmem:[%s0 + $0xc] sm:$0xf]
      %v180 = vld [vmem:[%s0 + $0x10] sm:$0xf]
      %v181 = vld [vmem:[%s0 + $0x14] sm:$0xf]
      %v182 = vld [vmem:[%s0 + $0x18] sm:$0xf]
      %v183 = vld [vmem:[%s0 + $0x1c] sm:$0xf]
      %s184 = scalar_lea.vmem %s165, 16
      %v185 = vld [vmem:[%s184] sm:$0xf]
      %v186 = vld [vmem:[%s184 + $0x4] sm:$0xf]
      %v187 = vld [vmem:[%s184 + $0x8] sm:$0xf]
      %v188 = vld [vmem:[%s184 + $0xc] sm:$0xf]
      %s189 = scalar_lea.vmem %s0, 32
      %v190 = vld [vmem:[%s189] sm:$0xf]
      %v191 = vld [vmem:[%s189 + $0x4] sm:$0xf]
      %v192 = vld [vmem:[%s189 + $0x8] sm:$0xf]
      %v193 = vld [vmem:[%s189 + $0xc] sm:$0xf]
      %v194 = vld [vmem:[%s189 + $0x10] sm:$0xf]
      %v195 = vld [vmem:[%s189 + $0x14] sm:$0xf]
      %v196 = vld [vmem:[%s189 + $0x18] sm:$0xf]
      %v197 = vld [vmem:[%s189 + $0x1c] sm:$0xf]
      %v206 = vunpack.c.l.b16 %v190
      %v207 = vunpack.c.l.b16 %v191
      %v208 = vunpack.c.l.b16 %v192
      %v209 = vunpack.c.l.b16 %v193
      %v210 = vunpack.c.l.b16 %v194
      %v211 = vunpack.c.l.b16 %v195
      %v212 = vunpack.c.l.b16 %v196
      %v213 = vunpack.c.l.b16 %v197
      %v214 = vpack.c.b16 %v207, %v206
      %v215 = vpack.c.b16 %v209, %v208
      %v216 = vpack.c.b16 %v211, %v210
      %v217 = vpack.c.b16 %v213, %v212
      %v222 = vunpack.c.l.b16 %v185
      %v223 = vunpack.c.l.b16 %v186
      %v224 = vunpack.c.l.b16 %v187
      %v225 = vunpack.c.l.b16 %v188
      %v226 = vpack.c.b16 %v223, %v222
      %v227 = vpack.c.b16 %v225, %v224
      %vm230 = vcmask 261120
      %v232 = vsel %vm230, %v214, 0
      %v235 = vsel %vm230, %v215, 0
      %v238 = vsel %vm230, %v216, 0
      %v241 = vsel %vm230, %v217, 0
      %243 = vmatpush.bf16.msra.mxu0 0
      %244 = vmatpush.bf16.msra.mxu0 0
      %245 = vmatpush.bf16.msra.mxu0 0
      %246 = vmatpush.bf16.msra.mxu0 0
      %247 = vmatpush.bf16.msra.mxu0 0
      %248 = vmatpush.bf16.msra.mxu0 0
      %249 = vmatpush.bf16.msra.mxu0 %v227
      %250 = vmatpush.bf16.msra.mxu0 %v226
      %251 = vmatmul.bf16.gmra.mxu0 %v232
      %v252 = vpop.f32.mrf.mxu0
      %v253 = vadd.f32 0.0, %v252
      %v254 = vpop.f32.mrf.mxu0
      %v255 = vadd.f32 0.0, %v254
      %256 = vmatmul.bf16.gmra.mxu0 %v235
      %v257 = vpop.f32.mrf.mxu0
      %v258 = vadd.f32 0.0, %v257
      %v259 = vpop.f32.mrf.mxu0
      %v260 = vadd.f32 0.0, %v259
      %261 = vmatmul.bf16.gmra.mxu0 %v238
      %v262 = vpop.f32.mrf.mxu0
      %v263 = vadd.f32 0.0, %v262
      %v264 = vpop.f32.mrf.mxu0
      %v265 = vadd.f32 0.0, %v264
      %266 = vmatmul.bf16.gmra.mxu0 %v241
      %v267 = vpop.f32.mrf.mxu0
      %v268 = vadd.f32 0.0, %v267
      %v269 = vpop.f32.mrf.mxu0
      %v270 = vadd.f32 0.0, %v269
      %271 = vdwg.mxu0
      %v280 = vunpack.c.l.b16 %v176
      %v281 = vunpack.c.l.b16 %v177
      %v282 = vunpack.c.l.b16 %v178
      %v283 = vunpack.c.l.b16 %v179
      %v284 = vunpack.c.l.b16 %v180
      %v285 = vunpack.c.l.b16 %v181
      %v286 = vunpack.c.l.b16 %v182
      %v287 = vunpack.c.l.b16 %v183
      %v288 = vpack.c.b16 %v281, %v280
      %v289 = vpack.c.b16 %v283, %v282
      %v290 = vpack.c.b16 %v285, %v284
      %v291 = vpack.c.b16 %v287, %v286
      %v296 = vunpack.c.l.b16 %v172
      %v297 = vunpack.c.l.b16 %v173
      %v298 = vunpack.c.l.b16 %v174
      %v299 = vunpack.c.l.b16 %v175
      %v300 = vpack.c.b16 %v297, %v296
      %v301 = vpack.c.b16 %v299, %v298
      %v305 = vsel %vm230, %v288, 0
      %v308 = vsel %vm230, %v289, 0
      %v311 = vsel %vm230, %v290, 0
      %v314 = vsel %vm230, %v291, 0
      %316 = vmatpush.bf16.msra.mxu0 0
      %317 = vmatpush.bf16.msra.mxu0 0
      %318 = vmatpush.bf16.msra.mxu0 0
      %319 = vmatpush.bf16.msra.mxu0 0
      %320 = vmatpush.bf16.msra.mxu0 0
      %321 = vmatpush.bf16.msra.mxu0 0
      %322 = vmatpush.bf16.msra.mxu0 %v301
      %323 = vmatpush.bf16.msra.mxu0 %v300
      %324 = vmatmul.bf16.gmra.mxu0 %v305
      %v325 = vpop.f32.mrf.mxu0
      %v326 = vadd.f32 %v253, %v325
      %v327 = vpop.f32.mrf.mxu0
      %v328 = vadd.f32 %v255, %v327
      %329 = vmatmul.bf16.gmra.mxu0 %v308
      %v330 = vpop.f32.mrf.mxu0
      %v331 = vadd.f32 %v258, %v330
      %v332 = vpop.f32.mrf.mxu0
      %v333 = vadd.f32 %v260, %v332
      %334 = vmatmul.bf16.gmra.mxu0 %v311
      %v335 = vpop.f32.mrf.mxu0
      %v336 = vadd.f32 %v263, %v335
      %v337 = vpop.f32.mrf.mxu0
      %v338 = vadd.f32 %v265, %v337
      %339 = vmatmul.bf16.gmra.mxu0 %v314
      %v340 = vpop.f32.mrf.mxu0
      %v341 = vadd.f32 %v268, %v340
      %v342 = vpop.f32.mrf.mxu0
      %v343 = vadd.f32 %v270, %v342
      %344 = vdwg.mxu0
      %s345 = scalar_lea.vmem %s0, 64
      %v346 = vld [vmem:[%s345] sm:$0xf]
      %v347 = vld [vmem:[%s345 + $0x4] sm:$0xf]
      %v348 = vld [vmem:[%s345 + $0x8] sm:$0xf]
      %v349 = vld [vmem:[%s345 + $0xc] sm:$0xf]
      %v350 = vld [vmem:[%s345 + $0x10] sm:$0xf]
      %v351 = vld [vmem:[%s345 + $0x14] sm:$0xf]
      %v352 = vld [vmem:[%s345 + $0x18] sm:$0xf]
      %v353 = vld [vmem:[%s345 + $0x1c] sm:$0xf]
      %v362 = vunpack.c.l.b16 %v346
      %v363 = vunpack.c.l.b16 %v347
      %v364 = vunpack.c.l.b16 %v348
      %v365 = vunpack.c.l.b16 %v349
      %v366 = vunpack.c.l.b16 %v350
      %v367 = vunpack.c.l.b16 %v351
      %v368 = vunpack.c.l.b16 %v352
      %v369 = vunpack.c.l.b16 %v353
      %v370 = vpack.c.b16 %v363, %v362
      %v371 = vpack.c.b16 %v365, %v364
      %v372 = vpack.c.b16 %v367, %v366
      %v373 = vpack.c.b16 %v369, %v368
      %374 = vrot.lane.b32.xlu0 %v300, 127
      %v375 = vpop.permute.xlu0 %374
      %376 = vrot.lane.b32.xlu0 %v301, 127
      %v377 = vpop.permute.xlu0 %376
      %v381 = vsel %vm230, %v370, 0
      %v384 = vsel %vm230, %v371, 0
      %v387 = vsel %vm230, %v372, 0
      %v390 = vsel %vm230, %v373, 0
      %392 = vmatpush.bf16.msra.mxu0 0
      %393 = vmatpush.bf16.msra.mxu0 0
      %394 = vmatpush.bf16.msra.mxu0 0
      %395 = vmatpush.bf16.msra.mxu0 0
      %396 = vmatpush.bf16.msra.mxu0 0
      %397 = vmatpush.bf16.msra.mxu0 0
      %398 = vmatpush.bf16.msra.mxu0 %v377
      %399 = vmatpush.bf16.msra.mxu0 %v375
      %400 = vmatmul.bf16.gmra.mxu0 %v381
      %v401 = vpop.f32.mrf.mxu0
      %v402 = vadd.f32 0.0, %v401
      %v403 = vpop.f32.mrf.mxu0
      %v404 = vadd.f32 0.0, %v403
      %405 = vmatmul.bf16.gmra.mxu0 %v384
      %v406 = vpop.f32.mrf.mxu0
      %v407 = vadd.f32 0.0, %v406
      %v408 = vpop.f32.mrf.mxu0
      %v409 = vadd.f32 0.0, %v408
      %410 = vmatmul.bf16.gmra.mxu0 %v387
      %v411 = vpop.f32.mrf.mxu0
      %v412 = vadd.f32 0.0, %v411
      %v413 = vpop.f32.mrf.mxu0
      %v414 = vadd.f32 0.0, %v413
      %415 = vmatmul.bf16.gmra.mxu0 %v390
      %v416 = vpop.f32.mrf.mxu0
      %v417 = vadd.f32 0.0, %v416
      %v418 = vpop.f32.mrf.mxu0
      %v419 = vadd.f32 0.0, %v418
      %420 = vdwg.mxu0
      %v421 = vadd.f32 %v326, %v402
      %v422 = vadd.f32 %v328, %v404
      %v423 = vadd.f32 %v331, %v407
      %v424 = vadd.f32 %v333, %v409
      %v425 = vadd.f32 %v336, %v412
      %v426 = vadd.f32 %v338, %v414
      %v427 = vadd.f32 %v341, %v417
      %v428 = vadd.f32 %v343, %v419
      %s429 = scalar_lea.vmem %s165, 32
      %v430 = vld [vmem:[%s429] sm:$0xf]
      %v431 = vld [vmem:[%s429 + $0x4] sm:$0xf]
      %v432 = vld [vmem:[%s429 + $0x8] sm:$0xf]
      %v433 = vld [vmem:[%s429 + $0xc] sm:$0xf]
      %s434 = scalar_lea.vmem %s0, 96
      %v435 = vld [vmem:[%s434] sm:$0xf]
      %v436 = vld [vmem:[%s434 + $0x4] sm:$0xf]
      %v437 = vld [vmem:[%s434 + $0x8] sm:$0xf]
      %v438 = vld [vmem:[%s434 + $0xc] sm:$0xf]
      %v439 = vld [vmem:[%s434 + $0x10] sm:$0xf]
      %v440 = vld [vmem:[%s434 + $0x14] sm:$0xf]
      %v441 = vld [vmem:[%s434 + $0x18] sm:$0xf]
      %v442 = vld [vmem:[%s434 + $0x1c] sm:$0xf]
      %v451 = vunpack.c.l.b16 %v435
      %v452 = vunpack.c.l.b16 %v436
      %v453 = vunpack.c.l.b16 %v437
      %v454 = vunpack.c.l.b16 %v438
      %v455 = vunpack.c.l.b16 %v439
      %v456 = vunpack.c.l.b16 %v440
      %v457 = vunpack.c.l.b16 %v441
      %v458 = vunpack.c.l.b16 %v442
      %v459 = vpack.c.b16 %v452, %v451
      %v460 = vpack.c.b16 %v454, %v453
      %v461 = vpack.c.b16 %v456, %v455
      %v462 = vpack.c.b16 %v458, %v457
      %v467 = vunpack.c.l.b16 %v430
      %v468 = vunpack.c.l.b16 %v431
      %v469 = vunpack.c.l.b16 %v432
      %v470 = vunpack.c.l.b16 %v433
      %v471 = vpack.c.b16 %v468, %v467
      %v472 = vpack.c.b16 %v470, %v469
      %v476 = vsel %vm230, %v459, 0
      %v479 = vsel %vm230, %v460, 0
      %v482 = vsel %vm230, %v461, 0
      %v485 = vsel %vm230, %v462, 0
      %487 = vmatpush.bf16.msra.mxu0 0
      %488 = vmatpush.bf16.msra.mxu0 0
      %489 = vmatpush.bf16.msra.mxu0 0
      %490 = vmatpush.bf16.msra.mxu0 0
      %491 = vmatpush.bf16.msra.mxu0 0
      %492 = vmatpush.bf16.msra.mxu0 0
      %493 = vmatpush.bf16.msra.mxu0 %v472
      %494 = vmatpush.bf16.msra.mxu0 %v471
      %495 = vmatmul.bf16.gmra.mxu0 %v476
      %v496 = vpop.f32.mrf.mxu0
      %v497 = vadd.f32 0.0, %v496
      %v498 = vpop.f32.mrf.mxu0
      %v499 = vadd.f32 0.0, %v498
      %500 = vmatmul.bf16.gmra.mxu0 %v479
      %v501 = vpop.f32.mrf.mxu0
      %v502 = vadd.f32 0.0, %v501
      %v503 = vpop.f32.mrf.mxu0
      %v504 = vadd.f32 0.0, %v503
      %505 = vmatmul.bf16.gmra.mxu0 %v482
      %v506 = vpop.f32.mrf.mxu0
      %v507 = vadd.f32 0.0, %v506
      %v508 = vpop.f32.mrf.mxu0
      %v509 = vadd.f32 0.0, %v508
      %510 = vmatmul.bf16.gmra.mxu0 %v485
      %v511 = vpop.f32.mrf.mxu0
      %v512 = vadd.f32 0.0, %v511
      %v513 = vpop.f32.mrf.mxu0
      %v514 = vadd.f32 0.0, %v513
      %515 = vdwg.mxu0
      %v516 = vadd.f32 %v421, %v497
      %v517 = vadd.f32 %v422, %v499
      %v518 = vadd.f32 %v423, %v502
      %v519 = vadd.f32 %v424, %v504
      %v520 = vadd.f32 %v425, %v507
      %v521 = vadd.f32 %v426, %v509
      %v522 = vadd.f32 %v427, %v512
      %v523 = vadd.f32 %v428, %v514
      %s524 = scalar_lea.vmem %s165, 48
      %v525 = vld [vmem:[%s524] sm:$0xf]
      %v526 = vld [vmem:[%s524 + $0x4] sm:$0xf]
      %v527 = vld [vmem:[%s524 + $0x8] sm:$0xf]
      %v528 = vld [vmem:[%s524 + $0xc] sm:$0xf]
      %s529 = scalar_lea.vmem %s0, 128
      %v530 = vld [vmem:[%s529] sm:$0xf]
      %v531 = vld [vmem:[%s529 + $0x4] sm:$0xf]
      %v532 = vld [vmem:[%s529 + $0x8] sm:$0xf]
      %v533 = vld [vmem:[%s529 + $0xc] sm:$0xf]
      %v534 = vld [vmem:[%s529 + $0x10] sm:$0xf]
      %v535 = vld [vmem:[%s529 + $0x14] sm:$0xf]
      %v536 = vld [vmem:[%s529 + $0x18] sm:$0xf]
      %v537 = vld [vmem:[%s529 + $0x1c] sm:$0xf]
      %v546 = vunpack.c.l.b16 %v530
      %v547 = vunpack.c.l.b16 %v531
      %v548 = vunpack.c.l.b16 %v532
      %v549 = vunpack.c.l.b16 %v533
      %v550 = vunpack.c.l.b16 %v534
      %v551 = vunpack.c.l.b16 %v535
      %v552 = vunpack.c.l.b16 %v536
      %v553 = vunpack.c.l.b16 %v537
      %v554 = vpack.c.b16 %v547, %v546
      %v555 = vpack.c.b16 %v549, %v548
      %v556 = vpack.c.b16 %v551, %v550
      %v557 = vpack.c.b16 %v553, %v552
      %v562 = vunpack.c.l.b16 %v525
      %v563 = vunpack.c.l.b16 %v526
      %v564 = vunpack.c.l.b16 %v527
      %v565 = vunpack.c.l.b16 %v528
      %v566 = vpack.c.b16 %v563, %v562
      %v567 = vpack.c.b16 %v565, %v564
      %v571 = vsel %vm230, %v554, 0
      %v574 = vsel %vm230, %v555, 0
      %v577 = vsel %vm230, %v556, 0
      %v580 = vsel %vm230, %v557, 0
      %582 = vmatpush.bf16.msra.mxu0 0
      %583 = vmatpush.bf16.msra.mxu0 0
      %584 = vmatpush.bf16.msra.mxu0 0
      %585 = vmatpush.bf16.msra.mxu0 0
      %586 = vmatpush.bf16.msra.mxu0 0
      %587 = vmatpush.bf16.msra.mxu0 0
      %588 = vmatpush.bf16.msra.mxu0 %v567
      %589 = vmatpush.bf16.msra.mxu0 %v566
      %590 = vmatmul.bf16.gmra.mxu0 %v571
      %v591 = vpop.f32.mrf.mxu0
      %v592 = vadd.f32 0.0, %v591
      %v593 = vpop.f32.mrf.mxu0
      %v594 = vadd.f32 0.0, %v593
      %595 = vmatmul.bf16.gmra.mxu0 %v574
      %v596 = vpop.f32.mrf.mxu0
      %v597 = vadd.f32 0.0, %v596
      %v598 = vpop.f32.mrf.mxu0
      %v599 = vadd.f32 0.0, %v598
      %600 = vmatmul.bf16.gmra.mxu0 %v577
      %v601 = vpop.f32.mrf.mxu0
      %v602 = vadd.f32 0.0, %v601
      %v603 = vpop.f32.mrf.mxu0
      %v604 = vadd.f32 0.0, %v603
      %605 = vmatmul.bf16.gmra.mxu0 %v580
      %v606 = vpop.f32.mrf.mxu0
      %v607 = vadd.f32 0.0, %v606
      %v608 = vpop.f32.mrf.mxu0
      %v609 = vadd.f32 0.0, %v608
      %610 = vdwg.mxu0
      %v611 = vadd.f32 %v516, %v592
      %v612 = vadd.f32 %v517, %v594
      %v613 = vadd.f32 %v518, %v597
      %v614 = vadd.f32 %v519, %v599
      %v615 = vadd.f32 %v520, %v602
      %v616 = vadd.f32 %v521, %v604
      %v617 = vadd.f32 %v522, %v607
      %v618 = vadd.f32 %v523, %v609
      %s619 = scalar_lea.vmem %s0, 160
      %v620 = vld [vmem:[%s619] sm:$0xf]
      %v621 = vld [vmem:[%s619 + $0x4] sm:$0xf]
      %v622 = vld [vmem:[%s619 + $0x8] sm:$0xf]
      %v623 = vld [vmem:[%s619 + $0xc] sm:$0xf]
      %v624 = vld [vmem:[%s619 + $0x10] sm:$0xf]
      %v625 = vld [vmem:[%s619 + $0x14] sm:$0xf]
      %v626 = vld [vmem:[%s619 + $0x18] sm:$0xf]
      %v627 = vld [vmem:[%s619 + $0x1c] sm:$0xf]
      %v636 = vunpack.c.l.b16 %v620
      %v637 = vunpack.c.l.b16 %v621
      %v638 = vunpack.c.l.b16 %v622
      %v639 = vunpack.c.l.b16 %v623
      %v640 = vunpack.c.l.b16 %v624
      %v641 = vunpack.c.l.b16 %v625
      %v642 = vunpack.c.l.b16 %v626
      %v643 = vunpack.c.l.b16 %v627
      %v644 = vpack.c.b16 %v637, %v636
      %v645 = vpack.c.b16 %v639, %v638
      %v646 = vpack.c.b16 %v641, %v640
      %v647 = vpack.c.b16 %v643, %v642
      %648 = vrot.lane.b32.xlu0 %v471, 127
      %v649 = vpop.permute.xlu0 %648
      %650 = vrot.lane.b32.xlu0 %v472, 127
      %v651 = vpop.permute.xlu0 %650
      %v655 = vsel %vm230, %v644, 0
      %v658 = vsel %vm230, %v645, 0
      %v661 = vsel %vm230, %v646, 0
      %v664 = vsel %vm230, %v647, 0
      %666 = vmatpush.bf16.msra.mxu0 0
      %667 = vmatpush.bf16.msra.mxu0 0
      %668 = vmatpush.bf16.msra.mxu0 0
      %669 = vmatpush.bf16.msra.mxu0 0
      %670 = vmatpush.bf16.msra.mxu0 0
      %671 = vmatpush.bf16.msra.mxu0 0
      %672 = vmatpush.bf16.msra.mxu0 %v651
      %673 = vmatpush.bf16.msra.mxu0 %v649
      %674 = vmatmul.bf16.gmra.mxu0 %v655
      %v675 = vpop.f32.mrf.mxu0
      %v676 = vadd.f32 0.0, %v675
      %v677 = vpop.f32.mrf.mxu0
      %v678 = vadd.f32 0.0, %v677
      %679 = vmatmul.bf16.gmra.mxu0 %v658
      %v680 = vpop.f32.mrf.mxu0
      %v681 = vadd.f32 0.0, %v680
      %v682 = vpop.f32.mrf.mxu0
      %v683 = vadd.f32 0.0, %v682
      %684 = vmatmul.bf16.gmra.mxu0 %v661
      %v685 = vpop.f32.mrf.mxu0
      %v686 = vadd.f32 0.0, %v685
      %v687 = vpop.f32.mrf.mxu0
      %v688 = vadd.f32 0.0, %v687
      %689 = vmatmul.bf16.gmra.mxu0 %v664
      %v690 = vpop.f32.mrf.mxu0
      %v691 = vadd.f32 0.0, %v690
      %v692 = vpop.f32.mrf.mxu0
      %v693 = vadd.f32 0.0, %v692
      %694 = vdwg.mxu0
      %v695 = vadd.f32 %v611, %v676
      %v696 = vadd.f32 %v612, %v678
      %v697 = vadd.f32 %v613, %v681
      %v698 = vadd.f32 %v614, %v683
      %v699 = vadd.f32 %v615, %v686
      %v700 = vadd.f32 %v616, %v688
      %v701 = vadd.f32 %v617, %v691
      %v702 = vadd.f32 %v618, %v693
      %s703 = scalar_lea.vmem %s0, 192
      %v704 = vld [vmem:[%s703] sm:$0xf]
      %v705 = vld [vmem:[%s703 + $0x4] sm:$0xf]
      %v706 = vld [vmem:[%s703 + $0x8] sm:$0xf]
      %v707 = vld [vmem:[%s703 + $0xc] sm:$0xf]
      %v708 = vld [vmem:[%s703 + $0x10] sm:$0xf]
      %v709 = vld [vmem:[%s703 + $0x14] sm:$0xf]
      %v710 = vld [vmem:[%s703 + $0x18] sm:$0xf]
      %v711 = vld [vmem:[%s703 + $0x1c] sm:$0xf]
      %v720 = vunpack.c.l.b16 %v704
      %v721 = vunpack.c.l.b16 %v705
      %v722 = vunpack.c.l.b16 %v706
      %v723 = vunpack.c.l.b16 %v707
      %v724 = vunpack.c.l.b16 %v708
      %v725 = vunpack.c.l.b16 %v709
      %v726 = vunpack.c.l.b16 %v710
      %v727 = vunpack.c.l.b16 %v711
      %v728 = vpack.c.b16 %v721, %v720
      %v729 = vpack.c.b16 %v723, %v722
      %v730 = vpack.c.b16 %v725, %v724
      %v731 = vpack.c.b16 %v727, %v726
      %732 = vrot.lane.b32.xlu0 %v300, 126
      %v733 = vpop.permute.xlu0 %732
      %734 = vrot.lane.b32.xlu0 %v301, 126
      %v735 = vpop.permute.xlu0 %734
      %v739 = vsel %vm230, %v728, 0
      %v742 = vsel %vm230, %v729, 0
      %v745 = vsel %vm230, %v730, 0
      %v748 = vsel %vm230, %v731, 0
      %750 = vmatpush.bf16.msra.mxu0 0
      %751 = vmatpush.bf16.msra.mxu0 0
      %752 = vmatpush.bf16.msra.mxu0 0
      %753 = vmatpush.bf16.msra.mxu0 0
      %754 = vmatpush.bf16.msra.mxu0 0
      %755 = vmatpush.bf16.msra.mxu0 0
      %756 = vmatpush.bf16.msra.mxu0 %v735
      %757 = vmatpush.bf16.msra.mxu0 %v733
      %758 = vmatmul.bf16.gmra.mxu0 %v739
      %v759 = vpop.f32.mrf.mxu0
      %v760 = vadd.f32 0.0, %v759
      %v761 = vpop.f32.mrf.mxu0
      %v762 = vadd.f32 0.0, %v761
      %763 = vmatmul.bf16.gmra.mxu0 %v742
      %v764 = vpop.f32.mrf.mxu0
      %v765 = vadd.f32 0.0, %v764
      %v766 = vpop.f32.mrf.mxu0
      %v767 = vadd.f32 0.0, %v766
      %768 = vmatmul.bf16.gmra.mxu0 %v745
      %v769 = vpop.f32.mrf.mxu0
      %v770 = vadd.f32 0.0, %v769
      %v771 = vpop.f32.mrf.mxu0
      %v772 = vadd.f32 0.0, %v771
      %773 = vmatmul.bf16.gmra.mxu0 %v748
      %v774 = vpop.f32.mrf.mxu0
      %v775 = vadd.f32 0.0, %v774
      %v776 = vpop.f32.mrf.mxu0
      %v777 = vadd.f32 0.0, %v776
      %778 = vdwg.mxu0
      %v779 = vadd.f32 %v695, %v760
      %v780 = vadd.f32 %v696, %v762
      %v781 = vadd.f32 %v697, %v765
      %v782 = vadd.f32 %v698, %v767
      %v783 = vadd.f32 %v699, %v770
      %v784 = vadd.f32 %v700, %v772
      %v785 = vadd.f32 %v701, %v775
      %v786 = vadd.f32 %v702, %v777
      %s787 = scalar_lea.vmem %s0, 224
      %v788 = vld [vmem:[%s787] sm:$0xf]
      %v789 = vld [vmem:[%s787 + $0x4] sm:$0xf]
      %v790 = vld [vmem:[%s787 + $0x8] sm:$0xf]
      %v791 = vld [vmem:[%s787 + $0xc] sm:$0xf]
      %v792 = vld [vmem:[%s787 + $0x10] sm:$0xf]
      %v793 = vld [vmem:[%s787 + $0x14] sm:$0xf]
      %v794 = vld [vmem:[%s787 + $0x18] sm:$0xf]
      %v795 = vld [vmem:[%s787 + $0x1c] sm:$0xf]
      %v804 = vunpack.c.l.b16 %v788
      %v805 = vunpack.c.l.b16 %v789
      %v806 = vunpack.c.l.b16 %v790
      %v807 = vunpack.c.l.b16 %v791
      %v808 = vunpack.c.l.b16 %v792
      %v809 = vunpack.c.l.b16 %v793
      %v810 = vunpack.c.l.b16 %v794
      %v811 = vunpack.c.l.b16 %v795
      %v812 = vpack.c.b16 %v805, %v804
      %v813 = vpack.c.b16 %v807, %v806
      %v814 = vpack.c.b16 %v809, %v808
      %v815 = vpack.c.b16 %v811, %v810
      %816 = vrot.lane.b32.xlu0 %v226, 126
      %v817 = vpop.permute.xlu0 %816
      %818 = vrot.lane.b32.xlu0 %v227, 126
      %v819 = vpop.permute.xlu0 %818
      %v823 = vsel %vm230, %v812, 0
      %v826 = vsel %vm230, %v813, 0
      %v829 = vsel %vm230, %v814, 0
      %v832 = vsel %vm230, %v815, 0
      %834 = vmatpush.bf16.msra.mxu0 0
      %835 = vmatpush.bf16.msra.mxu0 0
      %836 = vmatpush.bf16.msra.mxu0 0
      %837 = vmatpush.bf16.msra.mxu0 0
      %838 = vmatpush.bf16.msra.mxu0 0
      %839 = vmatpush.bf16.msra.mxu0 0
      %840 = vmatpush.bf16.msra.mxu0 %v819
      %841 = vmatpush.bf16.msra.mxu0 %v817
      %842 = vmatmul.bf16.gmra.mxu0 %v823
      %v843 = vpop.f32.mrf.mxu0
      %v844 = vadd.f32 0.0, %v843
      %v845 = vpop.f32.mrf.mxu0
      %v846 = vadd.f32 0.0, %v845
      %847 = vmatmul.bf16.gmra.mxu0 %v826
      %v848 = vpop.f32.mrf.mxu0
      %v849 = vadd.f32 0.0, %v848
      %v850 = vpop.f32.mrf.mxu0
      %v851 = vadd.f32 0.0, %v850
      %852 = vmatmul.bf16.gmra.mxu0 %v829
      %v853 = vpop.f32.mrf.mxu0
      %v854 = vadd.f32 0.0, %v853
      %v855 = vpop.f32.mrf.mxu0
      %v856 = vadd.f32 0.0, %v855
      %857 = vmatmul.bf16.gmra.mxu0 %v832
      %v858 = vpop.f32.mrf.mxu0
      %v859 = vadd.f32 0.0, %v858
      %v860 = vpop.f32.mrf.mxu0
      %v861 = vadd.f32 0.0, %v860
      %862 = vdwg.mxu0
      %v863 = vadd.f32 %v779, %v844
      %v864 = vadd.f32 %v780, %v846
      %v865 = vadd.f32 %v781, %v849
      %v866 = vadd.f32 %v782, %v851
      %v867 = vadd.f32 %v783, %v854
      %v868 = vadd.f32 %v784, %v856
      %v869 = vadd.f32 %v785, %v859
      %v870 = vadd.f32 %v786, %v861
      %s871 = scalar_lea.vmem %s0, 256
      %v872 = vld [vmem:[%s871] sm:$0xf]
      %v873 = vld [vmem:[%s871 + $0x4] sm:$0xf]
      %v874 = vld [vmem:[%s871 + $0x8] sm:$0xf]
      %v875 = vld [vmem:[%s871 + $0xc] sm:$0xf]
      %v876 = vld [vmem:[%s871 + $0x10] sm:$0xf]
      %v877 = vld [vmem:[%s871 + $0x14] sm:$0xf]
      %v878 = vld [vmem:[%s871 + $0x18] sm:$0xf]
      %v879 = vld [vmem:[%s871 + $0x1c] sm:$0xf]
      %v888 = vunpack.c.l.b16 %v872
      %v889 = vunpack.c.l.b16 %v873
      %v890 = vunpack.c.l.b16 %v874
      %v891 = vunpack.c.l.b16 %v875
      %v892 = vunpack.c.l.b16 %v876
      %v893 = vunpack.c.l.b16 %v877
      %v894 = vunpack.c.l.b16 %v878
      %v895 = vunpack.c.l.b16 %v879
      %v896 = vpack.c.b16 %v889, %v888
      %v897 = vpack.c.b16 %v891, %v890
      %v898 = vpack.c.b16 %v893, %v892
      %v899 = vpack.c.b16 %v895, %v894
      %900 = vrot.lane.b32.xlu0 %v300, 125
      %v901 = vpop.permute.xlu0 %900
      %902 = vrot.lane.b32.xlu0 %v301, 125
      %v903 = vpop.permute.xlu0 %902
      %v907 = vsel %vm230, %v896, 0
      %v910 = vsel %vm230, %v897, 0
      %v913 = vsel %vm230, %v898, 0
      %v916 = vsel %vm230, %v899, 0
      %918 = vmatpush.bf16.msra.mxu0 0
      %919 = vmatpush.bf16.msra.mxu0 0
      %920 = vmatpush.bf16.msra.mxu0 0
      %921 = vmatpush.bf16.msra.mxu0 0
      %922 = vmatpush.bf16.msra.mxu0 0
      %923 = vmatpush.bf16.msra.mxu0 0
      %924 = vmatpush.bf16.msra.mxu0 %v903
      %925 = vmatpush.bf16.msra.mxu0 %v901
      %926 = vmatmul.bf16.gmra.mxu0 %v907
      %v927 = vpop.f32.mrf.mxu0
      %v928 = vadd.f32 0.0, %v927
      %v929 = vpop.f32.mrf.mxu0
      %v930 = vadd.f32 0.0, %v929
      %931 = vmatmul.bf16.gmra.mxu0 %v910
      %v932 = vpop.f32.mrf.mxu0
      %v933 = vadd.f32 0.0, %v932
      %v934 = vpop.f32.mrf.mxu0
      %v935 = vadd.f32 0.0, %v934
      %936 = vmatmul.bf16.gmra.mxu0 %v913
      %v937 = vpop.f32.mrf.mxu0
      %v938 = vadd.f32 0.0, %v937
      %v939 = vpop.f32.mrf.mxu0
      %v940 = vadd.f32 0.0, %v939
      %941 = vmatmul.bf16.gmra.mxu0 %v916
      %v942 = vpop.f32.mrf.mxu0
      %v943 = vadd.f32 0.0, %v942
      %v944 = vpop.f32.mrf.mxu0
      %v945 = vadd.f32 0.0, %v944
      %946 = vdwg.mxu0
      %v947 = vadd.f32 %v863, %v928
      %v948 = vadd.f32 %v864, %v930
      %v949 = vadd.f32 %v865, %v933
      %v950 = vadd.f32 %v866, %v935
      %v951 = vadd.f32 %v867, %v938
      %v952 = vadd.f32 %v868, %v940
      %v953 = vadd.f32 %v869, %v943
      %v954 = vadd.f32 %v870, %v945
      %v955 = vld [vmem:[%s1] sm:$0xff]
      %v956 = vld [vmem:[%s1 + $0x8] sm:$0xff]
      %v957 = vld [vmem:[%s1 + $0x10] sm:$0xff]
      %v958 = vld [vmem:[%s1 + $0x18] sm:$0xff]
      %v959 = vld [vmem:[%s1 + $0x20] sm:$0xff]
      %v960 = vld [vmem:[%s1 + $0x28] sm:$0xff]
      %v961 = vld [vmem:[%s1 + $0x30] sm:$0xff]
      %v962 = vld [vmem:[%s1 + $0x38] sm:$0xff]
      %v963 = vadd.f32 %v947, %v955
      %v964 = vadd.f32 %v948, %v956
      %v965 = vadd.f32 %v949, %v957
      %v966 = vadd.f32 %v950, %v958
      %v967 = vadd.f32 %v951, %v959
      %v968 = vadd.f32 %v952, %v960
      %v969 = vadd.f32 %v953, %v961
      %v970 = vadd.f32 %v954, %v962
      %v971 = vmax.f32 %v963, 0.0
      %v972 = vmax.f32 %v964, 0.0
      %v973 = vmax.f32 %v965, 0.0
      %v974 = vmax.f32 %v966, 0.0
      %v975 = vmax.f32 %v967, 0.0
      %v976 = vmax.f32 %v968, 0.0
      %v977 = vmax.f32 %v969, 0.0
      %v978 = vmax.f32 %v970, 0.0
      %v979 = vpack.c.bf16 %v971, %v971
      %v980 = vpack.c.bf16 %v972, %v972
      %v981 = vpack.c.bf16 %v973, %v973
      %v982 = vpack.c.bf16 %v974, %v974
      %v983 = vpack.c.bf16 %v975, %v975
      %v984 = vpack.c.bf16 %v976, %v976
      %v985 = vpack.c.bf16 %v977, %v977
      %v986 = vpack.c.bf16 %v978, %v978
      %vm987 = vcmask 3072
      %988 = vst.msk [vmem:[%s170] sm:$0xf] %vm987, %v979
      %989 = vst.msk [vmem:[%s170 + $0x4] sm:$0xf] %vm987, %v980
      %990 = vst.msk [vmem:[%s170 + $0x8] sm:$0xf] %vm987, %v981
      %991 = vst.msk [vmem:[%s170 + $0xc] sm:$0xf] %vm987, %v982
      %992 = vst.msk [vmem:[%s170 + $0x10] sm:$0xf] %vm987, %v983
      %993 = vst.msk [vmem:[%s170 + $0x14] sm:$0xf] %vm987, %v984
      %994 = vst.msk [vmem:[%s170 + $0x18] sm:$0xf] %vm987, %v985
      %995 = vst.msk [vmem:[%s170 + $0x1c] sm:$0xf] %vm987, %v986
      %p996 = scmp.lt.s32.totalorder %s14, 1
      %s997 = scalar_select %p996, %s14, 1
      %s998 = smul.addr %s997, 8
      %s999 = smul.addr %s998, 4
      %s1000 = scalar_lea.vmem %s3, %s999
      // Predicated region
      $region33: #{ccnn1_forward.11} parent=31 // pred_check
        %p1001 = pneg %p100
      $region34: #{ccnn1_forward.11} parent=31 // pred_check_branch
        %1003 = sbr.rel (%p1001) target = $region36
      $region35: #{ccnn1_forward.11} parent=31 // pred_region
        _
      $region36: #{ccnn1_forward.11} parent=31 // pred_fallthru
        _
    $region32: #{ccnn1_forward.11} parent=5 // pred_fallthru
      _
    %p1004 = scmp.le.s32.totalorder 2, %s9
    // Predicated region
    $region37: #{ccnn1_forward.11} parent=5 // pred_check
      %p1005 = pneg %p1004
    $region38: #{ccnn1_forward.11} parent=5 // pred_check_branch
      %1007 = sbr.rel (%p1005) target = $region40
    $region39: #{ccnn1_forward.11} parent=5 // pred_region
      %s1008 = ssub.s32 %s9, 2
      // Predicated region
      $region41: #{ccnn1_forward.11} parent=39 // pred_check
        %p1009 = pneg %p106
      $region42: #{ccnn1_forward.11} parent=39 // pred_check_branch
        %1011 = sbr.rel (%p1009) target = $region44
      $region43: #{ccnn1_forward.11} parent=39 // pred_region
        %p1012 = scmp.lt.s32.totalorder %s15, 1
        %s1013 = scalar_select %p1012, %s15, 1
        %s1014 = smul.addr %s1013, 8
        %s1015 = smul.addr %s1014, 4
        %s1016 = scalar_lea.vmem %s3, %s1015
      $region44: #{ccnn1_forward.11} parent=39 // pred_fallthru
        _
    $region40: #{ccnn1_forward.11} parent=5 // pred_fallthru
      _
  $region6: #{ccnn1_forward.11} parent=0 // loop_footer
    %s13 = sadd.s32 1, %s9
  $region7: #{ccnn1_forward.11} parent=0 // loop_footer_branch
    %8 = sbr.rel target = $region3
  $region8: #{ccnn1_forward.11} parent=0 // loop_exit
    _

// kernel: ccnn1_forward.12
$region0: #{ccnn1_forward.12}
  #allocation0 [shape = 'u32[]', space=smem, size = 0x4, offset = 0x4, fixed_abs, tag = 'smem constant byte address 0x4 - core index']
  #allocation1 [shape = 'u32[72,128]{1,0:T(1,128)}', space=vmem, size = 0x9000, scoped, tag = 'internal scratch']
  %s0 = inlined_call_operand.vmem [shape: bf16[9,128,64], index: 0, kind: input, shape index: {}]
  %s1 = inlined_call_operand.vmem [shape: f32[128,1], index: 1, kind: input, shape index: {}]
  %s2 = inlined_call_operand.vmem [shape: bf16[2,1,64,9], index: 2, kind: input, shape index: {}]
  %s3 = inlined_call_operand.vmem [shape: bf16[2,128,1], index: 3, kind: output, shape index: {}]
  %s4 = sld [smem:[#allocation0]]
  $region45: #{ccnn1_forward.12} parent=0
    _
  %s6 = ssub.s32 1, %s4
  %s7 = scalar_select 0, %s6, %s4
  loop: start=0, step=1, limit=4
  $region2: #{ccnn1_forward.12} parent=0 // loop_pre_header
    _
  $region3: #{ccnn1_forward.12} parent=0 // loop_header
    %s9 = sphi 0, %s13
    %p10 = scmp.ge.s32.totalorder %s9, 4
    %s17 = sphi 0, %s17
    %s19 = sphi 0, %s17
    %s20 = sphi 0, %s19
    %s34 = sphi 0, %s20
    %s38 = sphi 0, %s38
    %s40 = sphi 0, %s38
    %s41 = sphi 0, %s40
    %s55 = sphi 0, %s41
    %s61 = sphi 0, %s63
    %s64 = sphi 0, %s61
    %s65 = sphi 0, %s64
    %s81 = sphi 0, %s65
    %s87 = sphi 0, %s89
    %s90 = sphi 0, %s87
    %s91 = sphi 0, %s90
    %s107 = sphi 0, %s91
  $region4: #{ccnn1_forward.12} parent=0 // loop_header_branch
    %12 = sbr.rel (%p10) target = $region8
  $region5: #{ccnn1_forward.12} parent=0 // loop_body
    %s14 = ssub.s32 %s9, 1
    %s15 = ssub.s32 %s9, 2
    %s16 = sadd.s32 %s9, 1
    %s18 = sadd.s32 %s17, 1
    %p21 = scmp.eq.s32.totalorder %s9, 1
    %p22 = scmp.ne.s32.totalorder %s17, %s19
    %p23 = scmp.eq.s32.totalorder %s9, 0
    %p24 = por %p22, %p23
    %p25 = scmp.ne.s32.totalorder %s17, %s19
    %p26 = scmp.eq.s32.totalorder %s14, 1
    %p27 = por %p25, %p26
    %p28 = scmp.ne.s32.totalorder %s19, %s20
    %p29 = scmp.eq.s32.totalorder %s14, 0
    %p30 = por %p28, %p29
    %p31 = scmp.ne.s32.totalorder %s19, %s20
    %p32 = scmp.eq.s32.totalorder %s15, 1
    %p33 = por %p31, %p32
    %p35 = scmp.ne.s32.totalorder %s20, %s34
    %p36 = scmp.eq.s32.totalorder %s15, 0
    %p37 = por %p35, %p36
    %s39 = sadd.s32 %s38, 1
    %p42 = scmp.eq.s32.totalorder %s9, 1
    %p43 = scmp.ne.s32.totalorder %s38, %s40
    %p44 = scmp.eq.s32.totalorder %s9, 0
    %p45 = por %p43, %p44
    %p46 = scmp.ne.s32.totalorder %s38, %s40
    %p47 = scmp.eq.s32.totalorder %s14, 1
    %p48 = por %p46, %p47
    %p49 = scmp.ne.s32.totalorder %s40, %s41
    %p50 = scmp.eq.s32.totalorder %s14, 0
    %p51 = por %p49, %p50
    %p52 = scmp.ne.s32.totalorder %s40, %s41
    %p53 = scmp.eq.s32.totalorder %s15, 1
    %p54 = por %p52, %p53
    %p56 = scmp.ne.s32.totalorder %s41, %s55
    %p57 = scmp.eq.s32.totalorder %s15, 0
    %p58 = por %p56, %p57
    %s59 = ssub.s32 %s9, %s16
    %p60 = scmp.eq.s32.totalorder %s59, 0
    %s62 = sadd.s32 %s61, 1
    %s63 = scalar_select %p60, %s61, %s62
    %p66 = pneg %p60
    %p67 = scmp.eq.s32.totalorder %s9, 1
    %p68 = por %p66, %p67
    %p69 = scmp.ne.s32.totalorder %s61, %s64
    %p70 = scmp.eq.s32.totalorder %s9, 0
    %p71 = por %p69, %p70
    %p72 = scmp.ne.s32.totalorder %s61, %s64
    %p73 = scmp.eq.s32.totalorder %s14, 1
    %p74 = por %p72, %p73
    %p75 = scmp.ne.s32.totalorder %s64, %s65
    %p76 = scmp.eq.s32.totalorder %s14, 0
    %p77 = por %p75, %p76
    %p78 = scmp.ne.s32.totalorder %s64, %s65
    %p79 = scmp.eq.s32.totalorder %s15, 1
    %p80 = por %p78, %p79
    %p82 = scmp.ne.s32.totalorder %s65, %s81
    %p83 = scmp.eq.s32.totalorder %s15, 0
    %p84 = por %p82, %p83
    %s85 = ssub.s32 %s9, %s16
    %p86 = scmp.eq.s32.totalorder %s85, 0
    %s88 = sadd.s32 %s87, 1
    %s89 = scalar_select %p86, %s87, %s88
    %p92 = pneg %p86
    %p93 = scmp.eq.s32.totalorder %s9, 1
    %p94 = por %p92, %p93
    %p95 = scmp.ne.s32.totalorder %s87, %s90
    %p96 = scmp.eq.s32.totalorder %s9, 0
    %p97 = por %p95, %p96
    %p98 = scmp.ne.s32.totalorder %s87, %s90
    %p99 = scmp.eq.s32.totalorder %s14, 1
    %p100 = por %p98, %p99
    %p101 = scmp.ne.s32.totalorder %s90, %s91
    %p102 = scmp.eq.s32.totalorder %s14, 0
    %p103 = por %p101, %p102
    %p104 = scmp.ne.s32.totalorder %s90, %s91
    %p105 = scmp.eq.s32.totalorder %s15, 1
    %p106 = por %p104, %p105
    %p108 = scmp.ne.s32.totalorder %s91, %s107
    %p109 = scmp.eq.s32.totalorder %s15, 0
    %p110 = por %p108, %p109
    %p111 = scmp.le.s32.totalorder 1, %s9
    %p112 = scmp.lt.s32.totalorder %s9, 3
    %p113 = pnand %p111, %p112
    %p114 = pneg %p113
    // Predicated region
    $region9: #{ccnn1_forward.12} parent=5 // pred_check
      _
    $region10: #{ccnn1_forward.12} parent=5 // pred_check_branch
      %116 = sbr.rel (%p113) target = $region12
    $region11: #{ccnn1_forward.12} parent=5 // pred_region
      %s117 = ssub.s32 %s9, 1
      // Predicated region
      $region13: #{ccnn1_forward.12} parent=11 // pred_check
        %p118 = pneg %p30
      $region14: #{ccnn1_forward.12} parent=11 // pred_check_branch
        %120 = sbr.rel (%p118) target = $region16
      $region15: #{ccnn1_forward.12} parent=11 // pred_region
        _
      $region16: #{ccnn1_forward.12} parent=11 // pred_fallthru
        _
      // Predicated region
      $region17: #{ccnn1_forward.12} parent=11 // pred_check
        %p121 = pneg %p51
      $region18: #{ccnn1_forward.12} parent=11 // pred_check_branch
        %123 = sbr.rel (%p121) target = $region20
      $region19: #{ccnn1_forward.12} parent=11 // pred_region
        _
      $region20: #{ccnn1_forward.12} parent=11 // pred_fallthru
        _
    $region12: #{ccnn1_forward.12} parent=5 // pred_fallthru
      _
    %p124 = scmp.lt.s32.totalorder %s9, 2
    // Predicated region
    $region21: #{ccnn1_forward.12} parent=5 // pred_check
      %p125 = pneg %p124
    $region22: #{ccnn1_forward.12} parent=5 // pred_check_branch
      %127 = sbr.rel (%p125) target = $region24
    $region23: #{ccnn1_forward.12} parent=5 // pred_region
      // Predicated region
      $region25: #{ccnn1_forward.12} parent=23 // pred_check
        %p128 = pneg %p71
      $region26: #{ccnn1_forward.12} parent=23 // pred_check_branch
        %130 = sbr.rel (%p128) target = $region28
      $region27: #{ccnn1_forward.12} parent=23 // pred_region
        %p131 = scmp.lt.s32.totalorder %s9, 1
        %s132 = scalar_select %p131, %s9, 1
        %s133 = smul.addr %s132, 8
        %s134 = smul.addr %s133, 4
        %s135 = scalar_lea.vmem %s2, %s134
      $region28: #{ccnn1_forward.12} parent=23 // pred_fallthru
        _
    $region24: #{ccnn1_forward.12} parent=5 // pred_fallthru
      _
    %p136 = scmp.le.s32.totalorder 1, %s9
    %p137 = scmp.lt.s32.totalorder %s9, 3
    %p138 = pnand %p136, %p137
    %p139 = pneg %p138
    // Predicated region
    $region29: #{ccnn1_forward.12} parent=5 // pred_check
      _
    $region30: #{ccnn1_forward.12} parent=5 // pred_check_branch
      %141 = sbr.rel (%p138) target = $region32
    $region31: #{ccnn1_forward.12} parent=5 // pred_region
      %s142 = ssub.s32 %s9, 1
      %p143 = pneg %p30
      %p144 = pneg %p27
      %p145 = pneg %p51
      %p146 = pneg %p48
      %p147 = scmp.lt.s32.totalorder %s14, 1
      %s148 = scalar_select %p147, %s14, 1
      %s149 = smul.addr %s148, 8
      %s150 = smul.addr %s149, 4
      %s151 = scalar_lea.vmem %s2, %s150
      %p152 = pneg %p77
      %p153 = pneg %p74
      %p154 = pneg %p103
      %p155 = pneg %p100
      %p156 = scmp.lt.s32.totalorder %s14, 1
      %s157 = scalar_select %p156, %s14, 1
      %s158 = smul.addr %s157, 16
      %s159 = smul.addr %s158, 4
      %s160 = scalar_lea.vmem %s3, %s159
      %p161 = scmp.lt.s32.totalorder %s14, 1
      %s162 = scalar_select %p161, %s14, 1
      %s163 = smul.addr %s162, 8
      %s164 = smul.addr %s163, 4
      %s165 = scalar_lea.vmem %s2, %s164
      %p166 = scmp.lt.s32.totalorder %s14, 1
      %s167 = scalar_select %p166, %s14, 1
      %s168 = smul.addr %s167, 16
      %s169 = smul.addr %s168, 4
      %s170 = scalar_lea.vmem %s3, %s169
      %v172 = vld [vmem:[%s165] sm:$0xf]
      %v173 = vld [vmem:[%s165 + $0x4] sm:$0xf]
      %v174 = vld [vmem:[%s165 + $0x8] sm:$0xf]
      %v175 = vld [vmem:[%s165 + $0xc] sm:$0xf]
      %v176 = vld [vmem:[%s165 + $0x10] sm:$0xf]
      %v177 = vld [vmem:[%s165 + $0x14] sm:$0xf]
      %v178 = vld [vmem:[%s165 + $0x18] sm:$0xf]
      %v179 = vld [vmem:[%s165 + $0x1c] sm:$0xf]
      %v180 = vld [vmem:[%s0] sm:$0xf]
      %v181 = vld [vmem:[%s0 + $0x4] sm:$0xf]
      %v182 = vld [vmem:[%s0 + $0x8] sm:$0xf]
      %v183 = vld [vmem:[%s0 + $0xc] sm:$0xf]
      %v184 = vld [vmem:[%s0 + $0x10] sm:$0xf]
      %v185 = vld [vmem:[%s0 + $0x14] sm:$0xf]
      %v186 = vld [vmem:[%s0 + $0x18] sm:$0xf]
      %v187 = vld [vmem:[%s0 + $0x1c] sm:$0xf]
      %v188 = vld [vmem:[%s0 + $0x20] sm:$0xf]
      %v189 = vld [vmem:[%s0 + $0x24] sm:$0xf]
      %v190 = vld [vmem:[%s0 + $0x28] sm:$0xf]
      %v191 = vld [vmem:[%s0 + $0x2c] sm:$0xf]
      %v192 = vld [vmem:[%s0 + $0x30] sm:$0xf]
      %v193 = vld [vmem:[%s0 + $0x34] sm:$0xf]
      %v194 = vld [vmem:[%s0 + $0x38] sm:$0xf]
      %v195 = vld [vmem:[%s0 + $0x3c] sm:$0xf]
      %s196 = scalar_lea.vmem %s0, 64
      %v197 = vld [vmem:[%s196] sm:$0xf]
      %v198 = vld [vmem:[%s196 + $0x4] sm:$0xf]
      %v199 = vld [vmem:[%s196 + $0x8] sm:$0xf]
      %v200 = vld [vmem:[%s196 + $0xc] sm:$0xf]
      %v201 = vld [vmem:[%s196 + $0x10] sm:$0xf]
      %v202 = vld [vmem:[%s196 + $0x14] sm:$0xf]
      %v203 = vld [vmem:[%s196 + $0x18] sm:$0xf]
      %v204 = vld [vmem:[%s196 + $0x1c] sm:$0xf]
      %v205 = vld [vmem:[%s196 + $0x20] sm:$0xf]
      %v206 = vld [vmem:[%s196 + $0x24] sm:$0xf]
      %v207 = vld [vmem:[%s196 + $0x28] sm:$0xf]
      %v208 = vld [vmem:[%s196 + $0x2c] sm:$0xf]
      %v209 = vld [vmem:[%s196 + $0x30] sm:$0xf]
      %v210 = vld [vmem:[%s196 + $0x34] sm:$0xf]
      %v211 = vld [vmem:[%s196 + $0x38] sm:$0xf]
      %v212 = vld [vmem:[%s196 + $0x3c] sm:$0xf]
      %v229 = vunpack.c.l.b16 %v197
      %v230 = vunpack.c.l.b16 %v198
      %v231 = vunpack.c.l.b16 %v199
      %v232 = vunpack.c.l.b16 %v200
      %v233 = vunpack.c.l.b16 %v201
      %v234 = vunpack.c.l.b16 %v202
      %v235 = vunpack.c.l.b16 %v203
      %v236 = vunpack.c.l.b16 %v204
      %v237 = vunpack.c.l.b16 %v205
      %v238 = vunpack.c.l.b16 %v206
      %v239 = vunpack.c.l.b16 %v207
      %v240 = vunpack.c.l.b16 %v208
      %v241 = vunpack.c.l.b16 %v209
      %v242 = vunpack.c.l.b16 %v210
      %v243 = vunpack.c.l.b16 %v211
      %v244 = vunpack.c.l.b16 %v212
      %v245 = vpack.c.b16 %v230, %v229
      %v246 = vpack.c.b16 %v232, %v231
      %v247 = vpack.c.b16 %v234, %v233
      %v248 = vpack.c.b16 %v236, %v235
      %v249 = vpack.c.b16 %v238, %v237
      %v250 = vpack.c.b16 %v240, %v239
      %v251 = vpack.c.b16 %v242, %v241
      %v252 = vpack.c.b16 %v244, %v243
      %v261 = vunpack.c.l.b16 %v172
      %v262 = vunpack.c.l.b16 %v173
      %v263 = vunpack.c.l.b16 %v174
      %v264 = vunpack.c.l.b16 %v175
      %v265 = vunpack.c.l.b16 %v176
      %v266 = vunpack.c.l.b16 %v177
      %v267 = vunpack.c.l.b16 %v178
      %v268 = vunpack.c.l.b16 %v179
      %v269 = vpack.c.b16 %v262, %v261
      %v270 = vpack.c.b16 %v264, %v263
      %v271 = vpack.c.b16 %v266, %v265
      %v272 = vpack.c.b16 %v268, %v267
      %273 = vrot.lane.b32.xlu0 %v269, 127
      %v274 = vpop.permute.xlu0 %273
      %275 = vrot.lane.b32.xlu0 %v270, 127
      %v276 = vpop.permute.xlu0 %275
      %277 = vrot.lane.b32.xlu0 %v271, 127
      %v278 = vpop.permute.xlu0 %277
      %279 = vrot.lane.b32.xlu0 %v272, 127
      %v280 = vpop.permute.xlu0 %279
      %vm285 = vcmask 523264
      %v287 = vsel %vm285, %v245, 0
      %v290 = vsel %vm285, %v246, 0
      %v293 = vsel %vm285, %v247, 0
      %v296 = vsel %vm285, %v248, 0
      %v299 = vsel %vm285, %v249, 0
      %v302 = vsel %vm285, %v250, 0
      %v305 = vsel %vm285, %v251, 0
      %v308 = vsel %vm285, %v252, 0
      %310 = vmatpush.bf16.msra.mxu0 0
      %311 = vmatpush.bf16.msra.mxu0 0
      %312 = vmatpush.bf16.msra.mxu0 0
      %313 = vmatpush.bf16.msra.mxu0 0
      %314 = vmatpush.bf16.msra.mxu0 %v280
      %315 = vmatpush.bf16.msra.mxu0 %v278
      %316 = vmatpush.bf16.msra.mxu0 %v276
      %317 = vmatpush.bf16.msra.mxu0 %v274
      %318 = vmatmul.bf16.gmra.mxu0 %v287
      %v319 = vpop.f32.mrf.mxu0
      %v320 = vadd.f32 0.0, %v319
      %v321 = vpop.f32.mrf.mxu0
      %v322 = vadd.f32 0.0, %v321
      %323 = vmatmul.bf16.gmra.mxu0 %v290
      %v324 = vpop.f32.mrf.mxu0
      %v325 = vadd.f32 0.0, %v324
      %v326 = vpop.f32.mrf.mxu0
      %v327 = vadd.f32 0.0, %v326
      %328 = vmatmul.bf16.gmra.mxu0 %v293
      %v329 = vpop.f32.mrf.mxu0
      %v330 = vadd.f32 0.0, %v329
      %v331 = vpop.f32.mrf.mxu0
      %v332 = vadd.f32 0.0, %v331
      %333 = vmatmul.bf16.gmra.mxu0 %v296
      %v334 = vpop.f32.mrf.mxu0
      %v335 = vadd.f32 0.0, %v334
      %v336 = vpop.f32.mrf.mxu0
      %v337 = vadd.f32 0.0, %v336
      %338 = vmatmul.bf16.gmra.mxu0 %v299
      %v339 = vpop.f32.mrf.mxu0
      %v340 = vadd.f32 0.0, %v339
      %v341 = vpop.f32.mrf.mxu0
      %v342 = vadd.f32 0.0, %v341
      %343 = vmatmul.bf16.gmra.mxu0 %v302
      %v344 = vpop.f32.mrf.mxu0
      %v345 = vadd.f32 0.0, %v344
      %v346 = vpop.f32.mrf.mxu0
      %v347 = vadd.f32 0.0, %v346
      %348 = vmatmul.bf16.gmra.mxu0 %v305
      %v349 = vpop.f32.mrf.mxu0
      %v350 = vadd.f32 0.0, %v349
      %v351 = vpop.f32.mrf.mxu0
      %v352 = vadd.f32 0.0, %v351
      %353 = vmatmul.bf16.gmra.mxu0 %v308
      %v354 = vpop.f32.mrf.mxu0
      %v355 = vadd.f32 0.0, %v354
      %v356 = vpop.f32.mrf.mxu0
      %v357 = vadd.f32 0.0, %v356
      %358 = vdwg.mxu0
      %v375 = vunpack.c.l.b16 %v180
      %v376 = vunpack.c.l.b16 %v181
      %v377 = vunpack.c.l.b16 %v182
      %v378 = vunpack.c.l.b16 %v183
      %v379 = vunpack.c.l.b16 %v184
      %v380 = vunpack.c.l.b16 %v185
      %v381 = vunpack.c.l.b16 %v186
      %v382 = vunpack.c.l.b16 %v187
      %v383 = vunpack.c.l.b16 %v188
      %v384 = vunpack.c.l.b16 %v189
      %v385 = vunpack.c.l.b16 %v190
      %v386 = vunpack.c.l.b16 %v191
      %v387 = vunpack.c.l.b16 %v192
      %v388 = vunpack.c.l.b16 %v193
      %v389 = vunpack.c.l.b16 %v194
      %v390 = vunpack.c.l.b16 %v195
      %v391 = vpack.c.b16 %v376, %v375
      %v392 = vpack.c.b16 %v378, %v377
      %v393 = vpack.c.b16 %v380, %v379
      %v394 = vpack.c.b16 %v382, %v381
      %v395 = vpack.c.b16 %v384, %v383
      %v396 = vpack.c.b16 %v386, %v385
      %v397 = vpack.c.b16 %v388, %v387
      %v398 = vpack.c.b16 %v390, %v389
      %v404 = vsel %vm285, %v391, 0
      %v407 = vsel %vm285, %v392, 0
      %v410 = vsel %vm285, %v393, 0
      %v413 = vsel %vm285, %v394, 0
      %v416 = vsel %vm285, %v395, 0
      %v419 = vsel %vm285, %v396, 0
      %v422 = vsel %vm285, %v397, 0
      %v425 = vsel %vm285, %v398, 0
      %427 = vmatpush.bf16.msra.mxu0 0
      %428 = vmatpush.bf16.msra.mxu0 0
      %429 = vmatpush.bf16.msra.mxu0 0
      %430 = vmatpush.bf16.msra.mxu0 0
      %431 = vmatpush.bf16.msra.mxu0 %v272
      %432 = vmatpush.bf16.msra.mxu0 %v271
      %433 = vmatpush.bf16.msra.mxu0 %v270
      %434 = vmatpush.bf16.msra.mxu0 %v269
      %435 = vmatmul.bf16.gmra.mxu0 %v404
      %v436 = vpop.f32.mrf.mxu0
      %v437 = vadd.f32 %v320, %v436
      %v438 = vpop.f32.mrf.mxu0
      %v439 = vadd.f32 %v322, %v438
      %440 = vmatmul.bf16.gmra.mxu0 %v407
      %v441 = vpop.f32.mrf.mxu0
      %v442 = vadd.f32 %v325, %v441
      %v443 = vpop.f32.mrf.mxu0
      %v444 = vadd.f32 %v327, %v443
      %445 = vmatmul.bf16.gmra.mxu0 %v410
      %v446 = vpop.f32.mrf.mxu0
      %v447 = vadd.f32 %v330, %v446
      %v448 = vpop.f32.mrf.mxu0
      %v449 = vadd.f32 %v332, %v448
      %450 = vmatmul.bf16.gmra.mxu0 %v413
      %v451 = vpop.f32.mrf.mxu0
      %v452 = vadd.f32 %v335, %v451
      %v453 = vpop.f32.mrf.mxu0
      %v454 = vadd.f32 %v337, %v453
      %455 = vmatmul.bf16.gmra.mxu0 %v416
      %v456 = vpop.f32.mrf.mxu0
      %v457 = vadd.f32 %v340, %v456
      %v458 = vpop.f32.mrf.mxu0
      %v459 = vadd.f32 %v342, %v458
      %460 = vmatmul.bf16.gmra.mxu0 %v419
      %v461 = vpop.f32.mrf.mxu0
      %v462 = vadd.f32 %v345, %v461
      %v463 = vpop.f32.mrf.mxu0
      %v464 = vadd.f32 %v347, %v463
      %465 = vmatmul.bf16.gmra.mxu0 %v422
      %v466 = vpop.f32.mrf.mxu0
      %v467 = vadd.f32 %v350, %v466
      %v468 = vpop.f32.mrf.mxu0
      %v469 = vadd.f32 %v352, %v468
      %470 = vmatmul.bf16.gmra.mxu0 %v425
      %v471 = vpop.f32.mrf.mxu0
      %v472 = vadd.f32 %v355, %v471
      %v473 = vpop.f32.mrf.mxu0
      %v474 = vadd.f32 %v357, %v473
      %475 = vdwg.mxu0
      %s476 = scalar_lea.vmem %s0, 128
      %v477 = vld [vmem:[%s476] sm:$0xf]
      %v478 = vld [vmem:[%s476 + $0x4] sm:$0xf]
      %v479 = vld [vmem:[%s476 + $0x8] sm:$0xf]
      %v480 = vld [vmem:[%s476 + $0xc] sm:$0xf]
      %v481 = vld [vmem:[%s476 + $0x10] sm:$0xf]
      %v482 = vld [vmem:[%s476 + $0x14] sm:$0xf]
      %v483 = vld [vmem:[%s476 + $0x18] sm:$0xf]
      %v484 = vld [vmem:[%s476 + $0x1c] sm:$0xf]
      %v485 = vld [vmem:[%s476 + $0x20] sm:$0xf]
      %v486 = vld [vmem:[%s476 + $0x24] sm:$0xf]
      %v487 = vld [vmem:[%s476 + $0x28] sm:$0xf]
      %v488 = vld [vmem:[%s476 + $0x2c] sm:$0xf]
      %v489 = vld [vmem:[%s476 + $0x30] sm:$0xf]
      %v490 = vld [vmem:[%s476 + $0x34] sm:$0xf]
      %v491 = vld [vmem:[%s476 + $0x38] sm:$0xf]
      %v492 = vld [vmem:[%s476 + $0x3c] sm:$0xf]
      %v509 = vunpack.c.l.b16 %v477
      %v510 = vunpack.c.l.b16 %v478
      %v511 = vunpack.c.l.b16 %v479
      %v512 = vunpack.c.l.b16 %v480
      %v513 = vunpack.c.l.b16 %v481
      %v514 = vunpack.c.l.b16 %v482
      %v515 = vunpack.c.l.b16 %v483
      %v516 = vunpack.c.l.b16 %v484
      %v517 = vunpack.c.l.b16 %v485
      %v518 = vunpack.c.l.b16 %v486
      %v519 = vunpack.c.l.b16 %v487
      %v520 = vunpack.c.l.b16 %v488
      %v521 = vunpack.c.l.b16 %v489
      %v522 = vunpack.c.l.b16 %v490
      %v523 = vunpack.c.l.b16 %v491
      %v524 = vunpack.c.l.b16 %v492
      %v525 = vpack.c.b16 %v510, %v509
      %v526 = vpack.c.b16 %v512, %v511
      %v527 = vpack.c.b16 %v514, %v513
      %v528 = vpack.c.b16 %v516, %v515
      %v529 = vpack.c.b16 %v518, %v517
      %v530 = vpack.c.b16 %v520, %v519
      %v531 = vpack.c.b16 %v522, %v521
      %v532 = vpack.c.b16 %v524, %v523
      %533 = vrot.lane.b32.xlu0 %v269, 126
      %v534 = vpop.permute.xlu0 %533
      %535 = vrot.lane.b32.xlu0 %v270, 126
      %v536 = vpop.permute.xlu0 %535
      %537 = vrot.lane.b32.xlu0 %v271, 126
      %v538 = vpop.permute.xlu0 %537
      %539 = vrot.lane.b32.xlu0 %v272, 126
      %v540 = vpop.permute.xlu0 %539
      %v546 = vsel %vm285, %v525, 0
      %v549 = vsel %vm285, %v526, 0
      %v552 = vsel %vm285, %v527, 0
      %v555 = vsel %vm285, %v528, 0
      %v558 = vsel %vm285, %v529, 0
      %v561 = vsel %vm285, %v530, 0
      %v564 = vsel %vm285, %v531, 0
      %v567 = vsel %vm285, %v532, 0
      %569 = vmatpush.bf16.msra.mxu0 0
      %570 = vmatpush.bf16.msra.mxu0 0
      %571 = vmatpush.bf16.msra.mxu0 0
      %572 = vmatpush.bf16.msra.mxu0 0
      %573 = vmatpush.bf16.msra.mxu0 %v540
      %574 = vmatpush.bf16.msra.mxu0 %v538
      %575 = vmatpush.bf16.msra.mxu0 %v536
      %576 = vmatpush.bf16.msra.mxu0 %v534
      %577 = vmatmul.bf16.gmra.mxu0 %v546
      %v578 = vpop.f32.mrf.mxu0
      %v579 = vadd.f32 0.0, %v578
      %v580 = vpop.f32.mrf.mxu0
      %v581 = vadd.f32 0.0, %v580
      %582 = vmatmul.bf16.gmra.mxu0 %v549
      %v583 = vpop.f32.mrf.mxu0
      %v584 = vadd.f32 0.0, %v583
      %v585 = vpop.f32.mrf.mxu0
      %v586 = vadd.f32 0.0, %v585
      %587 = vmatmul.bf16.gmra.mxu0 %v552
      %v588 = vpop.f32.mrf.mxu0
      %v589 = vadd.f32 0.0, %v588
      %v590 = vpop.f32.mrf.mxu0
      %v591 = vadd.f32 0.0, %v590
      %592 = vmatmul.bf16.gmra.mxu0 %v555
      %v593 = vpop.f32.mrf.mxu0
      %v594 = vadd.f32 0.0, %v593
      %v595 = vpop.f32.mrf.mxu0
      %v596 = vadd.f32 0.0, %v595
      %597 = vmatmul.bf16.gmra.mxu0 %v558
      %v598 = vpop.f32.mrf.mxu0
      %v599 = vadd.f32 0.0, %v598
      %v600 = vpop.f32.mrf.mxu0
      %v601 = vadd.f32 0.0, %v600
      %602 = vmatmul.bf16.gmra.mxu0 %v561
      %v603 = vpop.f32.mrf.mxu0
      %v604 = vadd.f32 0.0, %v603
      %v605 = vpop.f32.mrf.mxu0
      %v606 = vadd.f32 0.0, %v605
      %607 = vmatmul.bf16.gmra.mxu0 %v564
      %v608 = vpop.f32.mrf.mxu0
      %v609 = vadd.f32 0.0, %v608
      %v610 = vpop.f32.mrf.mxu0
      %v611 = vadd.f32 0.0, %v610
      %612 = vmatmul.bf16.gmra.mxu0 %v567
      %v613 = vpop.f32.mrf.mxu0
      %v614 = vadd.f32 0.0, %v613
      %v615 = vpop.f32.mrf.mxu0
      %v616 = vadd.f32 0.0, %v615
      %617 = vdwg.mxu0
      %v618 = vadd.f32 %v437, %v579
      %v619 = vadd.f32 %v439, %v581
      %v620 = vadd.f32 %v442, %v584
      %v621 = vadd.f32 %v444, %v586
      %v622 = vadd.f32 %v447, %v589
      %v623 = vadd.f32 %v449, %v591
      %v624 = vadd.f32 %v452, %v594
      %v625 = vadd.f32 %v454, %v596
      %v626 = vadd.f32 %v457, %v599
      %v627 = vadd.f32 %v459, %v601
      %v628 = vadd.f32 %v462, %v604
      %v629 = vadd.f32 %v464, %v606
      %v630 = vadd.f32 %v467, %v609
      %v631 = vadd.f32 %v469, %v611
      %v632 = vadd.f32 %v472, %v614
      %v633 = vadd.f32 %v474, %v616
      %s634 = scalar_lea.vmem %s0, 192
      %v635 = vld [vmem:[%s634] sm:$0xf]
      %v636 = vld [vmem:[%s634 + $0x4] sm:$0xf]
      %v637 = vld [vmem:[%s634 + $0x8] sm:$0xf]
      %v638 = vld [vmem:[%s634 + $0xc] sm:$0xf]
      %v639 = vld [vmem:[%s634 + $0x10] sm:$0xf]
      %v640 = vld [vmem:[%s634 + $0x14] sm:$0xf]
      %v641 = vld [vmem:[%s634 + $0x18] sm:$0xf]
      %v642 = vld [vmem:[%s634 + $0x1c] sm:$0xf]
      %v643 = vld [vmem:[%s634 + $0x20] sm:$0xf]
      %v644 = vld [vmem:[%s634 + $0x24] sm:$0xf]
      %v645 = vld [vmem:[%s634 + $0x28] sm:$0xf]
      %v646 = vld [vmem:[%s634 + $0x2c] sm:$0xf]
      %v647 = vld [vmem:[%s634 + $0x30] sm:$0xf]
      %v648 = vld [vmem:[%s634 + $0x34] sm:$0xf]
      %v649 = vld [vmem:[%s634 + $0x38] sm:$0xf]
      %v650 = vld [vmem:[%s634 + $0x3c] sm:$0xf]
      %v667 = vunpack.c.l.b16 %v635
      %v668 = vunpack.c.l.b16 %v636
      %v669 = vunpack.c.l.b16 %v637
      %v670 = vunpack.c.l.b16 %v638
      %v671 = vunpack.c.l.b16 %v639
      %v672 = vunpack.c.l.b16 %v640
      %v673 = vunpack.c.l.b16 %v641
      %v674 = vunpack.c.l.b16 %v642
      %v675 = vunpack.c.l.b16 %v643
      %v676 = vunpack.c.l.b16 %v644
      %v677 = vunpack.c.l.b16 %v645
      %v678 = vunpack.c.l.b16 %v646
      %v679 = vunpack.c.l.b16 %v647
      %v680 = vunpack.c.l.b16 %v648
      %v681 = vunpack.c.l.b16 %v649
      %v682 = vunpack.c.l.b16 %v650
      %v683 = vpack.c.b16 %v668, %v667
      %v684 = vpack.c.b16 %v670, %v669
      %v685 = vpack.c.b16 %v672, %v671
      %v686 = vpack.c.b16 %v674, %v673
      %v687 = vpack.c.b16 %v676, %v675
      %v688 = vpack.c.b16 %v678, %v677
      %v689 = vpack.c.b16 %v680, %v679
      %v690 = vpack.c.b16 %v682, %v681
      %691 = vrot.lane.b32.xlu0 %v269, 125
      %v692 = vpop.permute.xlu0 %691
      %693 = vrot.lane.b32.xlu0 %v270, 125
      %v694 = vpop.permute.xlu0 %693
      %695 = vrot.lane.b32.xlu0 %v271, 125
      %v696 = vpop.permute.xlu0 %695
      %697 = vrot.lane.b32.xlu0 %v272, 125
      %v698 = vpop.permute.xlu0 %697
      %v704 = vsel %vm285, %v683, 0
      %v707 = vsel %vm285, %v684, 0
      %v710 = vsel %vm285, %v685, 0
      %v713 = vsel %vm285, %v686, 0
      %v716 = vsel %vm285, %v687, 0
      %v719 = vsel %vm285, %v688, 0
      %v722 = vsel %vm285, %v689, 0
      %v725 = vsel %vm285, %v690, 0
      %727 = vmatpush.bf16.msra.mxu0 0
      %728 = vmatpush.bf16.msra.mxu0 0
      %729 = vmatpush.bf16.msra.mxu0 0
      %730 = vmatpush.bf16.msra.mxu0 0
      %731 = vmatpush.bf16.msra.mxu0 %v698
      %732 = vmatpush.bf16.msra.mxu0 %v696
      %733 = vmatpush.bf16.msra.mxu0 %v694
      %734 = vmatpush.bf16.msra.mxu0 %v692
      %735 = vmatmul.bf16.gmra.mxu0 %v704
      %v736 = vpop.f32.mrf.mxu0
      %v737 = vadd.f32 0.0, %v736
      %v738 = vpop.f32.mrf.mxu0
      %v739 = vadd.f32 0.0, %v738
      %740 = vmatmul.bf16.gmra.mxu0 %v707
      %v741 = vpop.f32.mrf.mxu0
      %v742 = vadd.f32 0.0, %v741
      %v743 = vpop.f32.mrf.mxu0
      %v744 = vadd.f32 0.0, %v743
      %745 = vmatmul.bf16.gmra.mxu0 %v710
      %v746 = vpop.f32.mrf.mxu0
      %v747 = vadd.f32 0.0, %v746
      %v748 = vpop.f32.mrf.mxu0
      %v749 = vadd.f32 0.0, %v748
      %750 = vmatmul.bf16.gmra.mxu0 %v713
      %v751 = vpop.f32.mrf.mxu0
      %v752 = vadd.f32 0.0, %v751
      %v753 = vpop.f32.mrf.mxu0
      %v754 = vadd.f32 0.0, %v753
      %755 = vmatmul.bf16.gmra.mxu0 %v716
      %v756 = vpop.f32.mrf.mxu0
      %v757 = vadd.f32 0.0, %v756
      %v758 = vpop.f32.mrf.mxu0
      %v759 = vadd.f32 0.0, %v758
      %760 = vmatmul.bf16.gmra.mxu0 %v719
      %v761 = vpop.f32.mrf.mxu0
      %v762 = vadd.f32 0.0, %v761
      %v763 = vpop.f32.mrf.mxu0
      %v764 = vadd.f32 0.0, %v763
      %765 = vmatmul.bf16.gmra.mxu0 %v722
      %v766 = vpop.f32.mrf.mxu0
      %v767 = vadd.f32 0.0, %v766
      %v768 = vpop.f32.mrf.mxu0
      %v769 = vadd.f32 0.0, %v768
      %770 = vmatmul.bf16.gmra.mxu0 %v725
      %v771 = vpop.f32.mrf.mxu0
      %v772 = vadd.f32 0.0, %v771
      %v773 = vpop.f32.mrf.mxu0
      %v774 = vadd.f32 0.0, %v773
      %775 = vdwg.mxu0
      %v776 = vadd.f32 %v618, %v737
      %v777 = vadd.f32 %v619, %v739
      %v778 = vadd.f32 %v620, %v742
      %v779 = vadd.f32 %v621, %v744
      %v780 = vadd.f32 %v622, %v747
      %v781 = vadd.f32 %v623, %v749
      %v782 = vadd.f32 %v624, %v752
      %v783 = vadd.f32 %v625, %v754
      %v784 = vadd.f32 %v626, %v757
      %v785 = vadd.f32 %v627, %v759
      %v786 = vadd.f32 %v628, %v762
      %v787 = vadd.f32 %v629, %v764
      %v788 = vadd.f32 %v630, %v767
      %v789 = vadd.f32 %v631, %v769
      %v790 = vadd.f32 %v632, %v772
      %v791 = vadd.f32 %v633, %v774
      %s792 = scalar_lea.vmem %s0, 256
      %v793 = vld [vmem:[%s792] sm:$0xf]
      %v794 = vld [vmem:[%s792 + $0x4] sm:$0xf]
      %v795 = vld [vmem:[%s792 + $0x8] sm:$0xf]
      %v796 = vld [vmem:[%s792 + $0xc] sm:$0xf]
      %v797 = vld [vmem:[%s792 + $0x10] sm:$0xf]
      %v798 = vld [vmem:[%s792 + $0x14] sm:$0xf]
      %v799 = vld [vmem:[%s792 + $0x18] sm:$0xf]
      %v800 = vld [vmem:[%s792 + $0x1c] sm:$0xf]
      %v801 = vld [vmem:[%s792 + $0x20] sm:$0xf]
      %v802 = vld [vmem:[%s792 + $0x24] sm:$0xf]
      %v803 = vld [vmem:[%s792 + $0x28] sm:$0xf]
      %v804 = vld [vmem:[%s792 + $0x2c] sm:$0xf]
      %v805 = vld [vmem:[%s792 + $0x30] sm:$0xf]
      %v806 = vld [vmem:[%s792 + $0x34] sm:$0xf]
      %v807 = vld [vmem:[%s792 + $0x38] sm:$0xf]
      %v808 = vld [vmem:[%s792 + $0x3c] sm:$0xf]
      %v825 = vunpack.c.l.b16 %v793
      %v826 = vunpack.c.l.b16 %v794
      %v827 = vunpack.c.l.b16 %v795
      %v828 = vunpack.c.l.b16 %v796
      %v829 = vunpack.c.l.b16 %v797
      %v830 = vunpack.c.l.b16 %v798
      %v831 = vunpack.c.l.b16 %v799
      %v832 = vunpack.c.l.b16 %v800
      %v833 = vunpack.c.l.b16 %v801
      %v834 = vunpack.c.l.b16 %v802
      %v835 = vunpack.c.l.b16 %v803
      %v836 = vunpack.c.l.b16 %v804
      %v837 = vunpack.c.l.b16 %v805
      %v838 = vunpack.c.l.b16 %v806
      %v839 = vunpack.c.l.b16 %v807
      %v840 = vunpack.c.l.b16 %v808
      %v841 = vpack.c.b16 %v826, %v825
      %v842 = vpack.c.b16 %v828, %v827
      %v843 = vpack.c.b16 %v830, %v829
      %v844 = vpack.c.b16 %v832, %v831
      %v845 = vpack.c.b16 %v834, %v833
      %v846 = vpack.c.b16 %v836, %v835
      %v847 = vpack.c.b16 %v838, %v837
      %v848 = vpack.c.b16 %v840, %v839
      %849 = vrot.lane.b32.xlu0 %v269, 124
      %v850 = vpop.permute.xlu0 %849
      %851 = vrot.lane.b32.xlu0 %v270, 124
      %v852 = vpop.permute.xlu0 %851
      %853 = vrot.lane.b32.xlu0 %v271, 124
      %v854 = vpop.permute.xlu0 %853
      %855 = vrot.lane.b32.xlu0 %v272, 124
      %v856 = vpop.permute.xlu0 %855
      %v862 = vsel %vm285, %v841, 0
      %v865 = vsel %vm285, %v842, 0
      %v868 = vsel %vm285, %v843, 0
      %v871 = vsel %vm285, %v844, 0
      %v874 = vsel %vm285, %v845, 0
      %v877 = vsel %vm285, %v846, 0
      %v880 = vsel %vm285, %v847, 0
      %v883 = vsel %vm285, %v848, 0
      %885 = vmatpush.bf16.msra.mxu0 0
      %886 = vmatpush.bf16.msra.mxu0 0
      %887 = vmatpush.bf16.msra.mxu0 0
      %888 = vmatpush.bf16.msra.mxu0 0
      %889 = vmatpush.bf16.msra.mxu0 %v856
      %890 = vmatpush.bf16.msra.mxu0 %v854
      %891 = vmatpush.bf16.msra.mxu0 %v852
      %892 = vmatpush.bf16.msra.mxu0 %v850
      %893 = vmatmul.bf16.gmra.mxu0 %v862
      %v894 = vpop.f32.mrf.mxu0
      %v895 = vadd.f32 0.0, %v894
      %v896 = vpop.f32.mrf.mxu0
      %v897 = vadd.f32 0.0, %v896
      %898 = vmatmul.bf16.gmra.mxu0 %v865
      %v899 = vpop.f32.mrf.mxu0
      %v900 = vadd.f32 0.0, %v899
      %v901 = vpop.f32.mrf.mxu0
      %v902 = vadd.f32 0.0, %v901
      %903 = vmatmul.bf16.gmra.mxu0 %v868
      %v904 = vpop.f32.mrf.mxu0
      %v905 = vadd.f32 0.0, %v904
      %v906 = vpop.f32.mrf.mxu0
      %v907 = vadd.f32 0.0, %v906
      %908 = vmatmul.bf16.gmra.mxu0 %v871
      %v909 = vpop.f32.mrf.mxu0
      %v910 = vadd.f32 0.0, %v909
      %v911 = vpop.f32.mrf.mxu0
      %v912 = vadd.f32 0.0, %v911
      %913 = vmatmul.bf16.gmra.mxu0 %v874
      %v914 = vpop.f32.mrf.mxu0
      %v915 = vadd.f32 0.0, %v914
      %v916 = vpop.f32.mrf.mxu0
      %v917 = vadd.f32 0.0, %v916
      %918 = vmatmul.bf16.gmra.mxu0 %v877
      %v919 = vpop.f32.mrf.mxu0
      %v920 = vadd.f32 0.0, %v919
      %v921 = vpop.f32.mrf.mxu0
      %v922 = vadd.f32 0.0, %v921
      %923 = vmatmul.bf16.gmra.mxu0 %v880
      %v924 = vpop.f32.mrf.mxu0
      %v925 = vadd.f32 0.0, %v924
      %v926 = vpop.f32.mrf.mxu0
      %v927 = vadd.f32 0.0, %v926
      %928 = vmatmul.bf16.gmra.mxu0 %v883
      %v929 = vpop.f32.mrf.mxu0
      %v930 = vadd.f32 0.0, %v929
      %v931 = vpop.f32.mrf.mxu0
      %v932 = vadd.f32 0.0, %v931
      %933 = vdwg.mxu0
      %v934 = vadd.f32 %v776, %v895
      %v935 = vadd.f32 %v777, %v897
      %v936 = vadd.f32 %v778, %v900
      %v937 = vadd.f32 %v779, %v902
      %v938 = vadd.f32 %v780, %v905
      %v939 = vadd.f32 %v781, %v907
      %v940 = vadd.f32 %v782, %v910
      %v941 = vadd.f32 %v783, %v912
      %v942 = vadd.f32 %v784, %v915
      %v943 = vadd.f32 %v785, %v917
      %v944 = vadd.f32 %v786, %v920
      %v945 = vadd.f32 %v787, %v922
      %v946 = vadd.f32 %v788, %v925
      %v947 = vadd.f32 %v789, %v927
      %v948 = vadd.f32 %v790, %v930
      %v949 = vadd.f32 %v791, %v932
      %s950 = scalar_lea.vmem %s0, 320
      %v951 = vld [vmem:[%s950] sm:$0xf]
      %v952 = vld [vmem:[%s950 + $0x4] sm:$0xf]
      %v953 = vld [vmem:[%s950 + $0x8] sm:$0xf]
      %v954 = vld [vmem:[%s950 + $0xc] sm:$0xf]
      %v955 = vld [vmem:[%s950 + $0x10] sm:$0xf]
      %v956 = vld [vmem:[%s950 + $0x14] sm:$0xf]
      %v957 = vld [vmem:[%s950 + $0x18] sm:$0xf]
      %v958 = vld [vmem:[%s950 + $0x1c] sm:$0xf]
      %v959 = vld [vmem:[%s950 + $0x20] sm:$0xf]
      %v960 = vld [vmem:[%s950 + $0x24] sm:$0xf]
      %v961 = vld [vmem:[%s950 + $0x28] sm:$0xf]
      %v962 = vld [vmem:[%s950 + $0x2c] sm:$0xf]
      %v963 = vld [vmem:[%s950 + $0x30] sm:$0xf]
      %v964 = vld [vmem:[%s950 + $0x34] sm:$0xf]
      %v965 = vld [vmem:[%s950 + $0x38] sm:$0xf]
      %v966 = vld [vmem:[%s950 + $0x3c] sm:$0xf]
      %v983 = vunpack.c.l.b16 %v951
      %v984 = vunpack.c.l.b16 %v952
      %v985 = vunpack.c.l.b16 %v953
      %v986 = vunpack.c.l.b16 %v954
      %v987 = vunpack.c.l.b16 %v955
      %v988 = vunpack.c.l.b16 %v956
      %v989 = vunpack.c.l.b16 %v957
      %v990 = vunpack.c.l.b16 %v958
      %v991 = vunpack.c.l.b16 %v959
      %v992 = vunpack.c.l.b16 %v960
      %v993 = vunpack.c.l.b16 %v961
      %v994 = vunpack.c.l.b16 %v962
      %v995 = vunpack.c.l.b16 %v963
      %v996 = vunpack.c.l.b16 %v964
      %v997 = vunpack.c.l.b16 %v965
      %v998 = vunpack.c.l.b16 %v966
      %v999 = vpack.c.b16 %v984, %v983
      %v1000 = vpack.c.b16 %v986, %v985
      %v1001 = vpack.c.b16 %v988, %v987
      %v1002 = vpack.c.b16 %v990, %v989
      %v1003 = vpack.c.b16 %v992, %v991
      %v1004 = vpack.c.b16 %v994, %v993
      %v1005 = vpack.c.b16 %v996, %v995
      %v1006 = vpack.c.b16 %v998, %v997
      %1007 = vrot.lane.b32.xlu0 %v269, 123
      %v1008 = vpop.permute.xlu0 %1007
      %1009 = vrot.lane.b32.xlu0 %v270, 123
      %v1010 = vpop.permute.xlu0 %1009
      %1011 = vrot.lane.b32.xlu0 %v271, 123
      %v1012 = vpop.permute.xlu0 %1011
      %1013 = vrot.lane.b32.xlu0 %v272, 123
      %v1014 = vpop.permute.xlu0 %1013
      %v1020 = vsel %vm285, %v999, 0
      %v1023 = vsel %vm285, %v1000, 0
      %v1026 = vsel %vm285, %v1001, 0
      %v1029 = vsel %vm285, %v1002, 0
      %v1032 = vsel %vm285, %v1003, 0
      %v1035 = vsel %vm285, %v1004, 0
      %v1038 = vsel %vm285, %v1005, 0
      %v1041 = vsel %vm285, %v1006, 0
      %1043 = vmatpush.bf16.msra.mxu0 0
      %1044 = vmatpush.bf16.msra.mxu0 0
      %1045 = vmatpush.bf16.msra.mxu0 0
      %1046 = vmatpush.bf16.msra.mxu0 0
      %1047 = vmatpush.bf16.msra.mxu0 %v1014
      %1048 = vmatpush.bf16.msra.mxu0 %v1012
      %1049 = vmatpush.bf16.msra.mxu0 %v1010
      %1050 = vmatpush.bf16.msra.mxu0 %v1008
      %1051 = vmatmul.bf16.gmra.mxu0 %v1020
      %v1052 = vpop.f32.mrf.mxu0
      %v1053 = vadd.f32 0.0, %v1052
      %v1054 = vpop.f32.mrf.mxu0
      %v1055 = vadd.f32 0.0, %v1054
      %1056 = vmatmul.bf16.gmra.mxu0 %v1023
      %v1057 = vpop.f32.mrf.mxu0
      %v1058 = vadd.f32 0.0, %v1057
      %v1059 = vpop.f32.mrf.mxu0
      %v1060 = vadd.f32 0.0, %v1059
      %1061 = vmatmul.bf16.gmra.mxu0 %v1026
      %v1062 = vpop.f32.mrf.mxu0
      %v1063 = vadd.f32 0.0, %v1062
      %v1064 = vpop.f32.mrf.mxu0
      %v1065 = vadd.f32 0.0, %v1064
      %1066 = vmatmul.bf16.gmra.mxu0 %v1029
      %v1067 = vpop.f32.mrf.mxu0
      %v1068 = vadd.f32 0.0, %v1067
      %v1069 = vpop.f32.mrf.mxu0
      %v1070 = vadd.f32 0.0, %v1069
      %1071 = vmatmul.bf16.gmra.mxu0 %v1032
      %v1072 = vpop.f32.mrf.mxu0
      %v1073 = vadd.f32 0.0, %v1072
      %v1074 = vpop.f32.mrf.mxu0
      %v1075 = vadd.f32 0.0, %v1074
      %1076 = vmatmul.bf16.gmra.mxu0 %v1035
      %v1077 = vpop.f32.mrf.mxu0
      %v1078 = vadd.f32 0.0, %v1077
      %v1079 = vpop.f32.mrf.mxu0
      %v1080 = vadd.f32 0.0, %v1079
      %1081 = vmatmul.bf16.gmra.mxu0 %v1038
      %v1082 = vpop.f32.mrf.mxu0
      %v1083 = vadd.f32 0.0, %v1082
      %v1084 = vpop.f32.mrf.mxu0
      %v1085 = vadd.f32 0.0, %v1084
      %1086 = vmatmul.bf16.gmra.mxu0 %v1041
      %v1087 = vpop.f32.mrf.mxu0
      %v1088 = vadd.f32 0.0, %v1087
      %v1089 = vpop.f32.mrf.mxu0
      %v1090 = vadd.f32 0.0, %v1089
      %1091 = vdwg.mxu0
      %v1092 = vadd.f32 %v934, %v1053
      %v1093 = vadd.f32 %v935, %v1055
      %v1094 = vadd.f32 %v936, %v1058
      %v1095 = vadd.f32 %v937, %v1060
      %v1096 = vadd.f32 %v938, %v1063
      %v1097 = vadd.f32 %v939, %v1065
      %v1098 = vadd.f32 %v940, %v1068
      %v1099 = vadd.f32 %v941, %v1070
      %v1100 = vadd.f32 %v942, %v1073
      %v1101 = vadd.f32 %v943, %v1075
      %v1102 = vadd.f32 %v944, %v1078
      %v1103 = vadd.f32 %v945, %v1080
      %v1104 = vadd.f32 %v946, %v1083
      %v1105 = vadd.f32 %v947, %v1085
      %v1106 = vadd.f32 %v948, %v1088
      %v1107 = vadd.f32 %v949, %v1090
      %s1108 = scalar_lea.vmem %s0, 384
      %v1109 = vld [vmem:[%s1108] sm:$0xf]
      %v1110 = vld [vmem:[%s1108 + $0x4] sm:$0xf]
      %v1111 = vld [vmem:[%s1108 + $0x8] sm:$0xf]
      %v1112 = vld [vmem:[%s1108 + $0xc] sm:$0xf]
      %v1113 = vld [vmem:[%s1108 + $0x10] sm:$0xf]
      %v1114 = vld [vmem:[%s1108 + $0x14] sm:$0xf]
      %v1115 = vld [vmem:[%s1108 + $0x18] sm:$0xf]
      %v1116 = vld [vmem:[%s1108 + $0x1c] sm:$0xf]
      %v1117 = vld [vmem:[%s1108 + $0x20] sm:$0xf]
      %v1118 = vld [vmem:[%s1108 + $0x24] sm:$0xf]
      %v1119 = vld [vmem:[%s1108 + $0x28] sm:$0xf]
      %v1120 = vld [vmem:[%s1108 + $0x2c] sm:$0xf]
      %v1121 = vld [vmem:[%s1108 + $0x30] sm:$0xf]
      %v1122 = vld [vmem:[%s1108 + $0x34] sm:$0xf]
      %v1123 = vld [vmem:[%s1108 + $0x38] sm:$0xf]
      %v1124 = vld [vmem:[%s1108 + $0x3c] sm:$0xf]
      %v1141 = vunpack.c.l.b16 %v1109
      %v1142 = vunpack.c.l.b16 %v1110
      %v1143 = vunpack.c.l.b16 %v1111
      %v1144 = vunpack.c.l.b16 %v1112
      %v1145 = vunpack.c.l.b16 %v1113
      %v1146 = vunpack.c.l.b16 %v1114
      %v1147 = vunpack.c.l.b16 %v1115
      %v1148 = vunpack.c.l.b16 %v1116
      %v1149 = vunpack.c.l.b16 %v1117
      %v1150 = vunpack.c.l.b16 %v1118
      %v1151 = vunpack.c.l.b16 %v1119
      %v1152 = vunpack.c.l.b16 %v1120
      %v1153 = vunpack.c.l.b16 %v1121
      %v1154 = vunpack.c.l.b16 %v1122
      %v1155 = vunpack.c.l.b16 %v1123
      %v1156 = vunpack.c.l.b16 %v1124
      %v1157 = vpack.c.b16 %v1142, %v1141
      %v1158 = vpack.c.b16 %v1144, %v1143
      %v1159 = vpack.c.b16 %v1146, %v1145
      %v1160 = vpack.c.b16 %v1148, %v1147
      %v1161 = vpack.c.b16 %v1150, %v1149
      %v1162 = vpack.c.b16 %v1152, %v1151
      %v1163 = vpack.c.b16 %v1154, %v1153
      %v1164 = vpack.c.b16 %v1156, %v1155
      %1165 = vrot.lane.b32.xlu0 %v269, 122
      %v1166 = vpop.permute.xlu0 %1165
      %1167 = vrot.lane.b32.xlu0 %v270, 122
      %v1168 = vpop.permute.xlu0 %1167
      %1169 = vrot.lane.b32.xlu0 %v271, 122
      %v1170 = vpop.permute.xlu0 %1169
      %1171 = vrot.lane.b32.xlu0 %v272, 122
      %v1172 = vpop.permute.xlu0 %1171
      %v1178 = vsel %vm285, %v1157, 0
      %v1181 = vsel %vm285, %v1158, 0
      %v1184 = vsel %vm285, %v1159, 0
      %v1187 = vsel %vm285, %v1160, 0
      %v1190 = vsel %vm285, %v1161, 0
      %v1193 = vsel %vm285, %v1162, 0
      %v1196 = vsel %vm285, %v1163, 0
      %v1199 = vsel %vm285, %v1164, 0
      %1201 = vmatpush.bf16.msra.mxu0 0
      %1202 = vmatpush.bf16.msra.mxu0 0
      %1203 = vmatpush.bf16.msra.mxu0 0
      %1204 = vmatpush.bf16.msra.mxu0 0
      %1205 = vmatpush.bf16.msra.mxu0 %v1172
      %1206 = vmatpush.bf16.msra.mxu0 %v1170
      %1207 = vmatpush.bf16.msra.mxu0 %v1168
      %1208 = vmatpush.bf16.msra.mxu0 %v1166
      %1209 = vmatmul.bf16.gmra.mxu0 %v1178
      %v1210 = vpop.f32.mrf.mxu0
      %v1211 = vadd.f32 0.0, %v1210
      %v1212 = vpop.f32.mrf.mxu0
      %v1213 = vadd.f32 0.0, %v1212
      %1214 = vmatmul.bf16.gmra.mxu0 %v1181
      %v1215 = vpop.f32.mrf.mxu0
      %v1216 = vadd.f32 0.0, %v1215
      %v1217 = vpop.f32.mrf.mxu0
      %v1218 = vadd.f32 0.0, %v1217
      %1219 = vmatmul.bf16.gmra.mxu0 %v1184
      %v1220 = vpop.f32.mrf.mxu0
      %v1221 = vadd.f32 0.0, %v1220
      %v1222 = vpop.f32.mrf.mxu0
      %v1223 = vadd.f32 0.0, %v1222
      %1224 = vmatmul.bf16.gmra.mxu0 %v1187
      %v1225 = vpop.f32.mrf.mxu0
      %v1226 = vadd.f32 0.0, %v1225
      %v1227 = vpop.f32.mrf.mxu0
      %v1228 = vadd.f32 0.0, %v1227
      %1229 = vmatmul.bf16.gmra.mxu0 %v1190
      %v1230 = vpop.f32.mrf.mxu0
      %v1231 = vadd.f32 0.0, %v1230
      %v1232 = vpop.f32.mrf.mxu0
      %v1233 = vadd.f32 0.0, %v1232
      %1234 = vmatmul.bf16.gmra.mxu0 %v1193
      %v1235 = vpop.f32.mrf.mxu0
      %v1236 = vadd.f32 0.0, %v1235
      %v1237 = vpop.f32.mrf.mxu0
      %v1238 = vadd.f32 0.0, %v1237
      %1239 = vmatmul.bf16.gmra.mxu0 %v1196
      %v1240 = vpop.f32.mrf.mxu0
      %v1241 = vadd.f32 0.0, %v1240
      %v1242 = vpop.f32.mrf.mxu0
      %v1243 = vadd.f32 0.0, %v1242
      %1244 = vmatmul.bf16.gmra.mxu0 %v1199
      %v1245 = vpop.f32.mrf.mxu0
      %v1246 = vadd.f32 0.0, %v1245
      %v1247 = vpop.f32.mrf.mxu0
      %v1248 = vadd.f32 0.0, %v1247
      %1249 = vdwg.mxu0
      %v1250 = vadd.f32 %v1092, %v1211
      %v1251 = vadd.f32 %v1093, %v1213
      %v1252 = vadd.f32 %v1094, %v1216
      %v1253 = vadd.f32 %v1095, %v1218
      %v1254 = vadd.f32 %v1096, %v1221
      %v1255 = vadd.f32 %v1097, %v1223
      %v1256 = vadd.f32 %v1098, %v1226
      %v1257 = vadd.f32 %v1099, %v1228
      %v1258 = vadd.f32 %v1100, %v1231
      %v1259 = vadd.f32 %v1101, %v1233
      %v1260 = vadd.f32 %v1102, %v1236
      %v1261 = vadd.f32 %v1103, %v1238
      %v1262 = vadd.f32 %v1104, %v1241
      %v1263 = vadd.f32 %v1105, %v1243
      %v1264 = vadd.f32 %v1106, %v1246
      %v1265 = vadd.f32 %v1107, %v1248
      %s1266 = scalar_lea.vmem %s0, 448
      %v1267 = vld [vmem:[%s1266] sm:$0xf]
      %v1268 = vld [vmem:[%s1266 + $0x4] sm:$0xf]
      %v1269 = vld [vmem:[%s1266 + $0x8] sm:$0xf]
      %v1270 = vld [vmem:[%s1266 + $0xc] sm:$0xf]
      %v1271 = vld [vmem:[%s1266 + $0x10] sm:$0xf]
      %v1272 = vld [vmem:[%s1266 + $0x14] sm:$0xf]
      %v1273 = vld [vmem:[%s1266 + $0x18] sm:$0xf]
      %v1274 = vld [vmem:[%s1266 + $0x1c] sm:$0xf]
      %v1275 = vld [vmem:[%s1266 + $0x20] sm:$0xf]
      %v1276 = vld [vmem:[%s1266 + $0x24] sm:$0xf]
      %v1277 = vld [vmem:[%s1266 + $0x28] sm:$0xf]
      %v1278 = vld [vmem:[%s1266 + $0x2c] sm:$0xf]
      %v1279 = vld [vmem:[%s1266 + $0x30] sm:$0xf]
      %v1280 = vld [vmem:[%s1266 + $0x34] sm:$0xf]
      %v1281 = vld [vmem:[%s1266 + $0x38] sm:$0xf]
      %v1282 = vld [vmem:[%s1266 + $0x3c] sm:$0xf]
      %v1299 = vunpack.c.l.b16 %v1267
      %v1300 = vunpack.c.l.b16 %v1268
      %v1301 = vunpack.c.l.b16 %v1269
      %v1302 = vunpack.c.l.b16 %v1270
      %v1303 = vunpack.c.l.b16 %v1271
      %v1304 = vunpack.c.l.b16 %v1272
      %v1305 = vunpack.c.l.b16 %v1273
      %v1306 = vunpack.c.l.b16 %v1274
      %v1307 = vunpack.c.l.b16 %v1275
      %v1308 = vunpack.c.l.b16 %v1276
      %v1309 = vunpack.c.l.b16 %v1277
      %v1310 = vunpack.c.l.b16 %v1278
      %v1311 = vunpack.c.l.b16 %v1279
      %v1312 = vunpack.c.l.b16 %v1280
      %v1313 = vunpack.c.l.b16 %v1281
      %v1314 = vunpack.c.l.b16 %v1282
      %v1315 = vpack.c.b16 %v1300, %v1299
      %v1316 = vpack.c.b16 %v1302, %v1301
      %v1317 = vpack.c.b16 %v1304, %v1303
      %v1318 = vpack.c.b16 %v1306, %v1305
      %v1319 = vpack.c.b16 %v1308, %v1307
      %v1320 = vpack.c.b16 %v1310, %v1309
      %v1321 = vpack.c.b16 %v1312, %v1311
      %v1322 = vpack.c.b16 %v1314, %v1313
      %1323 = vrot.lane.b32.xlu0 %v269, 121
      %v1324 = vpop.permute.xlu0 %1323
      %1325 = vrot.lane.b32.xlu0 %v270, 121
      %v1326 = vpop.permute.xlu0 %1325
      %1327 = vrot.lane.b32.xlu0 %v271, 121
      %v1328 = vpop.permute.xlu0 %1327
      %1329 = vrot.lane.b32.xlu0 %v272, 121
      %v1330 = vpop.permute.xlu0 %1329
      %v1336 = vsel %vm285, %v1315, 0
      %v1339 = vsel %vm285, %v1316, 0
      %v1342 = vsel %vm285, %v1317, 0
      %v1345 = vsel %vm285, %v1318, 0
      %v1348 = vsel %vm285, %v1319, 0
      %v1351 = vsel %vm285, %v1320, 0
      %v1354 = vsel %vm285, %v1321, 0
      %v1357 = vsel %vm285, %v1322, 0
      %1359 = vmatpush.bf16.msra.mxu0 0
      %1360 = vmatpush.bf16.msra.mxu0 0
      %1361 = vmatpush.bf16.msra.mxu0 0
      %1362 = vmatpush.bf16.msra.mxu0 0
      %1363 = vmatpush.bf16.msra.mxu0 %v1330
      %1364 = vmatpush.bf16.msra.mxu0 %v1328
      %1365 = vmatpush.bf16.msra.mxu0 %v1326
      %1366 = vmatpush.bf16.msra.mxu0 %v1324
      %1367 = vmatmul.bf16.gmra.mxu0 %v1336
      %v1368 = vpop.f32.mrf.mxu0
      %v1369 = vadd.f32 0.0, %v1368
      %v1370 = vpop.f32.mrf.mxu0
      %v1371 = vadd.f32 0.0, %v1370
      %1372 = vmatmul.bf16.gmra.mxu0 %v1339
      %v1373 = vpop.f32.mrf.mxu0
      %v1374 = vadd.f32 0.0, %v1373
      %v1375 = vpop.f32.mrf.mxu0
      %v1376 = vadd.f32 0.0, %v1375
      %1377 = vmatmul.bf16.gmra.mxu0 %v1342
      %v1378 = vpop.f32.mrf.mxu0
      %v1379 = vadd.f32 0.0, %v1378
      %v1380 = vpop.f32.mrf.mxu0
      %v1381 = vadd.f32 0.0, %v1380
      %1382 = vmatmul.bf16.gmra.mxu0 %v1345
      %v1383 = vpop.f32.mrf.mxu0
      %v1384 = vadd.f32 0.0, %v1383
      %v1385 = vpop.f32.mrf.mxu0
      %v1386 = vadd.f32 0.0, %v1385
      %1387 = vmatmul.bf16.gmra.mxu0 %v1348
      %v1388 = vpop.f32.mrf.mxu0
      %v1389 = vadd.f32 0.0, %v1388
      %v1390 = vpop.f32.mrf.mxu0
      %v1391 = vadd.f32 0.0, %v1390
      %1392 = vmatmul.bf16.gmra.mxu0 %v1351
      %v1393 = vpop.f32.mrf.mxu0
      %v1394 = vadd.f32 0.0, %v1393
      %v1395 = vpop.f32.mrf.mxu0
      %v1396 = vadd.f32 0.0, %v1395
      %1397 = vmatmul.bf16.gmra.mxu0 %v1354
      %v1398 = vpop.f32.mrf.mxu0
      %v1399 = vadd.f32 0.0, %v1398
      %v1400 = vpop.f32.mrf.mxu0
      %v1401 = vadd.f32 0.0, %v1400
      %1402 = vmatmul.bf16.gmra.mxu0 %v1357
      %v1403 = vpop.f32.mrf.mxu0
      %v1404 = vadd.f32 0.0, %v1403
      %v1405 = vpop.f32.mrf.mxu0
      %v1406 = vadd.f32 0.0, %v1405
      %1407 = vdwg.mxu0
      %v1408 = vadd.f32 %v1250, %v1369
      %v1409 = vadd.f32 %v1251, %v1371
      %v1410 = vadd.f32 %v1252, %v1374
      %v1411 = vadd.f32 %v1253, %v1376
      %v1412 = vadd.f32 %v1254, %v1379
      %v1413 = vadd.f32 %v1255, %v1381
      %v1414 = vadd.f32 %v1256, %v1384
      %v1415 = vadd.f32 %v1257, %v1386
      %v1416 = vadd.f32 %v1258, %v1389
      %v1417 = vadd.f32 %v1259, %v1391
      %v1418 = vadd.f32 %v1260, %v1394
      %v1419 = vadd.f32 %v1261, %v1396
      %v1420 = vadd.f32 %v1262, %v1399
      %v1421 = vadd.f32 %v1263, %v1401
      %v1422 = vadd.f32 %v1264, %v1404
      %v1423 = vadd.f32 %v1265, %v1406
      %s1424 = scalar_lea.vmem %s0, 512
      %v1425 = vld [vmem:[%s1424] sm:$0xf]
      %v1426 = vld [vmem:[%s1424 + $0x4] sm:$0xf]
      %v1427 = vld [vmem:[%s1424 + $0x8] sm:$0xf]
      %v1428 = vld [vmem:[%s1424 + $0xc] sm:$0xf]
      %v1429 = vld [vmem:[%s1424 + $0x10] sm:$0xf]
      %v1430 = vld [vmem:[%s1424 + $0x14] sm:$0xf]
      %v1431 = vld [vmem:[%s1424 + $0x18] sm:$0xf]
      %v1432 = vld [vmem:[%s1424 + $0x1c] sm:$0xf]
      %v1433 = vld [vmem:[%s1424 + $0x20] sm:$0xf]
      %v1434 = vld [vmem:[%s1424 + $0x24] sm:$0xf]
      %v1435 = vld [vmem:[%s1424 + $0x28] sm:$0xf]
      %v1436 = vld [vmem:[%s1424 + $0x2c] sm:$0xf]
      %v1437 = vld [vmem:[%s1424 + $0x30] sm:$0xf]
      %v1438 = vld [vmem:[%s1424 + $0x34] sm:$0xf]
      %v1439 = vld [vmem:[%s1424 + $0x38] sm:$0xf]
      %v1440 = vld [vmem:[%s1424 + $0x3c] sm:$0xf]
      %v1457 = vunpack.c.l.b16 %v1425
      %v1458 = vunpack.c.l.b16 %v1426
      %v1459 = vunpack.c.l.b16 %v1427
      %v1460 = vunpack.c.l.b16 %v1428
      %v1461 = vunpack.c.l.b16 %v1429
      %v1462 = vunpack.c.l.b16 %v1430
      %v1463 = vunpack.c.l.b16 %v1431
      %v1464 = vunpack.c.l.b16 %v1432
      %v1465 = vunpack.c.l.b16 %v1433
      %v1466 = vunpack.c.l.b16 %v1434
      %v1467 = vunpack.c.l.b16 %v1435
      %v1468 = vunpack.c.l.b16 %v1436
      %v1469 = vunpack.c.l.b16 %v1437
      %v1470 = vunpack.c.l.b16 %v1438
      %v1471 = vunpack.c.l.b16 %v1439
      %v1472 = vunpack.c.l.b16 %v1440
      %v1473 = vpack.c.b16 %v1458, %v1457
      %v1474 = vpack.c.b16 %v1460, %v1459
      %v1475 = vpack.c.b16 %v1462, %v1461
      %v1476 = vpack.c.b16 %v1464, %v1463
      %v1477 = vpack.c.b16 %v1466, %v1465
      %v1478 = vpack.c.b16 %v1468, %v1467
      %v1479 = vpack.c.b16 %v1470, %v1469
      %v1480 = vpack.c.b16 %v1472, %v1471
      %1481 = vrot.lane.b32.xlu0 %v269, 120
      %v1482 = vpop.permute.xlu0 %1481
      %1483 = vrot.lane.b32.xlu0 %v270, 120
      %v1484 = vpop.permute.xlu0 %1483
      %1485 = vrot.lane.b32.xlu0 %v271, 120
      %v1486 = vpop.permute.xlu0 %1485
      %1487 = vrot.lane.b32.xlu0 %v272, 120
      %v1488 = vpop.permute.xlu0 %1487
      %v1494 = vsel %vm285, %v1473, 0
      %v1497 = vsel %vm285, %v1474, 0
      %v1500 = vsel %vm285, %v1475, 0
      %v1503 = vsel %vm285, %v1476, 0
      %v1506 = vsel %vm285, %v1477, 0
      %v1509 = vsel %vm285, %v1478, 0
      %v1512 = vsel %vm285, %v1479, 0
      %v1515 = vsel %vm285, %v1480, 0
      %1517 = vmatpush.bf16.msra.mxu0 0
      %1518 = vmatpush.bf16.msra.mxu0 0
      %1519 = vmatpush.bf16.msra.mxu0 0
      %1520 = vmatpush.bf16.msra.mxu0 0
      %1521 = vmatpush.bf16.msra.mxu0 %v1488
      %1522 = vmatpush.bf16.msra.mxu0 %v1486
      %1523 = vmatpush.bf16.msra.mxu0 %v1484
      %1524 = vmatpush.bf16.msra.mxu0 %v1482
      %1525 = vmatmul.bf16.gmra.mxu0 %v1494
      %v1526 = vpop.f32.mrf.mxu0
      %v1527 = vadd.f32 0.0, %v1526
      %v1528 = vpop.f32.mrf.mxu0
      %v1529 = vadd.f32 0.0, %v1528
      %1530 = vmatmul.bf16.gmra.mxu0 %v1497
      %v1531 = vpop.f32.mrf.mxu0
      %v1532 = vadd.f32 0.0, %v1531
      %v1533 = vpop.f32.mrf.mxu0
      %v1534 = vadd.f32 0.0, %v1533
      %1535 = vmatmul.bf16.gmra.mxu0 %v1500
      %v1536 = vpop.f32.mrf.mxu0
      %v1537 = vadd.f32 0.0, %v1536
      %v1538 = vpop.f32.mrf.mxu0
      %v1539 = vadd.f32 0.0, %v1538
      %1540 = vmatmul.bf16.gmra.mxu0 %v1503
      %v1541 = vpop.f32.mrf.mxu0
      %v1542 = vadd.f32 0.0, %v1541
      %v1543 = vpop.f32.mrf.mxu0
      %v1544 = vadd.f32 0.0, %v1543
      %1545 = vmatmul.bf16.gmra.mxu0 %v1506
      %v1546 = vpop.f32.mrf.mxu0
      %v1547 = vadd.f32 0.0, %v1546
      %v1548 = vpop.f32.mrf.mxu0
      %v1549 = vadd.f32 0.0, %v1548
      %1550 = vmatmul.bf16.gmra.mxu0 %v1509
      %v1551 = vpop.f32.mrf.mxu0
      %v1552 = vadd.f32 0.0, %v1551
      %v1553 = vpop.f32.mrf.mxu0
      %v1554 = vadd.f32 0.0, %v1553
      %1555 = vmatmul.bf16.gmra.mxu0 %v1512
      %v1556 = vpop.f32.mrf.mxu0
      %v1557 = vadd.f32 0.0, %v1556
      %v1558 = vpop.f32.mrf.mxu0
      %v1559 = vadd.f32 0.0, %v1558
      %1560 = vmatmul.bf16.gmra.mxu0 %v1515
      %v1561 = vpop.f32.mrf.mxu0
      %v1562 = vadd.f32 0.0, %v1561
      %v1563 = vpop.f32.mrf.mxu0
      %v1564 = vadd.f32 0.0, %v1563
      %1565 = vdwg.mxu0
      %v1566 = vadd.f32 %v1408, %v1527
      %v1567 = vadd.f32 %v1409, %v1529
      %v1568 = vadd.f32 %v1410, %v1532
      %v1569 = vadd.f32 %v1411, %v1534
      %v1570 = vadd.f32 %v1412, %v1537
      %v1571 = vadd.f32 %v1413, %v1539
      %v1572 = vadd.f32 %v1414, %v1542
      %v1573 = vadd.f32 %v1415, %v1544
      %v1574 = vadd.f32 %v1416, %v1547
      %v1575 = vadd.f32 %v1417, %v1549
      %v1576 = vadd.f32 %v1418, %v1552
      %v1577 = vadd.f32 %v1419, %v1554
      %v1578 = vadd.f32 %v1420, %v1557
      %v1579 = vadd.f32 %v1421, %v1559
      %v1580 = vadd.f32 %v1422, %v1562
      %v1581 = vadd.f32 %v1423, %v1564
      %v1582 = vld [vmem:[%s1] sm:$0xff]
      %v1583 = vld [vmem:[%s1 + $0x8] sm:$0xff]
      %v1584 = vld [vmem:[%s1 + $0x10] sm:$0xff]
      %v1585 = vld [vmem:[%s1 + $0x18] sm:$0xff]
      %v1586 = vld [vmem:[%s1 + $0x20] sm:$0xff]
      %v1587 = vld [vmem:[%s1 + $0x28] sm:$0xff]
      %v1588 = vld [vmem:[%s1 + $0x30] sm:$0xff]
      %v1589 = vld [vmem:[%s1 + $0x38] sm:$0xff]
      %v1590 = vld [vmem:[%s1 + $0x40] sm:$0xff]
      %v1591 = vld [vmem:[%s1 + $0x48] sm:$0xff]
      %v1592 = vld [vmem:[%s1 + $0x50] sm:$0xff]
      %v1593 = vld [vmem:[%s1 + $0x58] sm:$0xff]
      %v1594 = vld [vmem:[%s1 + $0x60] sm:$0xff]
      %v1595 = vld [vmem:[%s1 + $0x68] sm:$0xff]
      %v1596 = vld [vmem:[%s1 + $0x70] sm:$0xff]
      %v1597 = vld [vmem:[%s1 + $0x78] sm:$0xff]
      %v1598 = vadd.f32 %v1566, %v1582
      %v1599 = vadd.f32 %v1567, %v1583
      %v1600 = vadd.f32 %v1568, %v1584
      %v1601 = vadd.f32 %v1569, %v1585
      %v1602 = vadd.f32 %v1570, %v1586
      %v1603 = vadd.f32 %v1571, %v1587
      %v1604 = vadd.f32 %v1572, %v1588
      %v1605 = vadd.f32 %v1573, %v1589
      %v1606 = vadd.f32 %v1574, %v1590
      %v1607 = vadd.f32 %v1575, %v1591
      %v1608 = vadd.f32 %v1576, %v1592
      %v1609 = vadd.f32 %v1577, %v1593
      %v1610 = vadd.f32 %v1578, %v1594
      %v1611 = vadd.f32 %v1579, %v1595
      %v1612 = vadd.f32 %v1580, %v1596
      %v1613 = vadd.f32 %v1581, %v1597
      %v1614 = vmax.f32 %v1598, 0.0
      %v1615 = vmax.f32 %v1599, 0.0
      %v1616 = vmax.f32 %v1600, 0.0
      %v1617 = vmax.f32 %v1601, 0.0
      %v1618 = vmax.f32 %v1602, 0.0
      %v1619 = vmax.f32 %v1603, 0.0
      %v1620 = vmax.f32 %v1604, 0.0
      %v1621 = vmax.f32 %v1605, 0.0
      %v1622 = vmax.f32 %v1606, 0.0
      %v1623 = vmax.f32 %v1607, 0.0
      %v1624 = vmax.f32 %v1608, 0.0
      %v1625 = vmax.f32 %v1609, 0.0
      %v1626 = vmax.f32 %v1610, 0.0
      %v1627 = vmax.f32 %v1611, 0.0
      %v1628 = vmax.f32 %v1612, 0.0
      %v1629 = vmax.f32 %v1613, 0.0
      %v1630 = vpack.c.bf16 %v1614, %v1614
      %v1631 = vpack.c.bf16 %v1615, %v1615
      %v1632 = vpack.c.bf16 %v1616, %v1616
      %v1633 = vpack.c.bf16 %v1617, %v1617
      %v1634 = vpack.c.bf16 %v1618, %v1618
      %v1635 = vpack.c.bf16 %v1619, %v1619
      %v1636 = vpack.c.bf16 %v1620, %v1620
      %v1637 = vpack.c.bf16 %v1621, %v1621
      %v1638 = vpack.c.bf16 %v1622, %v1622
      %v1639 = vpack.c.bf16 %v1623, %v1623
      %v1640 = vpack.c.bf16 %v1624, %v1624
      %v1641 = vpack.c.bf16 %v1625, %v1625
      %v1642 = vpack.c.bf16 %v1626, %v1626
      %v1643 = vpack.c.bf16 %v1627, %v1627
      %v1644 = vpack.c.bf16 %v1628, %v1628
      %v1645 = vpack.c.bf16 %v1629, %v1629
      %vm1646 = vcmask 3072
      %1647 = vst.msk [vmem:[%s170] sm:$0xf] %vm1646, %v1630
      %1648 = vst.msk [vmem:[%s170 + $0x4] sm:$0xf] %vm1646, %v1631
      %1649 = vst.msk [vmem:[%s170 + $0x8] sm:$0xf] %vm1646, %v1632
      %1650 = vst.msk [vmem:[%s170 + $0xc] sm:$0xf] %vm1646, %v1633
      %1651 = vst.msk [vmem:[%s170 + $0x10] sm:$0xf] %vm1646, %v1634
      %1652 = vst.msk [vmem:[%s170 + $0x14] sm:$0xf] %vm1646, %v1635
      %1653 = vst.msk [vmem:[%s170 + $0x18] sm:$0xf] %vm1646, %v1636
      %1654 = vst.msk [vmem:[%s170 + $0x1c] sm:$0xf] %vm1646, %v1637
      %1655 = vst.msk [vmem:[%s170 + $0x20] sm:$0xf] %vm1646, %v1638
      %1656 = vst.msk [vmem:[%s170 + $0x24] sm:$0xf] %vm1646, %v1639
      %1657 = vst.msk [vmem:[%s170 + $0x28] sm:$0xf] %vm1646, %v1640
      %1658 = vst.msk [vmem:[%s170 + $0x2c] sm:$0xf] %vm1646, %v1641
      %1659 = vst.msk [vmem:[%s170 + $0x30] sm:$0xf] %vm1646, %v1642
      %1660 = vst.msk [vmem:[%s170 + $0x34] sm:$0xf] %vm1646, %v1643
      %1661 = vst.msk [vmem:[%s170 + $0x38] sm:$0xf] %vm1646, %v1644
      %1662 = vst.msk [vmem:[%s170 + $0x3c] sm:$0xf] %vm1646, %v1645
      %p1663 = scmp.lt.s32.totalorder %s14, 1
      %s1664 = scalar_select %p1663, %s14, 1
      %s1665 = smul.addr %s1664, 16
      %s1666 = smul.addr %s1665, 4
      %s1667 = scalar_lea.vmem %s3, %s1666
      // Predicated region
      $region33: #{ccnn1_forward.12} parent=31 // pred_check
        %p1668 = pneg %p100
      $region34: #{ccnn1_forward.12} parent=31 // pred_check_branch
        %1670 = sbr.rel (%p1668) target = $region36
      $region35: #{ccnn1_forward.12} parent=31 // pred_region
        _
      $region36: #{ccnn1_forward.12} parent=31 // pred_fallthru
        _
    $region32: #{ccnn1_forward.12} parent=5 // pred_fallthru
      _
    %p1671 = scmp.le.s32.totalorder 2, %s9
    // Predicated region
    $region37: #{ccnn1_forward.12} parent=5 // pred_check
      %p1672 = pneg %p1671
    $region38: #{ccnn1_forward.12} parent=5 // pred_check_branch
      %1674 = sbr.rel (%p1672) target = $region40
    $region39: #{ccnn1_forward.12} parent=5 // pred_region
      %s1675 = ssub.s32 %s9, 2
      // Predicated region
      $region41: #{ccnn1_forward.12} parent=39 // pred_check
        %p1676 = pneg %p106
      $region42: #{ccnn1_forward.12} parent=39 // pred_check_branch
        %1678 = sbr.rel (%p1676) target = $region44
      $region43: #{ccnn1_forward.12} parent=39 // pred_region
        %p1679 = scmp.lt.s32.totalorder %s15, 1
        %s1680 = scalar_select %p1679, %s15, 1
        %s1681 = smul.addr %s1680, 16
        %s1682 = smul.addr %s1681, 4
        %s1683 = scalar_lea.vmem %s3, %s1682
      $region44: #{ccnn1_forward.12} parent=39 // pred_fallthru
        _
    $region40: #{ccnn1_forward.12} parent=5 // pred_fallthru
      _
  $region6: #{ccnn1_forward.12} parent=0 // loop_footer
    %s13 = sadd.s32 1, %s9
  $region7: #{ccnn1_forward.12} parent=0 // loop_footer_branch
    %8 = sbr.rel target = $region3
  $region8: #{ccnn1_forward.12} parent=0 // loop_exit
    _

// kernel: ccnn1_forward.13
$region0: #{ccnn1_forward.13}
  #allocation0 [shape = 'u32[]', space=smem, size = 0x4, offset = 0x4, fixed_abs, tag = 'smem constant byte address 0x4 - core index']
  #allocation1 [shape = 'u32[72,128]{1,0:T(1,128)}', space=vmem, size = 0x9000, scoped, tag = 'internal scratch']
  %s0 = inlined_call_operand.vmem [shape: bf16[9,64,32], index: 0, kind: input, shape index: {}]
  %s1 = inlined_call_operand.vmem [shape: f32[64,1], index: 1, kind: input, shape index: {}]
  %s2 = inlined_call_operand.vmem [shape: bf16[2,1,32,16], index: 2, kind: input, shape index: {}]
  %s3 = inlined_call_operand.vmem [shape: bf16[2,64,6], index: 3, kind: output, shape index: {}]
  %s4 = sld [smem:[#allocation0]]
  $region45: #{ccnn1_forward.13} parent=0
    _
  %s6 = ssub.s32 1, %s4
  %s7 = scalar_select 0, %s6, %s4
  loop: start=0, step=1, limit=4
  $region2: #{ccnn1_forward.13} parent=0 // loop_pre_header
    _
  $region3: #{ccnn1_forward.13} parent=0 // loop_header
    %s9 = sphi 0, %s13
    %p10 = scmp.ge.s32.totalorder %s9, 4
    %s17 = sphi 0, %s17
    %s19 = sphi 0, %s17
    %s20 = sphi 0, %s19
    %s34 = sphi 0, %s20
    %s38 = sphi 0, %s38
    %s40 = sphi 0, %s38
    %s41 = sphi 0, %s40
    %s55 = sphi 0, %s41
    %s61 = sphi 0, %s63
    %s64 = sphi 0, %s61
    %s65 = sphi 0, %s64
    %s81 = sphi 0, %s65
    %s87 = sphi 0, %s89
    %s90 = sphi 0, %s87
    %s91 = sphi 0, %s90
    %s107 = sphi 0, %s91
  $region4: #{ccnn1_forward.13} parent=0 // loop_header_branch
    %12 = sbr.rel (%p10) target = $region8
  $region5: #{ccnn1_forward.13} parent=0 // loop_body
    %s14 = ssub.s32 %s9, 1
    %s15 = ssub.s32 %s9, 2
    %s16 = sadd.s32 %s9, 1
    %s18 = sadd.s32 %s17, 1
    %p21 = scmp.eq.s32.totalorder %s9, 1
    %p22 = scmp.ne.s32.totalorder %s17, %s19
    %p23 = scmp.eq.s32.totalorder %s9, 0
    %p24 = por %p22, %p23
    %p25 = scmp.ne.s32.totalorder %s17, %s19
    %p26 = scmp.eq.s32.totalorder %s14, 1
    %p27 = por %p25, %p26
    %p28 = scmp.ne.s32.totalorder %s19, %s20
    %p29 = scmp.eq.s32.totalorder %s14, 0
    %p30 = por %p28, %p29
    %p31 = scmp.ne.s32.totalorder %s19, %s20
    %p32 = scmp.eq.s32.totalorder %s15, 1
    %p33 = por %p31, %p32
    %p35 = scmp.ne.s32.totalorder %s20, %s34
    %p36 = scmp.eq.s32.totalorder %s15, 0
    %p37 = por %p35, %p36
    %s39 = sadd.s32 %s38, 1
    %p42 = scmp.eq.s32.totalorder %s9, 1
    %p43 = scmp.ne.s32.totalorder %s38, %s40
    %p44 = scmp.eq.s32.totalorder %s9, 0
    %p45 = por %p43, %p44
    %p46 = scmp.ne.s32.totalorder %s38, %s40
    %p47 = scmp.eq.s32.totalorder %s14, 1
    %p48 = por %p46, %p47
    %p49 = scmp.ne.s32.totalorder %s40, %s41
    %p50 = scmp.eq.s32.totalorder %s14, 0
    %p51 = por %p49, %p50
    %p52 = scmp.ne.s32.totalorder %s40, %s41
    %p53 = scmp.eq.s32.totalorder %s15, 1
    %p54 = por %p52, %p53
    %p56 = scmp.ne.s32.totalorder %s41, %s55
    %p57 = scmp.eq.s32.totalorder %s15, 0
    %p58 = por %p56, %p57
    %s59 = ssub.s32 %s9, %s16
    %p60 = scmp.eq.s32.totalorder %s59, 0
    %s62 = sadd.s32 %s61, 1
    %s63 = scalar_select %p60, %s61, %s62
    %p66 = pneg %p60
    %p67 = scmp.eq.s32.totalorder %s9, 1
    %p68 = por %p66, %p67
    %p69 = scmp.ne.s32.totalorder %s61, %s64
    %p70 = scmp.eq.s32.totalorder %s9, 0
    %p71 = por %p69, %p70
    %p72 = scmp.ne.s32.totalorder %s61, %s64
    %p73 = scmp.eq.s32.totalorder %s14, 1
    %p74 = por %p72, %p73
    %p75 = scmp.ne.s32.totalorder %s64, %s65
    %p76 = scmp.eq.s32.totalorder %s14, 0
    %p77 = por %p75, %p76
    %p78 = scmp.ne.s32.totalorder %s64, %s65
    %p79 = scmp.eq.s32.totalorder %s15, 1
    %p80 = por %p78, %p79
    %p82 = scmp.ne.s32.totalorder %s65, %s81
    %p83 = scmp.eq.s32.totalorder %s15, 0
    %p84 = por %p82, %p83
    %s85 = ssub.s32 %s9, %s16
    %p86 = scmp.eq.s32.totalorder %s85, 0
    %s88 = sadd.s32 %s87, 1
    %s89 = scalar_select %p86, %s87, %s88
    %p92 = pneg %p86
    %p93 = scmp.eq.s32.totalorder %s9, 1
    %p94 = por %p92, %p93
    %p95 = scmp.ne.s32.totalorder %s87, %s90
    %p96 = scmp.eq.s32.totalorder %s9, 0
    %p97 = por %p95, %p96
    %p98 = scmp.ne.s32.totalorder %s87, %s90
    %p99 = scmp.eq.s32.totalorder %s14, 1
    %p100 = por %p98, %p99
    %p101 = scmp.ne.s32.totalorder %s90, %s91
    %p102 = scmp.eq.s32.totalorder %s14, 0
    %p103 = por %p101, %p102
    %p104 = scmp.ne.s32.totalorder %s90, %s91
    %p105 = scmp.eq.s32.totalorder %s15, 1
    %p106 = por %p104, %p105
    %p108 = scmp.ne.s32.totalorder %s91, %s107
    %p109 = scmp.eq.s32.totalorder %s15, 0
    %p110 = por %p108, %p109
    %p111 = scmp.le.s32.totalorder 1, %s9
    %p112 = scmp.lt.s32.totalorder %s9, 3
    %p113 = pnand %p111, %p112
    %p114 = pneg %p113
    // Predicated region
    $region9: #{ccnn1_forward.13} parent=5 // pred_check
      _
    $region10: #{ccnn1_forward.13} parent=5 // pred_check_branch
      %116 = sbr.rel (%p113) target = $region12
    $region11: #{ccnn1_forward.13} parent=5 // pred_region
      %s117 = ssub.s32 %s9, 1
      // Predicated region
      $region13: #{ccnn1_forward.13} parent=11 // pred_check
        %p118 = pneg %p30
      $region14: #{ccnn1_forward.13} parent=11 // pred_check_branch
        %120 = sbr.rel (%p118) target = $region16
      $region15: #{ccnn1_forward.13} parent=11 // pred_region
        _
      $region16: #{ccnn1_forward.13} parent=11 // pred_fallthru
        _
      // Predicated region
      $region17: #{ccnn1_forward.13} parent=11 // pred_check
        %p121 = pneg %p51
      $region18: #{ccnn1_forward.13} parent=11 // pred_check_branch
        %123 = sbr.rel (%p121) target = $region20
      $region19: #{ccnn1_forward.13} parent=11 // pred_region
        _
      $region20: #{ccnn1_forward.13} parent=11 // pred_fallthru
        _
    $region12: #{ccnn1_forward.13} parent=5 // pred_fallthru
      _
    %p124 = scmp.lt.s32.totalorder %s9, 2
    // Predicated region
    $region21: #{ccnn1_forward.13} parent=5 // pred_check
      %p125 = pneg %p124
    $region22: #{ccnn1_forward.13} parent=5 // pred_check_branch
      %127 = sbr.rel (%p125) target = $region24
    $region23: #{ccnn1_forward.13} parent=5 // pred_region
      // Predicated region
      $region25: #{ccnn1_forward.13} parent=23 // pred_check
        %p128 = pneg %p71
      $region26: #{ccnn1_forward.13} parent=23 // pred_check_branch
        %130 = sbr.rel (%p128) target = $region28
      $region27: #{ccnn1_forward.13} parent=23 // pred_region
        %p131 = scmp.lt.s32.totalorder %s9, 1
        %s132 = scalar_select %p131, %s9, 1
        %s133 = smul.addr %s132, 4
        %s134 = smul.addr %s133, 4
        %s135 = scalar_lea.vmem %s2, %s134
      $region28: #{ccnn1_forward.13} parent=23 // pred_fallthru
        _
    $region24: #{ccnn1_forward.13} parent=5 // pred_fallthru
      _
    %p136 = scmp.le.s32.totalorder 1, %s9
    %p137 = scmp.lt.s32.totalorder %s9, 3
    %p138 = pnand %p136, %p137
    %p139 = pneg %p138
    // Predicated region
    $region29: #{ccnn1_forward.13} parent=5 // pred_check
      _
    $region30: #{ccnn1_forward.13} parent=5 // pred_check_branch
      %141 = sbr.rel (%p138) target = $region32
    $region31: #{ccnn1_forward.13} parent=5 // pred_region
      %s142 = ssub.s32 %s9, 1
      %p143 = pneg %p30
      %p144 = pneg %p27
      %p145 = pneg %p51
      %p146 = pneg %p48
      %p147 = scmp.lt.s32.totalorder %s14, 1
      %s148 = scalar_select %p147, %s14, 1
      %s149 = smul.addr %s148, 4
      %s150 = smul.addr %s149, 4
      %s151 = scalar_lea.vmem %s2, %s150
      %p152 = pneg %p77
      %p153 = pneg %p74
      %p154 = pneg %p103
      %p155 = pneg %p100
      %p156 = scmp.lt.s32.totalorder %s14, 1
      %s157 = scalar_select %p156, %s14, 1
      %s158 = smul.addr %s157, 8
      %s159 = smul.addr %s158, 4
      %s160 = scalar_lea.vmem %s3, %s159
      %p161 = scmp.lt.s32.totalorder %s14, 1
      %s162 = scalar_select %p161, %s14, 1
      %s163 = smul.addr %s162, 4
      %s164 = smul.addr %s163, 4
      %s165 = scalar_lea.vmem %s2, %s164
      %p166 = scmp.lt.s32.totalorder %s14, 1
      %s167 = scalar_select %p166, %s14, 1
      %s168 = smul.addr %s167, 8
      %s169 = smul.addr %s168, 4
      %s170 = scalar_lea.vmem %s3, %s169
      %v172 = vld [vmem:[%s165] sm:$0xf]
      %v173 = vld [vmem:[%s165 + $0x4] sm:$0xf]
      %v174 = vld [vmem:[%s165 + $0x8] sm:$0xf]
      %v175 = vld [vmem:[%s165 + $0xc] sm:$0xf]
      %v176 = vld [vmem:[%s0] sm:$0xf]
      %v177 = vld [vmem:[%s0 + $0x4] sm:$0xf]
      %v178 = vld [vmem:[%s0 + $0x8] sm:$0xf]
      %v179 = vld [vmem:[%s0 + $0xc] sm:$0xf]
      %v180 = vld [vmem:[%s0 + $0x10] sm:$0xf]
      %v181 = vld [vmem:[%s0 + $0x14] sm:$0xf]
      %v182 = vld [vmem:[%s0 + $0x18] sm:$0xf]
      %v183 = vld [vmem:[%s0 + $0x1c] sm:$0xf]
      %s184 = scalar_lea.vmem %s0, 32
      %v185 = vld [vmem:[%s184] sm:$0xf]
      %v186 = vld [vmem:[%s184 + $0x4] sm:$0xf]
      %v187 = vld [vmem:[%s184 + $0x8] sm:$0xf]
      %v188 = vld [vmem:[%s184 + $0xc] sm:$0xf]
      %v189 = vld [vmem:[%s184 + $0x10] sm:$0xf]
      %v190 = vld [vmem:[%s184 + $0x14] sm:$0xf]
      %v191 = vld [vmem:[%s184 + $0x18] sm:$0xf]
      %v192 = vld [vmem:[%s184 + $0x1c] sm:$0xf]
      %v201 = vunpack.c.l.b16 %v185
      %v202 = vunpack.c.l.b16 %v186
      %v203 = vunpack.c.l.b16 %v187
      %v204 = vunpack.c.l.b16 %v188
      %v205 = vunpack.c.l.b16 %v189
      %v206 = vunpack.c.l.b16 %v190
      %v207 = vunpack.c.l.b16 %v191
      %v208 = vunpack.c.l.b16 %v192
      %v209 = vpack.c.b16 %v202, %v201
      %v210 = vpack.c.b16 %v204, %v203
      %v211 = vpack.c.b16 %v206, %v205
      %v212 = vpack.c.b16 %v208, %v207
      %v217 = vunpack.c.l.b16 %v172
      %v218 = vunpack.c.l.b16 %v173
      %v219 = vunpack.c.l.b16 %v174
      %v220 = vunpack.c.l.b16 %v175
      %v221 = vpack.c.b16 %v218, %v217
      %v222 = vpack.c.b16 %v220, %v219
      %223 = vrot.lane.b32.xlu0 %v221, 127
      %v224 = vpop.permute.xlu0 %223
      %225 = vrot.lane.b32.xlu0 %v222, 127
      %v226 = vpop.permute.xlu0 %225
      %vm229 = vcmask 261120
      %v231 = vsel %vm229, %v209, 0
      %v234 = vsel %vm229, %v210, 0
      %v237 = vsel %vm229, %v211, 0
      %v240 = vsel %vm229, %v212, 0
      %242 = vmatpush.bf16.msra.mxu0 0
      %243 = vmatpush.bf16.msra.mxu0 0
      %244 = vmatpush.bf16.msra.mxu0 0
      %245 = vmatpush.bf16.msra.mxu0 0
      %246 = vmatpush.bf16.msra.mxu0 0
      %247 = vmatpush.bf16.msra.mxu0 0
      %248 = vmatpush.bf16.msra.mxu0 %v226
      %249 = vmatpush.bf16.msra.mxu0 %v224
      %250 = vmatmul.bf16.gmra.mxu0 %v231
      %v251 = vpop.f32.mrf.mxu0
      %v252 = vadd.f32 0.0, %v251
      %v253 = vpop.f32.mrf.mxu0
      %v254 = vadd.f32 0.0, %v253
      %255 = vmatmul.bf16.gmra.mxu0 %v234
      %v256 = vpop.f32.mrf.mxu0
      %v257 = vadd.f32 0.0, %v256
      %v258 = vpop.f32.mrf.mxu0
      %v259 = vadd.f32 0.0, %v258
      %260 = vmatmul.bf16.gmra.mxu0 %v237
      %v261 = vpop.f32.mrf.mxu0
      %v262 = vadd.f32 0.0, %v261
      %v263 = vpop.f32.mrf.mxu0
      %v264 = vadd.f32 0.0, %v263
      %265 = vmatmul.bf16.gmra.mxu0 %v240
      %v266 = vpop.f32.mrf.mxu0
      %v267 = vadd.f32 0.0, %v266
      %v268 = vpop.f32.mrf.mxu0
      %v269 = vadd.f32 0.0, %v268
      %270 = vdwg.mxu0
      %v279 = vunpack.c.l.b16 %v176
      %v280 = vunpack.c.l.b16 %v177
      %v281 = vunpack.c.l.b16 %v178
      %v282 = vunpack.c.l.b16 %v179
      %v283 = vunpack.c.l.b16 %v180
      %v284 = vunpack.c.l.b16 %v181
      %v285 = vunpack.c.l.b16 %v182
      %v286 = vunpack.c.l.b16 %v183
      %v287 = vpack.c.b16 %v280, %v279
      %v288 = vpack.c.b16 %v282, %v281
      %v289 = vpack.c.b16 %v284, %v283
      %v290 = vpack.c.b16 %v286, %v285
      %v294 = vsel %vm229, %v287, 0
      %v297 = vsel %vm229, %v288, 0
      %v300 = vsel %vm229, %v289, 0
      %v303 = vsel %vm229, %v290, 0
      %305 = vmatpush.bf16.msra.mxu0 0
      %306 = vmatpush.bf16.msra.mxu0 0
      %307 = vmatpush.bf16.msra.mxu0 0
      %308 = vmatpush.bf16.msra.mxu0 0
      %309 = vmatpush.bf16.msra.mxu0 0
      %310 = vmatpush.bf16.msra.mxu0 0
      %311 = vmatpush.bf16.msra.mxu0 %v222
      %312 = vmatpush.bf16.msra.mxu0 %v221
      %313 = vmatmul.bf16.gmra.mxu0 %v294
      %v314 = vpop.f32.mrf.mxu0
      %v315 = vadd.f32 %v252, %v314
      %v316 = vpop.f32.mrf.mxu0
      %v317 = vadd.f32 %v254, %v316
      %318 = vmatmul.bf16.gmra.mxu0 %v297
      %v319 = vpop.f32.mrf.mxu0
      %v320 = vadd.f32 %v257, %v319
      %v321 = vpop.f32.mrf.mxu0
      %v322 = vadd.f32 %v259, %v321
      %323 = vmatmul.bf16.gmra.mxu0 %v300
      %v324 = vpop.f32.mrf.mxu0
      %v325 = vadd.f32 %v262, %v324
      %v326 = vpop.f32.mrf.mxu0
      %v327 = vadd.f32 %v264, %v326
      %328 = vmatmul.bf16.gmra.mxu0 %v303
      %v329 = vpop.f32.mrf.mxu0
      %v330 = vadd.f32 %v267, %v329
      %v331 = vpop.f32.mrf.mxu0
      %v332 = vadd.f32 %v269, %v331
      %333 = vdwg.mxu0
      %s334 = scalar_lea.vmem %s0, 64
      %v335 = vld [vmem:[%s334] sm:$0xf]
      %v336 = vld [vmem:[%s334 + $0x4] sm:$0xf]
      %v337 = vld [vmem:[%s334 + $0x8] sm:$0xf]
      %v338 = vld [vmem:[%s334 + $0xc] sm:$0xf]
      %v339 = vld [vmem:[%s334 + $0x10] sm:$0xf]
      %v340 = vld [vmem:[%s334 + $0x14] sm:$0xf]
      %v341 = vld [vmem:[%s334 + $0x18] sm:$0xf]
      %v342 = vld [vmem:[%s334 + $0x1c] sm:$0xf]
      %v351 = vunpack.c.l.b16 %v335
      %v352 = vunpack.c.l.b16 %v336
      %v353 = vunpack.c.l.b16 %v337
      %v354 = vunpack.c.l.b16 %v338
      %v355 = vunpack.c.l.b16 %v339
      %v356 = vunpack.c.l.b16 %v340
      %v357 = vunpack.c.l.b16 %v341
      %v358 = vunpack.c.l.b16 %v342
      %v359 = vpack.c.b16 %v352, %v351
      %v360 = vpack.c.b16 %v354, %v353
      %v361 = vpack.c.b16 %v356, %v355
      %v362 = vpack.c.b16 %v358, %v357
      %363 = vrot.lane.b32.xlu0 %v221, 126
      %v364 = vpop.permute.xlu0 %363
      %365 = vrot.lane.b32.xlu0 %v222, 126
      %v366 = vpop.permute.xlu0 %365
      %v370 = vsel %vm229, %v359, 0
      %v373 = vsel %vm229, %v360, 0
      %v376 = vsel %vm229, %v361, 0
      %v379 = vsel %vm229, %v362, 0
      %381 = vmatpush.bf16.msra.mxu0 0
      %382 = vmatpush.bf16.msra.mxu0 0
      %383 = vmatpush.bf16.msra.mxu0 0
      %384 = vmatpush.bf16.msra.mxu0 0
      %385 = vmatpush.bf16.msra.mxu0 0
      %386 = vmatpush.bf16.msra.mxu0 0
      %387 = vmatpush.bf16.msra.mxu0 %v366
      %388 = vmatpush.bf16.msra.mxu0 %v364
      %389 = vmatmul.bf16.gmra.mxu0 %v370
      %v390 = vpop.f32.mrf.mxu0
      %v391 = vadd.f32 0.0, %v390
      %v392 = vpop.f32.mrf.mxu0
      %v393 = vadd.f32 0.0, %v392
      %394 = vmatmul.bf16.gmra.mxu0 %v373
      %v395 = vpop.f32.mrf.mxu0
      %v396 = vadd.f32 0.0, %v395
      %v397 = vpop.f32.mrf.mxu0
      %v398 = vadd.f32 0.0, %v397
      %399 = vmatmul.bf16.gmra.mxu0 %v376
      %v400 = vpop.f32.mrf.mxu0
      %v401 = vadd.f32 0.0, %v400
      %v402 = vpop.f32.mrf.mxu0
      %v403 = vadd.f32 0.0, %v402
      %404 = vmatmul.bf16.gmra.mxu0 %v379
      %v405 = vpop.f32.mrf.mxu0
      %v406 = vadd.f32 0.0, %v405
      %v407 = vpop.f32.mrf.mxu0
      %v408 = vadd.f32 0.0, %v407
      %409 = vdwg.mxu0
      %v410 = vadd.f32 %v315, %v391
      %v411 = vadd.f32 %v317, %v393
      %v412 = vadd.f32 %v320, %v396
      %v413 = vadd.f32 %v322, %v398
      %v414 = vadd.f32 %v325, %v401
      %v415 = vadd.f32 %v327, %v403
      %v416 = vadd.f32 %v330, %v406
      %v417 = vadd.f32 %v332, %v408
      %s418 = scalar_lea.vmem %s0, 96
      %v419 = vld [vmem:[%s418] sm:$0xf]
      %v420 = vld [vmem:[%s418 + $0x4] sm:$0xf]
      %v421 = vld [vmem:[%s418 + $0x8] sm:$0xf]
      %v422 = vld [vmem:[%s418 + $0xc] sm:$0xf]
      %v423 = vld [vmem:[%s418 + $0x10] sm:$0xf]
      %v424 = vld [vmem:[%s418 + $0x14] sm:$0xf]
      %v425 = vld [vmem:[%s418 + $0x18] sm:$0xf]
      %v426 = vld [vmem:[%s418 + $0x1c] sm:$0xf]
      %v435 = vunpack.c.l.b16 %v419
      %v436 = vunpack.c.l.b16 %v420
      %v437 = vunpack.c.l.b16 %v421
      %v438 = vunpack.c.l.b16 %v422
      %v439 = vunpack.c.l.b16 %v423
      %v440 = vunpack.c.l.b16 %v424
      %v441 = vunpack.c.l.b16 %v425
      %v442 = vunpack.c.l.b16 %v426
      %v443 = vpack.c.b16 %v436, %v435
      %v444 = vpack.c.b16 %v438, %v437
      %v445 = vpack.c.b16 %v440, %v439
      %v446 = vpack.c.b16 %v442, %v441
      %447 = vrot.lane.b32.xlu0 %v221, 124
      %v448 = vpop.permute.xlu0 %447
      %449 = vrot.lane.b32.xlu0 %v222, 124
      %v450 = vpop.permute.xlu0 %449
      %v454 = vsel %vm229, %v443, 0
      %v457 = vsel %vm229, %v444, 0
      %v460 = vsel %vm229, %v445, 0
      %v463 = vsel %vm229, %v446, 0
      %465 = vmatpush.bf16.msra.mxu0 0
      %466 = vmatpush.bf16.msra.mxu0 0
      %467 = vmatpush.bf16.msra.mxu0 0
      %468 = vmatpush.bf16.msra.mxu0 0
      %469 = vmatpush.bf16.msra.mxu0 0
      %470 = vmatpush.bf16.msra.mxu0 0
      %471 = vmatpush.bf16.msra.mxu0 %v450
      %472 = vmatpush.bf16.msra.mxu0 %v448
      %473 = vmatmul.bf16.gmra.mxu0 %v454
      %v474 = vpop.f32.mrf.mxu0
      %v475 = vadd.f32 0.0, %v474
      %v476 = vpop.f32.mrf.mxu0
      %v477 = vadd.f32 0.0, %v476
      %478 = vmatmul.bf16.gmra.mxu0 %v457
      %v479 = vpop.f32.mrf.mxu0
      %v480 = vadd.f32 0.0, %v479
      %v481 = vpop.f32.mrf.mxu0
      %v482 = vadd.f32 0.0, %v481
      %483 = vmatmul.bf16.gmra.mxu0 %v460
      %v484 = vpop.f32.mrf.mxu0
      %v485 = vadd.f32 0.0, %v484
      %v486 = vpop.f32.mrf.mxu0
      %v487 = vadd.f32 0.0, %v486
      %488 = vmatmul.bf16.gmra.mxu0 %v463
      %v489 = vpop.f32.mrf.mxu0
      %v490 = vadd.f32 0.0, %v489
      %v491 = vpop.f32.mrf.mxu0
      %v492 = vadd.f32 0.0, %v491
      %493 = vdwg.mxu0
      %v494 = vadd.f32 %v410, %v475
      %v495 = vadd.f32 %v411, %v477
      %v496 = vadd.f32 %v412, %v480
      %v497 = vadd.f32 %v413, %v482
      %v498 = vadd.f32 %v414, %v485
      %v499 = vadd.f32 %v415, %v487
      %v500 = vadd.f32 %v416, %v490
      %v501 = vadd.f32 %v417, %v492
      %s502 = scalar_lea.vmem %s0, 128
      %v503 = vld [vmem:[%s502] sm:$0xf]
      %v504 = vld [vmem:[%s502 + $0x4] sm:$0xf]
      %v505 = vld [vmem:[%s502 + $0x8] sm:$0xf]
      %v506 = vld [vmem:[%s502 + $0xc] sm:$0xf]
      %v507 = vld [vmem:[%s502 + $0x10] sm:$0xf]
      %v508 = vld [vmem:[%s502 + $0x14] sm:$0xf]
      %v509 = vld [vmem:[%s502 + $0x18] sm:$0xf]
      %v510 = vld [vmem:[%s502 + $0x1c] sm:$0xf]
      %v519 = vunpack.c.l.b16 %v503
      %v520 = vunpack.c.l.b16 %v504
      %v521 = vunpack.c.l.b16 %v505
      %v522 = vunpack.c.l.b16 %v506
      %v523 = vunpack.c.l.b16 %v507
      %v524 = vunpack.c.l.b16 %v508
      %v525 = vunpack.c.l.b16 %v509
      %v526 = vunpack.c.l.b16 %v510
      %v527 = vpack.c.b16 %v520, %v519
      %v528 = vpack.c.b16 %v522, %v521
      %v529 = vpack.c.b16 %v524, %v523
      %v530 = vpack.c.b16 %v526, %v525
      %531 = vrot.lane.b32.xlu0 %v221, 123
      %v532 = vpop.permute.xlu0 %531
      %533 = vrot.lane.b32.xlu0 %v222, 123
      %v534 = vpop.permute.xlu0 %533
      %v538 = vsel %vm229, %v527, 0
      %v541 = vsel %vm229, %v528, 0
      %v544 = vsel %vm229, %v529, 0
      %v547 = vsel %vm229, %v530, 0
      %549 = vmatpush.bf16.msra.mxu0 0
      %550 = vmatpush.bf16.msra.mxu0 0
      %551 = vmatpush.bf16.msra.mxu0 0
      %552 = vmatpush.bf16.msra.mxu0 0
      %553 = vmatpush.bf16.msra.mxu0 0
      %554 = vmatpush.bf16.msra.mxu0 0
      %555 = vmatpush.bf16.msra.mxu0 %v534
      %556 = vmatpush.bf16.msra.mxu0 %v532
      %557 = vmatmul.bf16.gmra.mxu0 %v538
      %v558 = vpop.f32.mrf.mxu0
      %v559 = vadd.f32 0.0, %v558
      %v560 = vpop.f32.mrf.mxu0
      %v561 = vadd.f32 0.0, %v560
      %562 = vmatmul.bf16.gmra.mxu0 %v541
      %v563 = vpop.f32.mrf.mxu0
      %v564 = vadd.f32 0.0, %v563
      %v565 = vpop.f32.mrf.mxu0
      %v566 = vadd.f32 0.0, %v565
      %567 = vmatmul.bf16.gmra.mxu0 %v544
      %v568 = vpop.f32.mrf.mxu0
      %v569 = vadd.f32 0.0, %v568
      %v570 = vpop.f32.mrf.mxu0
      %v571 = vadd.f32 0.0, %v570
      %572 = vmatmul.bf16.gmra.mxu0 %v547
      %v573 = vpop.f32.mrf.mxu0
      %v574 = vadd.f32 0.0, %v573
      %v575 = vpop.f32.mrf.mxu0
      %v576 = vadd.f32 0.0, %v575
      %577 = vdwg.mxu0
      %v578 = vadd.f32 %v494, %v559
      %v579 = vadd.f32 %v495, %v561
      %v580 = vadd.f32 %v496, %v564
      %v581 = vadd.f32 %v497, %v566
      %v582 = vadd.f32 %v498, %v569
      %v583 = vadd.f32 %v499, %v571
      %v584 = vadd.f32 %v500, %v574
      %v585 = vadd.f32 %v501, %v576
      %s586 = scalar_lea.vmem %s0, 160
      %v587 = vld [vmem:[%s586] sm:$0xf]
      %v588 = vld [vmem:[%s586 + $0x4] sm:$0xf]
      %v589 = vld [vmem:[%s586 + $0x8] sm:$0xf]
      %v590 = vld [vmem:[%s586 + $0xc] sm:$0xf]
      %v591 = vld [vmem:[%s586 + $0x10] sm:$0xf]
      %v592 = vld [vmem:[%s586 + $0x14] sm:$0xf]
      %v593 = vld [vmem:[%s586 + $0x18] sm:$0xf]
      %v594 = vld [vmem:[%s586 + $0x1c] sm:$0xf]
      %v603 = vunpack.c.l.b16 %v587
      %v604 = vunpack.c.l.b16 %v588
      %v605 = vunpack.c.l.b16 %v589
      %v606 = vunpack.c.l.b16 %v590
      %v607 = vunpack.c.l.b16 %v591
      %v608 = vunpack.c.l.b16 %v592
      %v609 = vunpack.c.l.b16 %v593
      %v610 = vunpack.c.l.b16 %v594
      %v611 = vpack.c.b16 %v604, %v603
      %v612 = vpack.c.b16 %v606, %v605
      %v613 = vpack.c.b16 %v608, %v607
      %v614 = vpack.c.b16 %v610, %v609
      %615 = vrot.lane.b32.xlu0 %v221, 122
      %v616 = vpop.permute.xlu0 %615
      %617 = vrot.lane.b32.xlu0 %v222, 122
      %v618 = vpop.permute.xlu0 %617
      %v622 = vsel %vm229, %v611, 0
      %v625 = vsel %vm229, %v612, 0
      %v628 = vsel %vm229, %v613, 0
      %v631 = vsel %vm229, %v614, 0
      %633 = vmatpush.bf16.msra.mxu0 0
      %634 = vmatpush.bf16.msra.mxu0 0
      %635 = vmatpush.bf16.msra.mxu0 0
      %636 = vmatpush.bf16.msra.mxu0 0
      %637 = vmatpush.bf16.msra.mxu0 0
      %638 = vmatpush.bf16.msra.mxu0 0
      %639 = vmatpush.bf16.msra.mxu0 %v618
      %640 = vmatpush.bf16.msra.mxu0 %v616
      %641 = vmatmul.bf16.gmra.mxu0 %v622
      %v642 = vpop.f32.mrf.mxu0
      %v643 = vadd.f32 0.0, %v642
      %v644 = vpop.f32.mrf.mxu0
      %v645 = vadd.f32 0.0, %v644
      %646 = vmatmul.bf16.gmra.mxu0 %v625
      %v647 = vpop.f32.mrf.mxu0
      %v648 = vadd.f32 0.0, %v647
      %v649 = vpop.f32.mrf.mxu0
      %v650 = vadd.f32 0.0, %v649
      %651 = vmatmul.bf16.gmra.mxu0 %v628
      %v652 = vpop.f32.mrf.mxu0
      %v653 = vadd.f32 0.0, %v652
      %v654 = vpop.f32.mrf.mxu0
      %v655 = vadd.f32 0.0, %v654
      %656 = vmatmul.bf16.gmra.mxu0 %v631
      %v657 = vpop.f32.mrf.mxu0
      %v658 = vadd.f32 0.0, %v657
      %v659 = vpop.f32.mrf.mxu0
      %v660 = vadd.f32 0.0, %v659
      %661 = vdwg.mxu0
      %v662 = vadd.f32 %v578, %v643
      %v663 = vadd.f32 %v579, %v645
      %v664 = vadd.f32 %v580, %v648
      %v665 = vadd.f32 %v581, %v650
      %v666 = vadd.f32 %v582, %v653
      %v667 = vadd.f32 %v583, %v655
      %v668 = vadd.f32 %v584, %v658
      %v669 = vadd.f32 %v585, %v660
      %s670 = scalar_lea.vmem %s0, 192
      %v671 = vld [vmem:[%s670] sm:$0xf]
      %v672 = vld [vmem:[%s670 + $0x4] sm:$0xf]
      %v673 = vld [vmem:[%s670 + $0x8] sm:$0xf]
      %v674 = vld [vmem:[%s670 + $0xc] sm:$0xf]
      %v675 = vld [vmem:[%s670 + $0x10] sm:$0xf]
      %v676 = vld [vmem:[%s670 + $0x14] sm:$0xf]
      %v677 = vld [vmem:[%s670 + $0x18] sm:$0xf]
      %v678 = vld [vmem:[%s670 + $0x1c] sm:$0xf]
      %v687 = vunpack.c.l.b16 %v671
      %v688 = vunpack.c.l.b16 %v672
      %v689 = vunpack.c.l.b16 %v673
      %v690 = vunpack.c.l.b16 %v674
      %v691 = vunpack.c.l.b16 %v675
      %v692 = vunpack.c.l.b16 %v676
      %v693 = vunpack.c.l.b16 %v677
      %v694 = vunpack.c.l.b16 %v678
      %v695 = vpack.c.b16 %v688, %v687
      %v696 = vpack.c.b16 %v690, %v689
      %v697 = vpack.c.b16 %v692, %v691
      %v698 = vpack.c.b16 %v694, %v693
      %699 = vrot.lane.b32.xlu0 %v221, 120
      %v700 = vpop.permute.xlu0 %699
      %701 = vrot.lane.b32.xlu0 %v222, 120
      %v702 = vpop.permute.xlu0 %701
      %v706 = vsel %vm229, %v695, 0
      %v709 = vsel %vm229, %v696, 0
      %v712 = vsel %vm229, %v697, 0
      %v715 = vsel %vm229, %v698, 0
      %717 = vmatpush.bf16.msra.mxu0 0
      %718 = vmatpush.bf16.msra.mxu0 0
      %719 = vmatpush.bf16.msra.mxu0 0
      %720 = vmatpush.bf16.msra.mxu0 0
      %721 = vmatpush.bf16.msra.mxu0 0
      %722 = vmatpush.bf16.msra.mxu0 0
      %723 = vmatpush.bf16.msra.mxu0 %v702
      %724 = vmatpush.bf16.msra.mxu0 %v700
      %725 = vmatmul.bf16.gmra.mxu0 %v706
      %v726 = vpop.f32.mrf.mxu0
      %v727 = vadd.f32 0.0, %v726
      %v728 = vpop.f32.mrf.mxu0
      %v729 = vadd.f32 0.0, %v728
      %730 = vmatmul.bf16.gmra.mxu0 %v709
      %v731 = vpop.f32.mrf.mxu0
      %v732 = vadd.f32 0.0, %v731
      %v733 = vpop.f32.mrf.mxu0
      %v734 = vadd.f32 0.0, %v733
      %735 = vmatmul.bf16.gmra.mxu0 %v712
      %v736 = vpop.f32.mrf.mxu0
      %v737 = vadd.f32 0.0, %v736
      %v738 = vpop.f32.mrf.mxu0
      %v739 = vadd.f32 0.0, %v738
      %740 = vmatmul.bf16.gmra.mxu0 %v715
      %v741 = vpop.f32.mrf.mxu0
      %v742 = vadd.f32 0.0, %v741
      %v743 = vpop.f32.mrf.mxu0
      %v744 = vadd.f32 0.0, %v743
      %745 = vdwg.mxu0
      %v746 = vadd.f32 %v662, %v727
      %v747 = vadd.f32 %v663, %v729
      %v748 = vadd.f32 %v664, %v732
      %v749 = vadd.f32 %v665, %v734
      %v750 = vadd.f32 %v666, %v737
      %v751 = vadd.f32 %v667, %v739
      %v752 = vadd.f32 %v668, %v742
      %v753 = vadd.f32 %v669, %v744
      %s754 = scalar_lea.vmem %s0, 224
      %v755 = vld [vmem:[%s754] sm:$0xf]
      %v756 = vld [vmem:[%s754 + $0x4] sm:$0xf]
      %v757 = vld [vmem:[%s754 + $0x8] sm:$0xf]
      %v758 = vld [vmem:[%s754 + $0xc] sm:$0xf]
      %v759 = vld [vmem:[%s754 + $0x10] sm:$0xf]
      %v760 = vld [vmem:[%s754 + $0x14] sm:$0xf]
      %v761 = vld [vmem:[%s754 + $0x18] sm:$0xf]
      %v762 = vld [vmem:[%s754 + $0x1c] sm:$0xf]
      %v771 = vunpack.c.l.b16 %v755
      %v772 = vunpack.c.l.b16 %v756
      %v773 = vunpack.c.l.b16 %v757
      %v774 = vunpack.c.l.b16 %v758
      %v775 = vunpack.c.l.b16 %v759
      %v776 = vunpack.c.l.b16 %v760
      %v777 = vunpack.c.l.b16 %v761
      %v778 = vunpack.c.l.b16 %v762
      %v779 = vpack.c.b16 %v772, %v771
      %v780 = vpack.c.b16 %v774, %v773
      %v781 = vpack.c.b16 %v776, %v775
      %v782 = vpack.c.b16 %v778, %v777
      %783 = vrot.lane.b32.xlu0 %v221, 119
      %v784 = vpop.permute.xlu0 %783
      %785 = vrot.lane.b32.xlu0 %v222, 119
      %v786 = vpop.permute.xlu0 %785
      %v790 = vsel %vm229, %v779, 0
      %v793 = vsel %vm229, %v780, 0
      %v796 = vsel %vm229, %v781, 0
      %v799 = vsel %vm229, %v782, 0
      %801 = vmatpush.bf16.msra.mxu0 0
      %802 = vmatpush.bf16.msra.mxu0 0
      %803 = vmatpush.bf16.msra.mxu0 0
      %804 = vmatpush.bf16.msra.mxu0 0
      %805 = vmatpush.bf16.msra.mxu0 0
      %806 = vmatpush.bf16.msra.mxu0 0
      %807 = vmatpush.bf16.msra.mxu0 %v786
      %808 = vmatpush.bf16.msra.mxu0 %v784
      %809 = vmatmul.bf16.gmra.mxu0 %v790
      %v810 = vpop.f32.mrf.mxu0
      %v811 = vadd.f32 0.0, %v810
      %v812 = vpop.f32.mrf.mxu0
      %v813 = vadd.f32 0.0, %v812
      %814 = vmatmul.bf16.gmra.mxu0 %v793
      %v815 = vpop.f32.mrf.mxu0
      %v816 = vadd.f32 0.0, %v815
      %v817 = vpop.f32.mrf.mxu0
      %v818 = vadd.f32 0.0, %v817
      %819 = vmatmul.bf16.gmra.mxu0 %v796
      %v820 = vpop.f32.mrf.mxu0
      %v821 = vadd.f32 0.0, %v820
      %v822 = vpop.f32.mrf.mxu0
      %v823 = vadd.f32 0.0, %v822
      %824 = vmatmul.bf16.gmra.mxu0 %v799
      %v825 = vpop.f32.mrf.mxu0
      %v826 = vadd.f32 0.0, %v825
      %v827 = vpop.f32.mrf.mxu0
      %v828 = vadd.f32 0.0, %v827
      %829 = vdwg.mxu0
      %v830 = vadd.f32 %v746, %v811
      %v831 = vadd.f32 %v747, %v813
      %v832 = vadd.f32 %v748, %v816
      %v833 = vadd.f32 %v749, %v818
      %v834 = vadd.f32 %v750, %v821
      %v835 = vadd.f32 %v751, %v823
      %v836 = vadd.f32 %v752, %v826
      %v837 = vadd.f32 %v753, %v828
      %s838 = scalar_lea.vmem %s0, 256
      %v839 = vld [vmem:[%s838] sm:$0xf]
      %v840 = vld [vmem:[%s838 + $0x4] sm:$0xf]
      %v841 = vld [vmem:[%s838 + $0x8] sm:$0xf]
      %v842 = vld [vmem:[%s838 + $0xc] sm:$0xf]
      %v843 = vld [vmem:[%s838 + $0x10] sm:$0xf]
      %v844 = vld [vmem:[%s838 + $0x14] sm:$0xf]
      %v845 = vld [vmem:[%s838 + $0x18] sm:$0xf]
      %v846 = vld [vmem:[%s838 + $0x1c] sm:$0xf]
      %v855 = vunpack.c.l.b16 %v839
      %v856 = vunpack.c.l.b16 %v840
      %v857 = vunpack.c.l.b16 %v841
      %v858 = vunpack.c.l.b16 %v842
      %v859 = vunpack.c.l.b16 %v843
      %v860 = vunpack.c.l.b16 %v844
      %v861 = vunpack.c.l.b16 %v845
      %v862 = vunpack.c.l.b16 %v846
      %v863 = vpack.c.b16 %v856, %v855
      %v864 = vpack.c.b16 %v858, %v857
      %v865 = vpack.c.b16 %v860, %v859
      %v866 = vpack.c.b16 %v862, %v861
      %867 = vrot.lane.b32.xlu0 %v221, 118
      %v868 = vpop.permute.xlu0 %867
      %869 = vrot.lane.b32.xlu0 %v222, 118
      %v870 = vpop.permute.xlu0 %869
      %v874 = vsel %vm229, %v863, 0
      %v877 = vsel %vm229, %v864, 0
      %v880 = vsel %vm229, %v865, 0
      %v883 = vsel %vm229, %v866, 0
      %885 = vmatpush.bf16.msra.mxu0 0
      %886 = vmatpush.bf16.msra.mxu0 0
      %887 = vmatpush.bf16.msra.mxu0 0
      %888 = vmatpush.bf16.msra.mxu0 0
      %889 = vmatpush.bf16.msra.mxu0 0
      %890 = vmatpush.bf16.msra.mxu0 0
      %891 = vmatpush.bf16.msra.mxu0 %v870
      %892 = vmatpush.bf16.msra.mxu0 %v868
      %893 = vmatmul.bf16.gmra.mxu0 %v874
      %v894 = vpop.f32.mrf.mxu0
      %v895 = vadd.f32 0.0, %v894
      %v896 = vpop.f32.mrf.mxu0
      %v897 = vadd.f32 0.0, %v896
      %898 = vmatmul.bf16.gmra.mxu0 %v877
      %v899 = vpop.f32.mrf.mxu0
      %v900 = vadd.f32 0.0, %v899
      %v901 = vpop.f32.mrf.mxu0
      %v902 = vadd.f32 0.0, %v901
      %903 = vmatmul.bf16.gmra.mxu0 %v880
      %v904 = vpop.f32.mrf.mxu0
      %v905 = vadd.f32 0.0, %v904
      %v906 = vpop.f32.mrf.mxu0
      %v907 = vadd.f32 0.0, %v906
      %908 = vmatmul.bf16.gmra.mxu0 %v883
      %v909 = vpop.f32.mrf.mxu0
      %v910 = vadd.f32 0.0, %v909
      %v911 = vpop.f32.mrf.mxu0
      %v912 = vadd.f32 0.0, %v911
      %913 = vdwg.mxu0
      %v914 = vadd.f32 %v830, %v895
      %v915 = vadd.f32 %v831, %v897
      %v916 = vadd.f32 %v832, %v900
      %v917 = vadd.f32 %v833, %v902
      %v918 = vadd.f32 %v834, %v905
      %v919 = vadd.f32 %v835, %v907
      %v920 = vadd.f32 %v836, %v910
      %v921 = vadd.f32 %v837, %v912
      %v922 = vld [vmem:[%s1] sm:$0xff]
      %v923 = vld [vmem:[%s1 + $0x8] sm:$0xff]
      %v924 = vld [vmem:[%s1 + $0x10] sm:$0xff]
      %v925 = vld [vmem:[%s1 + $0x18] sm:$0xff]
      %v926 = vld [vmem:[%s1 + $0x20] sm:$0xff]
      %v927 = vld [vmem:[%s1 + $0x28] sm:$0xff]
      %v928 = vld [vmem:[%s1 + $0x30] sm:$0xff]
      %v929 = vld [vmem:[%s1 + $0x38] sm:$0xff]
      %931 = vset.pattern.permute.xlu0 0
      %932 = vperm.xlu0 %931, %v922
      %v933 = vpop.permute.xlu0 %932
      %936 = vset.pattern.permute.xlu0 0
      %937 = vperm.xlu0 %936, %v923
      %v938 = vpop.permute.xlu0 %937
      %941 = vset.pattern.permute.xlu0 0
      %942 = vperm.xlu0 %941, %v924
      %v943 = vpop.permute.xlu0 %942
      %946 = vset.pattern.permute.xlu0 0
      %947 = vperm.xlu0 %946, %v925
      %v948 = vpop.permute.xlu0 %947
      %951 = vset.pattern.permute.xlu0 0
      %952 = vperm.xlu0 %951, %v926
      %v953 = vpop.permute.xlu0 %952
      %956 = vset.pattern.permute.xlu0 0
      %957 = vperm.xlu0 %956, %v927
      %v958 = vpop.permute.xlu0 %957
      %961 = vset.pattern.permute.xlu0 0
      %962 = vperm.xlu0 %961, %v928
      %v963 = vpop.permute.xlu0 %962
      %966 = vset.pattern.permute.xlu0 0
      %967 = vperm.xlu0 %966, %v929
      %v968 = vpop.permute.xlu0 %967
      %v970 = vadd.f32 %v914, %v933
      %v971 = vadd.f32 %v915, %v938
      %v972 = vadd.f32 %v916, %v943
      %v973 = vadd.f32 %v917, %v948
      %v974 = vadd.f32 %v918, %v953
      %v975 = vadd.f32 %v919, %v958
      %v976 = vadd.f32 %v920, %v963
      %v977 = vadd.f32 %v921, %v968
      %v978 = vmax.f32 %v970, 0.0
      %v979 = vmax.f32 %v971, 0.0
      %v980 = vmax.f32 %v972, 0.0
      %v981 = vmax.f32 %v973, 0.0
      %v982 = vmax.f32 %v974, 0.0
      %v983 = vmax.f32 %v975, 0.0
      %v984 = vmax.f32 %v976, 0.0
      %v985 = vmax.f32 %v977, 0.0
      %v986 = vpack.c.bf16 %v978, %v978
      %v987 = vpack.c.bf16 %v979, %v979
      %v988 = vpack.c.bf16 %v980, %v980
      %v989 = vpack.c.bf16 %v981, %v981
      %v990 = vpack.c.bf16 %v982, %v982
      %v991 = vpack.c.bf16 %v983, %v983
      %v992 = vpack.c.bf16 %v984, %v984
      %v993 = vpack.c.bf16 %v985, %v985
      %vm994 = vcmask 44032
      %995 = vst.msk [vmem:[%s170] sm:$0xf] %vm994, %v986
      %996 = vst.msk [vmem:[%s170 + $0x4] sm:$0xf] %vm994, %v987
      %997 = vst.msk [vmem:[%s170 + $0x8] sm:$0xf] %vm994, %v988
      %998 = vst.msk [vmem:[%s170 + $0xc] sm:$0xf] %vm994, %v989
      %999 = vst.msk [vmem:[%s170 + $0x10] sm:$0xf] %vm994, %v990
      %1000 = vst.msk [vmem:[%s170 + $0x14] sm:$0xf] %vm994, %v991
      %1001 = vst.msk [vmem:[%s170 + $0x18] sm:$0xf] %vm994, %v992
      %1002 = vst.msk [vmem:[%s170 + $0x1c] sm:$0xf] %vm994, %v993
      %p1003 = scmp.lt.s32.totalorder %s14, 1
      %s1004 = scalar_select %p1003, %s14, 1
      %s1005 = smul.addr %s1004, 8
      %s1006 = smul.addr %s1005, 4
      %s1007 = scalar_lea.vmem %s3, %s1006
      // Predicated region
      $region33: #{ccnn1_forward.13} parent=31 // pred_check
        %p1008 = pneg %p100
      $region34: #{ccnn1_forward.13} parent=31 // pred_check_branch
        %1010 = sbr.rel (%p1008) target = $region36
      $region35: #{ccnn1_forward.13} parent=31 // pred_region
        _
      $region36: #{ccnn1_forward.13} parent=31 // pred_fallthru
        _
    $region32: #{ccnn1_forward.13} parent=5 // pred_fallthru
      _
    %p1011 = scmp.le.s32.totalorder 2, %s9
    // Predicated region
    $region37: #{ccnn1_forward.13} parent=5 // pred_check
      %p1012 = pneg %p1011
    $region38: #{ccnn1_forward.13} parent=5 // pred_check_branch
      %1014 = sbr.rel (%p1012) target = $region40
    $region39: #{ccnn1_forward.13} parent=5 // pred_region
      %s1015 = ssub.s32 %s9, 2
      // Predicated region
      $region41: #{ccnn1_forward.13} parent=39 // pred_check
        %p1016 = pneg %p106
      $region42: #{ccnn1_forward.13} parent=39 // pred_check_branch
        %1018 = sbr.rel (%p1016) target = $region44
      $region43: #{ccnn1_forward.13} parent=39 // pred_region
        %p1019 = scmp.lt.s32.totalorder %s15, 1
        %s1020 = scalar_select %p1019, %s15, 1
        %s1021 = smul.addr %s1020, 8
        %s1022 = smul.addr %s1021, 4
        %s1023 = scalar_lea.vmem %s3, %s1022
      $region44: #{ccnn1_forward.13} parent=39 // pred_fallthru
        _
    $region40: #{ccnn1_forward.13} parent=5 // pred_fallthru
      _
  $region6: #{ccnn1_forward.13} parent=0 // loop_footer
    %s13 = sadd.s32 1, %s9
  $region7: #{ccnn1_forward.13} parent=0 // loop_footer_branch
    %8 = sbr.rel target = $region3
  $region8: #{ccnn1_forward.13} parent=0 // loop_exit
    _

// kernel: ccnn1_forward.14
$region0: #{ccnn1_forward.14}
  #allocation0 [shape = 'u32[]', space=smem, size = 0x4, offset = 0x4, fixed_abs, tag = 'smem constant byte address 0x4 - core index']
  #allocation1 [shape = 'u32[72,128]{1,0:T(1,128)}', space=vmem, size = 0x9000, scoped, tag = 'internal scratch']
  %s0 = inlined_call_operand.vmem [shape: bf16[9,32,16], index: 0, kind: input, shape index: {}]
  %s1 = inlined_call_operand.vmem [shape: f32[32,1], index: 1, kind: input, shape index: {}]
  %s2 = inlined_call_operand.vmem [shape: bf16[2,1,16,36], index: 2, kind: input, shape index: {}]
  %s3 = inlined_call_operand.vmem [shape: bf16[2,32,22], index: 3, kind: output, shape index: {}]
  %s4 = sld [smem:[#allocation0]]
  $region45: #{ccnn1_forward.14} parent=0
    _
  %s6 = ssub.s32 1, %s4
  %s7 = scalar_select 0, %s6, %s4
  loop: start=0, step=1, limit=4
  $region2: #{ccnn1_forward.14} parent=0 // loop_pre_header
    _
  $region3: #{ccnn1_forward.14} parent=0 // loop_header
    %s9 = sphi 0, %s13
    %p10 = scmp.ge.s32.totalorder %s9, 4
    %s17 = sphi 0, %s17
    %s19 = sphi 0, %s17
    %s20 = sphi 0, %s19
    %s34 = sphi 0, %s20
    %s38 = sphi 0, %s38
    %s40 = sphi 0, %s38
    %s41 = sphi 0, %s40
    %s55 = sphi 0, %s41
    %s61 = sphi 0, %s63
    %s64 = sphi 0, %s61
    %s65 = sphi 0, %s64
    %s81 = sphi 0, %s65
    %s87 = sphi 0, %s89
    %s90 = sphi 0, %s87
    %s91 = sphi 0, %s90
    %s107 = sphi 0, %s91
  $region4: #{ccnn1_forward.14} parent=0 // loop_header_branch
    %12 = sbr.rel (%p10) target = $region8
  $region5: #{ccnn1_forward.14} parent=0 // loop_body
    %s14 = ssub.s32 %s9, 1
    %s15 = ssub.s32 %s9, 2
    %s16 = sadd.s32 %s9, 1
    %s18 = sadd.s32 %s17, 1
    %p21 = scmp.eq.s32.totalorder %s9, 1
    %p22 = scmp.ne.s32.totalorder %s17, %s19
    %p23 = scmp.eq.s32.totalorder %s9, 0
    %p24 = por %p22, %p23
    %p25 = scmp.ne.s32.totalorder %s17, %s19
    %p26 = scmp.eq.s32.totalorder %s14, 1
    %p27 = por %p25, %p26
    %p28 = scmp.ne.s32.totalorder %s19, %s20
    %p29 = scmp.eq.s32.totalorder %s14, 0
    %p30 = por %p28, %p29
    %p31 = scmp.ne.s32.totalorder %s19, %s20
    %p32 = scmp.eq.s32.totalorder %s15, 1
    %p33 = por %p31, %p32
    %p35 = scmp.ne.s32.totalorder %s20, %s34
    %p36 = scmp.eq.s32.totalorder %s15, 0
    %p37 = por %p35, %p36
    %s39 = sadd.s32 %s38, 1
    %p42 = scmp.eq.s32.totalorder %s9, 1
    %p43 = scmp.ne.s32.totalorder %s38, %s40
    %p44 = scmp.eq.s32.totalorder %s9, 0
    %p45 = por %p43, %p44
    %p46 = scmp.ne.s32.totalorder %s38, %s40
    %p47 = scmp.eq.s32.totalorder %s14, 1
    %p48 = por %p46, %p47
    %p49 = scmp.ne.s32.totalorder %s40, %s41
    %p50 = scmp.eq.s32.totalorder %s14, 0
    %p51 = por %p49, %p50
    %p52 = scmp.ne.s32.totalorder %s40, %s41
    %p53 = scmp.eq.s32.totalorder %s15, 1
    %p54 = por %p52, %p53
    %p56 = scmp.ne.s32.totalorder %s41, %s55
    %p57 = scmp.eq.s32.totalorder %s15, 0
    %p58 = por %p56, %p57
    %s59 = ssub.s32 %s9, %s16
    %p60 = scmp.eq.s32.totalorder %s59, 0
    %s62 = sadd.s32 %s61, 1
    %s63 = scalar_select %p60, %s61, %s62
    %p66 = pneg %p60
    %p67 = scmp.eq.s32.totalorder %s9, 1
    %p68 = por %p66, %p67
    %p69 = scmp.ne.s32.totalorder %s61, %s64
    %p70 = scmp.eq.s32.totalorder %s9, 0
    %p71 = por %p69, %p70
    %p72 = scmp.ne.s32.totalorder %s61, %s64
    %p73 = scmp.eq.s32.totalorder %s14, 1
    %p74 = por %p72, %p73
    %p75 = scmp.ne.s32.totalorder %s64, %s65
    %p76 = scmp.eq.s32.totalorder %s14, 0
    %p77 = por %p75, %p76
    %p78 = scmp.ne.s32.totalorder %s64, %s65
    %p79 = scmp.eq.s32.totalorder %s15, 1
    %p80 = por %p78, %p79
    %p82 = scmp.ne.s32.totalorder %s65, %s81
    %p83 = scmp.eq.s32.totalorder %s15, 0
    %p84 = por %p82, %p83
    %s85 = ssub.s32 %s9, %s16
    %p86 = scmp.eq.s32.totalorder %s85, 0
    %s88 = sadd.s32 %s87, 1
    %s89 = scalar_select %p86, %s87, %s88
    %p92 = pneg %p86
    %p93 = scmp.eq.s32.totalorder %s9, 1
    %p94 = por %p92, %p93
    %p95 = scmp.ne.s32.totalorder %s87, %s90
    %p96 = scmp.eq.s32.totalorder %s9, 0
    %p97 = por %p95, %p96
    %p98 = scmp.ne.s32.totalorder %s87, %s90
    %p99 = scmp.eq.s32.totalorder %s14, 1
    %p100 = por %p98, %p99
    %p101 = scmp.ne.s32.totalorder %s90, %s91
    %p102 = scmp.eq.s32.totalorder %s14, 0
    %p103 = por %p101, %p102
    %p104 = scmp.ne.s32.totalorder %s90, %s91
    %p105 = scmp.eq.s32.totalorder %s15, 1
    %p106 = por %p104, %p105
    %p108 = scmp.ne.s32.totalorder %s91, %s107
    %p109 = scmp.eq.s32.totalorder %s15, 0
    %p110 = por %p108, %p109
    %p111 = scmp.le.s32.totalorder 1, %s9
    %p112 = scmp.lt.s32.totalorder %s9, 3
    %p113 = pnand %p111, %p112
    %p114 = pneg %p113
    // Predicated region
    $region9: #{ccnn1_forward.14} parent=5 // pred_check
      _
    $region10: #{ccnn1_forward.14} parent=5 // pred_check_branch
      %116 = sbr.rel (%p113) target = $region12
    $region11: #{ccnn1_forward.14} parent=5 // pred_region
      %s117 = ssub.s32 %s9, 1
      // Predicated region
      $region13: #{ccnn1_forward.14} parent=11 // pred_check
        %p118 = pneg %p30
      $region14: #{ccnn1_forward.14} parent=11 // pred_check_branch
        %120 = sbr.rel (%p118) target = $region16
      $region15: #{ccnn1_forward.14} parent=11 // pred_region
        _
      $region16: #{ccnn1_forward.14} parent=11 // pred_fallthru
        _
      // Predicated region
      $region17: #{ccnn1_forward.14} parent=11 // pred_check
        %p121 = pneg %p51
      $region18: #{ccnn1_forward.14} parent=11 // pred_check_branch
        %123 = sbr.rel (%p121) target = $region20
      $region19: #{ccnn1_forward.14} parent=11 // pred_region
        _
      $region20: #{ccnn1_forward.14} parent=11 // pred_fallthru
        _
    $region12: #{ccnn1_forward.14} parent=5 // pred_fallthru
      _
    %p124 = scmp.lt.s32.totalorder %s9, 2
    // Predicated region
    $region21: #{ccnn1_forward.14} parent=5 // pred_check
      %p125 = pneg %p124
    $region22: #{ccnn1_forward.14} parent=5 // pred_check_branch
      %127 = sbr.rel (%p125) target = $region24
    $region23: #{ccnn1_forward.14} parent=5 // pred_region
      // Predicated region
      $region25: #{ccnn1_forward.14} parent=23 // pred_check
        %p128 = pneg %p71
      $region26: #{ccnn1_forward.14} parent=23 // pred_check_branch
        %130 = sbr.rel (%p128) target = $region28
      $region27: #{ccnn1_forward.14} parent=23 // pred_region
        %p131 = scmp.lt.s32.totalorder %s9, 1
        %s132 = scalar_select %p131, %s9, 1
        %s133 = smul.addr %s132, 2
        %s134 = smul.addr %s133, 4
        %s135 = scalar_lea.vmem %s2, %s134
      $region28: #{ccnn1_forward.14} parent=23 // pred_fallthru
        _
    $region24: #{ccnn1_forward.14} parent=5 // pred_fallthru
      _
    %p136 = scmp.le.s32.totalorder 1, %s9
    %p137 = scmp.lt.s32.totalorder %s9, 3
    %p138 = pnand %p136, %p137
    %p139 = pneg %p138
    // Predicated region
    $region29: #{ccnn1_forward.14} parent=5 // pred_check
      _
    $region30: #{ccnn1_forward.14} parent=5 // pred_check_branch
      %141 = sbr.rel (%p138) target = $region32
    $region31: #{ccnn1_forward.14} parent=5 // pred_region
      %s142 = ssub.s32 %s9, 1
      %p143 = pneg %p30
      %p144 = pneg %p27
      %p145 = pneg %p51
      %p146 = pneg %p48
      %p147 = scmp.lt.s32.totalorder %s14, 1
      %s148 = scalar_select %p147, %s14, 1
      %s149 = smul.addr %s148, 2
      %s150 = smul.addr %s149, 4
      %s151 = scalar_lea.vmem %s2, %s150
      %p152 = pneg %p77
      %p153 = pneg %p74
      %p154 = pneg %p103
      %p155 = pneg %p100
      %p156 = scmp.lt.s32.totalorder %s14, 1
      %s157 = scalar_select %p156, %s14, 1
      %s158 = smul.addr %s157, 4
      %s159 = smul.addr %s158, 4
      %s160 = scalar_lea.vmem %s3, %s159
      %p161 = scmp.lt.s32.totalorder %s14, 1
      %s162 = scalar_select %p161, %s14, 1
      %s163 = smul.addr %s162, 2
      %s164 = smul.addr %s163, 4
      %s165 = scalar_lea.vmem %s2, %s164
      %p166 = scmp.lt.s32.totalorder %s14, 1
      %s167 = scalar_select %p166, %s14, 1
      %s168 = smul.addr %s167, 4
      %s169 = smul.addr %s168, 4
      %s170 = scalar_lea.vmem %s3, %s169
      %v172 = vld [vmem:[%s165] sm:$0xf]
      %v173 = vld [vmem:[%s165 + $0x4] sm:$0xf]
      %v174 = vld [vmem:[%s0] sm:$0xf]
      %v175 = vld [vmem:[%s0 + $0x4] sm:$0xf]
      %v176 = vld [vmem:[%s0 + $0x8] sm:$0xf]
      %v177 = vld [vmem:[%s0 + $0xc] sm:$0xf]
      %s178 = scalar_lea.vmem %s0, 16
      %v179 = vld [vmem:[%s178] sm:$0xf]
      %v180 = vld [vmem:[%s178 + $0x4] sm:$0xf]
      %v181 = vld [vmem:[%s178 + $0x8] sm:$0xf]
      %v182 = vld [vmem:[%s178 + $0xc] sm:$0xf]
      %v187 = vunpack.c.l.b16 %v179
      %v188 = vunpack.c.l.b16 %v180
      %v189 = vunpack.c.l.b16 %v181
      %v190 = vunpack.c.l.b16 %v182
      %v191 = vpack.c.b16 %v188, %v187
      %v192 = vpack.c.b16 %v190, %v189
      %v195 = vunpack.c.l.b16 %v172
      %v196 = vunpack.c.l.b16 %v173
      %v197 = vpack.c.b16 %v196, %v195
      %198 = vrot.lane.b32.xlu0 %v197, 127
      %v199 = vpop.permute.xlu0 %198
      %vm201 = vcmask 130048
      %v203 = vsel %vm201, %v191, 0
      %v206 = vsel %vm201, %v192, 0
      %208 = vmatpush.bf16.msra.mxu0 0
      %209 = vmatpush.bf16.msra.mxu0 0
      %210 = vmatpush.bf16.msra.mxu0 0
      %211 = vmatpush.bf16.msra.mxu0 0
      %212 = vmatpush.bf16.msra.mxu0 0
      %213 = vmatpush.bf16.msra.mxu0 0
      %214 = vmatpush.bf16.msra.mxu0 0
      %215 = vmatpush.bf16.msra.mxu0 %v199
      %216 = vmatmul.bf16.gmra.mxu0 %v203
      %v217 = vpop.f32.mrf.mxu0
      %v218 = vadd.f32 0.0, %v217
      %v219 = vpop.f32.mrf.mxu0
      %v220 = vadd.f32 0.0, %v219
      %221 = vmatmul.bf16.gmra.mxu0 %v206
      %v222 = vpop.f32.mrf.mxu0
      %v223 = vadd.f32 0.0, %v222
      %v224 = vpop.f32.mrf.mxu0
      %v225 = vadd.f32 0.0, %v224
      %226 = vdwg.mxu0
      %v231 = vunpack.c.l.b16 %v174
      %v232 = vunpack.c.l.b16 %v175
      %v233 = vunpack.c.l.b16 %v176
      %v234 = vunpack.c.l.b16 %v177
      %v235 = vpack.c.b16 %v232, %v231
      %v236 = vpack.c.b16 %v234, %v233
      %v239 = vsel %vm201, %v235, 0
      %v242 = vsel %vm201, %v236, 0
      %244 = vmatpush.bf16.msra.mxu0 0
      %245 = vmatpush.bf16.msra.mxu0 0
      %246 = vmatpush.bf16.msra.mxu0 0
      %247 = vmatpush.bf16.msra.mxu0 0
      %248 = vmatpush.bf16.msra.mxu0 0
      %249 = vmatpush.bf16.msra.mxu0 0
      %250 = vmatpush.bf16.msra.mxu0 0
      %251 = vmatpush.bf16.msra.mxu0 %v197
      %252 = vmatmul.bf16.gmra.mxu0 %v239
      %v253 = vpop.f32.mrf.mxu0
      %v254 = vadd.f32 %v218, %v253
      %v255 = vpop.f32.mrf.mxu0
      %v256 = vadd.f32 %v220, %v255
      %257 = vmatmul.bf16.gmra.mxu0 %v242
      %v258 = vpop.f32.mrf.mxu0
      %v259 = vadd.f32 %v223, %v258
      %v260 = vpop.f32.mrf.mxu0
      %v261 = vadd.f32 %v225, %v260
      %262 = vdwg.mxu0
      %s263 = scalar_lea.vmem %s0, 32
      %v264 = vld [vmem:[%s263] sm:$0xf]
      %v265 = vld [vmem:[%s263 + $0x4] sm:$0xf]
      %v266 = vld [vmem:[%s263 + $0x8] sm:$0xf]
      %v267 = vld [vmem:[%s263 + $0xc] sm:$0xf]
      %v272 = vunpack.c.l.b16 %v264
      %v273 = vunpack.c.l.b16 %v265
      %v274 = vunpack.c.l.b16 %v266
      %v275 = vunpack.c.l.b16 %v267
      %v276 = vpack.c.b16 %v273, %v272
      %v277 = vpack.c.b16 %v275, %v274
      %278 = vrot.lane.b32.xlu0 %v197, 126
      %v279 = vpop.permute.xlu0 %278
      %v282 = vsel %vm201, %v276, 0
      %v285 = vsel %vm201, %v277, 0
      %287 = vmatpush.bf16.msra.mxu0 0
      %288 = vmatpush.bf16.msra.mxu0 0
      %289 = vmatpush.bf16.msra.mxu0 0
      %290 = vmatpush.bf16.msra.mxu0 0
      %291 = vmatpush.bf16.msra.mxu0 0
      %292 = vmatpush.bf16.msra.mxu0 0
      %293 = vmatpush.bf16.msra.mxu0 0
      %294 = vmatpush.bf16.msra.mxu0 %v279
      %295 = vmatmul.bf16.gmra.mxu0 %v282
      %v296 = vpop.f32.mrf.mxu0
      %v297 = vadd.f32 0.0, %v296
      %v298 = vpop.f32.mrf.mxu0
      %v299 = vadd.f32 0.0, %v298
      %300 = vmatmul.bf16.gmra.mxu0 %v285
      %v301 = vpop.f32.mrf.mxu0
      %v302 = vadd.f32 0.0, %v301
      %v303 = vpop.f32.mrf.mxu0
      %v304 = vadd.f32 0.0, %v303
      %305 = vdwg.mxu0
      %v306 = vadd.f32 %v254, %v297
      %v307 = vadd.f32 %v256, %v299
      %v308 = vadd.f32 %v259, %v302
      %v309 = vadd.f32 %v261, %v304
      %s310 = scalar_lea.vmem %s0, 48
      %v311 = vld [vmem:[%s310] sm:$0xf]
      %v312 = vld [vmem:[%s310 + $0x4] sm:$0xf]
      %v313 = vld [vmem:[%s310 + $0x8] sm:$0xf]
      %v314 = vld [vmem:[%s310 + $0xc] sm:$0xf]
      %v319 = vunpack.c.l.b16 %v311
      %v320 = vunpack.c.l.b16 %v312
      %v321 = vunpack.c.l.b16 %v313
      %v322 = vunpack.c.l.b16 %v314
      %v323 = vpack.c.b16 %v320, %v319
      %v324 = vpack.c.b16 %v322, %v321
      %325 = vrot.lane.b32.xlu0 %v197, 122
      %v326 = vpop.permute.xlu0 %325
      %v329 = vsel %vm201, %v323, 0
      %v332 = vsel %vm201, %v324, 0
      %334 = vmatpush.bf16.msra.mxu0 0
      %335 = vmatpush.bf16.msra.mxu0 0
      %336 = vmatpush.bf16.msra.mxu0 0
      %337 = vmatpush.bf16.msra.mxu0 0
      %338 = vmatpush.bf16.msra.mxu0 0
      %339 = vmatpush.bf16.msra.mxu0 0
      %340 = vmatpush.bf16.msra.mxu0 0
      %341 = vmatpush.bf16.msra.mxu0 %v326
      %342 = vmatmul.bf16.gmra.mxu0 %v329
      %v343 = vpop.f32.mrf.mxu0
      %v344 = vadd.f32 0.0, %v343
      %v345 = vpop.f32.mrf.mxu0
      %v346 = vadd.f32 0.0, %v345
      %347 = vmatmul.bf16.gmra.mxu0 %v332
      %v348 = vpop.f32.mrf.mxu0
      %v349 = vadd.f32 0.0, %v348
      %v350 = vpop.f32.mrf.mxu0
      %v351 = vadd.f32 0.0, %v350
      %352 = vdwg.mxu0
      %v353 = vadd.f32 %v306, %v344
      %v354 = vadd.f32 %v307, %v346
      %v355 = vadd.f32 %v308, %v349
      %v356 = vadd.f32 %v309, %v351
      %s357 = scalar_lea.vmem %s0, 64
      %v358 = vld [vmem:[%s357] sm:$0xf]
      %v359 = vld [vmem:[%s357 + $0x4] sm:$0xf]
      %v360 = vld [vmem:[%s357 + $0x8] sm:$0xf]
      %v361 = vld [vmem:[%s357 + $0xc] sm:$0xf]
      %v366 = vunpack.c.l.b16 %v358
      %v367 = vunpack.c.l.b16 %v359
      %v368 = vunpack.c.l.b16 %v360
      %v369 = vunpack.c.l.b16 %v361
      %v370 = vpack.c.b16 %v367, %v366
      %v371 = vpack.c.b16 %v369, %v368
      %372 = vrot.lane.b32.xlu0 %v197, 121
      %v373 = vpop.permute.xlu0 %372
      %v376 = vsel %vm201, %v370, 0
      %v379 = vsel %vm201, %v371, 0
      %381 = vmatpush.bf16.msra.mxu0 0
      %382 = vmatpush.bf16.msra.mxu0 0
      %383 = vmatpush.bf16.msra.mxu0 0
      %384 = vmatpush.bf16.msra.mxu0 0
      %385 = vmatpush.bf16.msra.mxu0 0
      %386 = vmatpush.bf16.msra.mxu0 0
      %387 = vmatpush.bf16.msra.mxu0 0
      %388 = vmatpush.bf16.msra.mxu0 %v373
      %389 = vmatmul.bf16.gmra.mxu0 %v376
      %v390 = vpop.f32.mrf.mxu0
      %v391 = vadd.f32 0.0, %v390
      %v392 = vpop.f32.mrf.mxu0
      %v393 = vadd.f32 0.0, %v392
      %394 = vmatmul.bf16.gmra.mxu0 %v379
      %v395 = vpop.f32.mrf.mxu0
      %v396 = vadd.f32 0.0, %v395
      %v397 = vpop.f32.mrf.mxu0
      %v398 = vadd.f32 0.0, %v397
      %399 = vdwg.mxu0
      %v400 = vadd.f32 %v353, %v391
      %v401 = vadd.f32 %v354, %v393
      %v402 = vadd.f32 %v355, %v396
      %v403 = vadd.f32 %v356, %v398
      %s404 = scalar_lea.vmem %s0, 80
      %v405 = vld [vmem:[%s404] sm:$0xf]
      %v406 = vld [vmem:[%s404 + $0x4] sm:$0xf]
      %v407 = vld [vmem:[%s404 + $0x8] sm:$0xf]
      %v408 = vld [vmem:[%s404 + $0xc] sm:$0xf]
      %v413 = vunpack.c.l.b16 %v405
      %v414 = vunpack.c.l.b16 %v406
      %v415 = vunpack.c.l.b16 %v407
      %v416 = vunpack.c.l.b16 %v408
      %v417 = vpack.c.b16 %v414, %v413
      %v418 = vpack.c.b16 %v416, %v415
      %419 = vrot.lane.b32.xlu0 %v197, 120
      %v420 = vpop.permute.xlu0 %419
      %v423 = vsel %vm201, %v417, 0
      %v426 = vsel %vm201, %v418, 0
      %428 = vmatpush.bf16.msra.mxu0 0
      %429 = vmatpush.bf16.msra.mxu0 0
      %430 = vmatpush.bf16.msra.mxu0 0
      %431 = vmatpush.bf16.msra.mxu0 0
      %432 = vmatpush.bf16.msra.mxu0 0
      %433 = vmatpush.bf16.msra.mxu0 0
      %434 = vmatpush.bf16.msra.mxu0 0
      %435 = vmatpush.bf16.msra.mxu0 %v420
      %436 = vmatmul.bf16.gmra.mxu0 %v423
      %v437 = vpop.f32.mrf.mxu0
      %v438 = vadd.f32 0.0, %v437
      %v439 = vpop.f32.mrf.mxu0
      %v440 = vadd.f32 0.0, %v439
      %441 = vmatmul.bf16.gmra.mxu0 %v426
      %v442 = vpop.f32.mrf.mxu0
      %v443 = vadd.f32 0.0, %v442
      %v444 = vpop.f32.mrf.mxu0
      %v445 = vadd.f32 0.0, %v444
      %446 = vdwg.mxu0
      %v447 = vadd.f32 %v400, %v438
      %v448 = vadd.f32 %v401, %v440
      %v449 = vadd.f32 %v402, %v443
      %v450 = vadd.f32 %v403, %v445
      %s451 = scalar_lea.vmem %s0, 96
      %v452 = vld [vmem:[%s451] sm:$0xf]
      %v453 = vld [vmem:[%s451 + $0x4] sm:$0xf]
      %v454 = vld [vmem:[%s451 + $0x8] sm:$0xf]
      %v455 = vld [vmem:[%s451 + $0xc] sm:$0xf]
      %v460 = vunpack.c.l.b16 %v452
      %v461 = vunpack.c.l.b16 %v453
      %v462 = vunpack.c.l.b16 %v454
      %v463 = vunpack.c.l.b16 %v455
      %v464 = vpack.c.b16 %v461, %v460
      %v465 = vpack.c.b16 %v463, %v462
      %466 = vrot.lane.b32.xlu0 %v197, 116
      %v467 = vpop.permute.xlu0 %466
      %v470 = vsel %vm201, %v464, 0
      %v473 = vsel %vm201, %v465, 0
      %475 = vmatpush.bf16.msra.mxu0 0
      %476 = vmatpush.bf16.msra.mxu0 0
      %477 = vmatpush.bf16.msra.mxu0 0
      %478 = vmatpush.bf16.msra.mxu0 0
      %479 = vmatpush.bf16.msra.mxu0 0
      %480 = vmatpush.bf16.msra.mxu0 0
      %481 = vmatpush.bf16.msra.mxu0 0
      %482 = vmatpush.bf16.msra.mxu0 %v467
      %483 = vmatmul.bf16.gmra.mxu0 %v470
      %v484 = vpop.f32.mrf.mxu0
      %v485 = vadd.f32 0.0, %v484
      %v486 = vpop.f32.mrf.mxu0
      %v487 = vadd.f32 0.0, %v486
      %488 = vmatmul.bf16.gmra.mxu0 %v473
      %v489 = vpop.f32.mrf.mxu0
      %v490 = vadd.f32 0.0, %v489
      %v491 = vpop.f32.mrf.mxu0
      %v492 = vadd.f32 0.0, %v491
      %493 = vdwg.mxu0
      %v494 = vadd.f32 %v447, %v485
      %v495 = vadd.f32 %v448, %v487
      %v496 = vadd.f32 %v449, %v490
      %v497 = vadd.f32 %v450, %v492
      %s498 = scalar_lea.vmem %s0, 112
      %v499 = vld [vmem:[%s498] sm:$0xf]
      %v500 = vld [vmem:[%s498 + $0x4] sm:$0xf]
      %v501 = vld [vmem:[%s498 + $0x8] sm:$0xf]
      %v502 = vld [vmem:[%s498 + $0xc] sm:$0xf]
      %v507 = vunpack.c.l.b16 %v499
      %v508 = vunpack.c.l.b16 %v500
      %v509 = vunpack.c.l.b16 %v501
      %v510 = vunpack.c.l.b16 %v502
      %v511 = vpack.c.b16 %v508, %v507
      %v512 = vpack.c.b16 %v510, %v509
      %513 = vrot.lane.b32.xlu0 %v197, 115
      %v514 = vpop.permute.xlu0 %513
      %v517 = vsel %vm201, %v511, 0
      %v520 = vsel %vm201, %v512, 0
      %522 = vmatpush.bf16.msra.mxu0 0
      %523 = vmatpush.bf16.msra.mxu0 0
      %524 = vmatpush.bf16.msra.mxu0 0
      %525 = vmatpush.bf16.msra.mxu0 0
      %526 = vmatpush.bf16.msra.mxu0 0
      %527 = vmatpush.bf16.msra.mxu0 0
      %528 = vmatpush.bf16.msra.mxu0 0
      %529 = vmatpush.bf16.msra.mxu0 %v514
      %530 = vmatmul.bf16.gmra.mxu0 %v517
      %v531 = vpop.f32.mrf.mxu0
      %v532 = vadd.f32 0.0, %v531
      %v533 = vpop.f32.mrf.mxu0
      %v534 = vadd.f32 0.0, %v533
      %535 = vmatmul.bf16.gmra.mxu0 %v520
      %v536 = vpop.f32.mrf.mxu0
      %v537 = vadd.f32 0.0, %v536
      %v538 = vpop.f32.mrf.mxu0
      %v539 = vadd.f32 0.0, %v538
      %540 = vdwg.mxu0
      %v541 = vadd.f32 %v494, %v532
      %v542 = vadd.f32 %v495, %v534
      %v543 = vadd.f32 %v496, %v537
      %v544 = vadd.f32 %v497, %v539
      %s545 = scalar_lea.vmem %s0, 128
      %v546 = vld [vmem:[%s545] sm:$0xf]
      %v547 = vld [vmem:[%s545 + $0x4] sm:$0xf]
      %v548 = vld [vmem:[%s545 + $0x8] sm:$0xf]
      %v549 = vld [vmem:[%s545 + $0xc] sm:$0xf]
      %v554 = vunpack.c.l.b16 %v546
      %v555 = vunpack.c.l.b16 %v547
      %v556 = vunpack.c.l.b16 %v548
      %v557 = vunpack.c.l.b16 %v549
      %v558 = vpack.c.b16 %v555, %v554
      %v559 = vpack.c.b16 %v557, %v556
      %560 = vrot.lane.b32.xlu0 %v197, 114
      %v561 = vpop.permute.xlu0 %560
      %v564 = vsel %vm201, %v558, 0
      %v567 = vsel %vm201, %v559, 0
      %569 = vmatpush.bf16.msra.mxu0 0
      %570 = vmatpush.bf16.msra.mxu0 0
      %571 = vmatpush.bf16.msra.mxu0 0
      %572 = vmatpush.bf16.msra.mxu0 0
      %573 = vmatpush.bf16.msra.mxu0 0
      %574 = vmatpush.bf16.msra.mxu0 0
      %575 = vmatpush.bf16.msra.mxu0 0
      %576 = vmatpush.bf16.msra.mxu0 %v561
      %577 = vmatmul.bf16.gmra.mxu0 %v564
      %v578 = vpop.f32.mrf.mxu0
      %v579 = vadd.f32 0.0, %v578
      %v580 = vpop.f32.mrf.mxu0
      %v581 = vadd.f32 0.0, %v580
      %582 = vmatmul.bf16.gmra.mxu0 %v567
      %v583 = vpop.f32.mrf.mxu0
      %v584 = vadd.f32 0.0, %v583
      %v585 = vpop.f32.mrf.mxu0
      %v586 = vadd.f32 0.0, %v585
      %587 = vdwg.mxu0
      %v588 = vadd.f32 %v541, %v579
      %v589 = vadd.f32 %v542, %v581
      %v590 = vadd.f32 %v543, %v584
      %v591 = vadd.f32 %v544, %v586
      %v592 = vld [vmem:[%s1] sm:$0xff]
      %v593 = vld [vmem:[%s1 + $0x8] sm:$0xff]
      %v594 = vld [vmem:[%s1 + $0x10] sm:$0xff]
      %v595 = vld [vmem:[%s1 + $0x18] sm:$0xff]
      %597 = vset.pattern.permute.xlu0 0
      %598 = vperm.xlu0 %597, %v592
      %v599 = vpop.permute.xlu0 %598
      %602 = vset.pattern.permute.xlu0 0
      %603 = vperm.xlu0 %602, %v593
      %v604 = vpop.permute.xlu0 %603
      %607 = vset.pattern.permute.xlu0 0
      %608 = vperm.xlu0 %607, %v594
      %v609 = vpop.permute.xlu0 %608
      %612 = vset.pattern.permute.xlu0 0
      %613 = vperm.xlu0 %612, %v595
      %v614 = vpop.permute.xlu0 %613
      %v616 = vadd.f32 %v588, %v599
      %v617 = vadd.f32 %v589, %v604
      %v618 = vadd.f32 %v590, %v609
      %v619 = vadd.f32 %v591, %v614
      %v620 = vmax.f32 %v616, 0.0
      %v621 = vmax.f32 %v617, 0.0
      %v622 = vmax.f32 %v618, 0.0
      %v623 = vmax.f32 %v619, 0.0
      %v624 = vpack.c.bf16 %v620, %v620
      %v625 = vpack.c.bf16 %v621, %v621
      %v626 = vpack.c.bf16 %v622, %v622
      %v627 = vpack.c.bf16 %v623, %v623
      %vm628 = vcmask 175104
      %629 = vst.msk [vmem:[%s170] sm:$0xf] %vm628, %v624
      %630 = vst.msk [vmem:[%s170 + $0x4] sm:$0xf] %vm628, %v625
      %631 = vst.msk [vmem:[%s170 + $0x8] sm:$0xf] %vm628, %v626
      %632 = vst.msk [vmem:[%s170 + $0xc] sm:$0xf] %vm628, %v627
      %p633 = scmp.lt.s32.totalorder %s14, 1
      %s634 = scalar_select %p633, %s14, 1
      %s635 = smul.addr %s634, 4
      %s636 = smul.addr %s635, 4
      %s637 = scalar_lea.vmem %s3, %s636
      // Predicated region
      $region33: #{ccnn1_forward.14} parent=31 // pred_check
        %p638 = pneg %p100
      $region34: #{ccnn1_forward.14} parent=31 // pred_check_branch
        %640 = sbr.rel (%p638) target = $region36
      $region35: #{ccnn1_forward.14} parent=31 // pred_region
        _
      $region36: #{ccnn1_forward.14} parent=31 // pred_fallthru
        _
    $region32: #{ccnn1_forward.14} parent=5 // pred_fallthru
      _
    %p641 = scmp.le.s32.totalorder 2, %s9
    // Predicated region
    $region37: #{ccnn1_forward.14} parent=5 // pred_check
      %p642 = pneg %p641
    $region38: #{ccnn1_forward.14} parent=5 // pred_check_branch
      %644 = sbr.rel (%p642) target = $region40
    $region39: #{ccnn1_forward.14} parent=5 // pred_region
      %s645 = ssub.s32 %s9, 2
      // Predicated region
      $region41: #{ccnn1_forward.14} parent=39 // pred_check
        %p646 = pneg %p106
      $region42: #{ccnn1_forward.14} parent=39 // pred_check_branch
        %648 = sbr.rel (%p646) target = $region44
      $region43: #{ccnn1_forward.14} parent=39 // pred_region
        %p649 = scmp.lt.s32.totalorder %s15, 1
        %s650 = scalar_select %p649, %s15, 1
        %s651 = smul.addr %s650, 4
        %s652 = smul.addr %s651, 4
        %s653 = scalar_lea.vmem %s3, %s652
      $region44: #{ccnn1_forward.14} parent=39 // pred_fallthru
        _
    $region40: #{ccnn1_forward.14} parent=5 // pred_fallthru
      _
  $region6: #{ccnn1_forward.14} parent=0 // loop_footer
    %s13 = sadd.s32 1, %s9
  $region7: #{ccnn1_forward.14} parent=0 // loop_footer_branch
    %8 = sbr.rel target = $region3
  $region8: #{ccnn1_forward.14} parent=0 // loop_exit
    _

// kernel: ccnn1_forward.15
$region0: #{ccnn1_forward.15}
  #allocation0 [shape = 'u32[]', space=smem, size = 0x4, offset = 0x4, fixed_abs, tag = 'smem constant byte address 0x4 - core index']
  #allocation1 [shape = 'u32[72,128]{1,0:T(1,128)}', space=vmem, size = 0x9000, scoped, tag = 'internal scratch']
  %s0 = inlined_call_operand.vmem [shape: bf16[9,8,8], index: 0, kind: input, shape index: {}]
  %s1 = inlined_call_operand.vmem [shape: f32[8,1], index: 1, kind: input, shape index: {}]
  %s2 = inlined_call_operand.vmem [shape: bf16[2,1,8,100], index: 2, kind: input, shape index: {}]
  %s3 = inlined_call_operand.vmem [shape: bf16[2,8,78], index: 3, kind: output, shape index: {}]
  %s4 = sld [smem:[#allocation0]]
  $region45: #{ccnn1_forward.15} parent=0
    _
  %s6 = ssub.s32 1, %s4
  %s7 = scalar_select 0, %s6, %s4
  loop: start=0, step=1, limit=4
  $region2: #{ccnn1_forward.15} parent=0 // loop_pre_header
    _
  $region3: #{ccnn1_forward.15} parent=0 // loop_header
    %s9 = sphi 0, %s13
    %p10 = scmp.ge.s32.totalorder %s9, 4
    %s17 = sphi 0, %s17
    %s19 = sphi 0, %s17
    %s20 = sphi 0, %s19
    %s34 = sphi 0, %s20
    %s38 = sphi 0, %s38
    %s40 = sphi 0, %s38
    %s41 = sphi 0, %s40
    %s55 = sphi 0, %s41
    %s61 = sphi 0, %s63
    %s64 = sphi 0, %s61
    %s65 = sphi 0, %s64
    %s81 = sphi 0, %s65
    %s87 = sphi 0, %s89
    %s90 = sphi 0, %s87
    %s91 = sphi 0, %s90
    %s107 = sphi 0, %s91
  $region4: #{ccnn1_forward.15} parent=0 // loop_header_branch
    %12 = sbr.rel (%p10) target = $region8
  $region5: #{ccnn1_forward.15} parent=0 // loop_body
    %s14 = ssub.s32 %s9, 1
    %s15 = ssub.s32 %s9, 2
    %s16 = sadd.s32 %s9, 1
    %s18 = sadd.s32 %s17, 1
    %p21 = scmp.eq.s32.totalorder %s9, 1
    %p22 = scmp.ne.s32.totalorder %s17, %s19
    %p23 = scmp.eq.s32.totalorder %s9, 0
    %p24 = por %p22, %p23
    %p25 = scmp.ne.s32.totalorder %s17, %s19
    %p26 = scmp.eq.s32.totalorder %s14, 1
    %p27 = por %p25, %p26
    %p28 = scmp.ne.s32.totalorder %s19, %s20
    %p29 = scmp.eq.s32.totalorder %s14, 0
    %p30 = por %p28, %p29
    %p31 = scmp.ne.s32.totalorder %s19, %s20
    %p32 = scmp.eq.s32.totalorder %s15, 1
    %p33 = por %p31, %p32
    %p35 = scmp.ne.s32.totalorder %s20, %s34
    %p36 = scmp.eq.s32.totalorder %s15, 0
    %p37 = por %p35, %p36
    %s39 = sadd.s32 %s38, 1
    %p42 = scmp.eq.s32.totalorder %s9, 1
    %p43 = scmp.ne.s32.totalorder %s38, %s40
    %p44 = scmp.eq.s32.totalorder %s9, 0
    %p45 = por %p43, %p44
    %p46 = scmp.ne.s32.totalorder %s38, %s40
    %p47 = scmp.eq.s32.totalorder %s14, 1
    %p48 = por %p46, %p47
    %p49 = scmp.ne.s32.totalorder %s40, %s41
    %p50 = scmp.eq.s32.totalorder %s14, 0
    %p51 = por %p49, %p50
    %p52 = scmp.ne.s32.totalorder %s40, %s41
    %p53 = scmp.eq.s32.totalorder %s15, 1
    %p54 = por %p52, %p53
    %p56 = scmp.ne.s32.totalorder %s41, %s55
    %p57 = scmp.eq.s32.totalorder %s15, 0
    %p58 = por %p56, %p57
    %s59 = ssub.s32 %s9, %s16
    %p60 = scmp.eq.s32.totalorder %s59, 0
    %s62 = sadd.s32 %s61, 1
    %s63 = scalar_select %p60, %s61, %s62
    %p66 = pneg %p60
    %p67 = scmp.eq.s32.totalorder %s9, 1
    %p68 = por %p66, %p67
    %p69 = scmp.ne.s32.totalorder %s61, %s64
    %p70 = scmp.eq.s32.totalorder %s9, 0
    %p71 = por %p69, %p70
    %p72 = scmp.ne.s32.totalorder %s61, %s64
    %p73 = scmp.eq.s32.totalorder %s14, 1
    %p74 = por %p72, %p73
    %p75 = scmp.ne.s32.totalorder %s64, %s65
    %p76 = scmp.eq.s32.totalorder %s14, 0
    %p77 = por %p75, %p76
    %p78 = scmp.ne.s32.totalorder %s64, %s65
    %p79 = scmp.eq.s32.totalorder %s15, 1
    %p80 = por %p78, %p79
    %p82 = scmp.ne.s32.totalorder %s65, %s81
    %p83 = scmp.eq.s32.totalorder %s15, 0
    %p84 = por %p82, %p83
    %s85 = ssub.s32 %s9, %s16
    %p86 = scmp.eq.s32.totalorder %s85, 0
    %s88 = sadd.s32 %s87, 1
    %s89 = scalar_select %p86, %s87, %s88
    %p92 = pneg %p86
    %p93 = scmp.eq.s32.totalorder %s9, 1
    %p94 = por %p92, %p93
    %p95 = scmp.ne.s32.totalorder %s87, %s90
    %p96 = scmp.eq.s32.totalorder %s9, 0
    %p97 = por %p95, %p96
    %p98 = scmp.ne.s32.totalorder %s87, %s90
    %p99 = scmp.eq.s32.totalorder %s14, 1
    %p100 = por %p98, %p99
    %p101 = scmp.ne.s32.totalorder %s90, %s91
    %p102 = scmp.eq.s32.totalorder %s14, 0
    %p103 = por %p101, %p102
    %p104 = scmp.ne.s32.totalorder %s90, %s91
    %p105 = scmp.eq.s32.totalorder %s15, 1
    %p106 = por %p104, %p105
    %p108 = scmp.ne.s32.totalorder %s91, %s107
    %p109 = scmp.eq.s32.totalorder %s15, 0
    %p110 = por %p108, %p109
    %p111 = scmp.le.s32.totalorder 1, %s9
    %p112 = scmp.lt.s32.totalorder %s9, 3
    %p113 = pnand %p111, %p112
    %p114 = pneg %p113
    // Predicated region
    $region9: #{ccnn1_forward.15} parent=5 // pred_check
      _
    $region10: #{ccnn1_forward.15} parent=5 // pred_check_branch
      %116 = sbr.rel (%p113) target = $region12
    $region11: #{ccnn1_forward.15} parent=5 // pred_region
      %s117 = ssub.s32 %s9, 1
      // Predicated region
      $region13: #{ccnn1_forward.15} parent=11 // pred_check
        %p118 = pneg %p30
      $region14: #{ccnn1_forward.15} parent=11 // pred_check_branch
        %120 = sbr.rel (%p118) target = $region16
      $region15: #{ccnn1_forward.15} parent=11 // pred_region
        _
      $region16: #{ccnn1_forward.15} parent=11 // pred_fallthru
        _
      // Predicated region
      $region17: #{ccnn1_forward.15} parent=11 // pred_check
        %p121 = pneg %p51
      $region18: #{ccnn1_forward.15} parent=11 // pred_check_branch
        %123 = sbr.rel (%p121) target = $region20
      $region19: #{ccnn1_forward.15} parent=11 // pred_region
        _
      $region20: #{ccnn1_forward.15} parent=11 // pred_fallthru
        _
    $region12: #{ccnn1_forward.15} parent=5 // pred_fallthru
      _
    %p124 = scmp.lt.s32.totalorder %s9, 2
    // Predicated region
    $region21: #{ccnn1_forward.15} parent=5 // pred_check
      %p125 = pneg %p124
    $region22: #{ccnn1_forward.15} parent=5 // pred_check_branch
      %127 = sbr.rel (%p125) target = $region24
    $region23: #{ccnn1_forward.15} parent=5 // pred_region
      // Predicated region
      $region25: #{ccnn1_forward.15} parent=23 // pred_check
        %p128 = pneg %p71
      $region26: #{ccnn1_forward.15} parent=23 // pred_check_branch
        %130 = sbr.rel (%p128) target = $region28
      $region27: #{ccnn1_forward.15} parent=23 // pred_region
        %p131 = scmp.lt.s32.totalorder %s9, 1
        %s132 = scalar_select %p131, %s9, 1
        %s133 = smul.addr %s132, 4
        %s134 = scalar_lea.vmem %s2, %s133
      $region28: #{ccnn1_forward.15} parent=23 // pred_fallthru
        _
    $region24: #{ccnn1_forward.15} parent=5 // pred_fallthru
      _
    %p135 = scmp.le.s32.totalorder 1, %s9
    %p136 = scmp.lt.s32.totalorder %s9, 3
    %p137 = pnand %p135, %p136
    %p138 = pneg %p137
    // Predicated region
    $region29: #{ccnn1_forward.15} parent=5 // pred_check
      _
    $region30: #{ccnn1_forward.15} parent=5 // pred_check_branch
      %140 = sbr.rel (%p137) target = $region32
    $region31: #{ccnn1_forward.15} parent=5 // pred_region
      %s141 = ssub.s32 %s9, 1
      %p142 = pneg %p30
      %p143 = pneg %p27
      %p144 = pneg %p51
      %p145 = pneg %p48
      %p146 = scmp.lt.s32.totalorder %s14, 1
      %s147 = scalar_select %p146, %s14, 1
      %s148 = smul.addr %s147, 4
      %s149 = scalar_lea.vmem %s2, %s148
      %p150 = pneg %p77
      %p151 = pneg %p74
      %p152 = pneg %p103
      %p153 = pneg %p100
      %p154 = scmp.lt.s32.totalorder %s14, 1
      %s155 = scalar_select %p154, %s14, 1
      %s156 = smul.addr %s155, 4
      %s157 = scalar_lea.vmem %s3, %s156
      %p158 = scmp.lt.s32.totalorder %s14, 1
      %s159 = scalar_select %p158, %s14, 1
      %s160 = smul.addr %s159, 4
      %s161 = scalar_lea.vmem %s2, %s160
      %p162 = scmp.lt.s32.totalorder %s14, 1
      %s163 = scalar_select %p162, %s14, 1
      %s164 = smul.addr %s163, 4
      %s165 = scalar_lea.vmem %s3, %s164
      %v167 = vld [vmem:[%s161] sm:$0xf]
      %v168 = vld [vmem:[%s0] sm:$0xf]
      %s169 = scalar_lea.vmem %s0, 4
      %v170 = vld [vmem:[%s169] sm:$0xf]
      %v172 = vunpack.c.l.b16 %v167
      %v173 = vpack.c.b16 %v172, %v172
      %174 = vrot.lane.b32.xlu0 %v173, 127
      %v175 = vpop.permute.xlu0 %174
      %vm176 = vcmask 64512
      %v178 = vsel %vm176, %v170, 0
      %vm180 = vcmask 1043456
      %v182 = vsel %vm180, %v175, 0
      %184 = vmatpush.bf16.msra.mxu0 0
      %185 = vmatpush.bf16.msra.mxu0 0
      %186 = vmatpush.bf16.msra.mxu0 0
      %187 = vmatpush.bf16.msra.mxu0 0
      %188 = vmatpush.bf16.msra.mxu0 0
      %189 = vmatpush.bf16.msra.mxu0 0
      %190 = vmatpush.bf16.msra.mxu0 0
      %191 = vmatpush.bf16.msra.mxu0 %v182
      %192 = vmatmul.bf16.gmra.mxu0 %v178
      %v193 = vpop.f32.mrf.mxu0
      %v194 = vadd.f32 0.0, %v193
      %v195 = vpop.f32.mrf.mxu0
      %196 = vdwg.mxu0
      %v198 = vsel %vm176, %v168, 0
      %v201 = vsel %vm180, %v167, 0
      %203 = vmatpush.bf16.msra.mxu0 0
      %204 = vmatpush.bf16.msra.mxu0 0
      %205 = vmatpush.bf16.msra.mxu0 0
      %206 = vmatpush.bf16.msra.mxu0 0
      %207 = vmatpush.bf16.msra.mxu0 0
      %208 = vmatpush.bf16.msra.mxu0 0
      %209 = vmatpush.bf16.msra.mxu0 0
      %210 = vmatpush.bf16.msra.mxu0 %v201
      %211 = vmatmul.bf16.gmra.mxu0 %v198
      %v212 = vpop.f32.mrf.mxu0
      %v213 = vadd.f32 %v194, %v212
      %v214 = vpop.f32.mrf.mxu0
      %215 = vdwg.mxu0
      %s216 = scalar_lea.vmem %s0, 8
      %v217 = vld [vmem:[%s216] sm:$0xf]
      %218 = vrot.lane.b32.xlu0 %v173, 126
      %v219 = vpop.permute.xlu0 %218
      %v221 = vsel %vm176, %v217, 0
      %v224 = vsel %vm180, %v219, 0
      %226 = vmatpush.bf16.msra.mxu0 0
      %227 = vmatpush.bf16.msra.mxu0 0
      %228 = vmatpush.bf16.msra.mxu0 0
      %229 = vmatpush.bf16.msra.mxu0 0
      %230 = vmatpush.bf16.msra.mxu0 0
      %231 = vmatpush.bf16.msra.mxu0 0
      %232 = vmatpush.bf16.msra.mxu0 0
      %233 = vmatpush.bf16.msra.mxu0 %v224
      %234 = vmatmul.bf16.gmra.mxu0 %v221
      %v235 = vpop.f32.mrf.mxu0
      %v236 = vadd.f32 0.0, %v235
      %v237 = vpop.f32.mrf.mxu0
      %238 = vdwg.mxu0
      %v239 = vadd.f32 %v213, %v236
      %s240 = scalar_lea.vmem %s0, 12
      %v241 = vld [vmem:[%s240] sm:$0xf]
      %242 = vrot.lane.b32.xlu0 %v173, 118
      %v243 = vpop.permute.xlu0 %242
      %v245 = vsel %vm176, %v241, 0
      %v248 = vsel %vm180, %v243, 0
      %250 = vmatpush.bf16.msra.mxu0 0
      %251 = vmatpush.bf16.msra.mxu0 0
      %252 = vmatpush.bf16.msra.mxu0 0
      %253 = vmatpush.bf16.msra.mxu0 0
      %254 = vmatpush.bf16.msra.mxu0 0
      %255 = vmatpush.bf16.msra.mxu0 0
      %256 = vmatpush.bf16.msra.mxu0 0
      %257 = vmatpush.bf16.msra.mxu0 %v248
      %258 = vmatmul.bf16.gmra.mxu0 %v245
      %v259 = vpop.f32.mrf.mxu0
      %v260 = vadd.f32 0.0, %v259
      %v261 = vpop.f32.mrf.mxu0
      %262 = vdwg.mxu0
      %v263 = vadd.f32 %v239, %v260
      %s264 = scalar_lea.vmem %s0, 16
      %v265 = vld [vmem:[%s264] sm:$0xf]
      %266 = vrot.lane.b32.xlu0 %v173, 117
      %v267 = vpop.permute.xlu0 %266
      %v269 = vsel %vm176, %v265, 0
      %v272 = vsel %vm180, %v267, 0
      %274 = vmatpush.bf16.msra.mxu0 0
      %275 = vmatpush.bf16.msra.mxu0 0
      %276 = vmatpush.bf16.msra.mxu0 0
      %277 = vmatpush.bf16.msra.mxu0 0
      %278 = vmatpush.bf16.msra.mxu0 0
      %279 = vmatpush.bf16.msra.mxu0 0
      %280 = vmatpush.bf16.msra.mxu0 0
      %281 = vmatpush.bf16.msra.mxu0 %v272
      %282 = vmatmul.bf16.gmra.mxu0 %v269
      %v283 = vpop.f32.mrf.mxu0
      %v284 = vadd.f32 0.0, %v283
      %v285 = vpop.f32.mrf.mxu0
      %286 = vdwg.mxu0
      %v287 = vadd.f32 %v263, %v284
      %s288 = scalar_lea.vmem %s0, 20
      %v289 = vld [vmem:[%s288] sm:$0xf]
      %290 = vrot.lane.b32.xlu0 %v173, 116
      %v291 = vpop.permute.xlu0 %290
      %v293 = vsel %vm176, %v289, 0
      %v296 = vsel %vm180, %v291, 0
      %298 = vmatpush.bf16.msra.mxu0 0
      %299 = vmatpush.bf16.msra.mxu0 0
      %300 = vmatpush.bf16.msra.mxu0 0
      %301 = vmatpush.bf16.msra.mxu0 0
      %302 = vmatpush.bf16.msra.mxu0 0
      %303 = vmatpush.bf16.msra.mxu0 0
      %304 = vmatpush.bf16.msra.mxu0 0
      %305 = vmatpush.bf16.msra.mxu0 %v296
      %306 = vmatmul.bf16.gmra.mxu0 %v293
      %v307 = vpop.f32.mrf.mxu0
      %v308 = vadd.f32 0.0, %v307
      %v309 = vpop.f32.mrf.mxu0
      %310 = vdwg.mxu0
      %v311 = vadd.f32 %v287, %v308
      %s312 = scalar_lea.vmem %s0, 24
      %v313 = vld [vmem:[%s312] sm:$0xf]
      %314 = vrot.lane.b32.xlu0 %v173, 108
      %v315 = vpop.permute.xlu0 %314
      %v317 = vsel %vm176, %v313, 0
      %v320 = vsel %vm180, %v315, 0
      %322 = vmatpush.bf16.msra.mxu0 0
      %323 = vmatpush.bf16.msra.mxu0 0
      %324 = vmatpush.bf16.msra.mxu0 0
      %325 = vmatpush.bf16.msra.mxu0 0
      %326 = vmatpush.bf16.msra.mxu0 0
      %327 = vmatpush.bf16.msra.mxu0 0
      %328 = vmatpush.bf16.msra.mxu0 0
      %329 = vmatpush.bf16.msra.mxu0 %v320
      %330 = vmatmul.bf16.gmra.mxu0 %v317
      %v331 = vpop.f32.mrf.mxu0
      %v332 = vadd.f32 0.0, %v331
      %v333 = vpop.f32.mrf.mxu0
      %334 = vdwg.mxu0
      %v335 = vadd.f32 %v311, %v332
      %s336 = scalar_lea.vmem %s0, 28
      %v337 = vld [vmem:[%s336] sm:$0xf]
      %338 = vrot.lane.b32.xlu0 %v173, 107
      %v339 = vpop.permute.xlu0 %338
      %v341 = vsel %vm176, %v337, 0
      %v344 = vsel %vm180, %v339, 0
      %346 = vmatpush.bf16.msra.mxu0 0
      %347 = vmatpush.bf16.msra.mxu0 0
      %348 = vmatpush.bf16.msra.mxu0 0
      %349 = vmatpush.bf16.msra.mxu0 0
      %350 = vmatpush.bf16.msra.mxu0 0
      %351 = vmatpush.bf16.msra.mxu0 0
      %352 = vmatpush.bf16.msra.mxu0 0
      %353 = vmatpush.bf16.msra.mxu0 %v344
      %354 = vmatmul.bf16.gmra.mxu0 %v341
      %v355 = vpop.f32.mrf.mxu0
      %v356 = vadd.f32 0.0, %v355
      %v357 = vpop.f32.mrf.mxu0
      %358 = vdwg.mxu0
      %v359 = vadd.f32 %v335, %v356
      %s360 = scalar_lea.vmem %s0, 32
      %v361 = vld [vmem:[%s360] sm:$0xf]
      %362 = vrot.lane.b32.xlu0 %v173, 106
      %v363 = vpop.permute.xlu0 %362
      %v365 = vsel %vm176, %v361, 0
      %v368 = vsel %vm180, %v363, 0
      %370 = vmatpush.bf16.msra.mxu0 0
      %371 = vmatpush.bf16.msra.mxu0 0
      %372 = vmatpush.bf16.msra.mxu0 0
      %373 = vmatpush.bf16.msra.mxu0 0
      %374 = vmatpush.bf16.msra.mxu0 0
      %375 = vmatpush.bf16.msra.mxu0 0
      %376 = vmatpush.bf16.msra.mxu0 0
      %377 = vmatpush.bf16.msra.mxu0 %v368
      %378 = vmatmul.bf16.gmra.mxu0 %v365
      %v379 = vpop.f32.mrf.mxu0
      %v380 = vadd.f32 0.0, %v379
      %v381 = vpop.f32.mrf.mxu0
      %382 = vdwg.mxu0
      %v383 = vadd.f32 %v359, %v380
      %v384 = vld [vmem:[%s1] sm:$0xff]
      %386 = vset.pattern.permute.xlu0 0
      %387 = vperm.xlu0 %386, %v384
      %v388 = vpop.permute.xlu0 %387
      %v390 = vadd.f32 %v383, %v388
      %v391 = vpack.c.bf16 %v390, %v390
      %vm392 = vcmask 633856
      %393 = vst.msk [vmem:[%s165] sm:$0xf] %vm392, %v391
      %p394 = scmp.lt.s32.totalorder %s14, 1
      %s395 = scalar_select %p394, %s14, 1
      %s396 = smul.addr %s395, 4
      %s397 = scalar_lea.vmem %s3, %s396
      // Predicated region
      $region33: #{ccnn1_forward.15} parent=31 // pred_check
        %p398 = pneg %p100
      $region34: #{ccnn1_forward.15} parent=31 // pred_check_branch
        %400 = sbr.rel (%p398) target = $region36
      $region35: #{ccnn1_forward.15} parent=31 // pred_region
        _
      $region36: #{ccnn1_forward.15} parent=31 // pred_fallthru
        _
    $region32: #{ccnn1_forward.15} parent=5 // pred_fallthru
      _
    %p401 = scmp.le.s32.totalorder 2, %s9
    // Predicated region
    $region37: #{ccnn1_forward.15} parent=5 // pred_check
      %p402 = pneg %p401
    $region38: #{ccnn1_forward.15} parent=5 // pred_check_branch
      %404 = sbr.rel (%p402) target = $region40
    $region39: #{ccnn1_forward.15} parent=5 // pred_region
      %s405 = ssub.s32 %s9, 2
      // Predicated region
      $region41: #{ccnn1_forward.15} parent=39 // pred_check
        %p406 = pneg %p106
      $region42: #{ccnn1_forward.15} parent=39 // pred_check_branch
        %408 = sbr.rel (%p406) target = $region44
      $region43: #{ccnn1_forward.15} parent=39 // pred_region
        %p409 = scmp.lt.s32.totalorder %s15, 1
        %s410 = scalar_select %p409, %s15, 1
        %s411 = smul.addr %s410, 4
        %s412 = scalar_lea.vmem %s3, %s411
      $region44: #{ccnn1_forward.15} parent=39 // pred_fallthru
        _
    $region40: #{ccnn1_forward.15} parent=5 // pred_fallthru
      _
  $region6: #{ccnn1_forward.15} parent=0 // loop_footer
    %s13 = sadd.s32 1, %s9
  $region7: #{ccnn1_forward.15} parent=0 // loop_footer_branch
    %8 = sbr.rel target = $region3
  $region8: #{ccnn1_forward.15} parent=0 // loop_exit
    _

</llo_original>
